<compile_context>
chip_gen: v6e
topology: v6e:2x2x1
jax: 0.10.0
libtpu: 0.0.40
codegen_flags: <defaults>
</compile_context>

<pallas_src>
import math

import jax
import jax.numpy as jnp
from jax import lax
from jax.experimental import pallas as pl
from jax.experimental.pallas import tpu as pltpu

# ---------------- model configuration (small, deterministic) -----------------
NUM_ELECTRODES = 4          # conv in_channels  (constants.DATA['NUM_ELECTRODES'])
OUT_CHANNELS   = 8          # conv out_channels == transformer sequence length
D_MODEL        = 32
N_HEADS        = 4
DH             = D_MODEL // N_HEADS
TRANSFORMER_LAYERS = 1
DFF            = 64         # TODO(synk): nn.Transformer default dim_feedforward=2048; shrunk for the small demo
NUM_CLASSES    = 5          # constants.DATA['NUM_CLASSES']
HIDDEN_SIZE    = OUT_CHANNELS * D_MODEL
BATCH          = 2
POOL           = 3
T_IN           = D_MODEL * POOL      # 96 time samples; MaxPool2d((1,3)) -> D_MODEL
CONV_K         = 10
KC             = CONV_K * NUM_ELECTRODES   # 40 = im2col contraction depth
BN_EPS         = 1e-3
LN_EPS         = 1e-5

_QKT_DIMS = (((1,), (1,)), ((), ()))       # A @ B^T contraction


# ========================= in-kernel building blocks ==========================
def _layer_norm(x, w_ref, b_ref):
    mu = jnp.mean(x, axis=-1, keepdims=True)
    var = jnp.mean((x - mu) ** 2, axis=-1, keepdims=True)
    return (x - mu) * lax.rsqrt(var + LN_EPS) * w_ref[...] + b_ref[...]


def _mha(xq, xkv, w_ref, b_ref, ow_ref, ob_ref):
    """Multi-head attention on (seq, d_model) values.

    w_ref: in_proj_weight^T (D, 3D), b_ref: (1, 3D),
    ow_ref: out_proj.weight^T (D, D), ob_ref: (1, D).
    """
    if xq is xkv:                              # self-attention: one fused QKV matmul
        qkv = jnp.dot(xq, w_ref[...], preferred_element_type=jnp.float32) + b_ref[...]
        q = qkv[:, 0:D_MODEL]
        k = qkv[:, D_MODEL:2 * D_MODEL]
        v = qkv[:, 2 * D_MODEL:3 * D_MODEL]
    else:                                      # cross-attention: q from xq, k/v from xkv
        w = w_ref[...]
        b = b_ref[...]
        q = jnp.dot(xq, w[:, 0:D_MODEL],
                    preferred_element_type=jnp.float32) + b[:, 0:D_MODEL]
        kv = jnp.dot(xkv, w[:, D_MODEL:3 * D_MODEL],
                     preferred_element_type=jnp.float32) + b[:, D_MODEL:3 * D_MODEL]
        k = kv[:, 0:D_MODEL]
        v = kv[:, D_MODEL:2 * D_MODEL]

    scale = 1.0 / math.sqrt(DH)
    out = jnp.zeros((xq.shape[0], D_MODEL), jnp.float32)
    for h in range(N_HEADS):                   # unrolled; static lane slices per head
        qh = q[:, h * DH:(h + 1) * DH]
        kh = k[:, h * DH:(h + 1) * DH]
        vh = v[:, h * DH:(h + 1) * DH]
        s = lax.dot_general(qh, kh, _QKT_DIMS,
                            preferred_element_type=jnp.float32) * scale
        s = s - jnp.max(s, axis=-1, keepdims=True)
        p = jnp.exp(s)
        p = p / jnp.sum(p, axis=-1, keepdims=True)
        oh = jnp.dot(p, vh, preferred_element_type=jnp.float32)          # (L, DH)
        # head h contributes oh @ out_w^T[h*DH:(h+1)*DH, :]  (avoids lane concat)
        out = out + jnp.dot(oh, ow_ref[pl.ds(h * DH, DH), :],
                            preferred_element_type=jnp.float32)          # (L, D)
    return out + ob_ref[...]


def _ffn(x, w1_ref, b1_ref, w2_ref, b2_ref):
    h = jnp.dot(x, w1_ref[...], preferred_element_type=jnp.float32) + b1_ref[...]
    h = jnp.maximum(h, 0.0)                    # nn.Transformer default activation = relu
    return jnp.dot(h, w2_ref[...], preferred_element_type=jnp.float32) + b2_ref[...]


# ============================== the fused kernel ==============================
def _make_ctn_kernel(n_tparams):
    def kernel(*refs):
        s_ref, convw_ref, convaux_ref, rollm_ref = refs[:4]
        t_refs = refs[4:4 + n_tparams]
        out_ref = refs[4 + n_tparams]
        dec_scratch = refs[5 + n_tparams]
        it = iter(t_refs)
        nxt = lambda: next(it)                 # consume params in flattening order

        # --- Conv2d(1,10,'same') + ELU + MaxPool2d(1,3) + BatchNorm2d (fused) ---
        wf = convw_ref[...]                                       # (C_out, K*C_in)
        pre = jnp.dot(wf, s_ref[0, 0], preferred_element_type=jnp.float32)
        for j in range(1, POOL):               # max over the 3 pool offsets
            pre = jnp.maximum(pre, jnp.dot(wf, s_ref[0, j],
                                           preferred_element_type=jnp.float32))
        aux = convaux_ref[...]                                    # (C_out, 3)
        pre = pre + aux[:, 0:1]                # conv bias (constant within pool window)
        act = jnp.where(pre > 0.0, pre,
                        jnp.exp(jnp.minimum(pre, 0.0)) - 1.0)     # ELU(alpha=1), clamped
        src = act * aux[:, 1:2] + aux[:, 2:3]                     # BatchNorm (eval stats)
        # src: (OUT_CHANNELS, D_MODEL) == (seq, d_model); dropout1 = identity.

        # tgt = torch.roll(src, -1, dims=-1) as a constant permutation matmul
        tgt = jnp.dot(src, rollm_ref[...], preferred_element_type=jnp.float32)

        # ----------------------------- encoder --------------------------------
        mem = src
        for _ in range(TRANSFORMER_LAYERS):
            aw, ab, ow, ob = nxt(), nxt(), nxt(), nxt()
            l1w, l1b = nxt(), nxt()
            w1, b1, w2, b2 = nxt(), nxt(), nxt(), nxt()
            l2w, l2b = nxt(), nxt()
            mem = _layer_norm(mem + _mha(mem, mem, aw, ab, ow, ob), l1w, l1b)
            mem = _layer_norm(mem + _ffn(mem, w1, b1, w2, b2), l2w, l2b)
        mem = _layer_norm(mem, nxt(), nxt())                      # encoder final norm

        # ----------------------------- decoder --------------------------------
        x = tgt
        for _ in range(TRANSFORMER_LAYERS):
            saw, sab, sow, sob = nxt(), nxt(), nxt(), nxt()
            l1w, l1b = nxt(), nxt()
            caw, cab, cow, cob = nxt(), nxt(), nxt(), nxt()
            l2w, l2b = nxt(), nxt()
            w1, b1, w2, b2 = nxt(), nxt(), nxt(), nxt()
            l3w, l3b = nxt(), nxt()
            x = _layer_norm(x + _mha(x, x, saw, sab, sow, sob), l1w, l1b)
            x = _layer_norm(x + _mha(x, mem, caw, cab, cow, cob), l2w, l2b)
            x = _layer_norm(x + _ffn(x, w1, b1, w2, b2), l3w, l3b)
        x = _layer_norm(x, nxt(), nxt())                          # decoder final norm

        # --------------------------- Flatten + fc -----------------------------
        fcw_ref, fcb_ref = nxt(), nxt()        # (S, D, C) and (1, C)
        dec_scratch[...] = x
        logits = fcb_ref[...]                                      # (1, NUM_CLASSES)
        for s in range(OUT_CHANNELS):          # flat @ fc_w^T as 8 row-block matmuls
            row = dec_scratch[pl.ds(s, 1), :]                      # (1, D_MODEL)
            logits = logits + jnp.dot(row, fcw_ref[s],
                                      preferred_element_type=jnp.float32)
        out_ref[0] = logits
    return kernel


# ============================ host-side wrappers ==============================
def _const_spec(shape):
    nd = len(shape)
    return pl.BlockSpec(shape, lambda b, _nd=nd: (0,) * _nd)


def _im2col_pooled(inp):
    """(B, C_in, 1, T) -> (B, POOL, K*C_in, T//POOL) strided im2col stacks.

    stacks[b, j, 4k + ci, t] = x_pad[b, ci, POOL*t + j + k], so that
    conv_w_flat @ stacks[b, j] is the conv output restricted to pool offset j.
    """
    x = inp.astype(jnp.float32)[:, :, 0, :]                       # (B, C_in, T)
    xp = jnp.pad(x, ((0, 0), (0, 0), (4, 5)))                     # 'same' pad for K=10
    pooled = T_IN // POOL
    cols = [xp[:, :, m:m + POOL * pooled:POOL] for m in range(CONV_K + POOL - 1)]
    stacks = [jnp.concatenate(cols[j:j + CONV_K], axis=1) for j in range(POOL)]
    return jnp.stack(stacks, axis=1)                              # (B, POOL, KC, pooled)


def ctn_forward(inp, prep):
    """Fused CTN forward: one pallas_call, grid over batch ('parallel' for v7x)."""
    s_in = _im2col_pooled(inp)                                    # (B, 3, 40, 32)
    B = s_in.shape[0]
    t_list = list(prep["tparams"])
    inputs = [s_in, prep["conv_w_flat"], prep["conv_aux"], prep["roll_m"]] + t_list

    in_specs = [pl.BlockSpec((1, POOL, KC, D_MODEL), lambda b: (b, 0, 0, 0))]
    in_specs += [_const_spec(a.shape) for a in inputs[1:]]

    out = pl.pallas_call(
        _make_ctn_kernel(len(t_list)),
        out_shape=jax.ShapeDtypeStruct((B, 1, NUM_CLASSES), jnp.float32),
        grid=(B,),
        in_specs=in_specs,
        out_specs=pl.BlockSpec((1, 1, NUM_CLASSES), lambda b: (b, 0, 0)),
        scratch_shapes=[pltpu.VMEM((OUT_CHANNELS, D_MODEL), jnp.float32)],
        compiler_params=pltpu.CompilerParams(dimension_semantics=("parallel",)),
    )(*inputs)
    return out.reshape(B, NUM_CLASSES)


def prepare_params(p):
    """One-time packing of PyTorch-layout params into kernel layout (outside jit)."""
    f32 = jnp.float32
    conv_w_flat = jnp.transpose(p["conv_w"], (0, 2, 1)).reshape(OUT_CHANNELS, KC).astype(f32)
    bn_scale = p["bn_gamma"] / jnp.sqrt(p["bn_var"] + BN_EPS)
    bn_shift = p["bn_beta"] - p["bn_mean"] * bn_scale
    conv_aux = jnp.stack([p["conv_b"], bn_scale, bn_shift], axis=1).astype(f32)   # (C_out,3)
    # Permutation matrix implementing torch.roll(x, -1, dims=-1) as x @ roll_m.
    roll_m = jnp.roll(jnp.eye(D_MODEL, dtype=f32), 1, axis=0)

    def attn(a):
        return [a["in_w"].T, a["in_b"].reshape(1, -1), a["out_w"].T, a["out_b"].reshape(1, -1)]

    def lnp(w, b):
        return [w.reshape(1, -1), b.reshape(1, -1)]

    def ffnp(l):
        return [l["w1"].T, l["b1"].reshape(1, -1), l["w2"].T, l["b2"].reshape(1, -1)]

    t = p["transformer"]
    flat = []
    for l in t["encoder_layers"]:
        flat += attn(l["self_attn"]) + lnp(l["ln1_w"], l["ln1_b"])
        flat += ffnp(l) + lnp(l["ln2_w"], l["ln2_b"])
    flat += lnp(t["enc_norm_w"], t["enc_norm_b"])
    for l in t["decoder_layers"]:
        flat += attn(l["self_attn"]) + lnp(l["ln1_w"], l["ln1_b"])
        flat += attn(l["cross_attn"]) + lnp(l["ln2_w"], l["ln2_b"])
        flat += ffnp(l) + lnp(l["ln3_w"], l["ln3_b"])
    flat += lnp(t["dec_norm_w"], t["dec_norm_b"])
    fc_w3d = p["fc_w"].reshape(NUM_CLASSES, OUT_CHANNELS, D_MODEL).transpose(1, 2, 0)
    flat += [fc_w3d, p["fc_b"].reshape(1, -1)]
    return {"conv_w_flat": conv_w_flat, "conv_aux": conv_aux, "roll_m": roll_m,
            "tparams": [a.astype(f32) for a in flat]}


# ============================== parameter init ================================
def init_params(key):
    keys = iter(jax.random.split(key, 64))

    def p(shape, scale=0.05):
        return jax.random.normal(next(keys), shape, jnp.float32) * scale

    def mha_params():
        return {"in_w": p((3 * D_MODEL, D_MODEL)), "in_b": p((3 * D_MODEL,)),
                "out_w": p((D_MODEL, D_MODEL)), "out_b": p((D_MODEL,))}

    def enc_layer():
        return {"self_attn": mha_params(),
                "w1": p((DFF, D_MODEL)), "b1": p((DFF,)),
                "w2": p((D_MODEL, DFF)), "b2": p((D_MODEL,)),
                "ln1_w": jnp.ones((D_MODEL,)), "ln1_b": jnp.zeros((D_MODEL,)),
                "ln2_w": jnp.ones((D_MODEL,)), "ln2_b": jnp.zeros((D_MODEL,))}

    def dec_layer():
        d = enc_layer()
        d["cross_attn"] = mha_params()
        d["ln3_w"] = jnp.ones((D_MODEL,))
        d["ln3_b"] = jnp.zeros((D_MODEL,))
        return d

    return {
        "conv_w": p((OUT_CHANNELS, NUM_ELECTRODES, CONV_K)),   # PyTorch (C_out,C_in,1,K), H squeezed
        "conv_b": p((OUT_CHANNELS,)),
        "bn_gamma": jnp.ones((OUT_CHANNELS,)) + p((OUT_CHANNELS,), 0.02),
        "bn_beta": p((OUT_CHANNELS,)),
        "bn_mean": p((OUT_CHANNELS,)),
        "bn_var": jnp.ones((OUT_CHANNELS,)) + jnp.abs(p((OUT_CHANNELS,), 0.02)),
        "transformer": {
            "encoder_layers": [enc_layer() for _ in range(TRANSFORMER_LAYERS)],
            "decoder_layers": [dec_layer() for _ in range(TRANSFORMER_LAYERS)],
            "enc_norm_w": jnp.ones((D_MODEL,)), "enc_norm_b": jnp.zeros((D_MODEL,)),
            "dec_norm_w": jnp.ones((D_MODEL,)), "dec_norm_b": jnp.zeros((D_MODEL,)),
        },
        "fc_w": p((NUM_CLASSES, HIDDEN_SIZE)),
        "fc_b": p((NUM_CLASSES,)),
    }


# ======================= pure-jnp reference (validation) ======================
def ctn_reference(inp, params):
    x = inp.astype(jnp.float32)[:, :, 0, :]
    xp = jnp.pad(x, ((0, 0), (0, 0), (4, 5)))
    W = params["conv_w"]
    y = jnp.zeros((x.shape[0], OUT_CHANNELS, T_IN), jnp.float32)
    for k in range(CONV_K):
        y = y + jnp.einsum("oc,bct->bot", W[:, :, k], xp[:, :, k:k + T_IN])
    y = y + params["conv_b"][None, :, None]
    y = jnp.where(y > 0, y, jnp.exp(jnp.minimum(y, 0.0)) - 1.0)            # ELU
    y = y.reshape(y.shape[0], OUT_CHANNELS, T_IN // POOL, POOL).max(-1)    # MaxPool(1,3)
    scale = params["bn_gamma"] / jnp.sqrt(params["bn_var"] + BN_EPS)
    shift = params["bn_beta"] - params["bn_mean"] * scale
    src = y * scale[None, :, None] + shift[None, :, None]
    tgt = jnp.roll(src, -1, axis=2)

    def ln(v, w, b):
        mu = v.mean(-1, keepdims=True)
        var = ((v - mu) ** 2).mean(-1, keepdims=True)
        return (v - mu) / jnp.sqrt(var + LN_EPS) * w + b

    def mha(q_in, kv_in, a):
        wq, wk, wv = jnp.split(a["in_w"], 3, axis=0)
        bq, bk, bv = jnp.split(a["in_b"], 3)
        q = q_in @ wq.T + bq
        k = kv_in @ wk.T + bk
        v = kv_in @ wv.T + bv
        Bb, Lq, _ = q.shape
        Lk = k.shape[1]
        sh = lambda t, L: t.reshape(Bb, L, N_HEADS, DH).transpose(0, 2, 1, 3)
        qh, kh, vh = sh(q, Lq), sh(k, Lk), sh(v, Lk)
        s = jnp.einsum("bhqd,bhkd->bhqk", qh, kh) / math.sqrt(DH)
        p = jax.nn.softmax(s, axis=-1)
        o = jnp.einsum("bhqk,bhkd->bhqd", p, vh).transpose(0, 2, 1, 3).reshape(Bb, Lq, D_MODEL)
        return o @ a["out_w"].T + a["out_b"]

    def ffn(v, l):
        return jnp.maximum(v @ l["w1"].T + l["b1"], 0.0) @ l["w2"].T + l["b2"]

    t = params["transformer"]
    mem = src
    for l in t["encoder_layers"]:
        mem = ln(mem + mha(mem, mem, l["self_attn"]), l["ln1_w"], l["ln1_b"])
        mem = ln(mem + ffn(mem, l), l["ln2_w"], l["ln2_b"])
    mem = ln(mem, t["enc_norm_w"], t["enc_norm_b"])
    out = tgt
    for l in t["decoder_layers"]:
        out = ln(out + mha(out, out, l["self_attn"]), l["ln1_w"], l["ln1_b"])
        out = ln(out + mha(out, mem, l["cross_attn"]), l["ln2_w"], l["ln2_b"])
        out = ln(out + ffn(out, l), l["ln3_w"], l["ln3_b"])
    out = ln(out, t["dec_norm_w"], t["dec_norm_b"])
    return out.reshape(out.shape[0], -1) @ params["fc_w"].T + params["fc_b"]


if __name__ == "__main__":
    key = jax.random.PRNGKey(0)
    pkey, xkey = jax.random.split(key)
    params = init_params(pkey)
    prep = prepare_params(params)                       # one-time packing, outside jit
    inp = jax.random.normal(xkey, (BATCH, NUM_ELECTRODES, 1, T_IN), jnp.float32)

    out = jax.jit(ctn_forward)(inp, prep)
    jax.block_until_ready(out)
    assert out.shape == (BATCH, NUM_CLASSES), out.shape

    ref = ctn_reference(inp, params)
    err = float(jnp.max(jnp.abs(out - ref)))
    assert err < 5e-2, f"kernel/reference mismatch: max abs err = {err}"
    print("KERNEL_OK")
</pallas_src>

<mosaic_0001>
module attributes {stable_mosaic.version = 11 : i64} {
  func.func @kernel(%arg0: i32, %arg1: memref<1x3x40x32xf32, #tpu.memory_space<vmem>>, %arg2: memref<8x40xf32, #tpu.memory_space<vmem>>, %arg3: memref<8x3xf32, #tpu.memory_space<vmem>>, %arg4: memref<32x32xf32, #tpu.memory_space<vmem>>, %arg5: memref<32x96xf32, #tpu.memory_space<vmem>>, %arg6: memref<1x96xf32, #tpu.memory_space<vmem>>, %arg7: memref<32x32xf32, #tpu.memory_space<vmem>>, %arg8: memref<1x32xf32, #tpu.memory_space<vmem>>, %arg9: memref<1x32xf32, #tpu.memory_space<vmem>>, %arg10: memref<1x32xf32, #tpu.memory_space<vmem>>, %arg11: memref<32x64xf32, #tpu.memory_space<vmem>>, %arg12: memref<1x64xf32, #tpu.memory_space<vmem>>, %arg13: memref<64x32xf32, #tpu.memory_space<vmem>>, %arg14: memref<1x32xf32, #tpu.memory_space<vmem>>, %arg15: memref<1x32xf32, #tpu.memory_space<vmem>>, %arg16: memref<1x32xf32, #tpu.memory_space<vmem>>, %arg17: memref<1x32xf32, #tpu.memory_space<vmem>>, %arg18: memref<1x32xf32, #tpu.memory_space<vmem>>, %arg19: memref<32x96xf32, #tpu.memory_space<vmem>>, %arg20: memref<1x96xf32, #tpu.memory_space<vmem>>, %arg21: memref<32x32xf32, #tpu.memory_space<vmem>>, %arg22: memref<1x32xf32, #tpu.memory_space<vmem>>, %arg23: memref<1x32xf32, #tpu.memory_space<vmem>>, %arg24: memref<1x32xf32, #tpu.memory_space<vmem>>, %arg25: memref<32x96xf32, #tpu.memory_space<vmem>>, %arg26: memref<1x96xf32, #tpu.memory_space<vmem>>, %arg27: memref<32x32xf32, #tpu.memory_space<vmem>>, %arg28: memref<1x32xf32, #tpu.memory_space<vmem>>, %arg29: memref<1x32xf32, #tpu.memory_space<vmem>>, %arg30: memref<1x32xf32, #tpu.memory_space<vmem>>, %arg31: memref<32x64xf32, #tpu.memory_space<vmem>>, %arg32: memref<1x64xf32, #tpu.memory_space<vmem>>, %arg33: memref<64x32xf32, #tpu.memory_space<vmem>>, %arg34: memref<1x32xf32, #tpu.memory_space<vmem>>, %arg35: memref<1x32xf32, #tpu.memory_space<vmem>>, %arg36: memref<1x32xf32, #tpu.memory_space<vmem>>, %arg37: memref<1x32xf32, #tpu.memory_space<vmem>>, %arg38: memref<1x32xf32, #tpu.memory_space<vmem>>, %arg39: memref<8x32x5xf32, #tpu.memory_space<vmem>>, %arg40: memref<1x5xf32, #tpu.memory_space<vmem>>, %arg41: memref<1x1x5xf32, #tpu.memory_space<vmem>>, %arg42: memref<8x32xf32, #tpu.memory_space<vmem>>) attributes {dimension_semantics = [#tpu.dimension_semantics<parallel>], iteration_bounds = array<i64: 2>, scalar_prefetch = 0 : i64, scratch_operands = 1 : i64, tpu.core_type = #tpu.core_type<tc>, window_params = [{transform_indices = @transform_0, window_bounds = array<i64: 1, 3, 40, 32>}, {pipeline_mode = #tpu.pipeline_mode<synchronous>, transform_indices = @transform_1, window_bounds = array<i64: 8, 40>}, {pipeline_mode = #tpu.pipeline_mode<synchronous>, transform_indices = @transform_2, window_bounds = array<i64: 8, 3>}, {pipeline_mode = #tpu.pipeline_mode<synchronous>, transform_indices = @transform_3, window_bounds = array<i64: 32, 32>}, {pipeline_mode = #tpu.pipeline_mode<synchronous>, transform_indices = @transform_4, window_bounds = array<i64: 32, 96>}, {pipeline_mode = #tpu.pipeline_mode<synchronous>, transform_indices = @transform_5, window_bounds = array<i64: 1, 96>}, {pipeline_mode = #tpu.pipeline_mode<synchronous>, transform_indices = @transform_6, window_bounds = array<i64: 32, 32>}, {pipeline_mode = #tpu.pipeline_mode<synchronous>, transform_indices = @transform_7, window_bounds = array<i64: 1, 32>}, {pipeline_mode = #tpu.pipeline_mode<synchronous>, transform_indices = @transform_8, window_bounds = array<i64: 1, 32>}, {pipeline_mode = #tpu.pipeline_mode<synchronous>, transform_indices = @transform_9, window_bounds = array<i64: 1, 32>}, {pipeline_mode = #tpu.pipeline_mode<synchronous>, transform_indices = @transform_10, window_bounds = array<i64: 32, 64>}, {pipeline_mode = #tpu.pipeline_mode<synchronous>, transform_indices = @transform_11, window_bounds = array<i64: 1, 64>}, {pipeline_mode = #tpu.pipeline_mode<synchronous>, transform_indices = @transform_12, window_bounds = array<i64: 64, 32>}, {pipeline_mode = #tpu.pipeline_mode<synchronous>, transform_indices = @transform_13, window_bounds = array<i64: 1, 32>}, {pipeline_mode = #tpu.pipeline_mode<synchronous>, transform_indices = @transform_14, window_bounds = array<i64: 1, 32>}, {pipeline_mode = #tpu.pipeline_mode<synchronous>, transform_indices = @transform_15, window_bounds = array<i64: 1, 32>}, {pipeline_mode = #tpu.pipeline_mode<synchronous>, transform_indices = @transform_16, window_bounds = array<i64: 1, 32>}, {pipeline_mode = #tpu.pipeline_mode<synchronous>, transform_indices = @transform_17, window_bounds = array<i64: 1, 32>}, {pipeline_mode = #tpu.pipeline_mode<synchronous>, transform_indices = @transform_18, window_bounds = array<i64: 32, 96>}, {pipeline_mode = #tpu.pipeline_mode<synchronous>, transform_indices = @transform_19, window_bounds = array<i64: 1, 96>}, {pipeline_mode = #tpu.pipeline_mode<synchronous>, transform_indices = @transform_20, window_bounds = array<i64: 32, 32>}, {pipeline_mode = #tpu.pipeline_mode<synchronous>, transform_indices = @transform_21, window_bounds = array<i64: 1, 32>}, {pipeline_mode = #tpu.pipeline_mode<synchronous>, transform_indices = @transform_22, window_bounds = array<i64: 1, 32>}, {pipeline_mode = #tpu.pipeline_mode<synchronous>, transform_indices = @transform_23, window_bounds = array<i64: 1, 32>}, {pipeline_mode = #tpu.pipeline_mode<synchronous>, transform_indices = @transform_24, window_bounds = array<i64: 32, 96>}, {pipeline_mode = #tpu.pipeline_mode<synchronous>, transform_indices = @transform_25, window_bounds = array<i64: 1, 96>}, {pipeline_mode = #tpu.pipeline_mode<synchronous>, transform_indices = @transform_26, window_bounds = array<i64: 32, 32>}, {pipeline_mode = #tpu.pipeline_mode<synchronous>, transform_indices = @transform_27, window_bounds = array<i64: 1, 32>}, {pipeline_mode = #tpu.pipeline_mode<synchronous>, transform_indices = @transform_28, window_bounds = array<i64: 1, 32>}, {pipeline_mode = #tpu.pipeline_mode<synchronous>, transform_indices = @transform_29, window_bounds = array<i64: 1, 32>}, {pipeline_mode = #tpu.pipeline_mode<synchronous>, transform_indices = @transform_30, window_bounds = array<i64: 32, 64>}, {pipeline_mode = #tpu.pipeline_mode<synchronous>, transform_indices = @transform_31, window_bounds = array<i64: 1, 64>}, {pipeline_mode = #tpu.pipeline_mode<synchronous>, transform_indices = @transform_32, window_bounds = array<i64: 64, 32>}, {pipeline_mode = #tpu.pipeline_mode<synchronous>, transform_indices = @transform_33, window_bounds = array<i64: 1, 32>}, {pipeline_mode = #tpu.pipeline_mode<synchronous>, transform_indices = @transform_34, window_bounds = array<i64: 1, 32>}, {pipeline_mode = #tpu.pipeline_mode<synchronous>, transform_indices = @transform_35, window_bounds = array<i64: 1, 32>}, {pipeline_mode = #tpu.pipeline_mode<synchronous>, transform_indices = @transform_36, window_bounds = array<i64: 1, 32>}, {pipeline_mode = #tpu.pipeline_mode<synchronous>, transform_indices = @transform_37, window_bounds = array<i64: 1, 32>}, {pipeline_mode = #tpu.pipeline_mode<synchronous>, transform_indices = @transform_38, window_bounds = array<i64: 8, 32, 5>}, {pipeline_mode = #tpu.pipeline_mode<synchronous>, transform_indices = @transform_39, window_bounds = array<i64: 1, 5>}, {transform_indices = @transform_40, window_bounds = array<i64: 1, 1, 5>}]} {
    %c0 = arith.constant 0 : index
    %c0_0 = arith.constant 0 : index
    %0 = vector.load %arg2[%c0, %c0_0] : memref<8x40xf32, #tpu.memory_space<vmem>>, vector<8x40xf32>
    %c0_1 = arith.constant 0 : index
    %c0_2 = arith.constant 0 : index
    %c0_3 = arith.constant 0 : index
    %c0_4 = arith.constant 0 : index
    %1 = vector.load %arg1[%c0_1, %c0_2, %c0_3, %c0_4] : memref<1x3x40x32xf32, #tpu.memory_space<vmem>>, vector<1x1x40x32xf32>
    %2 = vector.shape_cast %1 : vector<1x1x40x32xf32> to vector<40x32xf32>
    %cst = arith.constant dense<0.000000e+00> : vector<8x32xf32>
    %3 = tpu.matmul %0, %2, %cst {dimension_numbers = #tpu.dot_dimension_numbers<[1], [0], [0], [1], [0, 0, 1, 1], [], []>} : vector<8x40xf32>, vector<40x32xf32>, vector<8x32xf32> -> vector<8x32xf32>
    %c0_5 = arith.constant 0 : index
    %c1 = arith.constant 1 : index
    %c0_6 = arith.constant 0 : index
    %c0_7 = arith.constant 0 : index
    %4 = vector.load %arg1[%c0_5, %c1, %c0_6, %c0_7] : memref<1x3x40x32xf32, #tpu.memory_space<vmem>>, vector<1x1x40x32xf32>
    %5 = vector.shape_cast %4 : vector<1x1x40x32xf32> to vector<40x32xf32>
    %cst_8 = arith.constant dense<0.000000e+00> : vector<8x32xf32>
    %6 = tpu.matmul %0, %5, %cst_8 {dimension_numbers = #tpu.dot_dimension_numbers<[1], [0], [0], [1], [0, 0, 1, 1], [], []>} : vector<8x40xf32>, vector<40x32xf32>, vector<8x32xf32> -> vector<8x32xf32>
    %7 = arith.maximumf %3, %6 : vector<8x32xf32>
    %c0_9 = arith.constant 0 : index
    %c2 = arith.constant 2 : index
    %c0_10 = arith.constant 0 : index
    %c0_11 = arith.constant 0 : index
    %8 = vector.load %arg1[%c0_9, %c2, %c0_10, %c0_11] : memref<1x3x40x32xf32, #tpu.memory_space<vmem>>, vector<1x1x40x32xf32>
    %9 = vector.shape_cast %8 : vector<1x1x40x32xf32> to vector<40x32xf32>
    %cst_12 = arith.constant dense<0.000000e+00> : vector<8x32xf32>
    %10 = tpu.matmul %0, %9, %cst_12 {dimension_numbers = #tpu.dot_dimension_numbers<[1], [0], [0], [1], [0, 0, 1, 1], [], []>} : vector<8x40xf32>, vector<40x32xf32>, vector<8x32xf32> -> vector<8x32xf32>
    %11 = arith.maximumf %7, %10 : vector<8x32xf32>
    %c0_13 = arith.constant 0 : index
    %c0_14 = arith.constant 0 : index
    %12 = vector.load %arg3[%c0_13, %c0_14] : memref<8x3xf32, #tpu.memory_space<vmem>>, vector<8x3xf32>
    %13 = vector.extract_strided_slice %12 {offsets = [0, 0], sizes = [8, 1], strides = [1, 1]} : vector<8x3xf32> to vector<8x1xf32>
    %14 = vector.broadcast %13 : vector<8x1xf32> to vector<8x32xf32>
    %15 = arith.addf %11, %14 : vector<8x32xf32>
    %cst_15 = arith.constant 0.000000e+00 : f32
    %16 = vector.broadcast %cst_15 : f32 to vector<8x32xf32>
    %17 = arith.cmpf ogt, %15, %16 : vector<8x32xf32>
    %cst_16 = arith.constant 0.000000e+00 : f32
    %18 = vector.broadcast %cst_16 : f32 to vector<8x32xf32>
    %19 = arith.minimumf %15, %18 : vector<8x32xf32>
    %20 = math.exp %19 : vector<8x32xf32>
    %cst_17 = arith.constant 1.000000e+00 : f32
    %21 = vector.broadcast %cst_17 : f32 to vector<8x32xf32>
    %22 = arith.subf %20, %21 : vector<8x32xf32>
    %23 = arith.select %17, %15, %22 : vector<8x32xi1>, vector<8x32xf32>
    %24 = vector.extract_strided_slice %12 {offsets = [0, 1], sizes = [8, 1], strides = [1, 1]} : vector<8x3xf32> to vector<8x1xf32>
    %25 = vector.broadcast %24 : vector<8x1xf32> to vector<8x32xf32>
    %26 = arith.mulf %23, %25 : vector<8x32xf32>
    %27 = vector.extract_strided_slice %12 {offsets = [0, 2], sizes = [8, 1], strides = [1, 1]} : vector<8x3xf32> to vector<8x1xf32>
    %28 = vector.broadcast %27 : vector<8x1xf32> to vector<8x32xf32>
    %29 = arith.addf %26, %28 : vector<8x32xf32>
    %c0_18 = arith.constant 0 : index
    %c0_19 = arith.constant 0 : index
    %30 = vector.load %arg4[%c0_18, %c0_19] : memref<32x32xf32, #tpu.memory_space<vmem>>, vector<32x32xf32>
    %cst_20 = arith.constant dense<0.000000e+00> : vector<8x32xf32>
    %31 = tpu.matmul %29, %30, %cst_20 {dimension_numbers = #tpu.dot_dimension_numbers<[1], [0], [0], [1], [0, 0, 1, 1], [], []>} : vector<8x32xf32>, vector<32x32xf32>, vector<8x32xf32> -> vector<8x32xf32>
    %c0_21 = arith.constant 0 : index
    %c0_22 = arith.constant 0 : index
    %32 = vector.load %arg5[%c0_21, %c0_22] : memref<32x96xf32, #tpu.memory_space<vmem>>, vector<32x96xf32>
    %cst_23 = arith.constant dense<0.000000e+00> : vector<8x96xf32>
    %33 = tpu.matmul %29, %32, %cst_23 {dimension_numbers = #tpu.dot_dimension_numbers<[1], [0], [0], [1], [0, 0, 1, 1], [], []>} : vector<8x32xf32>, vector<32x96xf32>, vector<8x96xf32> -> vector<8x96xf32>
    %c0_24 = arith.constant 0 : index
    %c0_25 = arith.constant 0 : index
    %34 = vector.load %arg6[%c0_24, %c0_25] : memref<1x96xf32, #tpu.memory_space<vmem>>, vector<1x96xf32>
    %35 = vector.broadcast %34 : vector<1x96xf32> to vector<8x96xf32>
    %36 = arith.addf %33, %35 : vector<8x96xf32>
    %37 = vector.extract_strided_slice %36 {offsets = [0, 0], sizes = [8, 32], strides = [1, 1]} : vector<8x96xf32> to vector<8x32xf32>
    %38 = vector.extract_strided_slice %36 {offsets = [0, 32], sizes = [8, 32], strides = [1, 1]} : vector<8x96xf32> to vector<8x32xf32>
    %39 = vector.extract_strided_slice %36 {offsets = [0, 64], sizes = [8, 32], strides = [1, 1]} : vector<8x96xf32> to vector<8x32xf32>
    %cst_26 = arith.constant 0.000000e+00 : f32
    %40 = vector.broadcast %cst_26 : f32 to vector<8x32xf32>
    %41 = vector.extract_strided_slice %37 {offsets = [0, 0], sizes = [8, 8], strides = [1, 1]} : vector<8x32xf32> to vector<8x8xf32>
    %42 = vector.extract_strided_slice %38 {offsets = [0, 0], sizes = [8, 8], strides = [1, 1]} : vector<8x32xf32> to vector<8x8xf32>
    %43 = vector.extract_strided_slice %39 {offsets = [0, 0], sizes = [8, 8], strides = [1, 1]} : vector<8x32xf32> to vector<8x8xf32>
    %cst_27 = arith.constant dense<0.000000e+00> : vector<8x8xf32>
    %44 = tpu.matmul %41, %42, %cst_27 {dimension_numbers = #tpu.dot_dimension_numbers<[1], [1], [0], [0], [0, 0, 1, 0], [], []>} : vector<8x8xf32>, vector<8x8xf32>, vector<8x8xf32> -> vector<8x8xf32>
    %cst_28 = arith.constant 0.353553385 : f32
    %45 = vector.broadcast %cst_28 : f32 to vector<8x8xf32>
    %46 = arith.mulf %44, %45 : vector<8x8xf32>
    %cst_29 = arith.constant dense<0xFF800000> : vector<8xf32>
    %47 = vector.multi_reduction <maximumf>, %46, %cst_29 [1] : vector<8x8xf32> to vector<8xf32>
    %48 = vector.shape_cast %47 : vector<8xf32> to vector<8x1xf32>
    %49 = vector.broadcast %48 : vector<8x1xf32> to vector<8x8xf32>
    %50 = arith.subf %46, %49 : vector<8x8xf32>
    %51 = math.exp %50 : vector<8x8xf32>
    %cst_30 = arith.constant dense<0.000000e+00> : vector<8xf32>
    %52 = vector.multi_reduction <add>, %51, %cst_30 [1] : vector<8x8xf32> to vector<8xf32>
    %53 = vector.shape_cast %52 : vector<8xf32> to vector<8x1xf32>
    %54 = vector.broadcast %53 : vector<8x1xf32> to vector<8x8xf32>
    %55 = arith.divf %51, %54 : vector<8x8xf32>
    %cst_31 = arith.constant dense<0.000000e+00> : vector<8x8xf32>
    %56 = tpu.matmul %55, %43, %cst_31 {dimension_numbers = #tpu.dot_dimension_numbers<[1], [0], [0], [1], [0, 0, 1, 1], [], []>} : vector<8x8xf32>, vector<8x8xf32>, vector<8x8xf32> -> vector<8x8xf32>
    %c0_32 = arith.constant 0 : index
    %c0_33 = arith.constant 0 : index
    %57 = vector.load %arg7[%c0_32, %c0_33] : memref<32x32xf32, #tpu.memory_space<vmem>>, vector<8x32xf32>
    %cst_34 = arith.constant dense<0.000000e+00> : vector<8x32xf32>
    %58 = tpu.matmul %56, %57, %cst_34 {dimension_numbers = #tpu.dot_dimension_numbers<[1], [0], [0], [1], [0, 0, 1, 1], [], []>} : vector<8x8xf32>, vector<8x32xf32>, vector<8x32xf32> -> vector<8x32xf32>
    %59 = arith.addf %40, %58 : vector<8x32xf32>
    %60 = vector.extract_strided_slice %37 {offsets = [0, 8], sizes = [8, 8], strides = [1, 1]} : vector<8x32xf32> to vector<8x8xf32>
    %61 = vector.extract_strided_slice %38 {offsets = [0, 8], sizes = [8, 8], strides = [1, 1]} : vector<8x32xf32> to vector<8x8xf32>
    %62 = vector.extract_strided_slice %39 {offsets = [0, 8], sizes = [8, 8], strides = [1, 1]} : vector<8x32xf32> to vector<8x8xf32>
    %cst_35 = arith.constant dense<0.000000e+00> : vector<8x8xf32>
    %63 = tpu.matmul %60, %61, %cst_35 {dimension_numbers = #tpu.dot_dimension_numbers<[1], [1], [0], [0], [0, 0, 1, 0], [], []>} : vector<8x8xf32>, vector<8x8xf32>, vector<8x8xf32> -> vector<8x8xf32>
    %cst_36 = arith.constant 0.353553385 : f32
    %64 = vector.broadcast %cst_36 : f32 to vector<8x8xf32>
    %65 = arith.mulf %63, %64 : vector<8x8xf32>
    %cst_37 = arith.constant dense<0xFF800000> : vector<8xf32>
    %66 = vector.multi_reduction <maximumf>, %65, %cst_37 [1] : vector<8x8xf32> to vector<8xf32>
    %67 = vector.shape_cast %66 : vector<8xf32> to vector<8x1xf32>
    %68 = vector.broadcast %67 : vector<8x1xf32> to vector<8x8xf32>
    %69 = arith.subf %65, %68 : vector<8x8xf32>
    %70 = math.exp %69 : vector<8x8xf32>
    %cst_38 = arith.constant dense<0.000000e+00> : vector<8xf32>
    %71 = vector.multi_reduction <add>, %70, %cst_38 [1] : vector<8x8xf32> to vector<8xf32>
    %72 = vector.shape_cast %71 : vector<8xf32> to vector<8x1xf32>
    %73 = vector.broadcast %72 : vector<8x1xf32> to vector<8x8xf32>
    %74 = arith.divf %70, %73 : vector<8x8xf32>
    %cst_39 = arith.constant dense<0.000000e+00> : vector<8x8xf32>
    %75 = tpu.matmul %74, %62, %cst_39 {dimension_numbers = #tpu.dot_dimension_numbers<[1], [0], [0], [1], [0, 0, 1, 1], [], []>} : vector<8x8xf32>, vector<8x8xf32>, vector<8x8xf32> -> vector<8x8xf32>
    %c8 = arith.constant 8 : index
    %c0_40 = arith.constant 0 : index
    %76 = vector.load %arg7[%c8, %c0_40] : memref<32x32xf32, #tpu.memory_space<vmem>>, vector<8x32xf32>
    %cst_41 = arith.constant dense<0.000000e+00> : vector<8x32xf32>
    %77 = tpu.matmul %75, %76, %cst_41 {dimension_numbers = #tpu.dot_dimension_numbers<[1], [0], [0], [1], [0, 0, 1, 1], [], []>} : vector<8x8xf32>, vector<8x32xf32>, vector<8x32xf32> -> vector<8x32xf32>
    %78 = arith.addf %59, %77 : vector<8x32xf32>
    %79 = vector.extract_strided_slice %37 {offsets = [0, 16], sizes = [8, 8], strides = [1, 1]} : vector<8x32xf32> to vector<8x8xf32>
    %80 = vector.extract_strided_slice %38 {offsets = [0, 16], sizes = [8, 8], strides = [1, 1]} : vector<8x32xf32> to vector<8x8xf32>
    %81 = vector.extract_strided_slice %39 {offsets = [0, 16], sizes = [8, 8], strides = [1, 1]} : vector<8x32xf32> to vector<8x8xf32>
    %cst_42 = arith.constant dense<0.000000e+00> : vector<8x8xf32>
    %82 = tpu.matmul %79, %80, %cst_42 {dimension_numbers = #tpu.dot_dimension_numbers<[1], [1], [0], [0], [0, 0, 1, 0], [], []>} : vector<8x8xf32>, vector<8x8xf32>, vector<8x8xf32> -> vector<8x8xf32>
    %cst_43 = arith.constant 0.353553385 : f32
    %83 = vector.broadcast %cst_43 : f32 to vector<8x8xf32>
    %84 = arith.mulf %82, %83 : vector<8x8xf32>
    %cst_44 = arith.constant dense<0xFF800000> : vector<8xf32>
    %85 = vector.multi_reduction <maximumf>, %84, %cst_44 [1] : vector<8x8xf32> to vector<8xf32>
    %86 = vector.shape_cast %85 : vector<8xf32> to vector<8x1xf32>
    %87 = vector.broadcast %86 : vector<8x1xf32> to vector<8x8xf32>
    %88 = arith.subf %84, %87 : vector<8x8xf32>
    %89 = math.exp %88 : vector<8x8xf32>
    %cst_45 = arith.constant dense<0.000000e+00> : vector<8xf32>
    %90 = vector.multi_reduction <add>, %89, %cst_45 [1] : vector<8x8xf32> to vector<8xf32>
    %91 = vector.shape_cast %90 : vector<8xf32> to vector<8x1xf32>
    %92 = vector.broadcast %91 : vector<8x1xf32> to vector<8x8xf32>
    %93 = arith.divf %89, %92 : vector<8x8xf32>
    %cst_46 = arith.constant dense<0.000000e+00> : vector<8x8xf32>
    %94 = tpu.matmul %93, %81, %cst_46 {dimension_numbers = #tpu.dot_dimension_numbers<[1], [0], [0], [1], [0, 0, 1, 1], [], []>} : vector<8x8xf32>, vector<8x8xf32>, vector<8x8xf32> -> vector<8x8xf32>
    %c16 = arith.constant 16 : index
    %c0_47 = arith.constant 0 : index
    %95 = vector.load %arg7[%c16, %c0_47] : memref<32x32xf32, #tpu.memory_space<vmem>>, vector<8x32xf32>
    %cst_48 = arith.constant dense<0.000000e+00> : vector<8x32xf32>
    %96 = tpu.matmul %94, %95, %cst_48 {dimension_numbers = #tpu.dot_dimension_numbers<[1], [0], [0], [1], [0, 0, 1, 1], [], []>} : vector<8x8xf32>, vector<8x32xf32>, vector<8x32xf32> -> vector<8x32xf32>
    %97 = arith.addf %78, %96 : vector<8x32xf32>
    %98 = vector.extract_strided_slice %37 {offsets = [0, 24], sizes = [8, 8], strides = [1, 1]} : vector<8x32xf32> to vector<8x8xf32>
    %99 = vector.extract_strided_slice %38 {offsets = [0, 24], sizes = [8, 8], strides = [1, 1]} : vector<8x32xf32> to vector<8x8xf32>
    %100 = vector.extract_strided_slice %39 {offsets = [0, 24], sizes = [8, 8], strides = [1, 1]} : vector<8x32xf32> to vector<8x8xf32>
    %cst_49 = arith.constant dense<0.000000e+00> : vector<8x8xf32>
    %101 = tpu.matmul %98, %99, %cst_49 {dimension_numbers = #tpu.dot_dimension_numbers<[1], [1], [0], [0], [0, 0, 1, 0], [], []>} : vector<8x8xf32>, vector<8x8xf32>, vector<8x8xf32> -> vector<8x8xf32>
    %cst_50 = arith.constant 0.353553385 : f32
    %102 = vector.broadcast %cst_50 : f32 to vector<8x8xf32>
    %103 = arith.mulf %101, %102 : vector<8x8xf32>
    %cst_51 = arith.constant dense<0xFF800000> : vector<8xf32>
    %104 = vector.multi_reduction <maximumf>, %103, %cst_51 [1] : vector<8x8xf32> to vector<8xf32>
    %105 = vector.shape_cast %104 : vector<8xf32> to vector<8x1xf32>
    %106 = vector.broadcast %105 : vector<8x1xf32> to vector<8x8xf32>
    %107 = arith.subf %103, %106 : vector<8x8xf32>
    %108 = math.exp %107 : vector<8x8xf32>
    %cst_52 = arith.constant dense<0.000000e+00> : vector<8xf32>
    %109 = vector.multi_reduction <add>, %108, %cst_52 [1] : vector<8x8xf32> to vector<8xf32>
    %110 = vector.shape_cast %109 : vector<8xf32> to vector<8x1xf32>
    %111 = vector.broadcast %110 : vector<8x1xf32> to vector<8x8xf32>
    %112 = arith.divf %108, %111 : vector<8x8xf32>
    %cst_53 = arith.constant dense<0.000000e+00> : vector<8x8xf32>
    %113 = tpu.matmul %112, %100, %cst_53 {dimension_numbers = #tpu.dot_dimension_numbers<[1], [0], [0], [1], [0, 0, 1, 1], [], []>} : vector<8x8xf32>, vector<8x8xf32>, vector<8x8xf32> -> vector<8x8xf32>
    %c24 = arith.constant 24 : index
    %c0_54 = arith.constant 0 : index
    %114 = vector.load %arg7[%c24, %c0_54] : memref<32x32xf32, #tpu.memory_space<vmem>>, vector<8x32xf32>
    %cst_55 = arith.constant dense<0.000000e+00> : vector<8x32xf32>
    %115 = tpu.matmul %113, %114, %cst_55 {dimension_numbers = #tpu.dot_dimension_numbers<[1], [0], [0], [1], [0, 0, 1, 1], [], []>} : vector<8x8xf32>, vector<8x32xf32>, vector<8x32xf32> -> vector<8x32xf32>
    %116 = arith.addf %97, %115 : vector<8x32xf32>
    %c0_56 = arith.constant 0 : index
    %c0_57 = arith.constant 0 : index
    %117 = vector.load %arg8[%c0_56, %c0_57] : memref<1x32xf32, #tpu.memory_space<vmem>>, vector<1x32xf32>
    %118 = vector.broadcast %117 : vector<1x32xf32> to vector<8x32xf32>
    %119 = arith.addf %116, %118 : vector<8x32xf32>
    %120 = arith.addf %29, %119 : vector<8x32xf32>
    %cst_58 = arith.constant dense<0.000000e+00> : vector<8xf32>
    %121 = vector.multi_reduction <add>, %120, %cst_58 [1] : vector<8x32xf32> to vector<8xf32>
    %122 = vector.shape_cast %121 : vector<8xf32> to vector<8x1xf32>
    %cst_59 = arith.constant 3.200000e+01 : f32
    %123 = vector.broadcast %cst_59 : f32 to vector<8x1xf32>
    %124 = arith.divf %122, %123 : vector<8x1xf32>
    %125 = vector.broadcast %124 : vector<8x1xf32> to vector<8x32xf32>
    %126 = arith.subf %120, %125 : vector<8x32xf32>
    %127 = arith.mulf %126, %126 : vector<8x32xf32>
    %cst_60 = arith.constant dense<0.000000e+00> : vector<8xf32>
    %128 = vector.multi_reduction <add>, %127, %cst_60 [1] : vector<8x32xf32> to vector<8xf32>
    %129 = vector.shape_cast %128 : vector<8xf32> to vector<8x1xf32>
    %cst_61 = arith.constant 3.200000e+01 : f32
    %130 = vector.broadcast %cst_61 : f32 to vector<8x1xf32>
    %131 = arith.divf %129, %130 : vector<8x1xf32>
    %132 = vector.broadcast %124 : vector<8x1xf32> to vector<8x32xf32>
    %133 = arith.subf %120, %132 : vector<8x32xf32>
    %cst_62 = arith.constant 9.99999974E-6 : f32
    %134 = vector.broadcast %cst_62 : f32 to vector<8x1xf32>
    %135 = arith.addf %131, %134 : vector<8x1xf32>
    %136 = math.rsqrt %135 : vector<8x1xf32>
    %137 = vector.broadcast %136 : vector<8x1xf32> to vector<8x32xf32>
    %138 = arith.mulf %133, %137 : vector<8x32xf32>
    %c0_63 = arith.constant 0 : index
    %c0_64 = arith.constant 0 : index
    %139 = vector.load %arg9[%c0_63, %c0_64] : memref<1x32xf32, #tpu.memory_space<vmem>>, vector<1x32xf32>
    %140 = vector.broadcast %139 : vector<1x32xf32> to vector<8x32xf32>
    %141 = arith.mulf %138, %140 : vector<8x32xf32>
    %c0_65 = arith.constant 0 : index
    %c0_66 = arith.constant 0 : index
    %142 = vector.load %arg10[%c0_65, %c0_66] : memref<1x32xf32, #tpu.memory_space<vmem>>, vector<1x32xf32>
    %143 = vector.broadcast %142 : vector<1x32xf32> to vector<8x32xf32>
    %144 = arith.addf %141, %143 : vector<8x32xf32>
    %c0_67 = arith.constant 0 : index
    %c0_68 = arith.constant 0 : index
    %145 = vector.load %arg11[%c0_67, %c0_68] : memref<32x64xf32, #tpu.memory_space<vmem>>, vector<32x64xf32>
    %cst_69 = arith.constant dense<0.000000e+00> : vector<8x64xf32>
    %146 = tpu.matmul %144, %145, %cst_69 {dimension_numbers = #tpu.dot_dimension_numbers<[1], [0], [0], [1], [0, 0, 1, 1], [], []>} : vector<8x32xf32>, vector<32x64xf32>, vector<8x64xf32> -> vector<8x64xf32>
    %c0_70 = arith.constant 0 : index
    %c0_71 = arith.constant 0 : index
    %147 = vector.load %arg12[%c0_70, %c0_71] : memref<1x64xf32, #tpu.memory_space<vmem>>, vector<1x64xf32>
    %148 = vector.broadcast %147 : vector<1x64xf32> to vector<8x64xf32>
    %149 = arith.addf %146, %148 : vector<8x64xf32>
    %cst_72 = arith.constant 0.000000e+00 : f32
    %150 = vector.broadcast %cst_72 : f32 to vector<8x64xf32>
    %151 = arith.maximumf %149, %150 : vector<8x64xf32>
    %c0_73 = arith.constant 0 : index
    %c0_74 = arith.constant 0 : index
    %152 = vector.load %arg13[%c0_73, %c0_74] : memref<64x32xf32, #tpu.memory_space<vmem>>, vector<64x32xf32>
    %cst_75 = arith.constant dense<0.000000e+00> : vector<8x32xf32>
    %153 = tpu.matmul %151, %152, %cst_75 {dimension_numbers = #tpu.dot_dimension_numbers<[1], [0], [0], [1], [0, 0, 1, 1], [], []>} : vector<8x64xf32>, vector<64x32xf32>, vector<8x32xf32> -> vector<8x32xf32>
    %c0_76 = arith.constant 0 : index
    %c0_77 = arith.constant 0 : index
    %154 = vector.load %arg14[%c0_76, %c0_77] : memref<1x32xf32, #tpu.memory_space<vmem>>, vector<1x32xf32>
    %155 = vector.broadcast %154 : vector<1x32xf32> to vector<8x32xf32>
    %156 = arith.addf %153, %155 : vector<8x32xf32>
    %157 = arith.addf %144, %156 : vector<8x32xf32>
    %cst_78 = arith.constant dense<0.000000e+00> : vector<8xf32>
    %158 = vector.multi_reduction <add>, %157, %cst_78 [1] : vector<8x32xf32> to vector<8xf32>
    %159 = vector.shape_cast %158 : vector<8xf32> to vector<8x1xf32>
    %cst_79 = arith.constant 3.200000e+01 : f32
    %160 = vector.broadcast %cst_79 : f32 to vector<8x1xf32>
    %161 = arith.divf %159, %160 : vector<8x1xf32>
    %162 = vector.broadcast %161 : vector<8x1xf32> to vector<8x32xf32>
    %163 = arith.subf %157, %162 : vector<8x32xf32>
    %164 = arith.mulf %163, %163 : vector<8x32xf32>
    %cst_80 = arith.constant dense<0.000000e+00> : vector<8xf32>
    %165 = vector.multi_reduction <add>, %164, %cst_80 [1] : vector<8x32xf32> to vector<8xf32>
    %166 = vector.shape_cast %165 : vector<8xf32> to vector<8x1xf32>
    %cst_81 = arith.constant 3.200000e+01 : f32
    %167 = vector.broadcast %cst_81 : f32 to vector<8x1xf32>
    %168 = arith.divf %166, %167 : vector<8x1xf32>
    %169 = vector.broadcast %161 : vector<8x1xf32> to vector<8x32xf32>
    %170 = arith.subf %157, %169 : vector<8x32xf32>
    %cst_82 = arith.constant 9.99999974E-6 : f32
    %171 = vector.broadcast %cst_82 : f32 to vector<8x1xf32>
    %172 = arith.addf %168, %171 : vector<8x1xf32>
    %173 = math.rsqrt %172 : vector<8x1xf32>
    %174 = vector.broadcast %173 : vector<8x1xf32> to vector<8x32xf32>
    %175 = arith.mulf %170, %174 : vector<8x32xf32>
    %c0_83 = arith.constant 0 : index
    %c0_84 = arith.constant 0 : index
    %176 = vector.load %arg15[%c0_83, %c0_84] : memref<1x32xf32, #tpu.memory_space<vmem>>, vector<1x32xf32>
    %177 = vector.broadcast %176 : vector<1x32xf32> to vector<8x32xf32>
    %178 = arith.mulf %175, %177 : vector<8x32xf32>
    %c0_85 = arith.constant 0 : index
    %c0_86 = arith.constant 0 : index
    %179 = vector.load %arg16[%c0_85, %c0_86] : memref<1x32xf32, #tpu.memory_space<vmem>>, vector<1x32xf32>
    %180 = vector.broadcast %179 : vector<1x32xf32> to vector<8x32xf32>
    %181 = arith.addf %178, %180 : vector<8x32xf32>
    %cst_87 = arith.constant dense<0.000000e+00> : vector<8xf32>
    %182 = vector.multi_reduction <add>, %181, %cst_87 [1] : vector<8x32xf32> to vector<8xf32>
    %183 = vector.shape_cast %182 : vector<8xf32> to vector<8x1xf32>
    %cst_88 = arith.constant 3.200000e+01 : f32
    %184 = vector.broadcast %cst_88 : f32 to vector<8x1xf32>
    %185 = arith.divf %183, %184 : vector<8x1xf32>
    %186 = vector.broadcast %185 : vector<8x1xf32> to vector<8x32xf32>
    %187 = arith.subf %181, %186 : vector<8x32xf32>
    %188 = arith.mulf %187, %187 : vector<8x32xf32>
    %cst_89 = arith.constant dense<0.000000e+00> : vector<8xf32>
    %189 = vector.multi_reduction <add>, %188, %cst_89 [1] : vector<8x32xf32> to vector<8xf32>
    %190 = vector.shape_cast %189 : vector<8xf32> to vector<8x1xf32>
    %cst_90 = arith.constant 3.200000e+01 : f32
    %191 = vector.broadcast %cst_90 : f32 to vector<8x1xf32>
    %192 = arith.divf %190, %191 : vector<8x1xf32>
    %193 = vector.broadcast %185 : vector<8x1xf32> to vector<8x32xf32>
    %194 = arith.subf %181, %193 : vector<8x32xf32>
    %cst_91 = arith.constant 9.99999974E-6 : f32
    %195 = vector.broadcast %cst_91 : f32 to vector<8x1xf32>
    %196 = arith.addf %192, %195 : vector<8x1xf32>
    %197 = math.rsqrt %196 : vector<8x1xf32>
    %198 = vector.broadcast %197 : vector<8x1xf32> to vector<8x32xf32>
    %199 = arith.mulf %194, %198 : vector<8x32xf32>
    %c0_92 = arith.constant 0 : index
    %c0_93 = arith.constant 0 : index
    %200 = vector.load %arg17[%c0_92, %c0_93] : memref<1x32xf32, #tpu.memory_space<vmem>>, vector<1x32xf32>
    %201 = vector.broadcast %200 : vector<1x32xf32> to vector<8x32xf32>
    %202 = arith.mulf %199, %201 : vector<8x32xf32>
    %c0_94 = arith.constant 0 : index
    %c0_95 = arith.constant 0 : index
    %203 = vector.load %arg18[%c0_94, %c0_95] : memref<1x32xf32, #tpu.memory_space<vmem>>, vector<1x32xf32>
    %204 = vector.broadcast %203 : vector<1x32xf32> to vector<8x32xf32>
    %205 = arith.addf %202, %204 : vector<8x32xf32>
    %c0_96 = arith.constant 0 : index
    %c0_97 = arith.constant 0 : index
    %206 = vector.load %arg19[%c0_96, %c0_97] : memref<32x96xf32, #tpu.memory_space<vmem>>, vector<32x96xf32>
    %cst_98 = arith.constant dense<0.000000e+00> : vector<8x96xf32>
    %207 = tpu.matmul %31, %206, %cst_98 {dimension_numbers = #tpu.dot_dimension_numbers<[1], [0], [0], [1], [0, 0, 1, 1], [], []>} : vector<8x32xf32>, vector<32x96xf32>, vector<8x96xf32> -> vector<8x96xf32>
    %c0_99 = arith.constant 0 : index
    %c0_100 = arith.constant 0 : index
    %208 = vector.load %arg20[%c0_99, %c0_100] : memref<1x96xf32, #tpu.memory_space<vmem>>, vector<1x96xf32>
    %209 = vector.broadcast %208 : vector<1x96xf32> to vector<8x96xf32>
    %210 = arith.addf %207, %209 : vector<8x96xf32>
    %211 = vector.extract_strided_slice %210 {offsets = [0, 0], sizes = [8, 32], strides = [1, 1]} : vector<8x96xf32> to vector<8x32xf32>
    %212 = vector.extract_strided_slice %210 {offsets = [0, 32], sizes = [8, 32], strides = [1, 1]} : vector<8x96xf32> to vector<8x32xf32>
    %213 = vector.extract_strided_slice %210 {offsets = [0, 64], sizes = [8, 32], strides = [1, 1]} : vector<8x96xf32> to vector<8x32xf32>
    %cst_101 = arith.constant 0.000000e+00 : f32
    %214 = vector.broadcast %cst_101 : f32 to vector<8x32xf32>
    %215 = vector.extract_strided_slice %211 {offsets = [0, 0], sizes = [8, 8], strides = [1, 1]} : vector<8x32xf32> to vector<8x8xf32>
    %216 = vector.extract_strided_slice %212 {offsets = [0, 0], sizes = [8, 8], strides = [1, 1]} : vector<8x32xf32> to vector<8x8xf32>
    %217 = vector.extract_strided_slice %213 {offsets = [0, 0], sizes = [8, 8], strides = [1, 1]} : vector<8x32xf32> to vector<8x8xf32>
    %cst_102 = arith.constant dense<0.000000e+00> : vector<8x8xf32>
    %218 = tpu.matmul %215, %216, %cst_102 {dimension_numbers = #tpu.dot_dimension_numbers<[1], [1], [0], [0], [0, 0, 1, 0], [], []>} : vector<8x8xf32>, vector<8x8xf32>, vector<8x8xf32> -> vector<8x8xf32>
    %cst_103 = arith.constant 0.353553385 : f32
    %219 = vector.broadcast %cst_103 : f32 to vector<8x8xf32>
    %220 = arith.mulf %218, %219 : vector<8x8xf32>
    %cst_104 = arith.constant dense<0xFF800000> : vector<8xf32>
    %221 = vector.multi_reduction <maximumf>, %220, %cst_104 [1] : vector<8x8xf32> to vector<8xf32>
    %222 = vector.shape_cast %221 : vector<8xf32> to vector<8x1xf32>
    %223 = vector.broadcast %222 : vector<8x1xf32> to vector<8x8xf32>
    %224 = arith.subf %220, %223 : vector<8x8xf32>
    %225 = math.exp %224 : vector<8x8xf32>
    %cst_105 = arith.constant dense<0.000000e+00> : vector<8xf32>
    %226 = vector.multi_reduction <add>, %225, %cst_105 [1] : vector<8x8xf32> to vector<8xf32>
    %227 = vector.shape_cast %226 : vector<8xf32> to vector<8x1xf32>
    %228 = vector.broadcast %227 : vector<8x1xf32> to vector<8x8xf32>
    %229 = arith.divf %225, %228 : vector<8x8xf32>
    %cst_106 = arith.constant dense<0.000000e+00> : vector<8x8xf32>
    %230 = tpu.matmul %229, %217, %cst_106 {dimension_numbers = #tpu.dot_dimension_numbers<[1], [0], [0], [1], [0, 0, 1, 1], [], []>} : vector<8x8xf32>, vector<8x8xf32>, vector<8x8xf32> -> vector<8x8xf32>
    %c0_107 = arith.constant 0 : index
    %c0_108 = arith.constant 0 : index
    %231 = vector.load %arg21[%c0_107, %c0_108] : memref<32x32xf32, #tpu.memory_space<vmem>>, vector<8x32xf32>
    %cst_109 = arith.constant dense<0.000000e+00> : vector<8x32xf32>
    %232 = tpu.matmul %230, %231, %cst_109 {dimension_numbers = #tpu.dot_dimension_numbers<[1], [0], [0], [1], [0, 0, 1, 1], [], []>} : vector<8x8xf32>, vector<8x32xf32>, vector<8x32xf32> -> vector<8x32xf32>
    %233 = arith.addf %214, %232 : vector<8x32xf32>
    %234 = vector.extract_strided_slice %211 {offsets = [0, 8], sizes = [8, 8], strides = [1, 1]} : vector<8x32xf32> to vector<8x8xf32>
    %235 = vector.extract_strided_slice %212 {offsets = [0, 8], sizes = [8, 8], strides = [1, 1]} : vector<8x32xf32> to vector<8x8xf32>
    %236 = vector.extract_strided_slice %213 {offsets = [0, 8], sizes = [8, 8], strides = [1, 1]} : vector<8x32xf32> to vector<8x8xf32>
    %cst_110 = arith.constant dense<0.000000e+00> : vector<8x8xf32>
    %237 = tpu.matmul %234, %235, %cst_110 {dimension_numbers = #tpu.dot_dimension_numbers<[1], [1], [0], [0], [0, 0, 1, 0], [], []>} : vector<8x8xf32>, vector<8x8xf32>, vector<8x8xf32> -> vector<8x8xf32>
    %cst_111 = arith.constant 0.353553385 : f32
    %238 = vector.broadcast %cst_111 : f32 to vector<8x8xf32>
    %239 = arith.mulf %237, %238 : vector<8x8xf32>
    %cst_112 = arith.constant dense<0xFF800000> : vector<8xf32>
    %240 = vector.multi_reduction <maximumf>, %239, %cst_112 [1] : vector<8x8xf32> to vector<8xf32>
    %241 = vector.shape_cast %240 : vector<8xf32> to vector<8x1xf32>
    %242 = vector.broadcast %241 : vector<8x1xf32> to vector<8x8xf32>
    %243 = arith.subf %239, %242 : vector<8x8xf32>
    %244 = math.exp %243 : vector<8x8xf32>
    %cst_113 = arith.constant dense<0.000000e+00> : vector<8xf32>
    %245 = vector.multi_reduction <add>, %244, %cst_113 [1] : vector<8x8xf32> to vector<8xf32>
    %246 = vector.shape_cast %245 : vector<8xf32> to vector<8x1xf32>
    %247 = vector.broadcast %246 : vector<8x1xf32> to vector<8x8xf32>
    %248 = arith.divf %244, %247 : vector<8x8xf32>
    %cst_114 = arith.constant dense<0.000000e+00> : vector<8x8xf32>
    %249 = tpu.matmul %248, %236, %cst_114 {dimension_numbers = #tpu.dot_dimension_numbers<[1], [0], [0], [1], [0, 0, 1, 1], [], []>} : vector<8x8xf32>, vector<8x8xf32>, vector<8x8xf32> -> vector<8x8xf32>
    %c8_115 = arith.constant 8 : index
    %c0_116 = arith.constant 0 : index
    %250 = vector.load %arg21[%c8_115, %c0_116] : memref<32x32xf32, #tpu.memory_space<vmem>>, vector<8x32xf32>
    %cst_117 = arith.constant dense<0.000000e+00> : vector<8x32xf32>
    %251 = tpu.matmul %249, %250, %cst_117 {dimension_numbers = #tpu.dot_dimension_numbers<[1], [0], [0], [1], [0, 0, 1, 1], [], []>} : vector<8x8xf32>, vector<8x32xf32>, vector<8x32xf32> -> vector<8x32xf32>
    %252 = arith.addf %233, %251 : vector<8x32xf32>
    %253 = vector.extract_strided_slice %211 {offsets = [0, 16], sizes = [8, 8], strides = [1, 1]} : vector<8x32xf32> to vector<8x8xf32>
    %254 = vector.extract_strided_slice %212 {offsets = [0, 16], sizes = [8, 8], strides = [1, 1]} : vector<8x32xf32> to vector<8x8xf32>
    %255 = vector.extract_strided_slice %213 {offsets = [0, 16], sizes = [8, 8], strides = [1, 1]} : vector<8x32xf32> to vector<8x8xf32>
    %cst_118 = arith.constant dense<0.000000e+00> : vector<8x8xf32>
    %256 = tpu.matmul %253, %254, %cst_118 {dimension_numbers = #tpu.dot_dimension_numbers<[1], [1], [0], [0], [0, 0, 1, 0], [], []>} : vector<8x8xf32>, vector<8x8xf32>, vector<8x8xf32> -> vector<8x8xf32>
    %cst_119 = arith.constant 0.353553385 : f32
    %257 = vector.broadcast %cst_119 : f32 to vector<8x8xf32>
    %258 = arith.mulf %256, %257 : vector<8x8xf32>
    %cst_120 = arith.constant dense<0xFF800000> : vector<8xf32>
    %259 = vector.multi_reduction <maximumf>, %258, %cst_120 [1] : vector<8x8xf32> to vector<8xf32>
    %260 = vector.shape_cast %259 : vector<8xf32> to vector<8x1xf32>
    %261 = vector.broadcast %260 : vector<8x1xf32> to vector<8x8xf32>
    %262 = arith.subf %258, %261 : vector<8x8xf32>
    %263 = math.exp %262 : vector<8x8xf32>
    %cst_121 = arith.constant dense<0.000000e+00> : vector<8xf32>
    %264 = vector.multi_reduction <add>, %263, %cst_121 [1] : vector<8x8xf32> to vector<8xf32>
    %265 = vector.shape_cast %264 : vector<8xf32> to vector<8x1xf32>
    %266 = vector.broadcast %265 : vector<8x1xf32> to vector<8x8xf32>
    %267 = arith.divf %263, %266 : vector<8x8xf32>
    %cst_122 = arith.constant dense<0.000000e+00> : vector<8x8xf32>
    %268 = tpu.matmul %267, %255, %cst_122 {dimension_numbers = #tpu.dot_dimension_numbers<[1], [0], [0], [1], [0, 0, 1, 1], [], []>} : vector<8x8xf32>, vector<8x8xf32>, vector<8x8xf32> -> vector<8x8xf32>
    %c16_123 = arith.constant 16 : index
    %c0_124 = arith.constant 0 : index
    %269 = vector.load %arg21[%c16_123, %c0_124] : memref<32x32xf32, #tpu.memory_space<vmem>>, vector<8x32xf32>
    %cst_125 = arith.constant dense<0.000000e+00> : vector<8x32xf32>
    %270 = tpu.matmul %268, %269, %cst_125 {dimension_numbers = #tpu.dot_dimension_numbers<[1], [0], [0], [1], [0, 0, 1, 1], [], []>} : vector<8x8xf32>, vector<8x32xf32>, vector<8x32xf32> -> vector<8x32xf32>
    %271 = arith.addf %252, %270 : vector<8x32xf32>
    %272 = vector.extract_strided_slice %211 {offsets = [0, 24], sizes = [8, 8], strides = [1, 1]} : vector<8x32xf32> to vector<8x8xf32>
    %273 = vector.extract_strided_slice %212 {offsets = [0, 24], sizes = [8, 8], strides = [1, 1]} : vector<8x32xf32> to vector<8x8xf32>
    %274 = vector.extract_strided_slice %213 {offsets = [0, 24], sizes = [8, 8], strides = [1, 1]} : vector<8x32xf32> to vector<8x8xf32>
    %cst_126 = arith.constant dense<0.000000e+00> : vector<8x8xf32>
    %275 = tpu.matmul %272, %273, %cst_126 {dimension_numbers = #tpu.dot_dimension_numbers<[1], [1], [0], [0], [0, 0, 1, 0], [], []>} : vector<8x8xf32>, vector<8x8xf32>, vector<8x8xf32> -> vector<8x8xf32>
    %cst_127 = arith.constant 0.353553385 : f32
    %276 = vector.broadcast %cst_127 : f32 to vector<8x8xf32>
    %277 = arith.mulf %275, %276 : vector<8x8xf32>
    %cst_128 = arith.constant dense<0xFF800000> : vector<8xf32>
    %278 = vector.multi_reduction <maximumf>, %277, %cst_128 [1] : vector<8x8xf32> to vector<8xf32>
    %279 = vector.shape_cast %278 : vector<8xf32> to vector<8x1xf32>
    %280 = vector.broadcast %279 : vector<8x1xf32> to vector<8x8xf32>
    %281 = arith.subf %277, %280 : vector<8x8xf32>
    %282 = math.exp %281 : vector<8x8xf32>
    %cst_129 = arith.constant dense<0.000000e+00> : vector<8xf32>
    %283 = vector.multi_reduction <add>, %282, %cst_129 [1] : vector<8x8xf32> to vector<8xf32>
    %284 = vector.shape_cast %283 : vector<8xf32> to vector<8x1xf32>
    %285 = vector.broadcast %284 : vector<8x1xf32> to vector<8x8xf32>
    %286 = arith.divf %282, %285 : vector<8x8xf32>
    %cst_130 = arith.constant dense<0.000000e+00> : vector<8x8xf32>
    %287 = tpu.matmul %286, %274, %cst_130 {dimension_numbers = #tpu.dot_dimension_numbers<[1], [0], [0], [1], [0, 0, 1, 1], [], []>} : vector<8x8xf32>, vector<8x8xf32>, vector<8x8xf32> -> vector<8x8xf32>
    %c24_131 = arith.constant 24 : index
    %c0_132 = arith.constant 0 : index
    %288 = vector.load %arg21[%c24_131, %c0_132] : memref<32x32xf32, #tpu.memory_space<vmem>>, vector<8x32xf32>
    %cst_133 = arith.constant dense<0.000000e+00> : vector<8x32xf32>
    %289 = tpu.matmul %287, %288, %cst_133 {dimension_numbers = #tpu.dot_dimension_numbers<[1], [0], [0], [1], [0, 0, 1, 1], [], []>} : vector<8x8xf32>, vector<8x32xf32>, vector<8x32xf32> -> vector<8x32xf32>
    %290 = arith.addf %271, %289 : vector<8x32xf32>
    %c0_134 = arith.constant 0 : index
    %c0_135 = arith.constant 0 : index
    %291 = vector.load %arg22[%c0_134, %c0_135] : memref<1x32xf32, #tpu.memory_space<vmem>>, vector<1x32xf32>
    %292 = vector.broadcast %291 : vector<1x32xf32> to vector<8x32xf32>
    %293 = arith.addf %290, %292 : vector<8x32xf32>
    %294 = arith.addf %31, %293 : vector<8x32xf32>
    %cst_136 = arith.constant dense<0.000000e+00> : vector<8xf32>
    %295 = vector.multi_reduction <add>, %294, %cst_136 [1] : vector<8x32xf32> to vector<8xf32>
    %296 = vector.shape_cast %295 : vector<8xf32> to vector<8x1xf32>
    %cst_137 = arith.constant 3.200000e+01 : f32
    %297 = vector.broadcast %cst_137 : f32 to vector<8x1xf32>
    %298 = arith.divf %296, %297 : vector<8x1xf32>
    %299 = vector.broadcast %298 : vector<8x1xf32> to vector<8x32xf32>
    %300 = arith.subf %294, %299 : vector<8x32xf32>
    %301 = arith.mulf %300, %300 : vector<8x32xf32>
    %cst_138 = arith.constant dense<0.000000e+00> : vector<8xf32>
    %302 = vector.multi_reduction <add>, %301, %cst_138 [1] : vector<8x32xf32> to vector<8xf32>
    %303 = vector.shape_cast %302 : vector<8xf32> to vector<8x1xf32>
    %cst_139 = arith.constant 3.200000e+01 : f32
    %304 = vector.broadcast %cst_139 : f32 to vector<8x1xf32>
    %305 = arith.divf %303, %304 : vector<8x1xf32>
    %306 = vector.broadcast %298 : vector<8x1xf32> to vector<8x32xf32>
    %307 = arith.subf %294, %306 : vector<8x32xf32>
    %cst_140 = arith.constant 9.99999974E-6 : f32
    %308 = vector.broadcast %cst_140 : f32 to vector<8x1xf32>
    %309 = arith.addf %305, %308 : vector<8x1xf32>
    %310 = math.rsqrt %309 : vector<8x1xf32>
    %311 = vector.broadcast %310 : vector<8x1xf32> to vector<8x32xf32>
    %312 = arith.mulf %307, %311 : vector<8x32xf32>
    %c0_141 = arith.constant 0 : index
    %c0_142 = arith.constant 0 : index
    %313 = vector.load %arg23[%c0_141, %c0_142] : memref<1x32xf32, #tpu.memory_space<vmem>>, vector<1x32xf32>
    %314 = vector.broadcast %313 : vector<1x32xf32> to vector<8x32xf32>
    %315 = arith.mulf %312, %314 : vector<8x32xf32>
    %c0_143 = arith.constant 0 : index
    %c0_144 = arith.constant 0 : index
    %316 = vector.load %arg24[%c0_143, %c0_144] : memref<1x32xf32, #tpu.memory_space<vmem>>, vector<1x32xf32>
    %317 = vector.broadcast %316 : vector<1x32xf32> to vector<8x32xf32>
    %318 = arith.addf %315, %317 : vector<8x32xf32>
    %c0_145 = arith.constant 0 : index
    %c0_146 = arith.constant 0 : index
    %319 = vector.load %arg25[%c0_145, %c0_146] : memref<32x96xf32, #tpu.memory_space<vmem>>, vector<32x96xf32>
    %c0_147 = arith.constant 0 : index
    %c0_148 = arith.constant 0 : index
    %320 = vector.load %arg26[%c0_147, %c0_148] : memref<1x96xf32, #tpu.memory_space<vmem>>, vector<1x96xf32>
    %321 = vector.extract_strided_slice %319 {offsets = [0, 0], sizes = [32, 32], strides = [1, 1]} : vector<32x96xf32> to vector<32x32xf32>
    %cst_149 = arith.constant dense<0.000000e+00> : vector<8x32xf32>
    %322 = tpu.matmul %318, %321, %cst_149 {dimension_numbers = #tpu.dot_dimension_numbers<[1], [0], [0], [1], [0, 0, 1, 1], [], []>} : vector<8x32xf32>, vector<32x32xf32>, vector<8x32xf32> -> vector<8x32xf32>
    %323 = vector.extract_strided_slice %320 {offsets = [0, 0], sizes = [1, 32], strides = [1, 1]} : vector<1x96xf32> to vector<1x32xf32>
    %324 = vector.broadcast %323 : vector<1x32xf32> to vector<8x32xf32>
    %325 = arith.addf %322, %324 : vector<8x32xf32>
    %326 = vector.extract_strided_slice %319 {offsets = [0, 32], sizes = [32, 64], strides = [1, 1]} : vector<32x96xf32> to vector<32x64xf32>
    %cst_150 = arith.constant dense<0.000000e+00> : vector<8x64xf32>
    %327 = tpu.matmul %205, %326, %cst_150 {dimension_numbers = #tpu.dot_dimension_numbers<[1], [0], [0], [1], [0, 0, 1, 1], [], []>} : vector<8x32xf32>, vector<32x64xf32>, vector<8x64xf32> -> vector<8x64xf32>
    %328 = vector.extract_strided_slice %320 {offsets = [0, 32], sizes = [1, 64], strides = [1, 1]} : vector<1x96xf32> to vector<1x64xf32>
    %329 = vector.broadcast %328 : vector<1x64xf32> to vector<8x64xf32>
    %330 = arith.addf %327, %329 : vector<8x64xf32>
    %331 = vector.extract_strided_slice %330 {offsets = [0, 0], sizes = [8, 32], strides = [1, 1]} : vector<8x64xf32> to vector<8x32xf32>
    %332 = vector.extract_strided_slice %330 {offsets = [0, 32], sizes = [8, 32], strides = [1, 1]} : vector<8x64xf32> to vector<8x32xf32>
    %cst_151 = arith.constant 0.000000e+00 : f32
    %333 = vector.broadcast %cst_151 : f32 to vector<8x32xf32>
    %334 = vector.extract_strided_slice %325 {offsets = [0, 0], sizes = [8, 8], strides = [1, 1]} : vector<8x32xf32> to vector<8x8xf32>
    %335 = vector.extract_strided_slice %331 {offsets = [0, 0], sizes = [8, 8], strides = [1, 1]} : vector<8x32xf32> to vector<8x8xf32>
    %336 = vector.extract_strided_slice %332 {offsets = [0, 0], sizes = [8, 8], strides = [1, 1]} : vector<8x32xf32> to vector<8x8xf32>
    %cst_152 = arith.constant dense<0.000000e+00> : vector<8x8xf32>
    %337 = tpu.matmul %334, %335, %cst_152 {dimension_numbers = #tpu.dot_dimension_numbers<[1], [1], [0], [0], [0, 0, 1, 0], [], []>} : vector<8x8xf32>, vector<8x8xf32>, vector<8x8xf32> -> vector<8x8xf32>
    %cst_153 = arith.constant 0.353553385 : f32
    %338 = vector.broadcast %cst_153 : f32 to vector<8x8xf32>
    %339 = arith.mulf %337, %338 : vector<8x8xf32>
    %cst_154 = arith.constant dense<0xFF800000> : vector<8xf32>
    %340 = vector.multi_reduction <maximumf>, %339, %cst_154 [1] : vector<8x8xf32> to vector<8xf32>
    %341 = vector.shape_cast %340 : vector<8xf32> to vector<8x1xf32>
    %342 = vector.broadcast %341 : vector<8x1xf32> to vector<8x8xf32>
    %343 = arith.subf %339, %342 : vector<8x8xf32>
    %344 = math.exp %343 : vector<8x8xf32>
    %cst_155 = arith.constant dense<0.000000e+00> : vector<8xf32>
    %345 = vector.multi_reduction <add>, %344, %cst_155 [1] : vector<8x8xf32> to vector<8xf32>
    %346 = vector.shape_cast %345 : vector<8xf32> to vector<8x1xf32>
    %347 = vector.broadcast %346 : vector<8x1xf32> to vector<8x8xf32>
    %348 = arith.divf %344, %347 : vector<8x8xf32>
    %cst_156 = arith.constant dense<0.000000e+00> : vector<8x8xf32>
    %349 = tpu.matmul %348, %336, %cst_156 {dimension_numbers = #tpu.dot_dimension_numbers<[1], [0], [0], [1], [0, 0, 1, 1], [], []>} : vector<8x8xf32>, vector<8x8xf32>, vector<8x8xf32> -> vector<8x8xf32>
    %c0_157 = arith.constant 0 : index
    %c0_158 = arith.constant 0 : index
    %350 = vector.load %arg27[%c0_157, %c0_158] : memref<32x32xf32, #tpu.memory_space<vmem>>, vector<8x32xf32>
    %cst_159 = arith.constant dense<0.000000e+00> : vector<8x32xf32>
    %351 = tpu.matmul %349, %350, %cst_159 {dimension_numbers = #tpu.dot_dimension_numbers<[1], [0], [0], [1], [0, 0, 1, 1], [], []>} : vector<8x8xf32>, vector<8x32xf32>, vector<8x32xf32> -> vector<8x32xf32>
    %352 = arith.addf %333, %351 : vector<8x32xf32>
    %353 = vector.extract_strided_slice %325 {offsets = [0, 8], sizes = [8, 8], strides = [1, 1]} : vector<8x32xf32> to vector<8x8xf32>
    %354 = vector.extract_strided_slice %331 {offsets = [0, 8], sizes = [8, 8], strides = [1, 1]} : vector<8x32xf32> to vector<8x8xf32>
    %355 = vector.extract_strided_slice %332 {offsets = [0, 8], sizes = [8, 8], strides = [1, 1]} : vector<8x32xf32> to vector<8x8xf32>
    %cst_160 = arith.constant dense<0.000000e+00> : vector<8x8xf32>
    %356 = tpu.matmul %353, %354, %cst_160 {dimension_numbers = #tpu.dot_dimension_numbers<[1], [1], [0], [0], [0, 0, 1, 0], [], []>} : vector<8x8xf32>, vector<8x8xf32>, vector<8x8xf32> -> vector<8x8xf32>
    %cst_161 = arith.constant 0.353553385 : f32
    %357 = vector.broadcast %cst_161 : f32 to vector<8x8xf32>
    %358 = arith.mulf %356, %357 : vector<8x8xf32>
    %cst_162 = arith.constant dense<0xFF800000> : vector<8xf32>
    %359 = vector.multi_reduction <maximumf>, %358, %cst_162 [1] : vector<8x8xf32> to vector<8xf32>
    %360 = vector.shape_cast %359 : vector<8xf32> to vector<8x1xf32>
    %361 = vector.broadcast %360 : vector<8x1xf32> to vector<8x8xf32>
    %362 = arith.subf %358, %361 : vector<8x8xf32>
    %363 = math.exp %362 : vector<8x8xf32>
    %cst_163 = arith.constant dense<0.000000e+00> : vector<8xf32>
    %364 = vector.multi_reduction <add>, %363, %cst_163 [1] : vector<8x8xf32> to vector<8xf32>
    %365 = vector.shape_cast %364 : vector<8xf32> to vector<8x1xf32>
    %366 = vector.broadcast %365 : vector<8x1xf32> to vector<8x8xf32>
    %367 = arith.divf %363, %366 : vector<8x8xf32>
    %cst_164 = arith.constant dense<0.000000e+00> : vector<8x8xf32>
    %368 = tpu.matmul %367, %355, %cst_164 {dimension_numbers = #tpu.dot_dimension_numbers<[1], [0], [0], [1], [0, 0, 1, 1], [], []>} : vector<8x8xf32>, vector<8x8xf32>, vector<8x8xf32> -> vector<8x8xf32>
    %c8_165 = arith.constant 8 : index
    %c0_166 = arith.constant 0 : index
    %369 = vector.load %arg27[%c8_165, %c0_166] : memref<32x32xf32, #tpu.memory_space<vmem>>, vector<8x32xf32>
    %cst_167 = arith.constant dense<0.000000e+00> : vector<8x32xf32>
    %370 = tpu.matmul %368, %369, %cst_167 {dimension_numbers = #tpu.dot_dimension_numbers<[1], [0], [0], [1], [0, 0, 1, 1], [], []>} : vector<8x8xf32>, vector<8x32xf32>, vector<8x32xf32> -> vector<8x32xf32>
    %371 = arith.addf %352, %370 : vector<8x32xf32>
    %372 = vector.extract_strided_slice %325 {offsets = [0, 16], sizes = [8, 8], strides = [1, 1]} : vector<8x32xf32> to vector<8x8xf32>
    %373 = vector.extract_strided_slice %331 {offsets = [0, 16], sizes = [8, 8], strides = [1, 1]} : vector<8x32xf32> to vector<8x8xf32>
    %374 = vector.extract_strided_slice %332 {offsets = [0, 16], sizes = [8, 8], strides = [1, 1]} : vector<8x32xf32> to vector<8x8xf32>
    %cst_168 = arith.constant dense<0.000000e+00> : vector<8x8xf32>
    %375 = tpu.matmul %372, %373, %cst_168 {dimension_numbers = #tpu.dot_dimension_numbers<[1], [1], [0], [0], [0, 0, 1, 0], [], []>} : vector<8x8xf32>, vector<8x8xf32>, vector<8x8xf32> -> vector<8x8xf32>
    %cst_169 = arith.constant 0.353553385 : f32
    %376 = vector.broadcast %cst_169 : f32 to vector<8x8xf32>
    %377 = arith.mulf %375, %376 : vector<8x8xf32>
    %cst_170 = arith.constant dense<0xFF800000> : vector<8xf32>
    %378 = vector.multi_reduction <maximumf>, %377, %cst_170 [1] : vector<8x8xf32> to vector<8xf32>
    %379 = vector.shape_cast %378 : vector<8xf32> to vector<8x1xf32>
    %380 = vector.broadcast %379 : vector<8x1xf32> to vector<8x8xf32>
    %381 = arith.subf %377, %380 : vector<8x8xf32>
    %382 = math.exp %381 : vector<8x8xf32>
    %cst_171 = arith.constant dense<0.000000e+00> : vector<8xf32>
    %383 = vector.multi_reduction <add>, %382, %cst_171 [1] : vector<8x8xf32> to vector<8xf32>
    %384 = vector.shape_cast %383 : vector<8xf32> to vector<8x1xf32>
    %385 = vector.broadcast %384 : vector<8x1xf32> to vector<8x8xf32>
    %386 = arith.divf %382, %385 : vector<8x8xf32>
    %cst_172 = arith.constant dense<0.000000e+00> : vector<8x8xf32>
    %387 = tpu.matmul %386, %374, %cst_172 {dimension_numbers = #tpu.dot_dimension_numbers<[1], [0], [0], [1], [0, 0, 1, 1], [], []>} : vector<8x8xf32>, vector<8x8xf32>, vector<8x8xf32> -> vector<8x8xf32>
    %c16_173 = arith.constant 16 : index
    %c0_174 = arith.constant 0 : index
    %388 = vector.load %arg27[%c16_173, %c0_174] : memref<32x32xf32, #tpu.memory_space<vmem>>, vector<8x32xf32>
    %cst_175 = arith.constant dense<0.000000e+00> : vector<8x32xf32>
    %389 = tpu.matmul %387, %388, %cst_175 {dimension_numbers = #tpu.dot_dimension_numbers<[1], [0], [0], [1], [0, 0, 1, 1], [], []>} : vector<8x8xf32>, vector<8x32xf32>, vector<8x32xf32> -> vector<8x32xf32>
    %390 = arith.addf %371, %389 : vector<8x32xf32>
    %391 = vector.extract_strided_slice %325 {offsets = [0, 24], sizes = [8, 8], strides = [1, 1]} : vector<8x32xf32> to vector<8x8xf32>
    %392 = vector.extract_strided_slice %331 {offsets = [0, 24], sizes = [8, 8], strides = [1, 1]} : vector<8x32xf32> to vector<8x8xf32>
    %393 = vector.extract_strided_slice %332 {offsets = [0, 24], sizes = [8, 8], strides = [1, 1]} : vector<8x32xf32> to vector<8x8xf32>
    %cst_176 = arith.constant dense<0.000000e+00> : vector<8x8xf32>
    %394 = tpu.matmul %391, %392, %cst_176 {dimension_numbers = #tpu.dot_dimension_numbers<[1], [1], [0], [0], [0, 0, 1, 0], [], []>} : vector<8x8xf32>, vector<8x8xf32>, vector<8x8xf32> -> vector<8x8xf32>
    %cst_177 = arith.constant 0.353553385 : f32
    %395 = vector.broadcast %cst_177 : f32 to vector<8x8xf32>
    %396 = arith.mulf %394, %395 : vector<8x8xf32>
    %cst_178 = arith.constant dense<0xFF800000> : vector<8xf32>
    %397 = vector.multi_reduction <maximumf>, %396, %cst_178 [1] : vector<8x8xf32> to vector<8xf32>
    %398 = vector.shape_cast %397 : vector<8xf32> to vector<8x1xf32>
    %399 = vector.broadcast %398 : vector<8x1xf32> to vector<8x8xf32>
    %400 = arith.subf %396, %399 : vector<8x8xf32>
    %401 = math.exp %400 : vector<8x8xf32>
    %cst_179 = arith.constant dense<0.000000e+00> : vector<8xf32>
    %402 = vector.multi_reduction <add>, %401, %cst_179 [1] : vector<8x8xf32> to vector<8xf32>
    %403 = vector.shape_cast %402 : vector<8xf32> to vector<8x1xf32>
    %404 = vector.broadcast %403 : vector<8x1xf32> to vector<8x8xf32>
    %405 = arith.divf %401, %404 : vector<8x8xf32>
    %cst_180 = arith.constant dense<0.000000e+00> : vector<8x8xf32>
    %406 = tpu.matmul %405, %393, %cst_180 {dimension_numbers = #tpu.dot_dimension_numbers<[1], [0], [0], [1], [0, 0, 1, 1], [], []>} : vector<8x8xf32>, vector<8x8xf32>, vector<8x8xf32> -> vector<8x8xf32>
    %c24_181 = arith.constant 24 : index
    %c0_182 = arith.constant 0 : index
    %407 = vector.load %arg27[%c24_181, %c0_182] : memref<32x32xf32, #tpu.memory_space<vmem>>, vector<8x32xf32>
    %cst_183 = arith.constant dense<0.000000e+00> : vector<8x32xf32>
    %408 = tpu.matmul %406, %407, %cst_183 {dimension_numbers = #tpu.dot_dimension_numbers<[1], [0], [0], [1], [0, 0, 1, 1], [], []>} : vector<8x8xf32>, vector<8x32xf32>, vector<8x32xf32> -> vector<8x32xf32>
    %409 = arith.addf %390, %408 : vector<8x32xf32>
    %c0_184 = arith.constant 0 : index
    %c0_185 = arith.constant 0 : index
    %410 = vector.load %arg28[%c0_184, %c0_185] : memref<1x32xf32, #tpu.memory_space<vmem>>, vector<1x32xf32>
    %411 = vector.broadcast %410 : vector<1x32xf32> to vector<8x32xf32>
    %412 = arith.addf %409, %411 : vector<8x32xf32>
    %413 = arith.addf %318, %412 : vector<8x32xf32>
    %cst_186 = arith.constant dense<0.000000e+00> : vector<8xf32>
    %414 = vector.multi_reduction <add>, %413, %cst_186 [1] : vector<8x32xf32> to vector<8xf32>
    %415 = vector.shape_cast %414 : vector<8xf32> to vector<8x1xf32>
    %cst_187 = arith.constant 3.200000e+01 : f32
    %416 = vector.broadcast %cst_187 : f32 to vector<8x1xf32>
    %417 = arith.divf %415, %416 : vector<8x1xf32>
    %418 = vector.broadcast %417 : vector<8x1xf32> to vector<8x32xf32>
    %419 = arith.subf %413, %418 : vector<8x32xf32>
    %420 = arith.mulf %419, %419 : vector<8x32xf32>
    %cst_188 = arith.constant dense<0.000000e+00> : vector<8xf32>
    %421 = vector.multi_reduction <add>, %420, %cst_188 [1] : vector<8x32xf32> to vector<8xf32>
    %422 = vector.shape_cast %421 : vector<8xf32> to vector<8x1xf32>
    %cst_189 = arith.constant 3.200000e+01 : f32
    %423 = vector.broadcast %cst_189 : f32 to vector<8x1xf32>
    %424 = arith.divf %422, %423 : vector<8x1xf32>
    %425 = vector.broadcast %417 : vector<8x1xf32> to vector<8x32xf32>
    %426 = arith.subf %413, %425 : vector<8x32xf32>
    %cst_190 = arith.constant 9.99999974E-6 : f32
    %427 = vector.broadcast %cst_190 : f32 to vector<8x1xf32>
    %428 = arith.addf %424, %427 : vector<8x1xf32>
    %429 = math.rsqrt %428 : vector<8x1xf32>
    %430 = vector.broadcast %429 : vector<8x1xf32> to vector<8x32xf32>
    %431 = arith.mulf %426, %430 : vector<8x32xf32>
    %c0_191 = arith.constant 0 : index
    %c0_192 = arith.constant 0 : index
    %432 = vector.load %arg29[%c0_191, %c0_192] : memref<1x32xf32, #tpu.memory_space<vmem>>, vector<1x32xf32>
    %433 = vector.broadcast %432 : vector<1x32xf32> to vector<8x32xf32>
    %434 = arith.mulf %431, %433 : vector<8x32xf32>
    %c0_193 = arith.constant 0 : index
    %c0_194 = arith.constant 0 : index
    %435 = vector.load %arg30[%c0_193, %c0_194] : memref<1x32xf32, #tpu.memory_space<vmem>>, vector<1x32xf32>
    %436 = vector.broadcast %435 : vector<1x32xf32> to vector<8x32xf32>
    %437 = arith.addf %434, %436 : vector<8x32xf32>
    %c0_195 = arith.constant 0 : index
    %c0_196 = arith.constant 0 : index
    %438 = vector.load %arg31[%c0_195, %c0_196] : memref<32x64xf32, #tpu.memory_space<vmem>>, vector<32x64xf32>
    %cst_197 = arith.constant dense<0.000000e+00> : vector<8x64xf32>
    %439 = tpu.matmul %437, %438, %cst_197 {dimension_numbers = #tpu.dot_dimension_numbers<[1], [0], [0], [1], [0, 0, 1, 1], [], []>} : vector<8x32xf32>, vector<32x64xf32>, vector<8x64xf32> -> vector<8x64xf32>
    %c0_198 = arith.constant 0 : index
    %c0_199 = arith.constant 0 : index
    %440 = vector.load %arg32[%c0_198, %c0_199] : memref<1x64xf32, #tpu.memory_space<vmem>>, vector<1x64xf32>
    %441 = vector.broadcast %440 : vector<1x64xf32> to vector<8x64xf32>
    %442 = arith.addf %439, %441 : vector<8x64xf32>
    %cst_200 = arith.constant 0.000000e+00 : f32
    %443 = vector.broadcast %cst_200 : f32 to vector<8x64xf32>
    %444 = arith.maximumf %442, %443 : vector<8x64xf32>
    %c0_201 = arith.constant 0 : index
    %c0_202 = arith.constant 0 : index
    %445 = vector.load %arg33[%c0_201, %c0_202] : memref<64x32xf32, #tpu.memory_space<vmem>>, vector<64x32xf32>
    %cst_203 = arith.constant dense<0.000000e+00> : vector<8x32xf32>
    %446 = tpu.matmul %444, %445, %cst_203 {dimension_numbers = #tpu.dot_dimension_numbers<[1], [0], [0], [1], [0, 0, 1, 1], [], []>} : vector<8x64xf32>, vector<64x32xf32>, vector<8x32xf32> -> vector<8x32xf32>
    %c0_204 = arith.constant 0 : index
    %c0_205 = arith.constant 0 : index
    %447 = vector.load %arg34[%c0_204, %c0_205] : memref<1x32xf32, #tpu.memory_space<vmem>>, vector<1x32xf32>
    %448 = vector.broadcast %447 : vector<1x32xf32> to vector<8x32xf32>
    %449 = arith.addf %446, %448 : vector<8x32xf32>
    %450 = arith.addf %437, %449 : vector<8x32xf32>
    %cst_206 = arith.constant dense<0.000000e+00> : vector<8xf32>
    %451 = vector.multi_reduction <add>, %450, %cst_206 [1] : vector<8x32xf32> to vector<8xf32>
    %452 = vector.shape_cast %451 : vector<8xf32> to vector<8x1xf32>
    %cst_207 = arith.constant 3.200000e+01 : f32
    %453 = vector.broadcast %cst_207 : f32 to vector<8x1xf32>
    %454 = arith.divf %452, %453 : vector<8x1xf32>
    %455 = vector.broadcast %454 : vector<8x1xf32> to vector<8x32xf32>
    %456 = arith.subf %450, %455 : vector<8x32xf32>
    %457 = arith.mulf %456, %456 : vector<8x32xf32>
    %cst_208 = arith.constant dense<0.000000e+00> : vector<8xf32>
    %458 = vector.multi_reduction <add>, %457, %cst_208 [1] : vector<8x32xf32> to vector<8xf32>
    %459 = vector.shape_cast %458 : vector<8xf32> to vector<8x1xf32>
    %cst_209 = arith.constant 3.200000e+01 : f32
    %460 = vector.broadcast %cst_209 : f32 to vector<8x1xf32>
    %461 = arith.divf %459, %460 : vector<8x1xf32>
    %462 = vector.broadcast %454 : vector<8x1xf32> to vector<8x32xf32>
    %463 = arith.subf %450, %462 : vector<8x32xf32>
    %cst_210 = arith.constant 9.99999974E-6 : f32
    %464 = vector.broadcast %cst_210 : f32 to vector<8x1xf32>
    %465 = arith.addf %461, %464 : vector<8x1xf32>
    %466 = math.rsqrt %465 : vector<8x1xf32>
    %467 = vector.broadcast %466 : vector<8x1xf32> to vector<8x32xf32>
    %468 = arith.mulf %463, %467 : vector<8x32xf32>
    %c0_211 = arith.constant 0 : index
    %c0_212 = arith.constant 0 : index
    %469 = vector.load %arg35[%c0_211, %c0_212] : memref<1x32xf32, #tpu.memory_space<vmem>>, vector<1x32xf32>
    %470 = vector.broadcast %469 : vector<1x32xf32> to vector<8x32xf32>
    %471 = arith.mulf %468, %470 : vector<8x32xf32>
    %c0_213 = arith.constant 0 : index
    %c0_214 = arith.constant 0 : index
    %472 = vector.load %arg36[%c0_213, %c0_214] : memref<1x32xf32, #tpu.memory_space<vmem>>, vector<1x32xf32>
    %473 = vector.broadcast %472 : vector<1x32xf32> to vector<8x32xf32>
    %474 = arith.addf %471, %473 : vector<8x32xf32>
    %cst_215 = arith.constant dense<0.000000e+00> : vector<8xf32>
    %475 = vector.multi_reduction <add>, %474, %cst_215 [1] : vector<8x32xf32> to vector<8xf32>
    %476 = vector.shape_cast %475 : vector<8xf32> to vector<8x1xf32>
    %cst_216 = arith.constant 3.200000e+01 : f32
    %477 = vector.broadcast %cst_216 : f32 to vector<8x1xf32>
    %478 = arith.divf %476, %477 : vector<8x1xf32>
    %479 = vector.broadcast %478 : vector<8x1xf32> to vector<8x32xf32>
    %480 = arith.subf %474, %479 : vector<8x32xf32>
    %481 = arith.mulf %480, %480 : vector<8x32xf32>
    %cst_217 = arith.constant dense<0.000000e+00> : vector<8xf32>
    %482 = vector.multi_reduction <add>, %481, %cst_217 [1] : vector<8x32xf32> to vector<8xf32>
    %483 = vector.shape_cast %482 : vector<8xf32> to vector<8x1xf32>
    %cst_218 = arith.constant 3.200000e+01 : f32
    %484 = vector.broadcast %cst_218 : f32 to vector<8x1xf32>
    %485 = arith.divf %483, %484 : vector<8x1xf32>
    %486 = vector.broadcast %478 : vector<8x1xf32> to vector<8x32xf32>
    %487 = arith.subf %474, %486 : vector<8x32xf32>
    %cst_219 = arith.constant 9.99999974E-6 : f32
    %488 = vector.broadcast %cst_219 : f32 to vector<8x1xf32>
    %489 = arith.addf %485, %488 : vector<8x1xf32>
    %490 = math.rsqrt %489 : vector<8x1xf32>
    %491 = vector.broadcast %490 : vector<8x1xf32> to vector<8x32xf32>
    %492 = arith.mulf %487, %491 : vector<8x32xf32>
    %c0_220 = arith.constant 0 : index
    %c0_221 = arith.constant 0 : index
    %493 = vector.load %arg37[%c0_220, %c0_221] : memref<1x32xf32, #tpu.memory_space<vmem>>, vector<1x32xf32>
    %494 = vector.broadcast %493 : vector<1x32xf32> to vector<8x32xf32>
    %495 = arith.mulf %492, %494 : vector<8x32xf32>
    %c0_222 = arith.constant 0 : index
    %c0_223 = arith.constant 0 : index
    %496 = vector.load %arg38[%c0_222, %c0_223] : memref<1x32xf32, #tpu.memory_space<vmem>>, vector<1x32xf32>
    %497 = vector.broadcast %496 : vector<1x32xf32> to vector<8x32xf32>
    %498 = arith.addf %495, %497 : vector<8x32xf32>
    %c0_224 = arith.constant 0 : index
    %c0_225 = arith.constant 0 : index
    %499 = vector.load %arg42[%c0_224, %c0_225] : memref<8x32xf32, #tpu.memory_space<vmem>>, vector<8x32xf32>
    tpu.vector_store %arg42[%c0_224, %c0_225], %498 {strides = array<i32>} : memref<8x32xf32, #tpu.memory_space<vmem>>, vector<8x32xf32>,
    %c0_226 = arith.constant 0 : index
    %c0_227 = arith.constant 0 : index
    %500 = vector.load %arg40[%c0_226, %c0_227] : memref<1x5xf32, #tpu.memory_space<vmem>>, vector<1x5xf32>
    %c0_228 = arith.constant 0 : index
    %c0_229 = arith.constant 0 : index
    %501 = vector.load %arg42[%c0_228, %c0_229] : memref<8x32xf32, #tpu.memory_space<vmem>>, vector<1x32xf32>
    %c0_230 = arith.constant 0 : index
    %c0_231 = arith.constant 0 : index
    %c0_232 = arith.constant 0 : index
    %502 = vector.load %arg39[%c0_230, %c0_231, %c0_232] : memref<8x32x5xf32, #tpu.memory_space<vmem>>, vector<1x32x5xf32>
    %503 = vector.shape_cast %502 : vector<1x32x5xf32> to vector<32x5xf32>
    %cst_233 = arith.constant dense<0.000000e+00> : vector<1x5xf32>
    %504 = tpu.matmul %501, %503, %cst_233 {dimension_numbers = #tpu.dot_dimension_numbers<[1], [0], [0], [1], [0, 0, 1, 1], [], []>} : vector<1x32xf32>, vector<32x5xf32>, vector<1x5xf32> -> vector<1x5xf32>
    %505 = arith.addf %500, %504 : vector<1x5xf32>
    %c1_234 = arith.constant 1 : index
    %c0_235 = arith.constant 0 : index
    %506 = vector.load %arg42[%c1_234, %c0_235] : memref<8x32xf32, #tpu.memory_space<vmem>>, vector<1x32xf32>
    %c1_236 = arith.constant 1 : index
    %c0_237 = arith.constant 0 : index
    %c0_238 = arith.constant 0 : index
    %507 = vector.load %arg39[%c1_236, %c0_237, %c0_238] : memref<8x32x5xf32, #tpu.memory_space<vmem>>, vector<1x32x5xf32>
    %508 = vector.shape_cast %507 : vector<1x32x5xf32> to vector<32x5xf32>
    %cst_239 = arith.constant dense<0.000000e+00> : vector<1x5xf32>
    %509 = tpu.matmul %506, %508, %cst_239 {dimension_numbers = #tpu.dot_dimension_numbers<[1], [0], [0], [1], [0, 0, 1, 1], [], []>} : vector<1x32xf32>, vector<32x5xf32>, vector<1x5xf32> -> vector<1x5xf32>
    %510 = arith.addf %505, %509 : vector<1x5xf32>
    %c2_240 = arith.constant 2 : index
    %c0_241 = arith.constant 0 : index
    %511 = vector.load %arg42[%c2_240, %c0_241] : memref<8x32xf32, #tpu.memory_space<vmem>>, vector<1x32xf32>
    %c2_242 = arith.constant 2 : index
    %c0_243 = arith.constant 0 : index
    %c0_244 = arith.constant 0 : index
    %512 = vector.load %arg39[%c2_242, %c0_243, %c0_244] : memref<8x32x5xf32, #tpu.memory_space<vmem>>, vector<1x32x5xf32>
    %513 = vector.shape_cast %512 : vector<1x32x5xf32> to vector<32x5xf32>
    %cst_245 = arith.constant dense<0.000000e+00> : vector<1x5xf32>
    %514 = tpu.matmul %511, %513, %cst_245 {dimension_numbers = #tpu.dot_dimension_numbers<[1], [0], [0], [1], [0, 0, 1, 1], [], []>} : vector<1x32xf32>, vector<32x5xf32>, vector<1x5xf32> -> vector<1x5xf32>
    %515 = arith.addf %510, %514 : vector<1x5xf32>
    %c3 = arith.constant 3 : index
    %c0_246 = arith.constant 0 : index
    %516 = vector.load %arg42[%c3, %c0_246] : memref<8x32xf32, #tpu.memory_space<vmem>>, vector<1x32xf32>
    %c3_247 = arith.constant 3 : index
    %c0_248 = arith.constant 0 : index
    %c0_249 = arith.constant 0 : index
    %517 = vector.load %arg39[%c3_247, %c0_248, %c0_249] : memref<8x32x5xf32, #tpu.memory_space<vmem>>, vector<1x32x5xf32>
    %518 = vector.shape_cast %517 : vector<1x32x5xf32> to vector<32x5xf32>
    %cst_250 = arith.constant dense<0.000000e+00> : vector<1x5xf32>
    %519 = tpu.matmul %516, %518, %cst_250 {dimension_numbers = #tpu.dot_dimension_numbers<[1], [0], [0], [1], [0, 0, 1, 1], [], []>} : vector<1x32xf32>, vector<32x5xf32>, vector<1x5xf32> -> vector<1x5xf32>
    %520 = arith.addf %515, %519 : vector<1x5xf32>
    %c4 = arith.constant 4 : index
    %c0_251 = arith.constant 0 : index
    %521 = vector.load %arg42[%c4, %c0_251] : memref<8x32xf32, #tpu.memory_space<vmem>>, vector<1x32xf32>
    %c4_252 = arith.constant 4 : index
    %c0_253 = arith.constant 0 : index
    %c0_254 = arith.constant 0 : index
    %522 = vector.load %arg39[%c4_252, %c0_253, %c0_254] : memref<8x32x5xf32, #tpu.memory_space<vmem>>, vector<1x32x5xf32>
    %523 = vector.shape_cast %522 : vector<1x32x5xf32> to vector<32x5xf32>
    %cst_255 = arith.constant dense<0.000000e+00> : vector<1x5xf32>
    %524 = tpu.matmul %521, %523, %cst_255 {dimension_numbers = #tpu.dot_dimension_numbers<[1], [0], [0], [1], [0, 0, 1, 1], [], []>} : vector<1x32xf32>, vector<32x5xf32>, vector<1x5xf32> -> vector<1x5xf32>
    %525 = arith.addf %520, %524 : vector<1x5xf32>
    %c5 = arith.constant 5 : index
    %c0_256 = arith.constant 0 : index
    %526 = vector.load %arg42[%c5, %c0_256] : memref<8x32xf32, #tpu.memory_space<vmem>>, vector<1x32xf32>
    %c5_257 = arith.constant 5 : index
    %c0_258 = arith.constant 0 : index
    %c0_259 = arith.constant 0 : index
    %527 = vector.load %arg39[%c5_257, %c0_258, %c0_259] : memref<8x32x5xf32, #tpu.memory_space<vmem>>, vector<1x32x5xf32>
    %528 = vector.shape_cast %527 : vector<1x32x5xf32> to vector<32x5xf32>
    %cst_260 = arith.constant dense<0.000000e+00> : vector<1x5xf32>
    %529 = tpu.matmul %526, %528, %cst_260 {dimension_numbers = #tpu.dot_dimension_numbers<[1], [0], [0], [1], [0, 0, 1, 1], [], []>} : vector<1x32xf32>, vector<32x5xf32>, vector<1x5xf32> -> vector<1x5xf32>
    %530 = arith.addf %525, %529 : vector<1x5xf32>
    %c6 = arith.constant 6 : index
    %c0_261 = arith.constant 0 : index
    %531 = vector.load %arg42[%c6, %c0_261] : memref<8x32xf32, #tpu.memory_space<vmem>>, vector<1x32xf32>
    %c6_262 = arith.constant 6 : index
    %c0_263 = arith.constant 0 : index
    %c0_264 = arith.constant 0 : index
    %532 = vector.load %arg39[%c6_262, %c0_263, %c0_264] : memref<8x32x5xf32, #tpu.memory_space<vmem>>, vector<1x32x5xf32>
    %533 = vector.shape_cast %532 : vector<1x32x5xf32> to vector<32x5xf32>
    %cst_265 = arith.constant dense<0.000000e+00> : vector<1x5xf32>
    %534 = tpu.matmul %531, %533, %cst_265 {dimension_numbers = #tpu.dot_dimension_numbers<[1], [0], [0], [1], [0, 0, 1, 1], [], []>} : vector<1x32xf32>, vector<32x5xf32>, vector<1x5xf32> -> vector<1x5xf32>
    %535 = arith.addf %530, %534 : vector<1x5xf32>
    %c7 = arith.constant 7 : index
    %c0_266 = arith.constant 0 : index
    %536 = vector.load %arg42[%c7, %c0_266] : memref<8x32xf32, #tpu.memory_space<vmem>>, vector<1x32xf32>
    %c7_267 = arith.constant 7 : index
    %c0_268 = arith.constant 0 : index
    %c0_269 = arith.constant 0 : index
    %537 = vector.load %arg39[%c7_267, %c0_268, %c0_269] : memref<8x32x5xf32, #tpu.memory_space<vmem>>, vector<1x32x5xf32>
    %538 = vector.shape_cast %537 : vector<1x32x5xf32> to vector<32x5xf32>
    %cst_270 = arith.constant dense<0.000000e+00> : vector<1x5xf32>
    %539 = tpu.matmul %536, %538, %cst_270 {dimension_numbers = #tpu.dot_dimension_numbers<[1], [0], [0], [1], [0, 0, 1, 1], [], []>} : vector<1x32xf32>, vector<32x5xf32>, vector<1x5xf32> -> vector<1x5xf32>
    %540 = arith.addf %535, %539 : vector<1x5xf32>
    %c0_271 = arith.constant 0 : index
    %c0_272 = arith.constant 0 : index
    %c0_273 = arith.constant 0 : index
    %541 = vector.load %arg41[%c0_271, %c0_272, %c0_273] : memref<1x1x5xf32, #tpu.memory_space<vmem>>, vector<1x1x5xf32>
    %542 = vector.shape_cast %541 : vector<1x1x5xf32> to vector<1x5xf32>
    %543 = vector.shape_cast %540 : vector<1x5xf32> to vector<1x1x5xf32>
    tpu.vector_store %arg41[%c0_271, %c0_272, %c0_273], %543 {strides = array<i32>} : memref<1x1x5xf32, #tpu.memory_space<vmem>>, vector<1x1x5xf32>,
    return
  }
  func.func @transform_0(%arg0: i32) -> (i32, i32, i32, i32) {
    %c0_i32 = arith.constant 0 : i32
    %c0_i32_0 = arith.constant 0 : i32
    %c0_i32_1 = arith.constant 0 : i32
    %c0_i32_2 = arith.constant 0 : i32
    return %arg0, %c0_i32, %c0_i32_0, %c0_i32_1 : i32, i32, i32, i32
  }
  func.func @transform_1(%arg0: i32) -> (i32, i32) {
    %c0_i32 = arith.constant 0 : i32
    %c0_i32_0 = arith.constant 0 : i32
    %c0_i32_1 = arith.constant 0 : i32
    return %c0_i32, %c0_i32_0 : i32, i32
  }
  func.func @transform_2(%arg0: i32) -> (i32, i32) {
    %c0_i32 = arith.constant 0 : i32
    %c0_i32_0 = arith.constant 0 : i32
    %c0_i32_1 = arith.constant 0 : i32
    return %c0_i32, %c0_i32_0 : i32, i32
  }
  func.func @transform_3(%arg0: i32) -> (i32, i32) {
    %c0_i32 = arith.constant 0 : i32
    %c0_i32_0 = arith.constant 0 : i32
    %c0_i32_1 = arith.constant 0 : i32
    return %c0_i32, %c0_i32_0 : i32, i32
  }
  func.func @transform_4(%arg0: i32) -> (i32, i32) {
    %c0_i32 = arith.constant 0 : i32
    %c0_i32_0 = arith.constant 0 : i32
    %c0_i32_1 = arith.constant 0 : i32
    return %c0_i32, %c0_i32_0 : i32, i32
  }
  func.func @transform_5(%arg0: i32) -> (i32, i32) {
    %c0_i32 = arith.constant 0 : i32
    %c0_i32_0 = arith.constant 0 : i32
    %c0_i32_1 = arith.constant 0 : i32
    return %c0_i32, %c0_i32_0 : i32, i32
  }
  func.func @transform_6(%arg0: i32) -> (i32, i32) {
    %c0_i32 = arith.constant 0 : i32
    %c0_i32_0 = arith.constant 0 : i32
    %c0_i32_1 = arith.constant 0 : i32
    return %c0_i32, %c0_i32_0 : i32, i32
  }
  func.func @transform_7(%arg0: i32) -> (i32, i32) {
    %c0_i32 = arith.constant 0 : i32
    %c0_i32_0 = arith.constant 0 : i32
    %c0_i32_1 = arith.constant 0 : i32
    return %c0_i32, %c0_i32_0 : i32, i32
  }
  func.func @transform_8(%arg0: i32) -> (i32, i32) {
    %c0_i32 = arith.constant 0 : i32
    %c0_i32_0 = arith.constant 0 : i32
    %c0_i32_1 = arith.constant 0 : i32
    return %c0_i32, %c0_i32_0 : i32, i32
  }
  func.func @transform_9(%arg0: i32) -> (i32, i32) {
    %c0_i32 = arith.constant 0 : i32
    %c0_i32_0 = arith.constant 0 : i32
    %c0_i32_1 = arith.constant 0 : i32
    return %c0_i32, %c0_i32_0 : i32, i32
  }
  func.func @transform_10(%arg0: i32) -> (i32, i32) {
    %c0_i32 = arith.constant 0 : i32
    %c0_i32_0 = arith.constant 0 : i32
    %c0_i32_1 = arith.constant 0 : i32
    return %c0_i32, %c0_i32_0 : i32, i32
  }
  func.func @transform_11(%arg0: i32) -> (i32, i32) {
    %c0_i32 = arith.constant 0 : i32
    %c0_i32_0 = arith.constant 0 : i32
    %c0_i32_1 = arith.constant 0 : i32
    return %c0_i32, %c0_i32_0 : i32, i32
  }
  func.func @transform_12(%arg0: i32) -> (i32, i32) {
    %c0_i32 = arith.constant 0 : i32
    %c0_i32_0 = arith.constant 0 : i32
    %c0_i32_1 = arith.constant 0 : i32
    return %c0_i32, %c0_i32_0 : i32, i32
  }
  func.func @transform_13(%arg0: i32) -> (i32, i32) {
    %c0_i32 = arith.constant 0 : i32
    %c0_i32_0 = arith.constant 0 : i32
    %c0_i32_1 = arith.constant 0 : i32
    return %c0_i32, %c0_i32_0 : i32, i32
  }
  func.func @transform_14(%arg0: i32) -> (i32, i32) {
    %c0_i32 = arith.constant 0 : i32
    %c0_i32_0 = arith.constant 0 : i32
    %c0_i32_1 = arith.constant 0 : i32
    return %c0_i32, %c0_i32_0 : i32, i32
  }
  func.func @transform_15(%arg0: i32) -> (i32, i32) {
    %c0_i32 = arith.constant 0 : i32
    %c0_i32_0 = arith.constant 0 : i32
    %c0_i32_1 = arith.constant 0 : i32
    return %c0_i32, %c0_i32_0 : i32, i32
  }
  func.func @transform_16(%arg0: i32) -> (i32, i32) {
    %c0_i32 = arith.constant 0 : i32
    %c0_i32_0 = arith.constant 0 : i32
    %c0_i32_1 = arith.constant 0 : i32
    return %c0_i32, %c0_i32_0 : i32, i32
  }
  func.func @transform_17(%arg0: i32) -> (i32, i32) {
    %c0_i32 = arith.constant 0 : i32
    %c0_i32_0 = arith.constant 0 : i32
    %c0_i32_1 = arith.constant 0 : i32
    return %c0_i32, %c0_i32_0 : i32, i32
  }
  func.func @transform_18(%arg0: i32) -> (i32, i32) {
    %c0_i32 = arith.constant 0 : i32
    %c0_i32_0 = arith.constant 0 : i32
    %c0_i32_1 = arith.constant 0 : i32
    return %c0_i32, %c0_i32_0 : i32, i32
  }
  func.func @transform_19(%arg0: i32) -> (i32, i32) {
    %c0_i32 = arith.constant 0 : i32
    %c0_i32_0 = arith.constant 0 : i32
    %c0_i32_1 = arith.constant 0 : i32
    return %c0_i32, %c0_i32_0 : i32, i32
  }
  func.func @transform_20(%arg0: i32) -> (i32, i32) {
    %c0_i32 = arith.constant 0 : i32
    %c0_i32_0 = arith.constant 0 : i32
    %c0_i32_1 = arith.constant 0 : i32
    return %c0_i32, %c0_i32_0 : i32, i32
  }
  func.func @transform_21(%arg0: i32) -> (i32, i32) {
    %c0_i32 = arith.constant 0 : i32
    %c0_i32_0 = arith.constant 0 : i32
    %c0_i32_1 = arith.constant 0 : i32
    return %c0_i32, %c0_i32_0 : i32, i32
  }
  func.func @transform_22(%arg0: i32) -> (i32, i32) {
    %c0_i32 = arith.constant 0 : i32
    %c0_i32_0 = arith.constant 0 : i32
    %c0_i32_1 = arith.constant 0 : i32
    return %c0_i32, %c0_i32_0 : i32, i32
  }
  func.func @transform_23(%arg0: i32) -> (i32, i32) {
    %c0_i32 = arith.constant 0 : i32
    %c0_i32_0 = arith.constant 0 : i32
    %c0_i32_1 = arith.constant 0 : i32
    return %c0_i32, %c0_i32_0 : i32, i32
  }
  func.func @transform_24(%arg0: i32) -> (i32, i32) {
    %c0_i32 = arith.constant 0 : i32
    %c0_i32_0 = arith.constant 0 : i32
    %c0_i32_1 = arith.constant 0 : i32
    return %c0_i32, %c0_i32_0 : i32, i32
  }
  func.func @transform_25(%arg0: i32) -> (i32, i32) {
    %c0_i32 = arith.constant 0 : i32
    %c0_i32_0 = arith.constant 0 : i32
    %c0_i32_1 = arith.constant 0 : i32
    return %c0_i32, %c0_i32_0 : i32, i32
  }
  func.func @transform_26(%arg0: i32) -> (i32, i32) {
    %c0_i32 = arith.constant 0 : i32
    %c0_i32_0 = arith.constant 0 : i32
    %c0_i32_1 = arith.constant 0 : i32
    return %c0_i32, %c0_i32_0 : i32, i32
  }
  func.func @transform_27(%arg0: i32) -> (i32, i32) {
    %c0_i32 = arith.constant 0 : i32
    %c0_i32_0 = arith.constant 0 : i32
    %c0_i32_1 = arith.constant 0 : i32
    return %c0_i32, %c0_i32_0 : i32, i32
  }
  func.func @transform_28(%arg0: i32) -> (i32, i32) {
    %c0_i32 = arith.constant 0 : i32
    %c0_i32_0 = arith.constant 0 : i32
    %c0_i32_1 = arith.constant 0 : i32
    return %c0_i32, %c0_i32_0 : i32, i32
  }
  func.func @transform_29(%arg0: i32) -> (i32, i32) {
    %c0_i32 = arith.constant 0 : i32
    %c0_i32_0 = arith.constant 0 : i32
    %c0_i32_1 = arith.constant 0 : i32
    return %c0_i32, %c0_i32_0 : i32, i32
  }
  func.func @transform_30(%arg0: i32) -> (i32, i32) {
    %c0_i32 = arith.constant 0 : i32
    %c0_i32_0 = arith.constant 0 : i32
    %c0_i32_1 = arith.constant 0 : i32
    return %c0_i32, %c0_i32_0 : i32, i32
  }
  func.func @transform_31(%arg0: i32) -> (i32, i32) {
    %c0_i32 = arith.constant 0 : i32
    %c0_i32_0 = arith.constant 0 : i32
    %c0_i32_1 = arith.constant 0 : i32
    return %c0_i32, %c0_i32_0 : i32, i32
  }
  func.func @transform_32(%arg0: i32) -> (i32, i32) {
    %c0_i32 = arith.constant 0 : i32
    %c0_i32_0 = arith.constant 0 : i32
    %c0_i32_1 = arith.constant 0 : i32
    return %c0_i32, %c0_i32_0 : i32, i32
  }
  func.func @transform_33(%arg0: i32) -> (i32, i32) {
    %c0_i32 = arith.constant 0 : i32
    %c0_i32_0 = arith.constant 0 : i32
    %c0_i32_1 = arith.constant 0 : i32
    return %c0_i32, %c0_i32_0 : i32, i32
  }
  func.func @transform_34(%arg0: i32) -> (i32, i32) {
    %c0_i32 = arith.constant 0 : i32
    %c0_i32_0 = arith.constant 0 : i32
    %c0_i32_1 = arith.constant 0 : i32
    return %c0_i32, %c0_i32_0 : i32, i32
  }
  func.func @transform_35(%arg0: i32) -> (i32, i32) {
    %c0_i32 = arith.constant 0 : i32
    %c0_i32_0 = arith.constant 0 : i32
    %c0_i32_1 = arith.constant 0 : i32
    return %c0_i32, %c0_i32_0 : i32, i32
  }
  func.func @transform_36(%arg0: i32) -> (i32, i32) {
    %c0_i32 = arith.constant 0 : i32
    %c0_i32_0 = arith.constant 0 : i32
    %c0_i32_1 = arith.constant 0 : i32
    return %c0_i32, %c0_i32_0 : i32, i32
  }
  func.func @transform_37(%arg0: i32) -> (i32, i32) {
    %c0_i32 = arith.constant 0 : i32
    %c0_i32_0 = arith.constant 0 : i32
    %c0_i32_1 = arith.constant 0 : i32
    return %c0_i32, %c0_i32_0 : i32, i32
  }
  func.func @transform_38(%arg0: i32) -> (i32, i32, i32) {
    %c0_i32 = arith.constant 0 : i32
    %c0_i32_0 = arith.constant 0 : i32
    %c0_i32_1 = arith.constant 0 : i32
    %c0_i32_2 = arith.constant 0 : i32
    return %c0_i32, %c0_i32_0, %c0_i32_1 : i32, i32, i32
  }
  func.func @transform_39(%arg0: i32) -> (i32, i32) {
    %c0_i32 = arith.constant 0 : i32
    %c0_i32_0 = arith.constant 0 : i32
    %c0_i32_1 = arith.constant 0 : i32
    return %c0_i32, %c0_i32_0 : i32, i32
  }
  func.func @transform_40(%arg0: i32) -> (i32, i32, i32) {
    %c0_i32 = arith.constant 0 : i32
    %c0_i32_0 = arith.constant 0 : i32
    %c0_i32_1 = arith.constant 0 : i32
    return %arg0, %c0_i32, %c0_i32_0 : i32, i32, i32
  }
}

</mosaic_0001>

<llo_original>
// kernel: ctn_forward.1
$region0: #{ctn_forward.1}
  #allocation0 [shape = 'u32[]', space=smem, size = 0x4, offset = 0x4, fixed_abs, tag = 'smem constant byte address 0x4 - core index']
  #allocation1 [shape = 'u32[144,128]{1,0:T(1,128)}', space=vmem, size = 0x12000, scoped, tag = 'internal scratch']
  #allocation2 [shape = 'f32[8,32]{1,0:T(8,128)}', space=vmem, size = 0x1000, scoped, tag = 'scratch operand']
  %s0 = inlined_call_operand.smem [shape: u32[41], index: -1, kind: input, shape index: {}]
  %s1 = sld [smem:[%s0]]
  %s2 = scalar_lea.smem %s0, 1
  %s3 = sld [smem:[%s2]]
  %s4 = scalar_lea.smem %s0, 2
  %s5 = sld [smem:[%s4]]
  %s6 = scalar_lea.smem %s0, 3
  %s7 = sld [smem:[%s6]]
  %s8 = scalar_lea.smem %s0, 4
  %s9 = sld [smem:[%s8]]
  %s10 = scalar_lea.smem %s0, 5
  %s11 = sld [smem:[%s10]]
  %s12 = scalar_lea.smem %s0, 6
  %s13 = sld [smem:[%s12]]
  %s14 = scalar_lea.smem %s0, 7
  %s15 = sld [smem:[%s14]]
  %s16 = scalar_lea.smem %s0, 8
  %s17 = sld [smem:[%s16]]
  %s18 = scalar_lea.smem %s0, 9
  %s19 = sld [smem:[%s18]]
  %s20 = scalar_lea.smem %s0, 10
  %s21 = sld [smem:[%s20]]
  %s22 = scalar_lea.smem %s0, 11
  %s23 = sld [smem:[%s22]]
  %s24 = scalar_lea.smem %s0, 12
  %s25 = sld [smem:[%s24]]
  %s26 = scalar_lea.smem %s0, 13
  %s27 = sld [smem:[%s26]]
  %s28 = scalar_lea.smem %s0, 14
  %s29 = sld [smem:[%s28]]
  %s30 = scalar_lea.smem %s0, 15
  %s31 = sld [smem:[%s30]]
  %s32 = scalar_lea.smem %s0, 16
  %s33 = sld [smem:[%s32]]
  %s34 = scalar_lea.smem %s0, 17
  %s35 = sld [smem:[%s34]]
  %s36 = scalar_lea.smem %s0, 18
  %s37 = sld [smem:[%s36]]
  %s38 = scalar_lea.smem %s0, 19
  %s39 = sld [smem:[%s38]]
  %s40 = scalar_lea.smem %s0, 20
  %s41 = sld [smem:[%s40]]
  %s42 = scalar_lea.smem %s0, 21
  %s43 = sld [smem:[%s42]]
  %s44 = scalar_lea.smem %s0, 22
  %s45 = sld [smem:[%s44]]
  %s46 = scalar_lea.smem %s0, 23
  %s47 = sld [smem:[%s46]]
  %s48 = scalar_lea.smem %s0, 24
  %s49 = sld [smem:[%s48]]
  %s50 = scalar_lea.smem %s0, 25
  %s51 = sld [smem:[%s50]]
  %s52 = scalar_lea.smem %s0, 26
  %s53 = sld [smem:[%s52]]
  %s54 = scalar_lea.smem %s0, 27
  %s55 = sld [smem:[%s54]]
  %s56 = scalar_lea.smem %s0, 28
  %s57 = sld [smem:[%s56]]
  %s58 = scalar_lea.smem %s0, 29
  %s59 = sld [smem:[%s58]]
  %s60 = scalar_lea.smem %s0, 30
  %s61 = sld [smem:[%s60]]
  %s62 = scalar_lea.smem %s0, 31
  %s63 = sld [smem:[%s62]]
  %s64 = scalar_lea.smem %s0, 32
  %s65 = sld [smem:[%s64]]
  %s66 = scalar_lea.smem %s0, 33
  %s67 = sld [smem:[%s66]]
  %s68 = scalar_lea.smem %s0, 34
  %s69 = sld [smem:[%s68]]
  %s70 = scalar_lea.smem %s0, 35
  %s71 = sld [smem:[%s70]]
  %s72 = scalar_lea.smem %s0, 36
  %s73 = sld [smem:[%s72]]
  %s74 = scalar_lea.smem %s0, 37
  %s75 = sld [smem:[%s74]]
  %s76 = scalar_lea.smem %s0, 38
  %s77 = sld [smem:[%s76]]
  %s78 = scalar_lea.smem %s0, 39
  %s79 = sld [smem:[%s78]]
  %s80 = scalar_lea.smem %s0, 40
  %s81 = sld [smem:[%s80]]
  %s82 = sld [smem:[#allocation0]]
  $region193: #{ctn_forward.1} parent=0
    _
  %s84 = ssub.s32 1, %s82
  %s85 = scalar_select 0, %s84, %s82
  $region1: #{ctn_forward.1} parent=0
    #allocation3 [shape = 'u8[1024]{0}', space=vmem, size = 0x400, scoped, tag = 'output window, operand 0']
    #allocation4 [shape = 's32[2]{0}', space=sflag, size = 0x8, scoped, tag = 'scoped memory for ctn_forward.1']
    %86 = vsyncpa [#allocation4], 0
    %s87 = scalar_lea.sflag [#allocation4], 1
    %88 = vsyncpa %s87, 0
    loop: start=0, step=1, limit=4
    $region2: #{ctn_forward.1} parent=1 // loop_pre_header
      _
    $region3: #{ctn_forward.1} parent=1 // loop_header
      %s90 = sphi 0, %s94
      %p91 = scmp.ge.s32.totalorder %s90, 4
      %s100 = sphi 0, %s102
      %s103 = sphi 0, %s100
      %s104 = sphi 0, %s103
      %s120 = sphi 0, %s104
      %s124 = sphi 0, %s124
      %s126 = sphi 0, %s124
      %s127 = sphi 0, %s126
      %s141 = sphi 0, %s127
      %s145 = sphi 0, %s145
      %s147 = sphi 0, %s145
      %s148 = sphi 0, %s147
      %s162 = sphi 0, %s148
      %s166 = sphi 0, %s166
      %s168 = sphi 0, %s166
      %s169 = sphi 0, %s168
      %s183 = sphi 0, %s169
      %s187 = sphi 0, %s187
      %s189 = sphi 0, %s187
      %s190 = sphi 0, %s189
      %s204 = sphi 0, %s190
      %s208 = sphi 0, %s208
      %s210 = sphi 0, %s208
      %s211 = sphi 0, %s210
      %s225 = sphi 0, %s211
      %s229 = sphi 0, %s229
      %s231 = sphi 0, %s229
      %s232 = sphi 0, %s231
      %s246 = sphi 0, %s232
      %s250 = sphi 0, %s250
      %s252 = sphi 0, %s250
      %s253 = sphi 0, %s252
      %s267 = sphi 0, %s253
      %s271 = sphi 0, %s271
      %s273 = sphi 0, %s271
      %s274 = sphi 0, %s273
      %s288 = sphi 0, %s274
      %s292 = sphi 0, %s292
      %s294 = sphi 0, %s292
      %s295 = sphi 0, %s294
      %s309 = sphi 0, %s295
      %s313 = sphi 0, %s313
      %s315 = sphi 0, %s313
      %s316 = sphi 0, %s315
      %s330 = sphi 0, %s316
      %s334 = sphi 0, %s334
      %s336 = sphi 0, %s334
      %s337 = sphi 0, %s336
      %s351 = sphi 0, %s337
      %s355 = sphi 0, %s355
      %s357 = sphi 0, %s355
      %s358 = sphi 0, %s357
      %s372 = sphi 0, %s358
      %s376 = sphi 0, %s376
      %s378 = sphi 0, %s376
      %s379 = sphi 0, %s378
      %s393 = sphi 0, %s379
      %s397 = sphi 0, %s397
      %s399 = sphi 0, %s397
      %s400 = sphi 0, %s399
      %s414 = sphi 0, %s400
      %s418 = sphi 0, %s418
      %s420 = sphi 0, %s418
      %s421 = sphi 0, %s420
      %s435 = sphi 0, %s421
      %s439 = sphi 0, %s439
      %s441 = sphi 0, %s439
      %s442 = sphi 0, %s441
      %s456 = sphi 0, %s442
      %s460 = sphi 0, %s460
      %s462 = sphi 0, %s460
      %s463 = sphi 0, %s462
      %s477 = sphi 0, %s463
      %s481 = sphi 0, %s481
      %s483 = sphi 0, %s481
      %s484 = sphi 0, %s483
      %s498 = sphi 0, %s484
      %s502 = sphi 0, %s502
      %s504 = sphi 0, %s502
      %s505 = sphi 0, %s504
      %s519 = sphi 0, %s505
      %s523 = sphi 0, %s523
      %s525 = sphi 0, %s523
      %s526 = sphi 0, %s525
      %s540 = sphi 0, %s526
      %s544 = sphi 0, %s544
      %s546 = sphi 0, %s544
      %s547 = sphi 0, %s546
      %s561 = sphi 0, %s547
      %s565 = sphi 0, %s565
      %s567 = sphi 0, %s565
      %s568 = sphi 0, %s567
      %s582 = sphi 0, %s568
      %s586 = sphi 0, %s586
      %s588 = sphi 0, %s586
      %s589 = sphi 0, %s588
      %s603 = sphi 0, %s589
      %s607 = sphi 0, %s607
      %s609 = sphi 0, %s607
      %s610 = sphi 0, %s609
      %s624 = sphi 0, %s610
      %s628 = sphi 0, %s628
      %s630 = sphi 0, %s628
      %s631 = sphi 0, %s630
      %s645 = sphi 0, %s631
      %s649 = sphi 0, %s649
      %s651 = sphi 0, %s649
      %s652 = sphi 0, %s651
      %s666 = sphi 0, %s652
      %s670 = sphi 0, %s670
      %s672 = sphi 0, %s670
      %s673 = sphi 0, %s672
      %s687 = sphi 0, %s673
      %s691 = sphi 0, %s691
      %s693 = sphi 0, %s691
      %s694 = sphi 0, %s693
      %s708 = sphi 0, %s694
      %s712 = sphi 0, %s712
      %s714 = sphi 0, %s712
      %s715 = sphi 0, %s714
      %s729 = sphi 0, %s715
      %s733 = sphi 0, %s733
      %s735 = sphi 0, %s733
      %s736 = sphi 0, %s735
      %s750 = sphi 0, %s736
      %s754 = sphi 0, %s754
      %s756 = sphi 0, %s754
      %s757 = sphi 0, %s756
      %s771 = sphi 0, %s757
      %s775 = sphi 0, %s775
      %s777 = sphi 0, %s775
      %s778 = sphi 0, %s777
      %s792 = sphi 0, %s778
      %s796 = sphi 0, %s796
      %s798 = sphi 0, %s796
      %s799 = sphi 0, %s798
      %s813 = sphi 0, %s799
      %s817 = sphi 0, %s817
      %s819 = sphi 0, %s817
      %s820 = sphi 0, %s819
      %s834 = sphi 0, %s820
      %s838 = sphi 0, %s838
      %s840 = sphi 0, %s838
      %s841 = sphi 0, %s840
      %s855 = sphi 0, %s841
      %s859 = sphi 0, %s859
      %s861 = sphi 0, %s859
      %s862 = sphi 0, %s861
      %s876 = sphi 0, %s862
      %s880 = sphi 0, %s880
      %s882 = sphi 0, %s880
      %s883 = sphi 0, %s882
      %s897 = sphi 0, %s883
      %s901 = sphi 0, %s901
      %s903 = sphi 0, %s901
      %s904 = sphi 0, %s903
      %s918 = sphi 0, %s904
      %s922 = sphi 0, %s922
      %s924 = sphi 0, %s922
      %s925 = sphi 0, %s924
      %s939 = sphi 0, %s925
      %s945 = sphi 0, %s947
      %s948 = sphi 0, %s945
      %s949 = sphi 0, %s948
      %s965 = sphi 0, %s949
    $region4: #{ctn_forward.1} parent=1 // loop_header_branch
      %93 = sbr.rel (%p91) target = $region8
    $region5: #{ctn_forward.1} parent=1 // loop_body
      %s95 = ssub.s32 %s90, 1
      %s96 = ssub.s32 %s90, 2
      %s97 = sadd.s32 %s90, 1
      %s98 = ssub.s32 %s90, %s97
      %p99 = scmp.eq.s32.totalorder %s98, 0
      %s101 = sadd.s32 %s100, 1
      %s102 = scalar_select %p99, %s100, %s101
      %p105 = pneg %p99
      %p106 = scmp.eq.s32.totalorder %s90, 1
      %p107 = por %p105, %p106
      %p108 = scmp.ne.s32.totalorder %s100, %s103
      %p109 = scmp.eq.s32.totalorder %s90, 0
      %p110 = por %p108, %p109
      %p111 = scmp.ne.s32.totalorder %s100, %s103
      %p112 = scmp.eq.s32.totalorder %s95, 1
      %p113 = por %p111, %p112
      %p114 = scmp.ne.s32.totalorder %s103, %s104
      %p115 = scmp.eq.s32.totalorder %s95, 0
      %p116 = por %p114, %p115
      %p117 = scmp.ne.s32.totalorder %s103, %s104
      %p118 = scmp.eq.s32.totalorder %s96, 1
      %p119 = por %p117, %p118
      %p121 = scmp.ne.s32.totalorder %s104, %s120
      %p122 = scmp.eq.s32.totalorder %s96, 0
      %p123 = por %p121, %p122
      %s125 = sadd.s32 %s124, 1
      %p128 = scmp.eq.s32.totalorder %s90, 1
      %p129 = scmp.ne.s32.totalorder %s124, %s126
      %p130 = scmp.eq.s32.totalorder %s90, 0
      %p131 = por %p129, %p130
      %p132 = scmp.ne.s32.totalorder %s124, %s126
      %p133 = scmp.eq.s32.totalorder %s95, 1
      %p134 = por %p132, %p133
      %p135 = scmp.ne.s32.totalorder %s126, %s127
      %p136 = scmp.eq.s32.totalorder %s95, 0
      %p137 = por %p135, %p136
      %p138 = scmp.ne.s32.totalorder %s126, %s127
      %p139 = scmp.eq.s32.totalorder %s96, 1
      %p140 = por %p138, %p139
      %p142 = scmp.ne.s32.totalorder %s127, %s141
      %p143 = scmp.eq.s32.totalorder %s96, 0
      %p144 = por %p142, %p143
      %s146 = sadd.s32 %s145, 1
      %p149 = scmp.eq.s32.totalorder %s90, 1
      %p150 = scmp.ne.s32.totalorder %s145, %s147
      %p151 = scmp.eq.s32.totalorder %s90, 0
      %p152 = por %p150, %p151
      %p153 = scmp.ne.s32.totalorder %s145, %s147
      %p154 = scmp.eq.s32.totalorder %s95, 1
      %p155 = por %p153, %p154
      %p156 = scmp.ne.s32.totalorder %s147, %s148
      %p157 = scmp.eq.s32.totalorder %s95, 0
      %p158 = por %p156, %p157
      %p159 = scmp.ne.s32.totalorder %s147, %s148
      %p160 = scmp.eq.s32.totalorder %s96, 1
      %p161 = por %p159, %p160
      %p163 = scmp.ne.s32.totalorder %s148, %s162
      %p164 = scmp.eq.s32.totalorder %s96, 0
      %p165 = por %p163, %p164
      %s167 = sadd.s32 %s166, 1
      %p170 = scmp.eq.s32.totalorder %s90, 1
      %p171 = scmp.ne.s32.totalorder %s166, %s168
      %p172 = scmp.eq.s32.totalorder %s90, 0
      %p173 = por %p171, %p172
      %p174 = scmp.ne.s32.totalorder %s166, %s168
      %p175 = scmp.eq.s32.totalorder %s95, 1
      %p176 = por %p174, %p175
      %p177 = scmp.ne.s32.totalorder %s168, %s169
      %p178 = scmp.eq.s32.totalorder %s95, 0
      %p179 = por %p177, %p178
      %p180 = scmp.ne.s32.totalorder %s168, %s169
      %p181 = scmp.eq.s32.totalorder %s96, 1
      %p182 = por %p180, %p181
      %p184 = scmp.ne.s32.totalorder %s169, %s183
      %p185 = scmp.eq.s32.totalorder %s96, 0
      %p186 = por %p184, %p185
      %s188 = sadd.s32 %s187, 1
      %p191 = scmp.eq.s32.totalorder %s90, 1
      %p192 = scmp.ne.s32.totalorder %s187, %s189
      %p193 = scmp.eq.s32.totalorder %s90, 0
      %p194 = por %p192, %p193
      %p195 = scmp.ne.s32.totalorder %s187, %s189
      %p196 = scmp.eq.s32.totalorder %s95, 1
      %p197 = por %p195, %p196
      %p198 = scmp.ne.s32.totalorder %s189, %s190
      %p199 = scmp.eq.s32.totalorder %s95, 0
      %p200 = por %p198, %p199
      %p201 = scmp.ne.s32.totalorder %s189, %s190
      %p202 = scmp.eq.s32.totalorder %s96, 1
      %p203 = por %p201, %p202
      %p205 = scmp.ne.s32.totalorder %s190, %s204
      %p206 = scmp.eq.s32.totalorder %s96, 0
      %p207 = por %p205, %p206
      %s209 = sadd.s32 %s208, 1
      %p212 = scmp.eq.s32.totalorder %s90, 1
      %p213 = scmp.ne.s32.totalorder %s208, %s210
      %p214 = scmp.eq.s32.totalorder %s90, 0
      %p215 = por %p213, %p214
      %p216 = scmp.ne.s32.totalorder %s208, %s210
      %p217 = scmp.eq.s32.totalorder %s95, 1
      %p218 = por %p216, %p217
      %p219 = scmp.ne.s32.totalorder %s210, %s211
      %p220 = scmp.eq.s32.totalorder %s95, 0
      %p221 = por %p219, %p220
      %p222 = scmp.ne.s32.totalorder %s210, %s211
      %p223 = scmp.eq.s32.totalorder %s96, 1
      %p224 = por %p222, %p223
      %p226 = scmp.ne.s32.totalorder %s211, %s225
      %p227 = scmp.eq.s32.totalorder %s96, 0
      %p228 = por %p226, %p227
      %s230 = sadd.s32 %s229, 1
      %p233 = scmp.eq.s32.totalorder %s90, 1
      %p234 = scmp.ne.s32.totalorder %s229, %s231
      %p235 = scmp.eq.s32.totalorder %s90, 0
      %p236 = por %p234, %p235
      %p237 = scmp.ne.s32.totalorder %s229, %s231
      %p238 = scmp.eq.s32.totalorder %s95, 1
      %p239 = por %p237, %p238
      %p240 = scmp.ne.s32.totalorder %s231, %s232
      %p241 = scmp.eq.s32.totalorder %s95, 0
      %p242 = por %p240, %p241
      %p243 = scmp.ne.s32.totalorder %s231, %s232
      %p244 = scmp.eq.s32.totalorder %s96, 1
      %p245 = por %p243, %p244
      %p247 = scmp.ne.s32.totalorder %s232, %s246
      %p248 = scmp.eq.s32.totalorder %s96, 0
      %p249 = por %p247, %p248
      %s251 = sadd.s32 %s250, 1
      %p254 = scmp.eq.s32.totalorder %s90, 1
      %p255 = scmp.ne.s32.totalorder %s250, %s252
      %p256 = scmp.eq.s32.totalorder %s90, 0
      %p257 = por %p255, %p256
      %p258 = scmp.ne.s32.totalorder %s250, %s252
      %p259 = scmp.eq.s32.totalorder %s95, 1
      %p260 = por %p258, %p259
      %p261 = scmp.ne.s32.totalorder %s252, %s253
      %p262 = scmp.eq.s32.totalorder %s95, 0
      %p263 = por %p261, %p262
      %p264 = scmp.ne.s32.totalorder %s252, %s253
      %p265 = scmp.eq.s32.totalorder %s96, 1
      %p266 = por %p264, %p265
      %p268 = scmp.ne.s32.totalorder %s253, %s267
      %p269 = scmp.eq.s32.totalorder %s96, 0
      %p270 = por %p268, %p269
      %s272 = sadd.s32 %s271, 1
      %p275 = scmp.eq.s32.totalorder %s90, 1
      %p276 = scmp.ne.s32.totalorder %s271, %s273
      %p277 = scmp.eq.s32.totalorder %s90, 0
      %p278 = por %p276, %p277
      %p279 = scmp.ne.s32.totalorder %s271, %s273
      %p280 = scmp.eq.s32.totalorder %s95, 1
      %p281 = por %p279, %p280
      %p282 = scmp.ne.s32.totalorder %s273, %s274
      %p283 = scmp.eq.s32.totalorder %s95, 0
      %p284 = por %p282, %p283
      %p285 = scmp.ne.s32.totalorder %s273, %s274
      %p286 = scmp.eq.s32.totalorder %s96, 1
      %p287 = por %p285, %p286
      %p289 = scmp.ne.s32.totalorder %s274, %s288
      %p290 = scmp.eq.s32.totalorder %s96, 0
      %p291 = por %p289, %p290
      %s293 = sadd.s32 %s292, 1
      %p296 = scmp.eq.s32.totalorder %s90, 1
      %p297 = scmp.ne.s32.totalorder %s292, %s294
      %p298 = scmp.eq.s32.totalorder %s90, 0
      %p299 = por %p297, %p298
      %p300 = scmp.ne.s32.totalorder %s292, %s294
      %p301 = scmp.eq.s32.totalorder %s95, 1
      %p302 = por %p300, %p301
      %p303 = scmp.ne.s32.totalorder %s294, %s295
      %p304 = scmp.eq.s32.totalorder %s95, 0
      %p305 = por %p303, %p304
      %p306 = scmp.ne.s32.totalorder %s294, %s295
      %p307 = scmp.eq.s32.totalorder %s96, 1
      %p308 = por %p306, %p307
      %p310 = scmp.ne.s32.totalorder %s295, %s309
      %p311 = scmp.eq.s32.totalorder %s96, 0
      %p312 = por %p310, %p311
      %s314 = sadd.s32 %s313, 1
      %p317 = scmp.eq.s32.totalorder %s90, 1
      %p318 = scmp.ne.s32.totalorder %s313, %s315
      %p319 = scmp.eq.s32.totalorder %s90, 0
      %p320 = por %p318, %p319
      %p321 = scmp.ne.s32.totalorder %s313, %s315
      %p322 = scmp.eq.s32.totalorder %s95, 1
      %p323 = por %p321, %p322
      %p324 = scmp.ne.s32.totalorder %s315, %s316
      %p325 = scmp.eq.s32.totalorder %s95, 0
      %p326 = por %p324, %p325
      %p327 = scmp.ne.s32.totalorder %s315, %s316
      %p328 = scmp.eq.s32.totalorder %s96, 1
      %p329 = por %p327, %p328
      %p331 = scmp.ne.s32.totalorder %s316, %s330
      %p332 = scmp.eq.s32.totalorder %s96, 0
      %p333 = por %p331, %p332
      %s335 = sadd.s32 %s334, 1
      %p338 = scmp.eq.s32.totalorder %s90, 1
      %p339 = scmp.ne.s32.totalorder %s334, %s336
      %p340 = scmp.eq.s32.totalorder %s90, 0
      %p341 = por %p339, %p340
      %p342 = scmp.ne.s32.totalorder %s334, %s336
      %p343 = scmp.eq.s32.totalorder %s95, 1
      %p344 = por %p342, %p343
      %p345 = scmp.ne.s32.totalorder %s336, %s337
      %p346 = scmp.eq.s32.totalorder %s95, 0
      %p347 = por %p345, %p346
      %p348 = scmp.ne.s32.totalorder %s336, %s337
      %p349 = scmp.eq.s32.totalorder %s96, 1
      %p350 = por %p348, %p349
      %p352 = scmp.ne.s32.totalorder %s337, %s351
      %p353 = scmp.eq.s32.totalorder %s96, 0
      %p354 = por %p352, %p353
      %s356 = sadd.s32 %s355, 1
      %p359 = scmp.eq.s32.totalorder %s90, 1
      %p360 = scmp.ne.s32.totalorder %s355, %s357
      %p361 = scmp.eq.s32.totalorder %s90, 0
      %p362 = por %p360, %p361
      %p363 = scmp.ne.s32.totalorder %s355, %s357
      %p364 = scmp.eq.s32.totalorder %s95, 1
      %p365 = por %p363, %p364
      %p366 = scmp.ne.s32.totalorder %s357, %s358
      %p367 = scmp.eq.s32.totalorder %s95, 0
      %p368 = por %p366, %p367
      %p369 = scmp.ne.s32.totalorder %s357, %s358
      %p370 = scmp.eq.s32.totalorder %s96, 1
      %p371 = por %p369, %p370
      %p373 = scmp.ne.s32.totalorder %s358, %s372
      %p374 = scmp.eq.s32.totalorder %s96, 0
      %p375 = por %p373, %p374
      %s377 = sadd.s32 %s376, 1
      %p380 = scmp.eq.s32.totalorder %s90, 1
      %p381 = scmp.ne.s32.totalorder %s376, %s378
      %p382 = scmp.eq.s32.totalorder %s90, 0
      %p383 = por %p381, %p382
      %p384 = scmp.ne.s32.totalorder %s376, %s378
      %p385 = scmp.eq.s32.totalorder %s95, 1
      %p386 = por %p384, %p385
      %p387 = scmp.ne.s32.totalorder %s378, %s379
      %p388 = scmp.eq.s32.totalorder %s95, 0
      %p389 = por %p387, %p388
      %p390 = scmp.ne.s32.totalorder %s378, %s379
      %p391 = scmp.eq.s32.totalorder %s96, 1
      %p392 = por %p390, %p391
      %p394 = scmp.ne.s32.totalorder %s379, %s393
      %p395 = scmp.eq.s32.totalorder %s96, 0
      %p396 = por %p394, %p395
      %s398 = sadd.s32 %s397, 1
      %p401 = scmp.eq.s32.totalorder %s90, 1
      %p402 = scmp.ne.s32.totalorder %s397, %s399
      %p403 = scmp.eq.s32.totalorder %s90, 0
      %p404 = por %p402, %p403
      %p405 = scmp.ne.s32.totalorder %s397, %s399
      %p406 = scmp.eq.s32.totalorder %s95, 1
      %p407 = por %p405, %p406
      %p408 = scmp.ne.s32.totalorder %s399, %s400
      %p409 = scmp.eq.s32.totalorder %s95, 0
      %p410 = por %p408, %p409
      %p411 = scmp.ne.s32.totalorder %s399, %s400
      %p412 = scmp.eq.s32.totalorder %s96, 1
      %p413 = por %p411, %p412
      %p415 = scmp.ne.s32.totalorder %s400, %s414
      %p416 = scmp.eq.s32.totalorder %s96, 0
      %p417 = por %p415, %p416
      %s419 = sadd.s32 %s418, 1
      %p422 = scmp.eq.s32.totalorder %s90, 1
      %p423 = scmp.ne.s32.totalorder %s418, %s420
      %p424 = scmp.eq.s32.totalorder %s90, 0
      %p425 = por %p423, %p424
      %p426 = scmp.ne.s32.totalorder %s418, %s420
      %p427 = scmp.eq.s32.totalorder %s95, 1
      %p428 = por %p426, %p427
      %p429 = scmp.ne.s32.totalorder %s420, %s421
      %p430 = scmp.eq.s32.totalorder %s95, 0
      %p431 = por %p429, %p430
      %p432 = scmp.ne.s32.totalorder %s420, %s421
      %p433 = scmp.eq.s32.totalorder %s96, 1
      %p434 = por %p432, %p433
      %p436 = scmp.ne.s32.totalorder %s421, %s435
      %p437 = scmp.eq.s32.totalorder %s96, 0
      %p438 = por %p436, %p437
      %s440 = sadd.s32 %s439, 1
      %p443 = scmp.eq.s32.totalorder %s90, 1
      %p444 = scmp.ne.s32.totalorder %s439, %s441
      %p445 = scmp.eq.s32.totalorder %s90, 0
      %p446 = por %p444, %p445
      %p447 = scmp.ne.s32.totalorder %s439, %s441
      %p448 = scmp.eq.s32.totalorder %s95, 1
      %p449 = por %p447, %p448
      %p450 = scmp.ne.s32.totalorder %s441, %s442
      %p451 = scmp.eq.s32.totalorder %s95, 0
      %p452 = por %p450, %p451
      %p453 = scmp.ne.s32.totalorder %s441, %s442
      %p454 = scmp.eq.s32.totalorder %s96, 1
      %p455 = por %p453, %p454
      %p457 = scmp.ne.s32.totalorder %s442, %s456
      %p458 = scmp.eq.s32.totalorder %s96, 0
      %p459 = por %p457, %p458
      %s461 = sadd.s32 %s460, 1
      %p464 = scmp.eq.s32.totalorder %s90, 1
      %p465 = scmp.ne.s32.totalorder %s460, %s462
      %p466 = scmp.eq.s32.totalorder %s90, 0
      %p467 = por %p465, %p466
      %p468 = scmp.ne.s32.totalorder %s460, %s462
      %p469 = scmp.eq.s32.totalorder %s95, 1
      %p470 = por %p468, %p469
      %p471 = scmp.ne.s32.totalorder %s462, %s463
      %p472 = scmp.eq.s32.totalorder %s95, 0
      %p473 = por %p471, %p472
      %p474 = scmp.ne.s32.totalorder %s462, %s463
      %p475 = scmp.eq.s32.totalorder %s96, 1
      %p476 = por %p474, %p475
      %p478 = scmp.ne.s32.totalorder %s463, %s477
      %p479 = scmp.eq.s32.totalorder %s96, 0
      %p480 = por %p478, %p479
      %s482 = sadd.s32 %s481, 1
      %p485 = scmp.eq.s32.totalorder %s90, 1
      %p486 = scmp.ne.s32.totalorder %s481, %s483
      %p487 = scmp.eq.s32.totalorder %s90, 0
      %p488 = por %p486, %p487
      %p489 = scmp.ne.s32.totalorder %s481, %s483
      %p490 = scmp.eq.s32.totalorder %s95, 1
      %p491 = por %p489, %p490
      %p492 = scmp.ne.s32.totalorder %s483, %s484
      %p493 = scmp.eq.s32.totalorder %s95, 0
      %p494 = por %p492, %p493
      %p495 = scmp.ne.s32.totalorder %s483, %s484
      %p496 = scmp.eq.s32.totalorder %s96, 1
      %p497 = por %p495, %p496
      %p499 = scmp.ne.s32.totalorder %s484, %s498
      %p500 = scmp.eq.s32.totalorder %s96, 0
      %p501 = por %p499, %p500
      %s503 = sadd.s32 %s502, 1
      %p506 = scmp.eq.s32.totalorder %s90, 1
      %p507 = scmp.ne.s32.totalorder %s502, %s504
      %p508 = scmp.eq.s32.totalorder %s90, 0
      %p509 = por %p507, %p508
      %p510 = scmp.ne.s32.totalorder %s502, %s504
      %p511 = scmp.eq.s32.totalorder %s95, 1
      %p512 = por %p510, %p511
      %p513 = scmp.ne.s32.totalorder %s504, %s505
      %p514 = scmp.eq.s32.totalorder %s95, 0
      %p515 = por %p513, %p514
      %p516 = scmp.ne.s32.totalorder %s504, %s505
      %p517 = scmp.eq.s32.totalorder %s96, 1
      %p518 = por %p516, %p517
      %p520 = scmp.ne.s32.totalorder %s505, %s519
      %p521 = scmp.eq.s32.totalorder %s96, 0
      %p522 = por %p520, %p521
      %s524 = sadd.s32 %s523, 1
      %p527 = scmp.eq.s32.totalorder %s90, 1
      %p528 = scmp.ne.s32.totalorder %s523, %s525
      %p529 = scmp.eq.s32.totalorder %s90, 0
      %p530 = por %p528, %p529
      %p531 = scmp.ne.s32.totalorder %s523, %s525
      %p532 = scmp.eq.s32.totalorder %s95, 1
      %p533 = por %p531, %p532
      %p534 = scmp.ne.s32.totalorder %s525, %s526
      %p535 = scmp.eq.s32.totalorder %s95, 0
      %p536 = por %p534, %p535
      %p537 = scmp.ne.s32.totalorder %s525, %s526
      %p538 = scmp.eq.s32.totalorder %s96, 1
      %p539 = por %p537, %p538
      %p541 = scmp.ne.s32.totalorder %s526, %s540
      %p542 = scmp.eq.s32.totalorder %s96, 0
      %p543 = por %p541, %p542
      %s545 = sadd.s32 %s544, 1
      %p548 = scmp.eq.s32.totalorder %s90, 1
      %p549 = scmp.ne.s32.totalorder %s544, %s546
      %p550 = scmp.eq.s32.totalorder %s90, 0
      %p551 = por %p549, %p550
      %p552 = scmp.ne.s32.totalorder %s544, %s546
      %p553 = scmp.eq.s32.totalorder %s95, 1
      %p554 = por %p552, %p553
      %p555 = scmp.ne.s32.totalorder %s546, %s547
      %p556 = scmp.eq.s32.totalorder %s95, 0
      %p557 = por %p555, %p556
      %p558 = scmp.ne.s32.totalorder %s546, %s547
      %p559 = scmp.eq.s32.totalorder %s96, 1
      %p560 = por %p558, %p559
      %p562 = scmp.ne.s32.totalorder %s547, %s561
      %p563 = scmp.eq.s32.totalorder %s96, 0
      %p564 = por %p562, %p563
      %s566 = sadd.s32 %s565, 1
      %p569 = scmp.eq.s32.totalorder %s90, 1
      %p570 = scmp.ne.s32.totalorder %s565, %s567
      %p571 = scmp.eq.s32.totalorder %s90, 0
      %p572 = por %p570, %p571
      %p573 = scmp.ne.s32.totalorder %s565, %s567
      %p574 = scmp.eq.s32.totalorder %s95, 1
      %p575 = por %p573, %p574
      %p576 = scmp.ne.s32.totalorder %s567, %s568
      %p577 = scmp.eq.s32.totalorder %s95, 0
      %p578 = por %p576, %p577
      %p579 = scmp.ne.s32.totalorder %s567, %s568
      %p580 = scmp.eq.s32.totalorder %s96, 1
      %p581 = por %p579, %p580
      %p583 = scmp.ne.s32.totalorder %s568, %s582
      %p584 = scmp.eq.s32.totalorder %s96, 0
      %p585 = por %p583, %p584
      %s587 = sadd.s32 %s586, 1
      %p590 = scmp.eq.s32.totalorder %s90, 1
      %p591 = scmp.ne.s32.totalorder %s586, %s588
      %p592 = scmp.eq.s32.totalorder %s90, 0
      %p593 = por %p591, %p592
      %p594 = scmp.ne.s32.totalorder %s586, %s588
      %p595 = scmp.eq.s32.totalorder %s95, 1
      %p596 = por %p594, %p595
      %p597 = scmp.ne.s32.totalorder %s588, %s589
      %p598 = scmp.eq.s32.totalorder %s95, 0
      %p599 = por %p597, %p598
      %p600 = scmp.ne.s32.totalorder %s588, %s589
      %p601 = scmp.eq.s32.totalorder %s96, 1
      %p602 = por %p600, %p601
      %p604 = scmp.ne.s32.totalorder %s589, %s603
      %p605 = scmp.eq.s32.totalorder %s96, 0
      %p606 = por %p604, %p605
      %s608 = sadd.s32 %s607, 1
      %p611 = scmp.eq.s32.totalorder %s90, 1
      %p612 = scmp.ne.s32.totalorder %s607, %s609
      %p613 = scmp.eq.s32.totalorder %s90, 0
      %p614 = por %p612, %p613
      %p615 = scmp.ne.s32.totalorder %s607, %s609
      %p616 = scmp.eq.s32.totalorder %s95, 1
      %p617 = por %p615, %p616
      %p618 = scmp.ne.s32.totalorder %s609, %s610
      %p619 = scmp.eq.s32.totalorder %s95, 0
      %p620 = por %p618, %p619
      %p621 = scmp.ne.s32.totalorder %s609, %s610
      %p622 = scmp.eq.s32.totalorder %s96, 1
      %p623 = por %p621, %p622
      %p625 = scmp.ne.s32.totalorder %s610, %s624
      %p626 = scmp.eq.s32.totalorder %s96, 0
      %p627 = por %p625, %p626
      %s629 = sadd.s32 %s628, 1
      %p632 = scmp.eq.s32.totalorder %s90, 1
      %p633 = scmp.ne.s32.totalorder %s628, %s630
      %p634 = scmp.eq.s32.totalorder %s90, 0
      %p635 = por %p633, %p634
      %p636 = scmp.ne.s32.totalorder %s628, %s630
      %p637 = scmp.eq.s32.totalorder %s95, 1
      %p638 = por %p636, %p637
      %p639 = scmp.ne.s32.totalorder %s630, %s631
      %p640 = scmp.eq.s32.totalorder %s95, 0
      %p641 = por %p639, %p640
      %p642 = scmp.ne.s32.totalorder %s630, %s631
      %p643 = scmp.eq.s32.totalorder %s96, 1
      %p644 = por %p642, %p643
      %p646 = scmp.ne.s32.totalorder %s631, %s645
      %p647 = scmp.eq.s32.totalorder %s96, 0
      %p648 = por %p646, %p647
      %s650 = sadd.s32 %s649, 1
      %p653 = scmp.eq.s32.totalorder %s90, 1
      %p654 = scmp.ne.s32.totalorder %s649, %s651
      %p655 = scmp.eq.s32.totalorder %s90, 0
      %p656 = por %p654, %p655
      %p657 = scmp.ne.s32.totalorder %s649, %s651
      %p658 = scmp.eq.s32.totalorder %s95, 1
      %p659 = por %p657, %p658
      %p660 = scmp.ne.s32.totalorder %s651, %s652
      %p661 = scmp.eq.s32.totalorder %s95, 0
      %p662 = por %p660, %p661
      %p663 = scmp.ne.s32.totalorder %s651, %s652
      %p664 = scmp.eq.s32.totalorder %s96, 1
      %p665 = por %p663, %p664
      %p667 = scmp.ne.s32.totalorder %s652, %s666
      %p668 = scmp.eq.s32.totalorder %s96, 0
      %p669 = por %p667, %p668
      %s671 = sadd.s32 %s670, 1
      %p674 = scmp.eq.s32.totalorder %s90, 1
      %p675 = scmp.ne.s32.totalorder %s670, %s672
      %p676 = scmp.eq.s32.totalorder %s90, 0
      %p677 = por %p675, %p676
      %p678 = scmp.ne.s32.totalorder %s670, %s672
      %p679 = scmp.eq.s32.totalorder %s95, 1
      %p680 = por %p678, %p679
      %p681 = scmp.ne.s32.totalorder %s672, %s673
      %p682 = scmp.eq.s32.totalorder %s95, 0
      %p683 = por %p681, %p682
      %p684 = scmp.ne.s32.totalorder %s672, %s673
      %p685 = scmp.eq.s32.totalorder %s96, 1
      %p686 = por %p684, %p685
      %p688 = scmp.ne.s32.totalorder %s673, %s687
      %p689 = scmp.eq.s32.totalorder %s96, 0
      %p690 = por %p688, %p689
      %s692 = sadd.s32 %s691, 1
      %p695 = scmp.eq.s32.totalorder %s90, 1
      %p696 = scmp.ne.s32.totalorder %s691, %s693
      %p697 = scmp.eq.s32.totalorder %s90, 0
      %p698 = por %p696, %p697
      %p699 = scmp.ne.s32.totalorder %s691, %s693
      %p700 = scmp.eq.s32.totalorder %s95, 1
      %p701 = por %p699, %p700
      %p702 = scmp.ne.s32.totalorder %s693, %s694
      %p703 = scmp.eq.s32.totalorder %s95, 0
      %p704 = por %p702, %p703
      %p705 = scmp.ne.s32.totalorder %s693, %s694
      %p706 = scmp.eq.s32.totalorder %s96, 1
      %p707 = por %p705, %p706
      %p709 = scmp.ne.s32.totalorder %s694, %s708
      %p710 = scmp.eq.s32.totalorder %s96, 0
      %p711 = por %p709, %p710
      %s713 = sadd.s32 %s712, 1
      %p716 = scmp.eq.s32.totalorder %s90, 1
      %p717 = scmp.ne.s32.totalorder %s712, %s714
      %p718 = scmp.eq.s32.totalorder %s90, 0
      %p719 = por %p717, %p718
      %p720 = scmp.ne.s32.totalorder %s712, %s714
      %p721 = scmp.eq.s32.totalorder %s95, 1
      %p722 = por %p720, %p721
      %p723 = scmp.ne.s32.totalorder %s714, %s715
      %p724 = scmp.eq.s32.totalorder %s95, 0
      %p725 = por %p723, %p724
      %p726 = scmp.ne.s32.totalorder %s714, %s715
      %p727 = scmp.eq.s32.totalorder %s96, 1
      %p728 = por %p726, %p727
      %p730 = scmp.ne.s32.totalorder %s715, %s729
      %p731 = scmp.eq.s32.totalorder %s96, 0
      %p732 = por %p730, %p731
      %s734 = sadd.s32 %s733, 1
      %p737 = scmp.eq.s32.totalorder %s90, 1
      %p738 = scmp.ne.s32.totalorder %s733, %s735
      %p739 = scmp.eq.s32.totalorder %s90, 0
      %p740 = por %p738, %p739
      %p741 = scmp.ne.s32.totalorder %s733, %s735
      %p742 = scmp.eq.s32.totalorder %s95, 1
      %p743 = por %p741, %p742
      %p744 = scmp.ne.s32.totalorder %s735, %s736
      %p745 = scmp.eq.s32.totalorder %s95, 0
      %p746 = por %p744, %p745
      %p747 = scmp.ne.s32.totalorder %s735, %s736
      %p748 = scmp.eq.s32.totalorder %s96, 1
      %p749 = por %p747, %p748
      %p751 = scmp.ne.s32.totalorder %s736, %s750
      %p752 = scmp.eq.s32.totalorder %s96, 0
      %p753 = por %p751, %p752
      %s755 = sadd.s32 %s754, 1
      %p758 = scmp.eq.s32.totalorder %s90, 1
      %p759 = scmp.ne.s32.totalorder %s754, %s756
      %p760 = scmp.eq.s32.totalorder %s90, 0
      %p761 = por %p759, %p760
      %p762 = scmp.ne.s32.totalorder %s754, %s756
      %p763 = scmp.eq.s32.totalorder %s95, 1
      %p764 = por %p762, %p763
      %p765 = scmp.ne.s32.totalorder %s756, %s757
      %p766 = scmp.eq.s32.totalorder %s95, 0
      %p767 = por %p765, %p766
      %p768 = scmp.ne.s32.totalorder %s756, %s757
      %p769 = scmp.eq.s32.totalorder %s96, 1
      %p770 = por %p768, %p769
      %p772 = scmp.ne.s32.totalorder %s757, %s771
      %p773 = scmp.eq.s32.totalorder %s96, 0
      %p774 = por %p772, %p773
      %s776 = sadd.s32 %s775, 1
      %p779 = scmp.eq.s32.totalorder %s90, 1
      %p780 = scmp.ne.s32.totalorder %s775, %s777
      %p781 = scmp.eq.s32.totalorder %s90, 0
      %p782 = por %p780, %p781
      %p783 = scmp.ne.s32.totalorder %s775, %s777
      %p784 = scmp.eq.s32.totalorder %s95, 1
      %p785 = por %p783, %p784
      %p786 = scmp.ne.s32.totalorder %s777, %s778
      %p787 = scmp.eq.s32.totalorder %s95, 0
      %p788 = por %p786, %p787
      %p789 = scmp.ne.s32.totalorder %s777, %s778
      %p790 = scmp.eq.s32.totalorder %s96, 1
      %p791 = por %p789, %p790
      %p793 = scmp.ne.s32.totalorder %s778, %s792
      %p794 = scmp.eq.s32.totalorder %s96, 0
      %p795 = por %p793, %p794
      %s797 = sadd.s32 %s796, 1
      %p800 = scmp.eq.s32.totalorder %s90, 1
      %p801 = scmp.ne.s32.totalorder %s796, %s798
      %p802 = scmp.eq.s32.totalorder %s90, 0
      %p803 = por %p801, %p802
      %p804 = scmp.ne.s32.totalorder %s796, %s798
      %p805 = scmp.eq.s32.totalorder %s95, 1
      %p806 = por %p804, %p805
      %p807 = scmp.ne.s32.totalorder %s798, %s799
      %p808 = scmp.eq.s32.totalorder %s95, 0
      %p809 = por %p807, %p808
      %p810 = scmp.ne.s32.totalorder %s798, %s799
      %p811 = scmp.eq.s32.totalorder %s96, 1
      %p812 = por %p810, %p811
      %p814 = scmp.ne.s32.totalorder %s799, %s813
      %p815 = scmp.eq.s32.totalorder %s96, 0
      %p816 = por %p814, %p815
      %s818 = sadd.s32 %s817, 1
      %p821 = scmp.eq.s32.totalorder %s90, 1
      %p822 = scmp.ne.s32.totalorder %s817, %s819
      %p823 = scmp.eq.s32.totalorder %s90, 0
      %p824 = por %p822, %p823
      %p825 = scmp.ne.s32.totalorder %s817, %s819
      %p826 = scmp.eq.s32.totalorder %s95, 1
      %p827 = por %p825, %p826
      %p828 = scmp.ne.s32.totalorder %s819, %s820
      %p829 = scmp.eq.s32.totalorder %s95, 0
      %p830 = por %p828, %p829
      %p831 = scmp.ne.s32.totalorder %s819, %s820
      %p832 = scmp.eq.s32.totalorder %s96, 1
      %p833 = por %p831, %p832
      %p835 = scmp.ne.s32.totalorder %s820, %s834
      %p836 = scmp.eq.s32.totalorder %s96, 0
      %p837 = por %p835, %p836
      %s839 = sadd.s32 %s838, 1
      %p842 = scmp.eq.s32.totalorder %s90, 1
      %p843 = scmp.ne.s32.totalorder %s838, %s840
      %p844 = scmp.eq.s32.totalorder %s90, 0
      %p845 = por %p843, %p844
      %p846 = scmp.ne.s32.totalorder %s838, %s840
      %p847 = scmp.eq.s32.totalorder %s95, 1
      %p848 = por %p846, %p847
      %p849 = scmp.ne.s32.totalorder %s840, %s841
      %p850 = scmp.eq.s32.totalorder %s95, 0
      %p851 = por %p849, %p850
      %p852 = scmp.ne.s32.totalorder %s840, %s841
      %p853 = scmp.eq.s32.totalorder %s96, 1
      %p854 = por %p852, %p853
      %p856 = scmp.ne.s32.totalorder %s841, %s855
      %p857 = scmp.eq.s32.totalorder %s96, 0
      %p858 = por %p856, %p857
      %s860 = sadd.s32 %s859, 1
      %p863 = scmp.eq.s32.totalorder %s90, 1
      %p864 = scmp.ne.s32.totalorder %s859, %s861
      %p865 = scmp.eq.s32.totalorder %s90, 0
      %p866 = por %p864, %p865
      %p867 = scmp.ne.s32.totalorder %s859, %s861
      %p868 = scmp.eq.s32.totalorder %s95, 1
      %p869 = por %p867, %p868
      %p870 = scmp.ne.s32.totalorder %s861, %s862
      %p871 = scmp.eq.s32.totalorder %s95, 0
      %p872 = por %p870, %p871
      %p873 = scmp.ne.s32.totalorder %s861, %s862
      %p874 = scmp.eq.s32.totalorder %s96, 1
      %p875 = por %p873, %p874
      %p877 = scmp.ne.s32.totalorder %s862, %s876
      %p878 = scmp.eq.s32.totalorder %s96, 0
      %p879 = por %p877, %p878
      %s881 = sadd.s32 %s880, 1
      %p884 = scmp.eq.s32.totalorder %s90, 1
      %p885 = scmp.ne.s32.totalorder %s880, %s882
      %p886 = scmp.eq.s32.totalorder %s90, 0
      %p887 = por %p885, %p886
      %p888 = scmp.ne.s32.totalorder %s880, %s882
      %p889 = scmp.eq.s32.totalorder %s95, 1
      %p890 = por %p888, %p889
      %p891 = scmp.ne.s32.totalorder %s882, %s883
      %p892 = scmp.eq.s32.totalorder %s95, 0
      %p893 = por %p891, %p892
      %p894 = scmp.ne.s32.totalorder %s882, %s883
      %p895 = scmp.eq.s32.totalorder %s96, 1
      %p896 = por %p894, %p895
      %p898 = scmp.ne.s32.totalorder %s883, %s897
      %p899 = scmp.eq.s32.totalorder %s96, 0
      %p900 = por %p898, %p899
      %s902 = sadd.s32 %s901, 1
      %p905 = scmp.eq.s32.totalorder %s90, 1
      %p906 = scmp.ne.s32.totalorder %s901, %s903
      %p907 = scmp.eq.s32.totalorder %s90, 0
      %p908 = por %p906, %p907
      %p909 = scmp.ne.s32.totalorder %s901, %s903
      %p910 = scmp.eq.s32.totalorder %s95, 1
      %p911 = por %p909, %p910
      %p912 = scmp.ne.s32.totalorder %s903, %s904
      %p913 = scmp.eq.s32.totalorder %s95, 0
      %p914 = por %p912, %p913
      %p915 = scmp.ne.s32.totalorder %s903, %s904
      %p916 = scmp.eq.s32.totalorder %s96, 1
      %p917 = por %p915, %p916
      %p919 = scmp.ne.s32.totalorder %s904, %s918
      %p920 = scmp.eq.s32.totalorder %s96, 0
      %p921 = por %p919, %p920
      %s923 = sadd.s32 %s922, 1
      %p926 = scmp.eq.s32.totalorder %s90, 1
      %p927 = scmp.ne.s32.totalorder %s922, %s924
      %p928 = scmp.eq.s32.totalorder %s90, 0
      %p929 = por %p927, %p928
      %p930 = scmp.ne.s32.totalorder %s922, %s924
      %p931 = scmp.eq.s32.totalorder %s95, 1
      %p932 = por %p930, %p931
      %p933 = scmp.ne.s32.totalorder %s924, %s925
      %p934 = scmp.eq.s32.totalorder %s95, 0
      %p935 = por %p933, %p934
      %p936 = scmp.ne.s32.totalorder %s924, %s925
      %p937 = scmp.eq.s32.totalorder %s96, 1
      %p938 = por %p936, %p937
      %p940 = scmp.ne.s32.totalorder %s925, %s939
      %p941 = scmp.eq.s32.totalorder %s96, 0
      %p942 = por %p940, %p941
      %s943 = ssub.s32 %s90, %s97
      %p944 = scmp.eq.s32.totalorder %s943, 0
      %s946 = sadd.s32 %s945, 1
      %s947 = scalar_select %p944, %s945, %s946
      %p950 = pneg %p944
      %p951 = scmp.eq.s32.totalorder %s90, 1
      %p952 = por %p950, %p951
      %p953 = scmp.ne.s32.totalorder %s945, %s948
      %p954 = scmp.eq.s32.totalorder %s90, 0
      %p955 = por %p953, %p954
      %p956 = scmp.ne.s32.totalorder %s945, %s948
      %p957 = scmp.eq.s32.totalorder %s95, 1
      %p958 = por %p956, %p957
      %p959 = scmp.ne.s32.totalorder %s948, %s949
      %p960 = scmp.eq.s32.totalorder %s95, 0
      %p961 = por %p959, %p960
      %p962 = scmp.ne.s32.totalorder %s948, %s949
      %p963 = scmp.eq.s32.totalorder %s96, 1
      %p964 = por %p962, %p963
      %p966 = scmp.ne.s32.totalorder %s949, %s965
      %p967 = scmp.eq.s32.totalorder %s96, 0
      %p968 = por %p966, %p967
      %p969 = scmp.le.s32.totalorder 1, %s90
      %p970 = scmp.lt.s32.totalorder %s90, 3
      %p971 = pnand %p969, %p970
      %p972 = pneg %p971
      // Predicated region
      $region9: #{ctn_forward.1} parent=5 // pred_check
        _
      $region10: #{ctn_forward.1} parent=5 // pred_check_branch
        %974 = sbr.rel (%p971) target = $region12
      $region11: #{ctn_forward.1} parent=5 // pred_region
        %s975 = ssub.s32 %s90, 1
        // Predicated region
        $region13: #{ctn_forward.1} parent=11 // pred_check
          %p976 = pneg %p137
        $region14: #{ctn_forward.1} parent=11 // pred_check_branch
          %978 = sbr.rel (%p976) target = $region16
        $region15: #{ctn_forward.1} parent=11 // pred_region
          _
        $region16: #{ctn_forward.1} parent=11 // pred_fallthru
          _
        // Predicated region
        $region17: #{ctn_forward.1} parent=11 // pred_check
          %p979 = pneg %p158
        $region18: #{ctn_forward.1} parent=11 // pred_check_branch
          %981 = sbr.rel (%p979) target = $region20
        $region19: #{ctn_forward.1} parent=11 // pred_region
          _
        $region20: #{ctn_forward.1} parent=11 // pred_fallthru
          _
        // Predicated region
        $region21: #{ctn_forward.1} parent=11 // pred_check
          %p982 = pneg %p179
        $region22: #{ctn_forward.1} parent=11 // pred_check_branch
          %984 = sbr.rel (%p982) target = $region24
        $region23: #{ctn_forward.1} parent=11 // pred_region
          _
        $region24: #{ctn_forward.1} parent=11 // pred_fallthru
          _
        // Predicated region
        $region25: #{ctn_forward.1} parent=11 // pred_check
          %p985 = pneg %p200
        $region26: #{ctn_forward.1} parent=11 // pred_check_branch
          %987 = sbr.rel (%p985) target = $region28
        $region27: #{ctn_forward.1} parent=11 // pred_region
          _
        $region28: #{ctn_forward.1} parent=11 // pred_fallthru
          _
        // Predicated region
        $region29: #{ctn_forward.1} parent=11 // pred_check
          %p988 = pneg %p221
        $region30: #{ctn_forward.1} parent=11 // pred_check_branch
          %990 = sbr.rel (%p988) target = $region32
        $region31: #{ctn_forward.1} parent=11 // pred_region
          _
        $region32: #{ctn_forward.1} parent=11 // pred_fallthru
          _
        // Predicated region
        $region33: #{ctn_forward.1} parent=11 // pred_check
          %p991 = pneg %p242
        $region34: #{ctn_forward.1} parent=11 // pred_check_branch
          %993 = sbr.rel (%p991) target = $region36
        $region35: #{ctn_forward.1} parent=11 // pred_region
          _
        $region36: #{ctn_forward.1} parent=11 // pred_fallthru
          _
        // Predicated region
        $region37: #{ctn_forward.1} parent=11 // pred_check
          %p994 = pneg %p263
        $region38: #{ctn_forward.1} parent=11 // pred_check_branch
          %996 = sbr.rel (%p994) target = $region40
        $region39: #{ctn_forward.1} parent=11 // pred_region
          _
        $region40: #{ctn_forward.1} parent=11 // pred_fallthru
          _
        // Predicated region
        $region41: #{ctn_forward.1} parent=11 // pred_check
          %p997 = pneg %p284
        $region42: #{ctn_forward.1} parent=11 // pred_check_branch
          %999 = sbr.rel (%p997) target = $region44
        $region43: #{ctn_forward.1} parent=11 // pred_region
          _
        $region44: #{ctn_forward.1} parent=11 // pred_fallthru
          _
        // Predicated region
        $region45: #{ctn_forward.1} parent=11 // pred_check
          %p1000 = pneg %p305
        $region46: #{ctn_forward.1} parent=11 // pred_check_branch
          %1002 = sbr.rel (%p1000) target = $region48
        $region47: #{ctn_forward.1} parent=11 // pred_region
          _
        $region48: #{ctn_forward.1} parent=11 // pred_fallthru
          _
        // Predicated region
        $region49: #{ctn_forward.1} parent=11 // pred_check
          %p1003 = pneg %p326
        $region50: #{ctn_forward.1} parent=11 // pred_check_branch
          %1005 = sbr.rel (%p1003) target = $region52
        $region51: #{ctn_forward.1} parent=11 // pred_region
          _
        $region52: #{ctn_forward.1} parent=11 // pred_fallthru
          _
        // Predicated region
        $region53: #{ctn_forward.1} parent=11 // pred_check
          %p1006 = pneg %p347
        $region54: #{ctn_forward.1} parent=11 // pred_check_branch
          %1008 = sbr.rel (%p1006) target = $region56
        $region55: #{ctn_forward.1} parent=11 // pred_region
          _
        $region56: #{ctn_forward.1} parent=11 // pred_fallthru
          _
        // Predicated region
        $region57: #{ctn_forward.1} parent=11 // pred_check
          %p1009 = pneg %p368
        $region58: #{ctn_forward.1} parent=11 // pred_check_branch
          %1011 = sbr.rel (%p1009) target = $region60
        $region59: #{ctn_forward.1} parent=11 // pred_region
          _
        $region60: #{ctn_forward.1} parent=11 // pred_fallthru
          _
        // Predicated region
        $region61: #{ctn_forward.1} parent=11 // pred_check
          %p1012 = pneg %p389
        $region62: #{ctn_forward.1} parent=11 // pred_check_branch
          %1014 = sbr.rel (%p1012) target = $region64
        $region63: #{ctn_forward.1} parent=11 // pred_region
          _
        $region64: #{ctn_forward.1} parent=11 // pred_fallthru
          _
        // Predicated region
        $region65: #{ctn_forward.1} parent=11 // pred_check
          %p1015 = pneg %p410
        $region66: #{ctn_forward.1} parent=11 // pred_check_branch
          %1017 = sbr.rel (%p1015) target = $region68
        $region67: #{ctn_forward.1} parent=11 // pred_region
          _
        $region68: #{ctn_forward.1} parent=11 // pred_fallthru
          _
        // Predicated region
        $region69: #{ctn_forward.1} parent=11 // pred_check
          %p1018 = pneg %p431
        $region70: #{ctn_forward.1} parent=11 // pred_check_branch
          %1020 = sbr.rel (%p1018) target = $region72
        $region71: #{ctn_forward.1} parent=11 // pred_region
          _
        $region72: #{ctn_forward.1} parent=11 // pred_fallthru
          _
        // Predicated region
        $region73: #{ctn_forward.1} parent=11 // pred_check
          %p1021 = pneg %p452
        $region74: #{ctn_forward.1} parent=11 // pred_check_branch
          %1023 = sbr.rel (%p1021) target = $region76
        $region75: #{ctn_forward.1} parent=11 // pred_region
          _
        $region76: #{ctn_forward.1} parent=11 // pred_fallthru
          _
        // Predicated region
        $region77: #{ctn_forward.1} parent=11 // pred_check
          %p1024 = pneg %p473
        $region78: #{ctn_forward.1} parent=11 // pred_check_branch
          %1026 = sbr.rel (%p1024) target = $region80
        $region79: #{ctn_forward.1} parent=11 // pred_region
          _
        $region80: #{ctn_forward.1} parent=11 // pred_fallthru
          _
        // Predicated region
        $region81: #{ctn_forward.1} parent=11 // pred_check
          %p1027 = pneg %p494
        $region82: #{ctn_forward.1} parent=11 // pred_check_branch
          %1029 = sbr.rel (%p1027) target = $region84
        $region83: #{ctn_forward.1} parent=11 // pred_region
          _
        $region84: #{ctn_forward.1} parent=11 // pred_fallthru
          _
        // Predicated region
        $region85: #{ctn_forward.1} parent=11 // pred_check
          %p1030 = pneg %p515
        $region86: #{ctn_forward.1} parent=11 // pred_check_branch
          %1032 = sbr.rel (%p1030) target = $region88
        $region87: #{ctn_forward.1} parent=11 // pred_region
          _
        $region88: #{ctn_forward.1} parent=11 // pred_fallthru
          _
        // Predicated region
        $region89: #{ctn_forward.1} parent=11 // pred_check
          %p1033 = pneg %p536
        $region90: #{ctn_forward.1} parent=11 // pred_check_branch
          %1035 = sbr.rel (%p1033) target = $region92
        $region91: #{ctn_forward.1} parent=11 // pred_region
          _
        $region92: #{ctn_forward.1} parent=11 // pred_fallthru
          _
        // Predicated region
        $region93: #{ctn_forward.1} parent=11 // pred_check
          %p1036 = pneg %p557
        $region94: #{ctn_forward.1} parent=11 // pred_check_branch
          %1038 = sbr.rel (%p1036) target = $region96
        $region95: #{ctn_forward.1} parent=11 // pred_region
          _
        $region96: #{ctn_forward.1} parent=11 // pred_fallthru
          _
        // Predicated region
        $region97: #{ctn_forward.1} parent=11 // pred_check
          %p1039 = pneg %p578
        $region98: #{ctn_forward.1} parent=11 // pred_check_branch
          %1041 = sbr.rel (%p1039) target = $region100
        $region99: #{ctn_forward.1} parent=11 // pred_region
          _
        $region100: #{ctn_forward.1} parent=11 // pred_fallthru
          _
        // Predicated region
        $region101: #{ctn_forward.1} parent=11 // pred_check
          %p1042 = pneg %p599
        $region102: #{ctn_forward.1} parent=11 // pred_check_branch
          %1044 = sbr.rel (%p1042) target = $region104
        $region103: #{ctn_forward.1} parent=11 // pred_region
          _
        $region104: #{ctn_forward.1} parent=11 // pred_fallthru
          _
        // Predicated region
        $region105: #{ctn_forward.1} parent=11 // pred_check
          %p1045 = pneg %p620
        $region106: #{ctn_forward.1} parent=11 // pred_check_branch
          %1047 = sbr.rel (%p1045) target = $region108
        $region107: #{ctn_forward.1} parent=11 // pred_region
          _
        $region108: #{ctn_forward.1} parent=11 // pred_fallthru
          _
        // Predicated region
        $region109: #{ctn_forward.1} parent=11 // pred_check
          %p1048 = pneg %p641
        $region110: #{ctn_forward.1} parent=11 // pred_check_branch
          %1050 = sbr.rel (%p1048) target = $region112
        $region111: #{ctn_forward.1} parent=11 // pred_region
          _
        $region112: #{ctn_forward.1} parent=11 // pred_fallthru
          _
        // Predicated region
        $region113: #{ctn_forward.1} parent=11 // pred_check
          %p1051 = pneg %p662
        $region114: #{ctn_forward.1} parent=11 // pred_check_branch
          %1053 = sbr.rel (%p1051) target = $region116
        $region115: #{ctn_forward.1} parent=11 // pred_region
          _
        $region116: #{ctn_forward.1} parent=11 // pred_fallthru
          _
        // Predicated region
        $region117: #{ctn_forward.1} parent=11 // pred_check
          %p1054 = pneg %p683
        $region118: #{ctn_forward.1} parent=11 // pred_check_branch
          %1056 = sbr.rel (%p1054) target = $region120
        $region119: #{ctn_forward.1} parent=11 // pred_region
          _
        $region120: #{ctn_forward.1} parent=11 // pred_fallthru
          _
        // Predicated region
        $region121: #{ctn_forward.1} parent=11 // pred_check
          %p1057 = pneg %p704
        $region122: #{ctn_forward.1} parent=11 // pred_check_branch
          %1059 = sbr.rel (%p1057) target = $region124
        $region123: #{ctn_forward.1} parent=11 // pred_region
          _
        $region124: #{ctn_forward.1} parent=11 // pred_fallthru
          _
        // Predicated region
        $region125: #{ctn_forward.1} parent=11 // pred_check
          %p1060 = pneg %p725
        $region126: #{ctn_forward.1} parent=11 // pred_check_branch
          %1062 = sbr.rel (%p1060) target = $region128
        $region127: #{ctn_forward.1} parent=11 // pred_region
          _
        $region128: #{ctn_forward.1} parent=11 // pred_fallthru
          _
        // Predicated region
        $region129: #{ctn_forward.1} parent=11 // pred_check
          %p1063 = pneg %p746
        $region130: #{ctn_forward.1} parent=11 // pred_check_branch
          %1065 = sbr.rel (%p1063) target = $region132
        $region131: #{ctn_forward.1} parent=11 // pred_region
          _
        $region132: #{ctn_forward.1} parent=11 // pred_fallthru
          _
        // Predicated region
        $region133: #{ctn_forward.1} parent=11 // pred_check
          %p1066 = pneg %p767
        $region134: #{ctn_forward.1} parent=11 // pred_check_branch
          %1068 = sbr.rel (%p1066) target = $region136
        $region135: #{ctn_forward.1} parent=11 // pred_region
          _
        $region136: #{ctn_forward.1} parent=11 // pred_fallthru
          _
        // Predicated region
        $region137: #{ctn_forward.1} parent=11 // pred_check
          %p1069 = pneg %p788
        $region138: #{ctn_forward.1} parent=11 // pred_check_branch
          %1071 = sbr.rel (%p1069) target = $region140
        $region139: #{ctn_forward.1} parent=11 // pred_region
          _
        $region140: #{ctn_forward.1} parent=11 // pred_fallthru
          _
        // Predicated region
        $region141: #{ctn_forward.1} parent=11 // pred_check
          %p1072 = pneg %p809
        $region142: #{ctn_forward.1} parent=11 // pred_check_branch
          %1074 = sbr.rel (%p1072) target = $region144
        $region143: #{ctn_forward.1} parent=11 // pred_region
          _
        $region144: #{ctn_forward.1} parent=11 // pred_fallthru
          _
        // Predicated region
        $region145: #{ctn_forward.1} parent=11 // pred_check
          %p1075 = pneg %p830
        $region146: #{ctn_forward.1} parent=11 // pred_check_branch
          %1077 = sbr.rel (%p1075) target = $region148
        $region147: #{ctn_forward.1} parent=11 // pred_region
          _
        $region148: #{ctn_forward.1} parent=11 // pred_fallthru
          _
        // Predicated region
        $region149: #{ctn_forward.1} parent=11 // pred_check
          %p1078 = pneg %p851
        $region150: #{ctn_forward.1} parent=11 // pred_check_branch
          %1080 = sbr.rel (%p1078) target = $region152
        $region151: #{ctn_forward.1} parent=11 // pred_region
          _
        $region152: #{ctn_forward.1} parent=11 // pred_fallthru
          _
        // Predicated region
        $region153: #{ctn_forward.1} parent=11 // pred_check
          %p1081 = pneg %p872
        $region154: #{ctn_forward.1} parent=11 // pred_check_branch
          %1083 = sbr.rel (%p1081) target = $region156
        $region155: #{ctn_forward.1} parent=11 // pred_region
          _
        $region156: #{ctn_forward.1} parent=11 // pred_fallthru
          _
        // Predicated region
        $region157: #{ctn_forward.1} parent=11 // pred_check
          %p1084 = pneg %p893
        $region158: #{ctn_forward.1} parent=11 // pred_check_branch
          %1086 = sbr.rel (%p1084) target = $region160
        $region159: #{ctn_forward.1} parent=11 // pred_region
          _
        $region160: #{ctn_forward.1} parent=11 // pred_fallthru
          _
        // Predicated region
        $region161: #{ctn_forward.1} parent=11 // pred_check
          %p1087 = pneg %p914
        $region162: #{ctn_forward.1} parent=11 // pred_check_branch
          %1089 = sbr.rel (%p1087) target = $region164
        $region163: #{ctn_forward.1} parent=11 // pred_region
          _
        $region164: #{ctn_forward.1} parent=11 // pred_fallthru
          _
        // Predicated region
        $region165: #{ctn_forward.1} parent=11 // pred_check
          %p1090 = pneg %p935
        $region166: #{ctn_forward.1} parent=11 // pred_check_branch
          %1092 = sbr.rel (%p1090) target = $region168
        $region167: #{ctn_forward.1} parent=11 // pred_region
          _
        $region168: #{ctn_forward.1} parent=11 // pred_fallthru
          _
      $region12: #{ctn_forward.1} parent=5 // pred_fallthru
        _
      %p1093 = scmp.lt.s32.totalorder %s90, 2
      // Predicated region
      $region169: #{ctn_forward.1} parent=5 // pred_check
        %p1094 = pneg %p1093
      $region170: #{ctn_forward.1} parent=5 // pred_check_branch
        %1096 = sbr.rel (%p1094) target = $region172
      $region171: #{ctn_forward.1} parent=5 // pred_region
        // Predicated region
        $region173: #{ctn_forward.1} parent=171 // pred_check
          %p1097 = pneg %p110
        $region174: #{ctn_forward.1} parent=171 // pred_check_branch
          %1099 = sbr.rel (%p1097) target = $region176
        $region175: #{ctn_forward.1} parent=171 // pred_region
          %p1100 = scmp.lt.s32.totalorder %s90, 1
          %s1101 = scalar_select %p1100, %s90, 1
          %s1102 = smul.addr %s1101, 15
          %s1103 = smul.addr %s1102, 8
          %s1104 = scalar_lea.vmem %s1, %s1103
        $region176: #{ctn_forward.1} parent=171 // pred_fallthru
          _
      $region172: #{ctn_forward.1} parent=5 // pred_fallthru
        _
      %p1105 = scmp.le.s32.totalorder 1, %s90
      %p1106 = scmp.lt.s32.totalorder %s90, 3
      %p1107 = pnand %p1105, %p1106
      %p1108 = pneg %p1107
      // Predicated region
      $region177: #{ctn_forward.1} parent=5 // pred_check
        _
      $region178: #{ctn_forward.1} parent=5 // pred_check_branch
        %1110 = sbr.rel (%p1107) target = $region180
      $region179: #{ctn_forward.1} parent=5 // pred_region
        %s1111 = ssub.s32 %s90, 1
        %p1112 = scmp.lt.s32.totalorder %s95, 1
        %s1113 = scalar_select %p1112, %s95, 1
        %s1114 = smul.addr %s1113, 15
        %s1115 = smul.addr %s1114, 8
        %s1116 = scalar_lea.vmem %s1, %s1115
        %p1117 = pneg %p116
        %p1118 = pneg %p113
        %p1119 = pneg %p137
        %p1120 = pneg %p134
        %p1121 = pneg %p158
        %p1122 = pneg %p155
        %p1123 = pneg %p179
        %p1124 = pneg %p176
        %p1125 = pneg %p200
        %p1126 = pneg %p197
        %p1127 = pneg %p221
        %p1128 = pneg %p218
        %p1129 = pneg %p242
        %p1130 = pneg %p239
        %p1131 = pneg %p263
        %p1132 = pneg %p260
        %p1133 = pneg %p284
        %p1134 = pneg %p281
        %p1135 = pneg %p305
        %p1136 = pneg %p302
        %p1137 = pneg %p326
        %p1138 = pneg %p323
        %p1139 = pneg %p347
        %p1140 = pneg %p344
        %p1141 = pneg %p368
        %p1142 = pneg %p365
        %p1143 = pneg %p389
        %p1144 = pneg %p386
        %p1145 = pneg %p410
        %p1146 = pneg %p407
        %p1147 = pneg %p431
        %p1148 = pneg %p428
        %p1149 = pneg %p452
        %p1150 = pneg %p449
        %p1151 = pneg %p473
        %p1152 = pneg %p470
        %p1153 = pneg %p494
        %p1154 = pneg %p491
        %p1155 = pneg %p515
        %p1156 = pneg %p512
        %p1157 = pneg %p536
        %p1158 = pneg %p533
        %p1159 = pneg %p557
        %p1160 = pneg %p554
        %p1161 = pneg %p578
        %p1162 = pneg %p575
        %p1163 = pneg %p599
        %p1164 = pneg %p596
        %p1165 = pneg %p620
        %p1166 = pneg %p617
        %p1167 = pneg %p641
        %p1168 = pneg %p638
        %p1169 = pneg %p662
        %p1170 = pneg %p659
        %p1171 = pneg %p683
        %p1172 = pneg %p680
        %p1173 = pneg %p704
        %p1174 = pneg %p701
        %p1175 = pneg %p725
        %p1176 = pneg %p722
        %p1177 = pneg %p746
        %p1178 = pneg %p743
        %p1179 = pneg %p767
        %p1180 = pneg %p764
        %p1181 = pneg %p788
        %p1182 = pneg %p785
        %p1183 = pneg %p809
        %p1184 = pneg %p806
        %p1185 = pneg %p830
        %p1186 = pneg %p827
        %p1187 = pneg %p851
        %p1188 = pneg %p848
        %p1189 = pneg %p872
        %p1190 = pneg %p869
        %p1191 = pneg %p893
        %p1192 = pneg %p890
        %p1193 = pneg %p914
        %p1194 = pneg %p911
        %p1195 = pneg %p935
        %p1196 = pneg %p932
        %p1197 = pneg %p961
        %p1198 = pneg %p958
        %s1199 = sand.u32 %s948, 1
        %s1200 = scalar_lea.sflag [#allocation4], %s1199
        %s1201 = sand.u32 %s948, 1
        %s1202 = scalar_lea.vmem [#allocation3], %s1201
        %p1203 = scmp.lt.s32.totalorder %s95, 1
        %s1204 = scalar_select %p1203, %s95, 1
        %s1205 = smul.addr %s1204, 15
        %s1206 = smul.addr %s1205, 8
        %s1207 = scalar_lea.vmem %s1, %s1206
        %v1208 = vld [vmem:[%s3] sm:$0xff]
        %v1209 = vld [vmem:[%s1207] sm:$0xff]
        %v1210 = vld [vmem:[%s1207 + $0x8] sm:$0xff]
        %v1211 = vld [vmem:[%s1207 + $0x10] sm:$0xff]
        %v1212 = vld [vmem:[%s1207 + $0x18] sm:$0xff]
        %v1213 = vld [vmem:[%s1207 + $0x20] sm:$0xff]
        %vm1214 = vcmask 326656
        %v1216 = vsel %vm1214, %v1208, 0
        %1218 = vmatprep.subr.mxu0 0.0
        %1219 = vmatpush1.msra.mxu0 0.0
        %1220 = vmatprep.subr.mxu0 0.0
        %1221 = vmatpush1.msra.mxu0 0.0
        %1222 = vmatprep.subr.mxu0 0.0
        %1223 = vmatpush1.msra.mxu0 0.0
        %1224 = vmatprep.subr.mxu0 0.0
        %1225 = vmatpush1.msra.mxu0 0.0
        %1226 = vmatprep.subr.mxu0 0.0
        %1227 = vmatpush1.msra.mxu0 0.0
        %1228 = vmatprep.subr.mxu0 0.0
        %1229 = vmatpush1.msra.mxu0 0.0
        %1230 = vmatprep.subr.mxu0 0.0
        %1231 = vmatpush1.msra.mxu0 0.0
        %1232 = vmatprep.subr.mxu0 0.0
        %1233 = vmatpush1.msra.mxu0 0.0
        %1234 = vmatprep.subr.mxu0 0.0
        %1235 = vmatpush1.msra.mxu0 0.0
        %1236 = vmatprep.subr.mxu0 0.0
        %1237 = vmatpush1.msra.mxu0 0.0
        %1238 = vmatprep.subr.mxu0 0.0
        %1239 = vmatpush1.msra.mxu0 0.0
        %1240 = vmatprep.subr.mxu0 0.0
        %1241 = vmatpush1.msra.mxu0 %v1213
        %1242 = vmatprep.subr.mxu0 0.0
        %1243 = vmatpush1.msra.mxu0 %v1212
        %1244 = vmatprep.subr.mxu0 0.0
        %1245 = vmatpush1.msra.mxu0 %v1211
        %1246 = vmatprep.subr.mxu0 0.0
        %1247 = vmatpush1.msra.mxu0 %v1210
        %1248 = vmatprep.subr.mxu0 0.0
        %1249 = vmatpush1.msra.mxu0 %v1209
        %1250 = vmatprep.subr.mxu0 0.0
        %1251 = vmatpush2.msra.mxu0 0.0
        %1252 = vmatprep.subr.mxu0 0.0
        %1253 = vmatpush2.msra.mxu0 0.0
        %1254 = vmatprep.subr.mxu0 0.0
        %1255 = vmatpush2.msra.mxu0 0.0
        %1256 = vmatprep.subr.mxu0 0.0
        %1257 = vmatpush2.msra.mxu0 0.0
        %1258 = vmatprep.subr.mxu0 0.0
        %1259 = vmatpush2.msra.mxu0 0.0
        %1260 = vmatprep.subr.mxu0 0.0
        %1261 = vmatpush2.msra.mxu0 0.0
        %1262 = vmatprep.subr.mxu0 0.0
        %1263 = vmatpush2.msra.mxu0 0.0
        %1264 = vmatprep.subr.mxu0 0.0
        %1265 = vmatpush2.msra.mxu0 0.0
        %1266 = vmatprep.subr.mxu0 0.0
        %1267 = vmatpush2.msra.mxu0 0.0
        %1268 = vmatprep.subr.mxu0 0.0
        %1269 = vmatpush2.msra.mxu0 0.0
        %1270 = vmatprep.subr.mxu0 0.0
        %1271 = vmatpush2.msra.mxu0 0.0
        %1272 = vmatprep.subr.mxu0 0.0
        %1273 = vmatpush2.msra.mxu0 0.0
        %1274 = vmatprep.subr.mxu0 0.0
        %1275 = vmatpush2.msra.mxu0 0.0
        %1276 = vmatprep.subr.mxu0 0.0
        %1277 = vmatpush2.msra.mxu0 0.0
        %1278 = vmatprep.subr.mxu0 0.0
        %1279 = vmatpush2.msra.mxu0 0.0
        %1280 = vmatprep.subr.mxu0 0.0
        %1281 = vmatpush2.msra.mxu0 0.0
        %1282 = vmatprep.mubr.f32.mxu0 0.0
        %1283 = vmatmul.mubr.f32.gmra.mxu0 %v1216
        %v1284 = vpop.f32.mrf.mxu0
        %v1285 = vadd.f32 0.0, %v1284
        %v1286 = vpop.f32.mrf.mxu0
        %1287 = vdwg.mxu0
        %s1288 = scalar_lea.vmem %s1207, 40
        %v1289 = vld [vmem:[%s1288] sm:$0xff]
        %v1290 = vld [vmem:[%s1288 + $0x8] sm:$0xff]
        %v1291 = vld [vmem:[%s1288 + $0x10] sm:$0xff]
        %v1292 = vld [vmem:[%s1288 + $0x18] sm:$0xff]
        %v1293 = vld [vmem:[%s1288 + $0x20] sm:$0xff]
        %1294 = vmatprep.subr.mxu0 0.0
        %1295 = vmatpush1.msra.mxu0 0.0
        %1296 = vmatprep.subr.mxu0 0.0
        %1297 = vmatpush1.msra.mxu0 0.0
        %1298 = vmatprep.subr.mxu0 0.0
        %1299 = vmatpush1.msra.mxu0 0.0
        %1300 = vmatprep.subr.mxu0 0.0
        %1301 = vmatpush1.msra.mxu0 0.0
        %1302 = vmatprep.subr.mxu0 0.0
        %1303 = vmatpush1.msra.mxu0 0.0
        %1304 = vmatprep.subr.mxu0 0.0
        %1305 = vmatpush1.msra.mxu0 0.0
        %1306 = vmatprep.subr.mxu0 0.0
        %1307 = vmatpush1.msra.mxu0 0.0
        %1308 = vmatprep.subr.mxu0 0.0
        %1309 = vmatpush1.msra.mxu0 0.0
        %1310 = vmatprep.subr.mxu0 0.0
        %1311 = vmatpush1.msra.mxu0 0.0
        %1312 = vmatprep.subr.mxu0 0.0
        %1313 = vmatpush1.msra.mxu0 0.0
        %1314 = vmatprep.subr.mxu0 0.0
        %1315 = vmatpush1.msra.mxu0 0.0
        %1316 = vmatprep.subr.mxu0 0.0
        %1317 = vmatpush1.msra.mxu0 %v1293
        %1318 = vmatprep.subr.mxu0 0.0
        %1319 = vmatpush1.msra.mxu0 %v1292
        %1320 = vmatprep.subr.mxu0 0.0
        %1321 = vmatpush1.msra.mxu0 %v1291
        %1322 = vmatprep.subr.mxu0 0.0
        %1323 = vmatpush1.msra.mxu0 %v1290
        %1324 = vmatprep.subr.mxu0 0.0
        %1325 = vmatpush1.msra.mxu0 %v1289
        %1326 = vmatprep.subr.mxu0 0.0
        %1327 = vmatpush2.msra.mxu0 0.0
        %1328 = vmatprep.subr.mxu0 0.0
        %1329 = vmatpush2.msra.mxu0 0.0
        %1330 = vmatprep.subr.mxu0 0.0
        %1331 = vmatpush2.msra.mxu0 0.0
        %1332 = vmatprep.subr.mxu0 0.0
        %1333 = vmatpush2.msra.mxu0 0.0
        %1334 = vmatprep.subr.mxu0 0.0
        %1335 = vmatpush2.msra.mxu0 0.0
        %1336 = vmatprep.subr.mxu0 0.0
        %1337 = vmatpush2.msra.mxu0 0.0
        %1338 = vmatprep.subr.mxu0 0.0
        %1339 = vmatpush2.msra.mxu0 0.0
        %1340 = vmatprep.subr.mxu0 0.0
        %1341 = vmatpush2.msra.mxu0 0.0
        %1342 = vmatprep.subr.mxu0 0.0
        %1343 = vmatpush2.msra.mxu0 0.0
        %1344 = vmatprep.subr.mxu0 0.0
        %1345 = vmatpush2.msra.mxu0 0.0
        %1346 = vmatprep.subr.mxu0 0.0
        %1347 = vmatpush2.msra.mxu0 0.0
        %1348 = vmatprep.subr.mxu0 0.0
        %1349 = vmatpush2.msra.mxu0 0.0
        %1350 = vmatprep.subr.mxu0 0.0
        %1351 = vmatpush2.msra.mxu0 0.0
        %1352 = vmatprep.subr.mxu0 0.0
        %1353 = vmatpush2.msra.mxu0 0.0
        %1354 = vmatprep.subr.mxu0 0.0
        %1355 = vmatpush2.msra.mxu0 0.0
        %1356 = vmatprep.subr.mxu0 0.0
        %1357 = vmatpush2.msra.mxu0 0.0
        %1358 = vmatprep.mubr.f32.mxu0 0.0
        %1359 = vmatmul.mubr.f32.gmra.mxu0 %v1216
        %v1360 = vpop.f32.mrf.mxu0
        %v1361 = vadd.f32 0.0, %v1360
        %v1362 = vpop.f32.mrf.mxu0
        %1363 = vdwg.mxu0
        %v1364 = vmax.f32 %v1285, %v1361
        %s1365 = scalar_lea.vmem %s1207, 80
        %v1366 = vld [vmem:[%s1365] sm:$0xff]
        %v1367 = vld [vmem:[%s1365 + $0x8] sm:$0xff]
        %v1368 = vld [vmem:[%s1365 + $0x10] sm:$0xff]
        %v1369 = vld [vmem:[%s1365 + $0x18] sm:$0xff]
        %v1370 = vld [vmem:[%s1365 + $0x20] sm:$0xff]
        %1371 = vmatprep.subr.mxu0 0.0
        %1372 = vmatpush1.msra.mxu0 0.0
        %1373 = vmatprep.subr.mxu0 0.0
        %1374 = vmatpush1.msra.mxu0 0.0
        %1375 = vmatprep.subr.mxu0 0.0
        %1376 = vmatpush1.msra.mxu0 0.0
        %1377 = vmatprep.subr.mxu0 0.0
        %1378 = vmatpush1.msra.mxu0 0.0
        %1379 = vmatprep.subr.mxu0 0.0
        %1380 = vmatpush1.msra.mxu0 0.0
        %1381 = vmatprep.subr.mxu0 0.0
        %1382 = vmatpush1.msra.mxu0 0.0
        %1383 = vmatprep.subr.mxu0 0.0
        %1384 = vmatpush1.msra.mxu0 0.0
        %1385 = vmatprep.subr.mxu0 0.0
        %1386 = vmatpush1.msra.mxu0 0.0
        %1387 = vmatprep.subr.mxu0 0.0
        %1388 = vmatpush1.msra.mxu0 0.0
        %1389 = vmatprep.subr.mxu0 0.0
        %1390 = vmatpush1.msra.mxu0 0.0
        %1391 = vmatprep.subr.mxu0 0.0
        %1392 = vmatpush1.msra.mxu0 0.0
        %1393 = vmatprep.subr.mxu0 0.0
        %1394 = vmatpush1.msra.mxu0 %v1370
        %1395 = vmatprep.subr.mxu0 0.0
        %1396 = vmatpush1.msra.mxu0 %v1369
        %1397 = vmatprep.subr.mxu0 0.0
        %1398 = vmatpush1.msra.mxu0 %v1368
        %1399 = vmatprep.subr.mxu0 0.0
        %1400 = vmatpush1.msra.mxu0 %v1367
        %1401 = vmatprep.subr.mxu0 0.0
        %1402 = vmatpush1.msra.mxu0 %v1366
        %1403 = vmatprep.subr.mxu0 0.0
        %1404 = vmatpush2.msra.mxu0 0.0
        %1405 = vmatprep.subr.mxu0 0.0
        %1406 = vmatpush2.msra.mxu0 0.0
        %1407 = vmatprep.subr.mxu0 0.0
        %1408 = vmatpush2.msra.mxu0 0.0
        %1409 = vmatprep.subr.mxu0 0.0
        %1410 = vmatpush2.msra.mxu0 0.0
        %1411 = vmatprep.subr.mxu0 0.0
        %1412 = vmatpush2.msra.mxu0 0.0
        %1413 = vmatprep.subr.mxu0 0.0
        %1414 = vmatpush2.msra.mxu0 0.0
        %1415 = vmatprep.subr.mxu0 0.0
        %1416 = vmatpush2.msra.mxu0 0.0
        %1417 = vmatprep.subr.mxu0 0.0
        %1418 = vmatpush2.msra.mxu0 0.0
        %1419 = vmatprep.subr.mxu0 0.0
        %1420 = vmatpush2.msra.mxu0 0.0
        %1421 = vmatprep.subr.mxu0 0.0
        %1422 = vmatpush2.msra.mxu0 0.0
        %1423 = vmatprep.subr.mxu0 0.0
        %1424 = vmatpush2.msra.mxu0 0.0
        %1425 = vmatprep.subr.mxu0 0.0
        %1426 = vmatpush2.msra.mxu0 0.0
        %1427 = vmatprep.subr.mxu0 0.0
        %1428 = vmatpush2.msra.mxu0 0.0
        %1429 = vmatprep.subr.mxu0 0.0
        %1430 = vmatpush2.msra.mxu0 0.0
        %1431 = vmatprep.subr.mxu0 0.0
        %1432 = vmatpush2.msra.mxu0 0.0
        %1433 = vmatprep.subr.mxu0 0.0
        %1434 = vmatpush2.msra.mxu0 0.0
        %1435 = vmatprep.mubr.f32.mxu0 0.0
        %1436 = vmatmul.mubr.f32.gmra.mxu0 %v1216
        %v1437 = vpop.f32.mrf.mxu0
        %v1438 = vadd.f32 0.0, %v1437
        %v1439 = vpop.f32.mrf.mxu0
        %1440 = vdwg.mxu0
        %v1441 = vmax.f32 %v1364, %v1438
        %v1442 = vld [vmem:[%s5] sm:$0xff]
        %1444 = vset.pattern.permute.xlu0 0
        %1445 = vperm.xlu0 %1444, %v1442
        %v1446 = vpop.permute.xlu0 %1445
        %v1448 = vadd.f32 %v1441, %v1446
        %vm1449 = vcmp.gt.f32.partialorder %v1448, 0.0
        %v1450 = vmin.f32 %v1448, 0.0
        %v1451 = vmul.f32 %v1450, 1.442695
        %v1452 = vpow.pop %v1451
        %v1453 = vsub.f32 %v1452, 1.0
        %v1454 = vsel %vm1449, %v1448, %v1453
        %1455 = vset.pattern.permute.xlu0 1
        %1456 = vperm.xlu0 %1455, %v1442
        %v1457 = vpop.permute.xlu0 %1456
        %v1459 = vmul.f32 %v1454, %v1457
        %1460 = vset.pattern.permute.xlu0 2
        %1461 = vperm.xlu0 %1460, %v1442
        %v1462 = vpop.permute.xlu0 %1461
        %v1464 = vadd.f32 %v1459, %v1462
        %v1465 = vld [vmem:[%s7] sm:$0xff]
        %v1466 = vld [vmem:[%s7 + $0x8] sm:$0xff]
        %v1467 = vld [vmem:[%s7 + $0x10] sm:$0xff]
        %v1468 = vld [vmem:[%s7 + $0x18] sm:$0xff]
        %vm1469 = vcmask 261120
        %v1471 = vsel %vm1469, %v1464, 0
        %1473 = vmatprep.subr.mxu0 0.0
        %1474 = vmatpush1.msra.mxu0 0.0
        %1475 = vmatprep.subr.mxu0 0.0
        %1476 = vmatpush1.msra.mxu0 0.0
        %1477 = vmatprep.subr.mxu0 0.0
        %1478 = vmatpush1.msra.mxu0 0.0
        %1479 = vmatprep.subr.mxu0 0.0
        %1480 = vmatpush1.msra.mxu0 0.0
        %1481 = vmatprep.subr.mxu0 0.0
        %1482 = vmatpush1.msra.mxu0 0.0
        %1483 = vmatprep.subr.mxu0 0.0
        %1484 = vmatpush1.msra.mxu0 0.0
        %1485 = vmatprep.subr.mxu0 0.0
        %1486 = vmatpush1.msra.mxu0 0.0
        %1487 = vmatprep.subr.mxu0 0.0
        %1488 = vmatpush1.msra.mxu0 0.0
        %1489 = vmatprep.subr.mxu0 0.0
        %1490 = vmatpush1.msra.mxu0 0.0
        %1491 = vmatprep.subr.mxu0 0.0
        %1492 = vmatpush1.msra.mxu0 0.0
        %1493 = vmatprep.subr.mxu0 0.0
        %1494 = vmatpush1.msra.mxu0 0.0
        %1495 = vmatprep.subr.mxu0 0.0
        %1496 = vmatpush1.msra.mxu0 0.0
        %1497 = vmatprep.subr.mxu0 0.0
        %1498 = vmatpush1.msra.mxu0 %v1468
        %1499 = vmatprep.subr.mxu0 0.0
        %1500 = vmatpush1.msra.mxu0 %v1467
        %1501 = vmatprep.subr.mxu0 0.0
        %1502 = vmatpush1.msra.mxu0 %v1466
        %1503 = vmatprep.subr.mxu0 0.0
        %1504 = vmatpush1.msra.mxu0 %v1465
        %1505 = vmatprep.subr.mxu0 0.0
        %1506 = vmatpush2.msra.mxu0 0.0
        %1507 = vmatprep.subr.mxu0 0.0
        %1508 = vmatpush2.msra.mxu0 0.0
        %1509 = vmatprep.subr.mxu0 0.0
        %1510 = vmatpush2.msra.mxu0 0.0
        %1511 = vmatprep.subr.mxu0 0.0
        %1512 = vmatpush2.msra.mxu0 0.0
        %1513 = vmatprep.subr.mxu0 0.0
        %1514 = vmatpush2.msra.mxu0 0.0
        %1515 = vmatprep.subr.mxu0 0.0
        %1516 = vmatpush2.msra.mxu0 0.0
        %1517 = vmatprep.subr.mxu0 0.0
        %1518 = vmatpush2.msra.mxu0 0.0
        %1519 = vmatprep.subr.mxu0 0.0
        %1520 = vmatpush2.msra.mxu0 0.0
        %1521 = vmatprep.subr.mxu0 0.0
        %1522 = vmatpush2.msra.mxu0 0.0
        %1523 = vmatprep.subr.mxu0 0.0
        %1524 = vmatpush2.msra.mxu0 0.0
        %1525 = vmatprep.subr.mxu0 0.0
        %1526 = vmatpush2.msra.mxu0 0.0
        %1527 = vmatprep.subr.mxu0 0.0
        %1528 = vmatpush2.msra.mxu0 0.0
        %1529 = vmatprep.subr.mxu0 0.0
        %1530 = vmatpush2.msra.mxu0 0.0
        %1531 = vmatprep.subr.mxu0 0.0
        %1532 = vmatpush2.msra.mxu0 0.0
        %1533 = vmatprep.subr.mxu0 0.0
        %1534 = vmatpush2.msra.mxu0 0.0
        %1535 = vmatprep.subr.mxu0 0.0
        %1536 = vmatpush2.msra.mxu0 0.0
        %1537 = vmatprep.mubr.f32.mxu0 0.0
        %1538 = vmatmul.mubr.f32.gmra.mxu0 %v1471
        %v1539 = vpop.f32.mrf.mxu0
        %v1540 = vadd.f32 0.0, %v1539
        %v1541 = vpop.f32.mrf.mxu0
        %1542 = vdwg.mxu0
        %v1543 = vld [vmem:[%s9] sm:$0xff]
        %v1544 = vld [vmem:[%s9 + $0x8] sm:$0xff]
        %v1545 = vld [vmem:[%s9 + $0x10] sm:$0xff]
        %v1546 = vld [vmem:[%s9 + $0x18] sm:$0xff]
        %v1547 = vld [vmem:[%s11] sm:$0x1]
        %v1549 = vlaneseq
        %v1550 = vshrl.u32 %v1549, 7
        %v1551 = vsub.s32 0, %v1550
        %v1552 = vrot.slane %v1547, %v1551
        %1554 = vmatprep.subr.mxu0 0.0
        %1555 = vmatpush1.msra.mxu0 0.0
        %1556 = vmatprep.subr.mxu0 0.0
        %1557 = vmatpush1.msra.mxu0 0.0
        %1558 = vmatprep.subr.mxu0 0.0
        %1559 = vmatpush1.msra.mxu0 0.0
        %1560 = vmatprep.subr.mxu0 0.0
        %1561 = vmatpush1.msra.mxu0 0.0
        %1562 = vmatprep.subr.mxu0 0.0
        %1563 = vmatpush1.msra.mxu0 0.0
        %1564 = vmatprep.subr.mxu0 0.0
        %1565 = vmatpush1.msra.mxu0 0.0
        %1566 = vmatprep.subr.mxu0 0.0
        %1567 = vmatpush1.msra.mxu0 0.0
        %1568 = vmatprep.subr.mxu0 0.0
        %1569 = vmatpush1.msra.mxu0 0.0
        %1570 = vmatprep.subr.mxu0 0.0
        %1571 = vmatpush1.msra.mxu0 0.0
        %1572 = vmatprep.subr.mxu0 0.0
        %1573 = vmatpush1.msra.mxu0 0.0
        %1574 = vmatprep.subr.mxu0 0.0
        %1575 = vmatpush1.msra.mxu0 0.0
        %1576 = vmatprep.subr.mxu0 0.0
        %1577 = vmatpush1.msra.mxu0 0.0
        %1578 = vmatprep.subr.mxu0 0.0
        %1579 = vmatpush1.msra.mxu0 %v1546
        %1580 = vmatprep.subr.mxu0 0.0
        %1581 = vmatpush1.msra.mxu0 %v1545
        %1582 = vmatprep.subr.mxu0 0.0
        %1583 = vmatpush1.msra.mxu0 %v1544
        %1584 = vmatprep.subr.mxu0 0.0
        %1585 = vmatpush1.msra.mxu0 %v1543
        %1586 = vmatprep.subr.mxu0 0.0
        %1587 = vmatpush2.msra.mxu0 0.0
        %1588 = vmatprep.subr.mxu0 0.0
        %1589 = vmatpush2.msra.mxu0 0.0
        %1590 = vmatprep.subr.mxu0 0.0
        %1591 = vmatpush2.msra.mxu0 0.0
        %1592 = vmatprep.subr.mxu0 0.0
        %1593 = vmatpush2.msra.mxu0 0.0
        %1594 = vmatprep.subr.mxu0 0.0
        %1595 = vmatpush2.msra.mxu0 0.0
        %1596 = vmatprep.subr.mxu0 0.0
        %1597 = vmatpush2.msra.mxu0 0.0
        %1598 = vmatprep.subr.mxu0 0.0
        %1599 = vmatpush2.msra.mxu0 0.0
        %1600 = vmatprep.subr.mxu0 0.0
        %1601 = vmatpush2.msra.mxu0 0.0
        %1602 = vmatprep.subr.mxu0 0.0
        %1603 = vmatpush2.msra.mxu0 0.0
        %1604 = vmatprep.subr.mxu0 0.0
        %1605 = vmatpush2.msra.mxu0 0.0
        %1606 = vmatprep.subr.mxu0 0.0
        %1607 = vmatpush2.msra.mxu0 0.0
        %1608 = vmatprep.subr.mxu0 0.0
        %1609 = vmatpush2.msra.mxu0 0.0
        %1610 = vmatprep.subr.mxu0 0.0
        %1611 = vmatpush2.msra.mxu0 0.0
        %1612 = vmatprep.subr.mxu0 0.0
        %1613 = vmatpush2.msra.mxu0 0.0
        %1614 = vmatprep.subr.mxu0 0.0
        %1615 = vmatpush2.msra.mxu0 0.0
        %1616 = vmatprep.subr.mxu0 0.0
        %1617 = vmatpush2.msra.mxu0 0.0
        %1618 = vmatprep.mubr.f32.mxu0 0.0
        %1619 = vmatmul.mubr.f32.gmra.mxu0 %v1471
        %v1620 = vpop.f32.mrf.mxu0
        %v1621 = vadd.f32 %v1552, %v1620
        %v1622 = vpop.f32.mrf.mxu0
        %1623 = vdwg.mxu0
        %1625 = vrot.lane.b32.xlu0 %v1621, 96
        %v1626 = vpop.permute.xlu0 %1625
        %vm1627 = vcmask 64512
        %v1628 = vsel %vm1627, %v1621, 0
        %v1630 = vsel %vm1627, %v1626, 0
        %1632 = vmatprep.subr.mxu0 0.0
        %1633 = vmatpush1.xpose.msra.mxu0 0.0
        %1634 = vmatprep.subr.mxu0 0.0
        %1635 = vmatpush1.xpose.msra.mxu0 0.0
        %1636 = vmatprep.subr.mxu0 0.0
        %1637 = vmatpush1.xpose.msra.mxu0 0.0
        %1638 = vmatprep.subr.mxu0 0.0
        %1639 = vmatpush1.xpose.msra.mxu0 0.0
        %1640 = vmatprep.subr.mxu0 0.0
        %1641 = vmatpush1.xpose.msra.mxu0 0.0
        %1642 = vmatprep.subr.mxu0 0.0
        %1643 = vmatpush1.xpose.msra.mxu0 0.0
        %1644 = vmatprep.subr.mxu0 0.0
        %1645 = vmatpush1.xpose.msra.mxu0 0.0
        %1646 = vmatprep.subr.mxu0 0.0
        %1647 = vmatpush1.xpose.msra.mxu0 0.0
        %1648 = vmatprep.subr.mxu0 0.0
        %1649 = vmatpush1.xpose.msra.mxu0 0.0
        %1650 = vmatprep.subr.mxu0 0.0
        %1651 = vmatpush1.xpose.msra.mxu0 0.0
        %1652 = vmatprep.subr.mxu0 0.0
        %1653 = vmatpush1.xpose.msra.mxu0 0.0
        %1654 = vmatprep.subr.mxu0 0.0
        %1655 = vmatpush1.xpose.msra.mxu0 0.0
        %1656 = vmatprep.subr.mxu0 0.0
        %1657 = vmatpush1.xpose.msra.mxu0 0.0
        %1658 = vmatprep.subr.mxu0 0.0
        %1659 = vmatpush1.xpose.msra.mxu0 0.0
        %1660 = vmatprep.subr.mxu0 0.0
        %1661 = vmatpush1.xpose.msra.mxu0 0.0
        %1662 = vmatprep.subr.mxu0 0.0
        %1663 = vmatpush1.xpose.msra.mxu0 %v1630
        %1664 = vmatprep.subr.mxu0 0.0
        %1665 = vmatpush2.xpose.msra.mxu0 0.0
        %1666 = vmatprep.subr.mxu0 0.0
        %1667 = vmatpush2.xpose.msra.mxu0 0.0
        %1668 = vmatprep.subr.mxu0 0.0
        %1669 = vmatpush2.xpose.msra.mxu0 0.0
        %1670 = vmatprep.subr.mxu0 0.0
        %1671 = vmatpush2.xpose.msra.mxu0 0.0
        %1672 = vmatprep.subr.mxu0 0.0
        %1673 = vmatpush2.xpose.msra.mxu0 0.0
        %1674 = vmatprep.subr.mxu0 0.0
        %1675 = vmatpush2.xpose.msra.mxu0 0.0
        %1676 = vmatprep.subr.mxu0 0.0
        %1677 = vmatpush2.xpose.msra.mxu0 0.0
        %1678 = vmatprep.subr.mxu0 0.0
        %1679 = vmatpush2.xpose.msra.mxu0 0.0
        %1680 = vmatprep.subr.mxu0 0.0
        %1681 = vmatpush2.xpose.msra.mxu0 0.0
        %1682 = vmatprep.subr.mxu0 0.0
        %1683 = vmatpush2.xpose.msra.mxu0 0.0
        %1684 = vmatprep.subr.mxu0 0.0
        %1685 = vmatpush2.xpose.msra.mxu0 0.0
        %1686 = vmatprep.subr.mxu0 0.0
        %1687 = vmatpush2.xpose.msra.mxu0 0.0
        %1688 = vmatprep.subr.mxu0 0.0
        %1689 = vmatpush2.xpose.msra.mxu0 0.0
        %1690 = vmatprep.subr.mxu0 0.0
        %1691 = vmatpush2.xpose.msra.mxu0 0.0
        %1692 = vmatprep.subr.mxu0 0.0
        %1693 = vmatpush2.xpose.msra.mxu0 0.0
        %1694 = vmatprep.subr.mxu0 0.0
        %1695 = vmatpush2.xpose.msra.mxu0 0.0
        %1696 = vmatprep.mubr.f32.mxu0 0.0
        %1697 = vmatmul.mubr.f32.gmra.mxu0 %v1628
        %v1698 = vpop.f32.mrf.mxu0
        %v1699 = vadd.f32 0.0, %v1698
        %v1700 = vpop.f32.mrf.mxu0
        %1701 = vdwg.mxu0
        %v1702 = vmul.f32 %v1699, 0.35355338
        %v1703 = vsel %vm1627, %v1702, -inf
        %1704 = vmax.xlane.f32.xlu0 %v1703
        %v1705 = vpop.xlane.xlu0 %1704
        %v1706 = vsub.f32 %v1702, %v1705
        %v1707 = vmul.f32 %v1706, 1.442695
        %v1708 = vpow.pop %v1707
        %v1709 = vsel %vm1627, %v1708, 0.0
        %1710 = vadd.xlane.f32.xlu0 %v1709
        %v1711 = vpop.xlane.xlu0 %1710
        %v1712 = vrcp.pop %v1711
        %v1713 = vmul.f32 %v1708, %v1712
        %1714 = vrot.lane.b32.xlu0 %v1621, 64
        %v1715 = vpop.permute.xlu0 %1714
        %v1718 = vsel %vm1627, %v1713, 0
        %1720 = vmatprep.subr.mxu0 0.0
        %1721 = vmatpush1.msra.mxu0 0.0
        %1722 = vmatprep.subr.mxu0 0.0
        %1723 = vmatpush1.msra.mxu0 0.0
        %1724 = vmatprep.subr.mxu0 0.0
        %1725 = vmatpush1.msra.mxu0 0.0
        %1726 = vmatprep.subr.mxu0 0.0
        %1727 = vmatpush1.msra.mxu0 0.0
        %1728 = vmatprep.subr.mxu0 0.0
        %1729 = vmatpush1.msra.mxu0 0.0
        %1730 = vmatprep.subr.mxu0 0.0
        %1731 = vmatpush1.msra.mxu0 0.0
        %1732 = vmatprep.subr.mxu0 0.0
        %1733 = vmatpush1.msra.mxu0 0.0
        %1734 = vmatprep.subr.mxu0 0.0
        %1735 = vmatpush1.msra.mxu0 0.0
        %1736 = vmatprep.subr.mxu0 0.0
        %1737 = vmatpush1.msra.mxu0 0.0
        %1738 = vmatprep.subr.mxu0 0.0
        %1739 = vmatpush1.msra.mxu0 0.0
        %1740 = vmatprep.subr.mxu0 0.0
        %1741 = vmatpush1.msra.mxu0 0.0
        %1742 = vmatprep.subr.mxu0 0.0
        %1743 = vmatpush1.msra.mxu0 0.0
        %1744 = vmatprep.subr.mxu0 0.0
        %1745 = vmatpush1.msra.mxu0 0.0
        %1746 = vmatprep.subr.mxu0 0.0
        %1747 = vmatpush1.msra.mxu0 0.0
        %1748 = vmatprep.subr.mxu0 0.0
        %1749 = vmatpush1.msra.mxu0 0.0
        %1750 = vmatprep.subr.mxu0 0.0
        %1751 = vmatpush1.msra.mxu0 %v1715
        %1752 = vmatprep.subr.mxu0 0.0
        %1753 = vmatpush2.msra.mxu0 0.0
        %1754 = vmatprep.subr.mxu0 0.0
        %1755 = vmatpush2.msra.mxu0 0.0
        %1756 = vmatprep.subr.mxu0 0.0
        %1757 = vmatpush2.msra.mxu0 0.0
        %1758 = vmatprep.subr.mxu0 0.0
        %1759 = vmatpush2.msra.mxu0 0.0
        %1760 = vmatprep.subr.mxu0 0.0
        %1761 = vmatpush2.msra.mxu0 0.0
        %1762 = vmatprep.subr.mxu0 0.0
        %1763 = vmatpush2.msra.mxu0 0.0
        %1764 = vmatprep.subr.mxu0 0.0
        %1765 = vmatpush2.msra.mxu0 0.0
        %1766 = vmatprep.subr.mxu0 0.0
        %1767 = vmatpush2.msra.mxu0 0.0
        %1768 = vmatprep.subr.mxu0 0.0
        %1769 = vmatpush2.msra.mxu0 0.0
        %1770 = vmatprep.subr.mxu0 0.0
        %1771 = vmatpush2.msra.mxu0 0.0
        %1772 = vmatprep.subr.mxu0 0.0
        %1773 = vmatpush2.msra.mxu0 0.0
        %1774 = vmatprep.subr.mxu0 0.0
        %1775 = vmatpush2.msra.mxu0 0.0
        %1776 = vmatprep.subr.mxu0 0.0
        %1777 = vmatpush2.msra.mxu0 0.0
        %1778 = vmatprep.subr.mxu0 0.0
        %1779 = vmatpush2.msra.mxu0 0.0
        %1780 = vmatprep.subr.mxu0 0.0
        %1781 = vmatpush2.msra.mxu0 0.0
        %1782 = vmatprep.subr.mxu0 0.0
        %1783 = vmatpush2.msra.mxu0 0.0
        %1784 = vmatprep.mubr.f32.mxu0 0.0
        %1785 = vmatmul.mubr.f32.gmra.mxu0 %v1718
        %v1786 = vpop.f32.mrf.mxu0
        %v1787 = vadd.f32 0.0, %v1786
        %v1788 = vpop.f32.mrf.mxu0
        %1789 = vdwg.mxu0
        %v1790 = vld [vmem:[%s13] sm:$0xff]
        %1791 = vrot.lane.b32.xlu0 %v1621, 120
        %v1792 = vpop.permute.xlu0 %1791
        %1793 = vrot.lane.b32.xlu0 %v1621, 88
        %v1794 = vpop.permute.xlu0 %1793
        %v1795 = vsel %vm1627, %v1792, 0
        %v1797 = vsel %vm1627, %v1794, 0
        %1799 = vmatprep.subr.mxu0 0.0
        %1800 = vmatpush1.xpose.msra.mxu0 0.0
        %1801 = vmatprep.subr.mxu0 0.0
        %1802 = vmatpush1.xpose.msra.mxu0 0.0
        %1803 = vmatprep.subr.mxu0 0.0
        %1804 = vmatpush1.xpose.msra.mxu0 0.0
        %1805 = vmatprep.subr.mxu0 0.0
        %1806 = vmatpush1.xpose.msra.mxu0 0.0
        %1807 = vmatprep.subr.mxu0 0.0
        %1808 = vmatpush1.xpose.msra.mxu0 0.0
        %1809 = vmatprep.subr.mxu0 0.0
        %1810 = vmatpush1.xpose.msra.mxu0 0.0
        %1811 = vmatprep.subr.mxu0 0.0
        %1812 = vmatpush1.xpose.msra.mxu0 0.0
        %1813 = vmatprep.subr.mxu0 0.0
        %1814 = vmatpush1.xpose.msra.mxu0 0.0
        %1815 = vmatprep.subr.mxu0 0.0
        %1816 = vmatpush1.xpose.msra.mxu0 0.0
        %1817 = vmatprep.subr.mxu0 0.0
        %1818 = vmatpush1.xpose.msra.mxu0 0.0
        %1819 = vmatprep.subr.mxu0 0.0
        %1820 = vmatpush1.xpose.msra.mxu0 0.0
        %1821 = vmatprep.subr.mxu0 0.0
        %1822 = vmatpush1.xpose.msra.mxu0 0.0
        %1823 = vmatprep.subr.mxu0 0.0
        %1824 = vmatpush1.xpose.msra.mxu0 0.0
        %1825 = vmatprep.subr.mxu0 0.0
        %1826 = vmatpush1.xpose.msra.mxu0 0.0
        %1827 = vmatprep.subr.mxu0 0.0
        %1828 = vmatpush1.xpose.msra.mxu0 0.0
        %1829 = vmatprep.subr.mxu0 0.0
        %1830 = vmatpush1.xpose.msra.mxu0 %v1797
        %1831 = vmatprep.subr.mxu0 0.0
        %1832 = vmatpush2.xpose.msra.mxu0 0.0
        %1833 = vmatprep.subr.mxu0 0.0
        %1834 = vmatpush2.xpose.msra.mxu0 0.0
        %1835 = vmatprep.subr.mxu0 0.0
        %1836 = vmatpush2.xpose.msra.mxu0 0.0
        %1837 = vmatprep.subr.mxu0 0.0
        %1838 = vmatpush2.xpose.msra.mxu0 0.0
        %1839 = vmatprep.subr.mxu0 0.0
        %1840 = vmatpush2.xpose.msra.mxu0 0.0
        %1841 = vmatprep.subr.mxu0 0.0
        %1842 = vmatpush2.xpose.msra.mxu0 0.0
        %1843 = vmatprep.subr.mxu0 0.0
        %1844 = vmatpush2.xpose.msra.mxu0 0.0
        %1845 = vmatprep.subr.mxu0 0.0
        %1846 = vmatpush2.xpose.msra.mxu0 0.0
        %1847 = vmatprep.subr.mxu0 0.0
        %1848 = vmatpush2.xpose.msra.mxu0 0.0
        %1849 = vmatprep.subr.mxu0 0.0
        %1850 = vmatpush2.xpose.msra.mxu0 0.0
        %1851 = vmatprep.subr.mxu0 0.0
        %1852 = vmatpush2.xpose.msra.mxu0 0.0
        %1853 = vmatprep.subr.mxu0 0.0
        %1854 = vmatpush2.xpose.msra.mxu0 0.0
        %1855 = vmatprep.subr.mxu0 0.0
        %1856 = vmatpush2.xpose.msra.mxu0 0.0
        %1857 = vmatprep.subr.mxu0 0.0
        %1858 = vmatpush2.xpose.msra.mxu0 0.0
        %1859 = vmatprep.subr.mxu0 0.0
        %1860 = vmatpush2.xpose.msra.mxu0 0.0
        %1861 = vmatprep.subr.mxu0 0.0
        %1862 = vmatpush2.xpose.msra.mxu0 0.0
        %1863 = vmatprep.mubr.f32.mxu0 0.0
        %1864 = vmatmul.mubr.f32.gmra.mxu0 %v1795
        %v1865 = vpop.f32.mrf.mxu0
        %v1866 = vadd.f32 0.0, %v1865
        %v1867 = vpop.f32.mrf.mxu0
        %1868 = vdwg.mxu0
        %v1869 = vmul.f32 %v1866, 0.35355338
        %v1870 = vsel %vm1627, %v1869, -inf
        %1871 = vmax.xlane.f32.xlu0 %v1870
        %v1872 = vpop.xlane.xlu0 %1871
        %v1873 = vsub.f32 %v1869, %v1872
        %v1874 = vmul.f32 %v1873, 1.442695
        %v1875 = vpow.pop %v1874
        %v1876 = vsel %vm1627, %v1875, 0.0
        %1877 = vadd.xlane.f32.xlu0 %v1876
        %v1878 = vpop.xlane.xlu0 %1877
        %v1879 = vrcp.pop %v1878
        %v1880 = vmul.f32 %v1875, %v1879
        %1881 = vrot.lane.b32.xlu0 %v1621, 56
        %v1882 = vpop.permute.xlu0 %1881
        %v1885 = vsel %vm1627, %v1880, 0
        %1887 = vmatprep.subr.mxu0 0.0
        %1888 = vmatpush1.msra.mxu0 0.0
        %1889 = vmatprep.subr.mxu0 0.0
        %1890 = vmatpush1.msra.mxu0 0.0
        %1891 = vmatprep.subr.mxu0 0.0
        %1892 = vmatpush1.msra.mxu0 0.0
        %1893 = vmatprep.subr.mxu0 0.0
        %1894 = vmatpush1.msra.mxu0 0.0
        %1895 = vmatprep.subr.mxu0 0.0
        %1896 = vmatpush1.msra.mxu0 0.0
        %1897 = vmatprep.subr.mxu0 0.0
        %1898 = vmatpush1.msra.mxu0 0.0
        %1899 = vmatprep.subr.mxu0 0.0
        %1900 = vmatpush1.msra.mxu0 0.0
        %1901 = vmatprep.subr.mxu0 0.0
        %1902 = vmatpush1.msra.mxu0 0.0
        %1903 = vmatprep.subr.mxu0 0.0
        %1904 = vmatpush1.msra.mxu0 0.0
        %1905 = vmatprep.subr.mxu0 0.0
        %1906 = vmatpush1.msra.mxu0 0.0
        %1907 = vmatprep.subr.mxu0 0.0
        %1908 = vmatpush1.msra.mxu0 0.0
        %1909 = vmatprep.subr.mxu0 0.0
        %1910 = vmatpush1.msra.mxu0 0.0
        %1911 = vmatprep.subr.mxu0 0.0
        %1912 = vmatpush1.msra.mxu0 0.0
        %1913 = vmatprep.subr.mxu0 0.0
        %1914 = vmatpush1.msra.mxu0 0.0
        %1915 = vmatprep.subr.mxu0 0.0
        %1916 = vmatpush1.msra.mxu0 0.0
        %1917 = vmatprep.subr.mxu0 0.0
        %1918 = vmatpush1.msra.mxu0 %v1882
        %1919 = vmatprep.subr.mxu0 0.0
        %1920 = vmatpush2.msra.mxu0 0.0
        %1921 = vmatprep.subr.mxu0 0.0
        %1922 = vmatpush2.msra.mxu0 0.0
        %1923 = vmatprep.subr.mxu0 0.0
        %1924 = vmatpush2.msra.mxu0 0.0
        %1925 = vmatprep.subr.mxu0 0.0
        %1926 = vmatpush2.msra.mxu0 0.0
        %1927 = vmatprep.subr.mxu0 0.0
        %1928 = vmatpush2.msra.mxu0 0.0
        %1929 = vmatprep.subr.mxu0 0.0
        %1930 = vmatpush2.msra.mxu0 0.0
        %1931 = vmatprep.subr.mxu0 0.0
        %1932 = vmatpush2.msra.mxu0 0.0
        %1933 = vmatprep.subr.mxu0 0.0
        %1934 = vmatpush2.msra.mxu0 0.0
        %1935 = vmatprep.subr.mxu0 0.0
        %1936 = vmatpush2.msra.mxu0 0.0
        %1937 = vmatprep.subr.mxu0 0.0
        %1938 = vmatpush2.msra.mxu0 0.0
        %1939 = vmatprep.subr.mxu0 0.0
        %1940 = vmatpush2.msra.mxu0 0.0
        %1941 = vmatprep.subr.mxu0 0.0
        %1942 = vmatpush2.msra.mxu0 0.0
        %1943 = vmatprep.subr.mxu0 0.0
        %1944 = vmatpush2.msra.mxu0 0.0
        %1945 = vmatprep.subr.mxu0 0.0
        %1946 = vmatpush2.msra.mxu0 0.0
        %1947 = vmatprep.subr.mxu0 0.0
        %1948 = vmatpush2.msra.mxu0 0.0
        %1949 = vmatprep.subr.mxu0 0.0
        %1950 = vmatpush2.msra.mxu0 0.0
        %1951 = vmatprep.mubr.f32.mxu0 0.0
        %1952 = vmatmul.mubr.f32.gmra.mxu0 %v1885
        %v1953 = vpop.f32.mrf.mxu0
        %v1954 = vadd.f32 0.0, %v1953
        %v1955 = vpop.f32.mrf.mxu0
        %1956 = vdwg.mxu0
        %v1957 = vld [vmem:[%s13 + $0x8] sm:$0xff]
        %v1959 = vsel %vm1627, %v1954, 0
        %1961 = vmatprep.subr.mxu0 0.0
        %1962 = vmatpush1.msra.mxu0 0.0
        %1963 = vmatprep.subr.mxu0 0.0
        %1964 = vmatpush1.msra.mxu0 0.0
        %1965 = vmatprep.subr.mxu0 0.0
        %1966 = vmatpush1.msra.mxu0 0.0
        %1967 = vmatprep.subr.mxu0 0.0
        %1968 = vmatpush1.msra.mxu0 0.0
        %1969 = vmatprep.subr.mxu0 0.0
        %1970 = vmatpush1.msra.mxu0 0.0
        %1971 = vmatprep.subr.mxu0 0.0
        %1972 = vmatpush1.msra.mxu0 0.0
        %1973 = vmatprep.subr.mxu0 0.0
        %1974 = vmatpush1.msra.mxu0 0.0
        %1975 = vmatprep.subr.mxu0 0.0
        %1976 = vmatpush1.msra.mxu0 0.0
        %1977 = vmatprep.subr.mxu0 0.0
        %1978 = vmatpush1.msra.mxu0 0.0
        %1979 = vmatprep.subr.mxu0 0.0
        %1980 = vmatpush1.msra.mxu0 0.0
        %1981 = vmatprep.subr.mxu0 0.0
        %1982 = vmatpush1.msra.mxu0 0.0
        %1983 = vmatprep.subr.mxu0 0.0
        %1984 = vmatpush1.msra.mxu0 0.0
        %1985 = vmatprep.subr.mxu0 0.0
        %1986 = vmatpush1.msra.mxu0 0.0
        %1987 = vmatprep.subr.mxu0 0.0
        %1988 = vmatpush1.msra.mxu0 0.0
        %1989 = vmatprep.subr.mxu0 0.0
        %1990 = vmatpush1.msra.mxu0 0.0
        %1991 = vmatprep.subr.mxu0 0.0
        %1992 = vmatpush1.msra.mxu0 %v1957
        %1993 = vmatprep.subr.mxu0 0.0
        %1994 = vmatpush2.msra.mxu0 0.0
        %1995 = vmatprep.subr.mxu0 0.0
        %1996 = vmatpush2.msra.mxu0 0.0
        %1997 = vmatprep.subr.mxu0 0.0
        %1998 = vmatpush2.msra.mxu0 0.0
        %1999 = vmatprep.subr.mxu0 0.0
        %2000 = vmatpush2.msra.mxu0 0.0
        %2001 = vmatprep.subr.mxu0 0.0
        %2002 = vmatpush2.msra.mxu0 0.0
        %2003 = vmatprep.subr.mxu0 0.0
        %2004 = vmatpush2.msra.mxu0 0.0
        %2005 = vmatprep.subr.mxu0 0.0
        %2006 = vmatpush2.msra.mxu0 0.0
        %2007 = vmatprep.subr.mxu0 0.0
        %2008 = vmatpush2.msra.mxu0 0.0
        %2009 = vmatprep.subr.mxu0 0.0
        %2010 = vmatpush2.msra.mxu0 0.0
        %2011 = vmatprep.subr.mxu0 0.0
        %2012 = vmatpush2.msra.mxu0 0.0
        %2013 = vmatprep.subr.mxu0 0.0
        %2014 = vmatpush2.msra.mxu0 0.0
        %2015 = vmatprep.subr.mxu0 0.0
        %2016 = vmatpush2.msra.mxu0 0.0
        %2017 = vmatprep.subr.mxu0 0.0
        %2018 = vmatpush2.msra.mxu0 0.0
        %2019 = vmatprep.subr.mxu0 0.0
        %2020 = vmatpush2.msra.mxu0 0.0
        %2021 = vmatprep.subr.mxu0 0.0
        %2022 = vmatpush2.msra.mxu0 0.0
        %2023 = vmatprep.subr.mxu0 0.0
        %2024 = vmatpush2.msra.mxu0 0.0
        %2025 = vmatprep.mubr.f32.mxu0 0.0
        %2026 = vmatmul.mubr.f32.gmra.mxu0 %v1959
        %v2027 = vpop.f32.mrf.mxu0
        %v2028 = vadd.f32 0.0, %v2027
        %v2029 = vpop.f32.mrf.mxu0
        %2030 = vdwg.mxu0
        %v2032 = vsel %vm1627, %v1787, 0
        %2034 = vmatprep.subr.mxu0 0.0
        %2035 = vmatpush1.msra.mxu0 0.0
        %2036 = vmatprep.subr.mxu0 0.0
        %2037 = vmatpush1.msra.mxu0 0.0
        %2038 = vmatprep.subr.mxu0 0.0
        %2039 = vmatpush1.msra.mxu0 0.0
        %2040 = vmatprep.subr.mxu0 0.0
        %2041 = vmatpush1.msra.mxu0 0.0
        %2042 = vmatprep.subr.mxu0 0.0
        %2043 = vmatpush1.msra.mxu0 0.0
        %2044 = vmatprep.subr.mxu0 0.0
        %2045 = vmatpush1.msra.mxu0 0.0
        %2046 = vmatprep.subr.mxu0 0.0
        %2047 = vmatpush1.msra.mxu0 0.0
        %2048 = vmatprep.subr.mxu0 0.0
        %2049 = vmatpush1.msra.mxu0 0.0
        %2050 = vmatprep.subr.mxu0 0.0
        %2051 = vmatpush1.msra.mxu0 0.0
        %2052 = vmatprep.subr.mxu0 0.0
        %2053 = vmatpush1.msra.mxu0 0.0
        %2054 = vmatprep.subr.mxu0 0.0
        %2055 = vmatpush1.msra.mxu0 0.0
        %2056 = vmatprep.subr.mxu0 0.0
        %2057 = vmatpush1.msra.mxu0 0.0
        %2058 = vmatprep.subr.mxu0 0.0
        %2059 = vmatpush1.msra.mxu0 0.0
        %2060 = vmatprep.subr.mxu0 0.0
        %2061 = vmatpush1.msra.mxu0 0.0
        %2062 = vmatprep.subr.mxu0 0.0
        %2063 = vmatpush1.msra.mxu0 0.0
        %2064 = vmatprep.subr.mxu0 0.0
        %2065 = vmatpush1.msra.mxu0 %v1790
        %2066 = vmatprep.subr.mxu0 0.0
        %2067 = vmatpush2.msra.mxu0 0.0
        %2068 = vmatprep.subr.mxu0 0.0
        %2069 = vmatpush2.msra.mxu0 0.0
        %2070 = vmatprep.subr.mxu0 0.0
        %2071 = vmatpush2.msra.mxu0 0.0
        %2072 = vmatprep.subr.mxu0 0.0
        %2073 = vmatpush2.msra.mxu0 0.0
        %2074 = vmatprep.subr.mxu0 0.0
        %2075 = vmatpush2.msra.mxu0 0.0
        %2076 = vmatprep.subr.mxu0 0.0
        %2077 = vmatpush2.msra.mxu0 0.0
        %2078 = vmatprep.subr.mxu0 0.0
        %2079 = vmatpush2.msra.mxu0 0.0
        %2080 = vmatprep.subr.mxu0 0.0
        %2081 = vmatpush2.msra.mxu0 0.0
        %2082 = vmatprep.subr.mxu0 0.0
        %2083 = vmatpush2.msra.mxu0 0.0
        %2084 = vmatprep.subr.mxu0 0.0
        %2085 = vmatpush2.msra.mxu0 0.0
        %2086 = vmatprep.subr.mxu0 0.0
        %2087 = vmatpush2.msra.mxu0 0.0
        %2088 = vmatprep.subr.mxu0 0.0
        %2089 = vmatpush2.msra.mxu0 0.0
        %2090 = vmatprep.subr.mxu0 0.0
        %2091 = vmatpush2.msra.mxu0 0.0
        %2092 = vmatprep.subr.mxu0 0.0
        %2093 = vmatpush2.msra.mxu0 0.0
        %2094 = vmatprep.subr.mxu0 0.0
        %2095 = vmatpush2.msra.mxu0 0.0
        %2096 = vmatprep.subr.mxu0 0.0
        %2097 = vmatpush2.msra.mxu0 0.0
        %2098 = vmatprep.mubr.f32.mxu0 0.0
        %2099 = vmatmul.mubr.f32.gmra.mxu0 %v2032
        %v2100 = vpop.f32.mrf.mxu0
        %v2101 = vadd.f32 %v2028, %v2100
        %v2102 = vpop.f32.mrf.mxu0
        %2103 = vdwg.mxu0
        %2104 = vrot.lane.b32.xlu0 %v1621, 112
        %v2105 = vpop.permute.xlu0 %2104
        %2106 = vrot.lane.b32.xlu0 %v1621, 80
        %v2107 = vpop.permute.xlu0 %2106
        %v2108 = vsel %vm1627, %v2105, 0
        %v2110 = vsel %vm1627, %v2107, 0
        %2112 = vmatprep.subr.mxu0 0.0
        %2113 = vmatpush1.xpose.msra.mxu0 0.0
        %2114 = vmatprep.subr.mxu0 0.0
        %2115 = vmatpush1.xpose.msra.mxu0 0.0
        %2116 = vmatprep.subr.mxu0 0.0
        %2117 = vmatpush1.xpose.msra.mxu0 0.0
        %2118 = vmatprep.subr.mxu0 0.0
        %2119 = vmatpush1.xpose.msra.mxu0 0.0
        %2120 = vmatprep.subr.mxu0 0.0
        %2121 = vmatpush1.xpose.msra.mxu0 0.0
        %2122 = vmatprep.subr.mxu0 0.0
        %2123 = vmatpush1.xpose.msra.mxu0 0.0
        %2124 = vmatprep.subr.mxu0 0.0
        %2125 = vmatpush1.xpose.msra.mxu0 0.0
        %2126 = vmatprep.subr.mxu0 0.0
        %2127 = vmatpush1.xpose.msra.mxu0 0.0
        %2128 = vmatprep.subr.mxu0 0.0
        %2129 = vmatpush1.xpose.msra.mxu0 0.0
        %2130 = vmatprep.subr.mxu0 0.0
        %2131 = vmatpush1.xpose.msra.mxu0 0.0
        %2132 = vmatprep.subr.mxu0 0.0
        %2133 = vmatpush1.xpose.msra.mxu0 0.0
        %2134 = vmatprep.subr.mxu0 0.0
        %2135 = vmatpush1.xpose.msra.mxu0 0.0
        %2136 = vmatprep.subr.mxu0 0.0
        %2137 = vmatpush1.xpose.msra.mxu0 0.0
        %2138 = vmatprep.subr.mxu0 0.0
        %2139 = vmatpush1.xpose.msra.mxu0 0.0
        %2140 = vmatprep.subr.mxu0 0.0
        %2141 = vmatpush1.xpose.msra.mxu0 0.0
        %2142 = vmatprep.subr.mxu0 0.0
        %2143 = vmatpush1.xpose.msra.mxu0 %v2110
        %2144 = vmatprep.subr.mxu0 0.0
        %2145 = vmatpush2.xpose.msra.mxu0 0.0
        %2146 = vmatprep.subr.mxu0 0.0
        %2147 = vmatpush2.xpose.msra.mxu0 0.0
        %2148 = vmatprep.subr.mxu0 0.0
        %2149 = vmatpush2.xpose.msra.mxu0 0.0
        %2150 = vmatprep.subr.mxu0 0.0
        %2151 = vmatpush2.xpose.msra.mxu0 0.0
        %2152 = vmatprep.subr.mxu0 0.0
        %2153 = vmatpush2.xpose.msra.mxu0 0.0
        %2154 = vmatprep.subr.mxu0 0.0
        %2155 = vmatpush2.xpose.msra.mxu0 0.0
        %2156 = vmatprep.subr.mxu0 0.0
        %2157 = vmatpush2.xpose.msra.mxu0 0.0
        %2158 = vmatprep.subr.mxu0 0.0
        %2159 = vmatpush2.xpose.msra.mxu0 0.0
        %2160 = vmatprep.subr.mxu0 0.0
        %2161 = vmatpush2.xpose.msra.mxu0 0.0
        %2162 = vmatprep.subr.mxu0 0.0
        %2163 = vmatpush2.xpose.msra.mxu0 0.0
        %2164 = vmatprep.subr.mxu0 0.0
        %2165 = vmatpush2.xpose.msra.mxu0 0.0
        %2166 = vmatprep.subr.mxu0 0.0
        %2167 = vmatpush2.xpose.msra.mxu0 0.0
        %2168 = vmatprep.subr.mxu0 0.0
        %2169 = vmatpush2.xpose.msra.mxu0 0.0
        %2170 = vmatprep.subr.mxu0 0.0
        %2171 = vmatpush2.xpose.msra.mxu0 0.0
        %2172 = vmatprep.subr.mxu0 0.0
        %2173 = vmatpush2.xpose.msra.mxu0 0.0
        %2174 = vmatprep.subr.mxu0 0.0
        %2175 = vmatpush2.xpose.msra.mxu0 0.0
        %2176 = vmatprep.mubr.f32.mxu0 0.0
        %2177 = vmatmul.mubr.f32.gmra.mxu0 %v2108
        %v2178 = vpop.f32.mrf.mxu0
        %v2179 = vadd.f32 0.0, %v2178
        %v2180 = vpop.f32.mrf.mxu0
        %2181 = vdwg.mxu0
        %v2182 = vmul.f32 %v2179, 0.35355338
        %v2183 = vsel %vm1627, %v2182, -inf
        %2184 = vmax.xlane.f32.xlu0 %v2183
        %v2185 = vpop.xlane.xlu0 %2184
        %v2186 = vsub.f32 %v2182, %v2185
        %v2187 = vmul.f32 %v2186, 1.442695
        %v2188 = vpow.pop %v2187
        %v2189 = vsel %vm1627, %v2188, 0.0
        %2190 = vadd.xlane.f32.xlu0 %v2189
        %v2191 = vpop.xlane.xlu0 %2190
        %v2192 = vrcp.pop %v2191
        %v2193 = vmul.f32 %v2188, %v2192
        %2194 = vrot.lane.b32.xlu0 %v1621, 48
        %v2195 = vpop.permute.xlu0 %2194
        %v2198 = vsel %vm1627, %v2193, 0
        %2200 = vmatprep.subr.mxu0 0.0
        %2201 = vmatpush1.msra.mxu0 0.0
        %2202 = vmatprep.subr.mxu0 0.0
        %2203 = vmatpush1.msra.mxu0 0.0
        %2204 = vmatprep.subr.mxu0 0.0
        %2205 = vmatpush1.msra.mxu0 0.0
        %2206 = vmatprep.subr.mxu0 0.0
        %2207 = vmatpush1.msra.mxu0 0.0
        %2208 = vmatprep.subr.mxu0 0.0
        %2209 = vmatpush1.msra.mxu0 0.0
        %2210 = vmatprep.subr.mxu0 0.0
        %2211 = vmatpush1.msra.mxu0 0.0
        %2212 = vmatprep.subr.mxu0 0.0
        %2213 = vmatpush1.msra.mxu0 0.0
        %2214 = vmatprep.subr.mxu0 0.0
        %2215 = vmatpush1.msra.mxu0 0.0
        %2216 = vmatprep.subr.mxu0 0.0
        %2217 = vmatpush1.msra.mxu0 0.0
        %2218 = vmatprep.subr.mxu0 0.0
        %2219 = vmatpush1.msra.mxu0 0.0
        %2220 = vmatprep.subr.mxu0 0.0
        %2221 = vmatpush1.msra.mxu0 0.0
        %2222 = vmatprep.subr.mxu0 0.0
        %2223 = vmatpush1.msra.mxu0 0.0
        %2224 = vmatprep.subr.mxu0 0.0
        %2225 = vmatpush1.msra.mxu0 0.0
        %2226 = vmatprep.subr.mxu0 0.0
        %2227 = vmatpush1.msra.mxu0 0.0
        %2228 = vmatprep.subr.mxu0 0.0
        %2229 = vmatpush1.msra.mxu0 0.0
        %2230 = vmatprep.subr.mxu0 0.0
        %2231 = vmatpush1.msra.mxu0 %v2195
        %2232 = vmatprep.subr.mxu0 0.0
        %2233 = vmatpush2.msra.mxu0 0.0
        %2234 = vmatprep.subr.mxu0 0.0
        %2235 = vmatpush2.msra.mxu0 0.0
        %2236 = vmatprep.subr.mxu0 0.0
        %2237 = vmatpush2.msra.mxu0 0.0
        %2238 = vmatprep.subr.mxu0 0.0
        %2239 = vmatpush2.msra.mxu0 0.0
        %2240 = vmatprep.subr.mxu0 0.0
        %2241 = vmatpush2.msra.mxu0 0.0
        %2242 = vmatprep.subr.mxu0 0.0
        %2243 = vmatpush2.msra.mxu0 0.0
        %2244 = vmatprep.subr.mxu0 0.0
        %2245 = vmatpush2.msra.mxu0 0.0
        %2246 = vmatprep.subr.mxu0 0.0
        %2247 = vmatpush2.msra.mxu0 0.0
        %2248 = vmatprep.subr.mxu0 0.0
        %2249 = vmatpush2.msra.mxu0 0.0
        %2250 = vmatprep.subr.mxu0 0.0
        %2251 = vmatpush2.msra.mxu0 0.0
        %2252 = vmatprep.subr.mxu0 0.0
        %2253 = vmatpush2.msra.mxu0 0.0
        %2254 = vmatprep.subr.mxu0 0.0
        %2255 = vmatpush2.msra.mxu0 0.0
        %2256 = vmatprep.subr.mxu0 0.0
        %2257 = vmatpush2.msra.mxu0 0.0
        %2258 = vmatprep.subr.mxu0 0.0
        %2259 = vmatpush2.msra.mxu0 0.0
        %2260 = vmatprep.subr.mxu0 0.0
        %2261 = vmatpush2.msra.mxu0 0.0
        %2262 = vmatprep.subr.mxu0 0.0
        %2263 = vmatpush2.msra.mxu0 0.0
        %2264 = vmatprep.mubr.f32.mxu0 0.0
        %2265 = vmatmul.mubr.f32.gmra.mxu0 %v2198
        %v2266 = vpop.f32.mrf.mxu0
        %v2267 = vadd.f32 0.0, %v2266
        %v2268 = vpop.f32.mrf.mxu0
        %2269 = vdwg.mxu0
        %v2270 = vld [vmem:[%s13 + $0x10] sm:$0xff]
        %v2272 = vsel %vm1627, %v2267, 0
        %2274 = vmatprep.subr.mxu0 0.0
        %2275 = vmatpush1.msra.mxu0 0.0
        %2276 = vmatprep.subr.mxu0 0.0
        %2277 = vmatpush1.msra.mxu0 0.0
        %2278 = vmatprep.subr.mxu0 0.0
        %2279 = vmatpush1.msra.mxu0 0.0
        %2280 = vmatprep.subr.mxu0 0.0
        %2281 = vmatpush1.msra.mxu0 0.0
        %2282 = vmatprep.subr.mxu0 0.0
        %2283 = vmatpush1.msra.mxu0 0.0
        %2284 = vmatprep.subr.mxu0 0.0
        %2285 = vmatpush1.msra.mxu0 0.0
        %2286 = vmatprep.subr.mxu0 0.0
        %2287 = vmatpush1.msra.mxu0 0.0
        %2288 = vmatprep.subr.mxu0 0.0
        %2289 = vmatpush1.msra.mxu0 0.0
        %2290 = vmatprep.subr.mxu0 0.0
        %2291 = vmatpush1.msra.mxu0 0.0
        %2292 = vmatprep.subr.mxu0 0.0
        %2293 = vmatpush1.msra.mxu0 0.0
        %2294 = vmatprep.subr.mxu0 0.0
        %2295 = vmatpush1.msra.mxu0 0.0
        %2296 = vmatprep.subr.mxu0 0.0
        %2297 = vmatpush1.msra.mxu0 0.0
        %2298 = vmatprep.subr.mxu0 0.0
        %2299 = vmatpush1.msra.mxu0 0.0
        %2300 = vmatprep.subr.mxu0 0.0
        %2301 = vmatpush1.msra.mxu0 0.0
        %2302 = vmatprep.subr.mxu0 0.0
        %2303 = vmatpush1.msra.mxu0 0.0
        %2304 = vmatprep.subr.mxu0 0.0
        %2305 = vmatpush1.msra.mxu0 %v2270
        %2306 = vmatprep.subr.mxu0 0.0
        %2307 = vmatpush2.msra.mxu0 0.0
        %2308 = vmatprep.subr.mxu0 0.0
        %2309 = vmatpush2.msra.mxu0 0.0
        %2310 = vmatprep.subr.mxu0 0.0
        %2311 = vmatpush2.msra.mxu0 0.0
        %2312 = vmatprep.subr.mxu0 0.0
        %2313 = vmatpush2.msra.mxu0 0.0
        %2314 = vmatprep.subr.mxu0 0.0
        %2315 = vmatpush2.msra.mxu0 0.0
        %2316 = vmatprep.subr.mxu0 0.0
        %2317 = vmatpush2.msra.mxu0 0.0
        %2318 = vmatprep.subr.mxu0 0.0
        %2319 = vmatpush2.msra.mxu0 0.0
        %2320 = vmatprep.subr.mxu0 0.0
        %2321 = vmatpush2.msra.mxu0 0.0
        %2322 = vmatprep.subr.mxu0 0.0
        %2323 = vmatpush2.msra.mxu0 0.0
        %2324 = vmatprep.subr.mxu0 0.0
        %2325 = vmatpush2.msra.mxu0 0.0
        %2326 = vmatprep.subr.mxu0 0.0
        %2327 = vmatpush2.msra.mxu0 0.0
        %2328 = vmatprep.subr.mxu0 0.0
        %2329 = vmatpush2.msra.mxu0 0.0
        %2330 = vmatprep.subr.mxu0 0.0
        %2331 = vmatpush2.msra.mxu0 0.0
        %2332 = vmatprep.subr.mxu0 0.0
        %2333 = vmatpush2.msra.mxu0 0.0
        %2334 = vmatprep.subr.mxu0 0.0
        %2335 = vmatpush2.msra.mxu0 0.0
        %2336 = vmatprep.subr.mxu0 0.0
        %2337 = vmatpush2.msra.mxu0 0.0
        %2338 = vmatprep.mubr.f32.mxu0 0.0
        %2339 = vmatmul.mubr.f32.gmra.mxu0 %v2272
        %v2340 = vpop.f32.mrf.mxu0
        %v2341 = vadd.f32 0.0, %v2340
        %v2342 = vpop.f32.mrf.mxu0
        %2343 = vdwg.mxu0
        %v2344 = vadd.f32 %v2101, %v2341
        %2345 = vrot.lane.b32.xlu0 %v1621, 104
        %v2346 = vpop.permute.xlu0 %2345
        %2347 = vrot.lane.b32.xlu0 %v1621, 72
        %v2348 = vpop.permute.xlu0 %2347
        %v2349 = vsel %vm1627, %v2346, 0
        %v2351 = vsel %vm1627, %v2348, 0
        %2353 = vmatprep.subr.mxu0 0.0
        %2354 = vmatpush1.xpose.msra.mxu0 0.0
        %2355 = vmatprep.subr.mxu0 0.0
        %2356 = vmatpush1.xpose.msra.mxu0 0.0
        %2357 = vmatprep.subr.mxu0 0.0
        %2358 = vmatpush1.xpose.msra.mxu0 0.0
        %2359 = vmatprep.subr.mxu0 0.0
        %2360 = vmatpush1.xpose.msra.mxu0 0.0
        %2361 = vmatprep.subr.mxu0 0.0
        %2362 = vmatpush1.xpose.msra.mxu0 0.0
        %2363 = vmatprep.subr.mxu0 0.0
        %2364 = vmatpush1.xpose.msra.mxu0 0.0
        %2365 = vmatprep.subr.mxu0 0.0
        %2366 = vmatpush1.xpose.msra.mxu0 0.0
        %2367 = vmatprep.subr.mxu0 0.0
        %2368 = vmatpush1.xpose.msra.mxu0 0.0
        %2369 = vmatprep.subr.mxu0 0.0
        %2370 = vmatpush1.xpose.msra.mxu0 0.0
        %2371 = vmatprep.subr.mxu0 0.0
        %2372 = vmatpush1.xpose.msra.mxu0 0.0
        %2373 = vmatprep.subr.mxu0 0.0
        %2374 = vmatpush1.xpose.msra.mxu0 0.0
        %2375 = vmatprep.subr.mxu0 0.0
        %2376 = vmatpush1.xpose.msra.mxu0 0.0
        %2377 = vmatprep.subr.mxu0 0.0
        %2378 = vmatpush1.xpose.msra.mxu0 0.0
        %2379 = vmatprep.subr.mxu0 0.0
        %2380 = vmatpush1.xpose.msra.mxu0 0.0
        %2381 = vmatprep.subr.mxu0 0.0
        %2382 = vmatpush1.xpose.msra.mxu0 0.0
        %2383 = vmatprep.subr.mxu0 0.0
        %2384 = vmatpush1.xpose.msra.mxu0 %v2351
        %2385 = vmatprep.subr.mxu0 0.0
        %2386 = vmatpush2.xpose.msra.mxu0 0.0
        %2387 = vmatprep.subr.mxu0 0.0
        %2388 = vmatpush2.xpose.msra.mxu0 0.0
        %2389 = vmatprep.subr.mxu0 0.0
        %2390 = vmatpush2.xpose.msra.mxu0 0.0
        %2391 = vmatprep.subr.mxu0 0.0
        %2392 = vmatpush2.xpose.msra.mxu0 0.0
        %2393 = vmatprep.subr.mxu0 0.0
        %2394 = vmatpush2.xpose.msra.mxu0 0.0
        %2395 = vmatprep.subr.mxu0 0.0
        %2396 = vmatpush2.xpose.msra.mxu0 0.0
        %2397 = vmatprep.subr.mxu0 0.0
        %2398 = vmatpush2.xpose.msra.mxu0 0.0
        %2399 = vmatprep.subr.mxu0 0.0
        %2400 = vmatpush2.xpose.msra.mxu0 0.0
        %2401 = vmatprep.subr.mxu0 0.0
        %2402 = vmatpush2.xpose.msra.mxu0 0.0
        %2403 = vmatprep.subr.mxu0 0.0
        %2404 = vmatpush2.xpose.msra.mxu0 0.0
        %2405 = vmatprep.subr.mxu0 0.0
        %2406 = vmatpush2.xpose.msra.mxu0 0.0
        %2407 = vmatprep.subr.mxu0 0.0
        %2408 = vmatpush2.xpose.msra.mxu0 0.0
        %2409 = vmatprep.subr.mxu0 0.0
        %2410 = vmatpush2.xpose.msra.mxu0 0.0
        %2411 = vmatprep.subr.mxu0 0.0
        %2412 = vmatpush2.xpose.msra.mxu0 0.0
        %2413 = vmatprep.subr.mxu0 0.0
        %2414 = vmatpush2.xpose.msra.mxu0 0.0
        %2415 = vmatprep.subr.mxu0 0.0
        %2416 = vmatpush2.xpose.msra.mxu0 0.0
        %2417 = vmatprep.mubr.f32.mxu0 0.0
        %2418 = vmatmul.mubr.f32.gmra.mxu0 %v2349
        %v2419 = vpop.f32.mrf.mxu0
        %v2420 = vadd.f32 0.0, %v2419
        %v2421 = vpop.f32.mrf.mxu0
        %2422 = vdwg.mxu0
        %v2423 = vmul.f32 %v2420, 0.35355338
        %v2424 = vsel %vm1627, %v2423, -inf
        %2425 = vmax.xlane.f32.xlu0 %v2424
        %v2426 = vpop.xlane.xlu0 %2425
        %v2427 = vsub.f32 %v2423, %v2426
        %v2428 = vmul.f32 %v2427, 1.442695
        %v2429 = vpow.pop %v2428
        %v2430 = vsel %vm1627, %v2429, 0.0
        %2431 = vadd.xlane.f32.xlu0 %v2430
        %v2432 = vpop.xlane.xlu0 %2431
        %v2433 = vrcp.pop %v2432
        %v2434 = vmul.f32 %v2429, %v2433
        %2435 = vrot.lane.b32.xlu0 %v1621, 40
        %v2436 = vpop.permute.xlu0 %2435
        %v2439 = vsel %vm1627, %v2434, 0
        %2441 = vmatprep.subr.mxu0 0.0
        %2442 = vmatpush1.msra.mxu0 0.0
        %2443 = vmatprep.subr.mxu0 0.0
        %2444 = vmatpush1.msra.mxu0 0.0
        %2445 = vmatprep.subr.mxu0 0.0
        %2446 = vmatpush1.msra.mxu0 0.0
        %2447 = vmatprep.subr.mxu0 0.0
        %2448 = vmatpush1.msra.mxu0 0.0
        %2449 = vmatprep.subr.mxu0 0.0
        %2450 = vmatpush1.msra.mxu0 0.0
        %2451 = vmatprep.subr.mxu0 0.0
        %2452 = vmatpush1.msra.mxu0 0.0
        %2453 = vmatprep.subr.mxu0 0.0
        %2454 = vmatpush1.msra.mxu0 0.0
        %2455 = vmatprep.subr.mxu0 0.0
        %2456 = vmatpush1.msra.mxu0 0.0
        %2457 = vmatprep.subr.mxu0 0.0
        %2458 = vmatpush1.msra.mxu0 0.0
        %2459 = vmatprep.subr.mxu0 0.0
        %2460 = vmatpush1.msra.mxu0 0.0
        %2461 = vmatprep.subr.mxu0 0.0
        %2462 = vmatpush1.msra.mxu0 0.0
        %2463 = vmatprep.subr.mxu0 0.0
        %2464 = vmatpush1.msra.mxu0 0.0
        %2465 = vmatprep.subr.mxu0 0.0
        %2466 = vmatpush1.msra.mxu0 0.0
        %2467 = vmatprep.subr.mxu0 0.0
        %2468 = vmatpush1.msra.mxu0 0.0
        %2469 = vmatprep.subr.mxu0 0.0
        %2470 = vmatpush1.msra.mxu0 0.0
        %2471 = vmatprep.subr.mxu0 0.0
        %2472 = vmatpush1.msra.mxu0 %v2436
        %2473 = vmatprep.subr.mxu0 0.0
        %2474 = vmatpush2.msra.mxu0 0.0
        %2475 = vmatprep.subr.mxu0 0.0
        %2476 = vmatpush2.msra.mxu0 0.0
        %2477 = vmatprep.subr.mxu0 0.0
        %2478 = vmatpush2.msra.mxu0 0.0
        %2479 = vmatprep.subr.mxu0 0.0
        %2480 = vmatpush2.msra.mxu0 0.0
        %2481 = vmatprep.subr.mxu0 0.0
        %2482 = vmatpush2.msra.mxu0 0.0
        %2483 = vmatprep.subr.mxu0 0.0
        %2484 = vmatpush2.msra.mxu0 0.0
        %2485 = vmatprep.subr.mxu0 0.0
        %2486 = vmatpush2.msra.mxu0 0.0
        %2487 = vmatprep.subr.mxu0 0.0
        %2488 = vmatpush2.msra.mxu0 0.0
        %2489 = vmatprep.subr.mxu0 0.0
        %2490 = vmatpush2.msra.mxu0 0.0
        %2491 = vmatprep.subr.mxu0 0.0
        %2492 = vmatpush2.msra.mxu0 0.0
        %2493 = vmatprep.subr.mxu0 0.0
        %2494 = vmatpush2.msra.mxu0 0.0
        %2495 = vmatprep.subr.mxu0 0.0
        %2496 = vmatpush2.msra.mxu0 0.0
        %2497 = vmatprep.subr.mxu0 0.0
        %2498 = vmatpush2.msra.mxu0 0.0
        %2499 = vmatprep.subr.mxu0 0.0
        %2500 = vmatpush2.msra.mxu0 0.0
        %2501 = vmatprep.subr.mxu0 0.0
        %2502 = vmatpush2.msra.mxu0 0.0
        %2503 = vmatprep.subr.mxu0 0.0
        %2504 = vmatpush2.msra.mxu0 0.0
        %2505 = vmatprep.mubr.f32.mxu0 0.0
        %2506 = vmatmul.mubr.f32.gmra.mxu0 %v2439
        %v2507 = vpop.f32.mrf.mxu0
        %v2508 = vadd.f32 0.0, %v2507
        %v2509 = vpop.f32.mrf.mxu0
        %2510 = vdwg.mxu0
        %v2511 = vld [vmem:[%s13 + $0x18] sm:$0xff]
        %v2513 = vsel %vm1627, %v2508, 0
        %2515 = vmatprep.subr.mxu0 0.0
        %2516 = vmatpush1.msra.mxu0 0.0
        %2517 = vmatprep.subr.mxu0 0.0
        %2518 = vmatpush1.msra.mxu0 0.0
        %2519 = vmatprep.subr.mxu0 0.0
        %2520 = vmatpush1.msra.mxu0 0.0
        %2521 = vmatprep.subr.mxu0 0.0
        %2522 = vmatpush1.msra.mxu0 0.0
        %2523 = vmatprep.subr.mxu0 0.0
        %2524 = vmatpush1.msra.mxu0 0.0
        %2525 = vmatprep.subr.mxu0 0.0
        %2526 = vmatpush1.msra.mxu0 0.0
        %2527 = vmatprep.subr.mxu0 0.0
        %2528 = vmatpush1.msra.mxu0 0.0
        %2529 = vmatprep.subr.mxu0 0.0
        %2530 = vmatpush1.msra.mxu0 0.0
        %2531 = vmatprep.subr.mxu0 0.0
        %2532 = vmatpush1.msra.mxu0 0.0
        %2533 = vmatprep.subr.mxu0 0.0
        %2534 = vmatpush1.msra.mxu0 0.0
        %2535 = vmatprep.subr.mxu0 0.0
        %2536 = vmatpush1.msra.mxu0 0.0
        %2537 = vmatprep.subr.mxu0 0.0
        %2538 = vmatpush1.msra.mxu0 0.0
        %2539 = vmatprep.subr.mxu0 0.0
        %2540 = vmatpush1.msra.mxu0 0.0
        %2541 = vmatprep.subr.mxu0 0.0
        %2542 = vmatpush1.msra.mxu0 0.0
        %2543 = vmatprep.subr.mxu0 0.0
        %2544 = vmatpush1.msra.mxu0 0.0
        %2545 = vmatprep.subr.mxu0 0.0
        %2546 = vmatpush1.msra.mxu0 %v2511
        %2547 = vmatprep.subr.mxu0 0.0
        %2548 = vmatpush2.msra.mxu0 0.0
        %2549 = vmatprep.subr.mxu0 0.0
        %2550 = vmatpush2.msra.mxu0 0.0
        %2551 = vmatprep.subr.mxu0 0.0
        %2552 = vmatpush2.msra.mxu0 0.0
        %2553 = vmatprep.subr.mxu0 0.0
        %2554 = vmatpush2.msra.mxu0 0.0
        %2555 = vmatprep.subr.mxu0 0.0
        %2556 = vmatpush2.msra.mxu0 0.0
        %2557 = vmatprep.subr.mxu0 0.0
        %2558 = vmatpush2.msra.mxu0 0.0
        %2559 = vmatprep.subr.mxu0 0.0
        %2560 = vmatpush2.msra.mxu0 0.0
        %2561 = vmatprep.subr.mxu0 0.0
        %2562 = vmatpush2.msra.mxu0 0.0
        %2563 = vmatprep.subr.mxu0 0.0
        %2564 = vmatpush2.msra.mxu0 0.0
        %2565 = vmatprep.subr.mxu0 0.0
        %2566 = vmatpush2.msra.mxu0 0.0
        %2567 = vmatprep.subr.mxu0 0.0
        %2568 = vmatpush2.msra.mxu0 0.0
        %2569 = vmatprep.subr.mxu0 0.0
        %2570 = vmatpush2.msra.mxu0 0.0
        %2571 = vmatprep.subr.mxu0 0.0
        %2572 = vmatpush2.msra.mxu0 0.0
        %2573 = vmatprep.subr.mxu0 0.0
        %2574 = vmatpush2.msra.mxu0 0.0
        %2575 = vmatprep.subr.mxu0 0.0
        %2576 = vmatpush2.msra.mxu0 0.0
        %2577 = vmatprep.subr.mxu0 0.0
        %2578 = vmatpush2.msra.mxu0 0.0
        %2579 = vmatprep.mubr.f32.mxu0 0.0
        %2580 = vmatmul.mubr.f32.gmra.mxu0 %v2513
        %v2581 = vpop.f32.mrf.mxu0
        %v2582 = vadd.f32 0.0, %v2581
        %v2583 = vpop.f32.mrf.mxu0
        %2584 = vdwg.mxu0
        %v2585 = vadd.f32 %v2344, %v2582
        %v2586 = vld [vmem:[%s15] sm:$0x1]
        %v2588 = vlaneseq
        %v2589 = vshrl.u32 %v2588, 7
        %v2590 = vsub.s32 0, %v2589
        %v2591 = vrot.slane %v2586, %v2590
        %v2593 = vadd.f32 %v2585, %v2591
        %v2594 = vadd.f32 %v1464, %v2593
        %v2595 = vsel %vm1469, %v2594, 0.0
        %2596 = vadd.xlane.f32.xlu0 %v2595
        %v2597 = vpop.xlane.xlu0 %2596
        %v2598 = vrcp.pop 32.0
        %v2599 = vmul.f32 %v2597, %v2598
        %v2600 = vsub.f32 %v2594, %v2599
        %v2601 = vmul.f32 %v2600, %v2600
        %v2602 = vsel %vm1469, %v2601, 0.0
        %2603 = vadd.xlane.f32.xlu0 %v2602
        %v2604 = vpop.xlane.xlu0 %2603
        %v2605 = vmul.f32 %v2604, %v2598
        %v2606 = vadd.f32 %v2605, 1e-05
        %v2607 = vrsqrt.pop %v2606
        %v2608 = vmul.f32 %v2600, %v2607
        %v2609 = vld [vmem:[%s17] sm:$0x1]
        %v2611 = vlaneseq
        %v2612 = vshrl.u32 %v2611, 7
        %v2613 = vsub.s32 0, %v2612
        %v2614 = vrot.slane %v2609, %v2613
        %v2616 = vmul.f32 %v2608, %v2614
        %v2617 = vld [vmem:[%s19] sm:$0x1]
        %v2619 = vlaneseq
        %v2620 = vshrl.u32 %v2619, 7
        %v2621 = vsub.s32 0, %v2620
        %v2622 = vrot.slane %v2617, %v2621
        %v2624 = vadd.f32 %v2616, %v2622
        %v2625 = vld [vmem:[%s21] sm:$0xff]
        %v2626 = vld [vmem:[%s21 + $0x8] sm:$0xff]
        %v2627 = vld [vmem:[%s21 + $0x10] sm:$0xff]
        %v2628 = vld [vmem:[%s21 + $0x18] sm:$0xff]
        %v2629 = vld [vmem:[%s23] sm:$0x1]
        %v2631 = vlaneseq
        %v2632 = vshrl.u32 %v2631, 7
        %v2633 = vsub.s32 0, %v2632
        %v2634 = vrot.slane %v2629, %v2633
        %v2637 = vsel %vm1469, %v2624, 0
        %2639 = vmatprep.subr.mxu0 0.0
        %2640 = vmatpush1.msra.mxu0 0.0
        %2641 = vmatprep.subr.mxu0 0.0
        %2642 = vmatpush1.msra.mxu0 0.0
        %2643 = vmatprep.subr.mxu0 0.0
        %2644 = vmatpush1.msra.mxu0 0.0
        %2645 = vmatprep.subr.mxu0 0.0
        %2646 = vmatpush1.msra.mxu0 0.0
        %2647 = vmatprep.subr.mxu0 0.0
        %2648 = vmatpush1.msra.mxu0 0.0
        %2649 = vmatprep.subr.mxu0 0.0
        %2650 = vmatpush1.msra.mxu0 0.0
        %2651 = vmatprep.subr.mxu0 0.0
        %2652 = vmatpush1.msra.mxu0 0.0
        %2653 = vmatprep.subr.mxu0 0.0
        %2654 = vmatpush1.msra.mxu0 0.0
        %2655 = vmatprep.subr.mxu0 0.0
        %2656 = vmatpush1.msra.mxu0 0.0
        %2657 = vmatprep.subr.mxu0 0.0
        %2658 = vmatpush1.msra.mxu0 0.0
        %2659 = vmatprep.subr.mxu0 0.0
        %2660 = vmatpush1.msra.mxu0 0.0
        %2661 = vmatprep.subr.mxu0 0.0
        %2662 = vmatpush1.msra.mxu0 0.0
        %2663 = vmatprep.subr.mxu0 0.0
        %2664 = vmatpush1.msra.mxu0 %v2628
        %2665 = vmatprep.subr.mxu0 0.0
        %2666 = vmatpush1.msra.mxu0 %v2627
        %2667 = vmatprep.subr.mxu0 0.0
        %2668 = vmatpush1.msra.mxu0 %v2626
        %2669 = vmatprep.subr.mxu0 0.0
        %2670 = vmatpush1.msra.mxu0 %v2625
        %2671 = vmatprep.subr.mxu0 0.0
        %2672 = vmatpush2.msra.mxu0 0.0
        %2673 = vmatprep.subr.mxu0 0.0
        %2674 = vmatpush2.msra.mxu0 0.0
        %2675 = vmatprep.subr.mxu0 0.0
        %2676 = vmatpush2.msra.mxu0 0.0
        %2677 = vmatprep.subr.mxu0 0.0
        %2678 = vmatpush2.msra.mxu0 0.0
        %2679 = vmatprep.subr.mxu0 0.0
        %2680 = vmatpush2.msra.mxu0 0.0
        %2681 = vmatprep.subr.mxu0 0.0
        %2682 = vmatpush2.msra.mxu0 0.0
        %2683 = vmatprep.subr.mxu0 0.0
        %2684 = vmatpush2.msra.mxu0 0.0
        %2685 = vmatprep.subr.mxu0 0.0
        %2686 = vmatpush2.msra.mxu0 0.0
        %2687 = vmatprep.subr.mxu0 0.0
        %2688 = vmatpush2.msra.mxu0 0.0
        %2689 = vmatprep.subr.mxu0 0.0
        %2690 = vmatpush2.msra.mxu0 0.0
        %2691 = vmatprep.subr.mxu0 0.0
        %2692 = vmatpush2.msra.mxu0 0.0
        %2693 = vmatprep.subr.mxu0 0.0
        %2694 = vmatpush2.msra.mxu0 0.0
        %2695 = vmatprep.subr.mxu0 0.0
        %2696 = vmatpush2.msra.mxu0 0.0
        %2697 = vmatprep.subr.mxu0 0.0
        %2698 = vmatpush2.msra.mxu0 0.0
        %2699 = vmatprep.subr.mxu0 0.0
        %2700 = vmatpush2.msra.mxu0 0.0
        %2701 = vmatprep.subr.mxu0 0.0
        %2702 = vmatpush2.msra.mxu0 0.0
        %2703 = vmatprep.mubr.f32.mxu0 0.0
        %2704 = vmatmul.mubr.f32.gmra.mxu0 %v2637
        %v2705 = vpop.f32.mrf.mxu0
        %v2706 = vadd.f32 %v2634, %v2705
        %v2707 = vpop.f32.mrf.mxu0
        %2708 = vdwg.mxu0
        %v2709 = vmax.f32 %v2706, 0.0
        %v2710 = vld [vmem:[%s25] sm:$0xff]
        %v2711 = vld [vmem:[%s25 + $0x8] sm:$0xff]
        %v2712 = vld [vmem:[%s25 + $0x10] sm:$0xff]
        %v2713 = vld [vmem:[%s25 + $0x18] sm:$0xff]
        %v2714 = vld [vmem:[%s25 + $0x20] sm:$0xff]
        %v2715 = vld [vmem:[%s25 + $0x28] sm:$0xff]
        %v2716 = vld [vmem:[%s25 + $0x30] sm:$0xff]
        %v2717 = vld [vmem:[%s25 + $0x38] sm:$0xff]
        %v2718 = vld [vmem:[%s27] sm:$0x1]
        %v2720 = vlaneseq
        %v2721 = vshrl.u32 %v2720, 7
        %v2722 = vsub.s32 0, %v2721
        %v2723 = vrot.slane %v2718, %v2722
        %vm2725 = vcmask 523264
        %v2727 = vsel %vm2725, %v2709, 0
        %2729 = vmatprep.subr.mxu0 0.0
        %2730 = vmatpush1.msra.mxu0 0.0
        %2731 = vmatprep.subr.mxu0 0.0
        %2732 = vmatpush1.msra.mxu0 0.0
        %2733 = vmatprep.subr.mxu0 0.0
        %2734 = vmatpush1.msra.mxu0 0.0
        %2735 = vmatprep.subr.mxu0 0.0
        %2736 = vmatpush1.msra.mxu0 0.0
        %2737 = vmatprep.subr.mxu0 0.0
        %2738 = vmatpush1.msra.mxu0 0.0
        %2739 = vmatprep.subr.mxu0 0.0
        %2740 = vmatpush1.msra.mxu0 0.0
        %2741 = vmatprep.subr.mxu0 0.0
        %2742 = vmatpush1.msra.mxu0 0.0
        %2743 = vmatprep.subr.mxu0 0.0
        %2744 = vmatpush1.msra.mxu0 0.0
        %2745 = vmatprep.subr.mxu0 0.0
        %2746 = vmatpush1.msra.mxu0 %v2717
        %2747 = vmatprep.subr.mxu0 0.0
        %2748 = vmatpush1.msra.mxu0 %v2716
        %2749 = vmatprep.subr.mxu0 0.0
        %2750 = vmatpush1.msra.mxu0 %v2715
        %2751 = vmatprep.subr.mxu0 0.0
        %2752 = vmatpush1.msra.mxu0 %v2714
        %2753 = vmatprep.subr.mxu0 0.0
        %2754 = vmatpush1.msra.mxu0 %v2713
        %2755 = vmatprep.subr.mxu0 0.0
        %2756 = vmatpush1.msra.mxu0 %v2712
        %2757 = vmatprep.subr.mxu0 0.0
        %2758 = vmatpush1.msra.mxu0 %v2711
        %2759 = vmatprep.subr.mxu0 0.0
        %2760 = vmatpush1.msra.mxu0 %v2710
        %2761 = vmatprep.subr.mxu0 0.0
        %2762 = vmatpush2.msra.mxu0 0.0
        %2763 = vmatprep.subr.mxu0 0.0
        %2764 = vmatpush2.msra.mxu0 0.0
        %2765 = vmatprep.subr.mxu0 0.0
        %2766 = vmatpush2.msra.mxu0 0.0
        %2767 = vmatprep.subr.mxu0 0.0
        %2768 = vmatpush2.msra.mxu0 0.0
        %2769 = vmatprep.subr.mxu0 0.0
        %2770 = vmatpush2.msra.mxu0 0.0
        %2771 = vmatprep.subr.mxu0 0.0
        %2772 = vmatpush2.msra.mxu0 0.0
        %2773 = vmatprep.subr.mxu0 0.0
        %2774 = vmatpush2.msra.mxu0 0.0
        %2775 = vmatprep.subr.mxu0 0.0
        %2776 = vmatpush2.msra.mxu0 0.0
        %2777 = vmatprep.subr.mxu0 0.0
        %2778 = vmatpush2.msra.mxu0 0.0
        %2779 = vmatprep.subr.mxu0 0.0
        %2780 = vmatpush2.msra.mxu0 0.0
        %2781 = vmatprep.subr.mxu0 0.0
        %2782 = vmatpush2.msra.mxu0 0.0
        %2783 = vmatprep.subr.mxu0 0.0
        %2784 = vmatpush2.msra.mxu0 0.0
        %2785 = vmatprep.subr.mxu0 0.0
        %2786 = vmatpush2.msra.mxu0 0.0
        %2787 = vmatprep.subr.mxu0 0.0
        %2788 = vmatpush2.msra.mxu0 0.0
        %2789 = vmatprep.subr.mxu0 0.0
        %2790 = vmatpush2.msra.mxu0 0.0
        %2791 = vmatprep.subr.mxu0 0.0
        %2792 = vmatpush2.msra.mxu0 0.0
        %2793 = vmatprep.mubr.f32.mxu0 0.0
        %2794 = vmatmul.mubr.f32.gmra.mxu0 %v2727
        %v2795 = vpop.f32.mrf.mxu0
        %v2796 = vadd.f32 %v2723, %v2795
        %v2797 = vpop.f32.mrf.mxu0
        %2798 = vdwg.mxu0
        %v2799 = vadd.f32 %v2624, %v2796
        %v2800 = vsel %vm1469, %v2799, 0.0
        %2801 = vadd.xlane.f32.xlu0 %v2800
        %v2802 = vpop.xlane.xlu0 %2801
        %v2803 = vmul.f32 %v2802, %v2598
        %v2804 = vsub.f32 %v2799, %v2803
        %v2805 = vmul.f32 %v2804, %v2804
        %v2806 = vsel %vm1469, %v2805, 0.0
        %2807 = vadd.xlane.f32.xlu0 %v2806
        %v2808 = vpop.xlane.xlu0 %2807
        %v2809 = vmul.f32 %v2808, %v2598
        %v2810 = vadd.f32 %v2809, 1e-05
        %v2811 = vrsqrt.pop %v2810
        %v2812 = vmul.f32 %v2804, %v2811
        %v2813 = vld [vmem:[%s29] sm:$0x1]
        %v2815 = vlaneseq
        %v2816 = vshrl.u32 %v2815, 7
        %v2817 = vsub.s32 0, %v2816
        %v2818 = vrot.slane %v2813, %v2817
        %v2820 = vmul.f32 %v2812, %v2818
        %v2821 = vld [vmem:[%s31] sm:$0x1]
        %v2823 = vlaneseq
        %v2824 = vshrl.u32 %v2823, 7
        %v2825 = vsub.s32 0, %v2824
        %v2826 = vrot.slane %v2821, %v2825
        %v2828 = vadd.f32 %v2820, %v2826
        %v2829 = vsel %vm1469, %v2828, 0.0
        %2830 = vadd.xlane.f32.xlu0 %v2829
        %v2831 = vpop.xlane.xlu0 %2830
        %v2832 = vmul.f32 %v2831, %v2598
        %v2833 = vsub.f32 %v2828, %v2832
        %v2834 = vmul.f32 %v2833, %v2833
        %v2835 = vsel %vm1469, %v2834, 0.0
        %2836 = vadd.xlane.f32.xlu0 %v2835
        %v2837 = vpop.xlane.xlu0 %2836
        %v2838 = vmul.f32 %v2837, %v2598
        %v2839 = vadd.f32 %v2838, 1e-05
        %v2840 = vrsqrt.pop %v2839
        %v2841 = vmul.f32 %v2833, %v2840
        %v2842 = vld [vmem:[%s33] sm:$0x1]
        %v2844 = vlaneseq
        %v2845 = vshrl.u32 %v2844, 7
        %v2846 = vsub.s32 0, %v2845
        %v2847 = vrot.slane %v2842, %v2846
        %v2849 = vmul.f32 %v2841, %v2847
        %v2850 = vld [vmem:[%s35] sm:$0x1]
        %v2852 = vlaneseq
        %v2853 = vshrl.u32 %v2852, 7
        %v2854 = vsub.s32 0, %v2853
        %v2855 = vrot.slane %v2850, %v2854
        %v2857 = vadd.f32 %v2849, %v2855
        %v2858 = vld [vmem:[%s37] sm:$0xff]
        %v2859 = vld [vmem:[%s37 + $0x8] sm:$0xff]
        %v2860 = vld [vmem:[%s37 + $0x10] sm:$0xff]
        %v2861 = vld [vmem:[%s37 + $0x18] sm:$0xff]
        %v2862 = vld [vmem:[%s39] sm:$0x1]
        %v2864 = vlaneseq
        %v2865 = vshrl.u32 %v2864, 7
        %v2866 = vsub.s32 0, %v2865
        %v2867 = vrot.slane %v2862, %v2866
        %v2870 = vsel %vm1469, %v1540, 0
        %2872 = vmatprep.subr.mxu0 0.0
        %2873 = vmatpush1.msra.mxu0 0.0
        %2874 = vmatprep.subr.mxu0 0.0
        %2875 = vmatpush1.msra.mxu0 0.0
        %2876 = vmatprep.subr.mxu0 0.0
        %2877 = vmatpush1.msra.mxu0 0.0
        %2878 = vmatprep.subr.mxu0 0.0
        %2879 = vmatpush1.msra.mxu0 0.0
        %2880 = vmatprep.subr.mxu0 0.0
        %2881 = vmatpush1.msra.mxu0 0.0
        %2882 = vmatprep.subr.mxu0 0.0
        %2883 = vmatpush1.msra.mxu0 0.0
        %2884 = vmatprep.subr.mxu0 0.0
        %2885 = vmatpush1.msra.mxu0 0.0
        %2886 = vmatprep.subr.mxu0 0.0
        %2887 = vmatpush1.msra.mxu0 0.0
        %2888 = vmatprep.subr.mxu0 0.0
        %2889 = vmatpush1.msra.mxu0 0.0
        %2890 = vmatprep.subr.mxu0 0.0
        %2891 = vmatpush1.msra.mxu0 0.0
        %2892 = vmatprep.subr.mxu0 0.0
        %2893 = vmatpush1.msra.mxu0 0.0
        %2894 = vmatprep.subr.mxu0 0.0
        %2895 = vmatpush1.msra.mxu0 0.0
        %2896 = vmatprep.subr.mxu0 0.0
        %2897 = vmatpush1.msra.mxu0 %v2861
        %2898 = vmatprep.subr.mxu0 0.0
        %2899 = vmatpush1.msra.mxu0 %v2860
        %2900 = vmatprep.subr.mxu0 0.0
        %2901 = vmatpush1.msra.mxu0 %v2859
        %2902 = vmatprep.subr.mxu0 0.0
        %2903 = vmatpush1.msra.mxu0 %v2858
        %2904 = vmatprep.subr.mxu0 0.0
        %2905 = vmatpush2.msra.mxu0 0.0
        %2906 = vmatprep.subr.mxu0 0.0
        %2907 = vmatpush2.msra.mxu0 0.0
        %2908 = vmatprep.subr.mxu0 0.0
        %2909 = vmatpush2.msra.mxu0 0.0
        %2910 = vmatprep.subr.mxu0 0.0
        %2911 = vmatpush2.msra.mxu0 0.0
        %2912 = vmatprep.subr.mxu0 0.0
        %2913 = vmatpush2.msra.mxu0 0.0
        %2914 = vmatprep.subr.mxu0 0.0
        %2915 = vmatpush2.msra.mxu0 0.0
        %2916 = vmatprep.subr.mxu0 0.0
        %2917 = vmatpush2.msra.mxu0 0.0
        %2918 = vmatprep.subr.mxu0 0.0
        %2919 = vmatpush2.msra.mxu0 0.0
        %2920 = vmatprep.subr.mxu0 0.0
        %2921 = vmatpush2.msra.mxu0 0.0
        %2922 = vmatprep.subr.mxu0 0.0
        %2923 = vmatpush2.msra.mxu0 0.0
        %2924 = vmatprep.subr.mxu0 0.0
        %2925 = vmatpush2.msra.mxu0 0.0
        %2926 = vmatprep.subr.mxu0 0.0
        %2927 = vmatpush2.msra.mxu0 0.0
        %2928 = vmatprep.subr.mxu0 0.0
        %2929 = vmatpush2.msra.mxu0 0.0
        %2930 = vmatprep.subr.mxu0 0.0
        %2931 = vmatpush2.msra.mxu0 0.0
        %2932 = vmatprep.subr.mxu0 0.0
        %2933 = vmatpush2.msra.mxu0 0.0
        %2934 = vmatprep.subr.mxu0 0.0
        %2935 = vmatpush2.msra.mxu0 0.0
        %2936 = vmatprep.mubr.f32.mxu0 0.0
        %2937 = vmatmul.mubr.f32.gmra.mxu0 %v2870
        %v2938 = vpop.f32.mrf.mxu0
        %v2939 = vadd.f32 %v2867, %v2938
        %v2940 = vpop.f32.mrf.mxu0
        %2941 = vdwg.mxu0
        %2943 = vrot.lane.b32.xlu0 %v2939, 96
        %v2944 = vpop.permute.xlu0 %2943
        %v2945 = vsel %vm1627, %v2939, 0
        %v2947 = vsel %vm1627, %v2944, 0
        %2949 = vmatprep.subr.mxu0 0.0
        %2950 = vmatpush1.xpose.msra.mxu0 0.0
        %2951 = vmatprep.subr.mxu0 0.0
        %2952 = vmatpush1.xpose.msra.mxu0 0.0
        %2953 = vmatprep.subr.mxu0 0.0
        %2954 = vmatpush1.xpose.msra.mxu0 0.0
        %2955 = vmatprep.subr.mxu0 0.0
        %2956 = vmatpush1.xpose.msra.mxu0 0.0
        %2957 = vmatprep.subr.mxu0 0.0
        %2958 = vmatpush1.xpose.msra.mxu0 0.0
        %2959 = vmatprep.subr.mxu0 0.0
        %2960 = vmatpush1.xpose.msra.mxu0 0.0
        %2961 = vmatprep.subr.mxu0 0.0
        %2962 = vmatpush1.xpose.msra.mxu0 0.0
        %2963 = vmatprep.subr.mxu0 0.0
        %2964 = vmatpush1.xpose.msra.mxu0 0.0
        %2965 = vmatprep.subr.mxu0 0.0
        %2966 = vmatpush1.xpose.msra.mxu0 0.0
        %2967 = vmatprep.subr.mxu0 0.0
        %2968 = vmatpush1.xpose.msra.mxu0 0.0
        %2969 = vmatprep.subr.mxu0 0.0
        %2970 = vmatpush1.xpose.msra.mxu0 0.0
        %2971 = vmatprep.subr.mxu0 0.0
        %2972 = vmatpush1.xpose.msra.mxu0 0.0
        %2973 = vmatprep.subr.mxu0 0.0
        %2974 = vmatpush1.xpose.msra.mxu0 0.0
        %2975 = vmatprep.subr.mxu0 0.0
        %2976 = vmatpush1.xpose.msra.mxu0 0.0
        %2977 = vmatprep.subr.mxu0 0.0
        %2978 = vmatpush1.xpose.msra.mxu0 0.0
        %2979 = vmatprep.subr.mxu0 0.0
        %2980 = vmatpush1.xpose.msra.mxu0 %v2947
        %2981 = vmatprep.subr.mxu0 0.0
        %2982 = vmatpush2.xpose.msra.mxu0 0.0
        %2983 = vmatprep.subr.mxu0 0.0
        %2984 = vmatpush2.xpose.msra.mxu0 0.0
        %2985 = vmatprep.subr.mxu0 0.0
        %2986 = vmatpush2.xpose.msra.mxu0 0.0
        %2987 = vmatprep.subr.mxu0 0.0
        %2988 = vmatpush2.xpose.msra.mxu0 0.0
        %2989 = vmatprep.subr.mxu0 0.0
        %2990 = vmatpush2.xpose.msra.mxu0 0.0
        %2991 = vmatprep.subr.mxu0 0.0
        %2992 = vmatpush2.xpose.msra.mxu0 0.0
        %2993 = vmatprep.subr.mxu0 0.0
        %2994 = vmatpush2.xpose.msra.mxu0 0.0
        %2995 = vmatprep.subr.mxu0 0.0
        %2996 = vmatpush2.xpose.msra.mxu0 0.0
        %2997 = vmatprep.subr.mxu0 0.0
        %2998 = vmatpush2.xpose.msra.mxu0 0.0
        %2999 = vmatprep.subr.mxu0 0.0
        %3000 = vmatpush2.xpose.msra.mxu0 0.0
        %3001 = vmatprep.subr.mxu0 0.0
        %3002 = vmatpush2.xpose.msra.mxu0 0.0
        %3003 = vmatprep.subr.mxu0 0.0
        %3004 = vmatpush2.xpose.msra.mxu0 0.0
        %3005 = vmatprep.subr.mxu0 0.0
        %3006 = vmatpush2.xpose.msra.mxu0 0.0
        %3007 = vmatprep.subr.mxu0 0.0
        %3008 = vmatpush2.xpose.msra.mxu0 0.0
        %3009 = vmatprep.subr.mxu0 0.0
        %3010 = vmatpush2.xpose.msra.mxu0 0.0
        %3011 = vmatprep.subr.mxu0 0.0
        %3012 = vmatpush2.xpose.msra.mxu0 0.0
        %3013 = vmatprep.mubr.f32.mxu0 0.0
        %3014 = vmatmul.mubr.f32.gmra.mxu0 %v2945
        %v3015 = vpop.f32.mrf.mxu0
        %v3016 = vadd.f32 0.0, %v3015
        %v3017 = vpop.f32.mrf.mxu0
        %3018 = vdwg.mxu0
        %v3019 = vmul.f32 %v3016, 0.35355338
        %v3020 = vsel %vm1627, %v3019, -inf
        %3021 = vmax.xlane.f32.xlu0 %v3020
        %v3022 = vpop.xlane.xlu0 %3021
        %v3023 = vsub.f32 %v3019, %v3022
        %v3024 = vmul.f32 %v3023, 1.442695
        %v3025 = vpow.pop %v3024
        %v3026 = vsel %vm1627, %v3025, 0.0
        %3027 = vadd.xlane.f32.xlu0 %v3026
        %v3028 = vpop.xlane.xlu0 %3027
        %v3029 = vrcp.pop %v3028
        %v3030 = vmul.f32 %v3025, %v3029
        %3031 = vrot.lane.b32.xlu0 %v2939, 64
        %v3032 = vpop.permute.xlu0 %3031
        %v3035 = vsel %vm1627, %v3030, 0
        %3037 = vmatprep.subr.mxu0 0.0
        %3038 = vmatpush1.msra.mxu0 0.0
        %3039 = vmatprep.subr.mxu0 0.0
        %3040 = vmatpush1.msra.mxu0 0.0
        %3041 = vmatprep.subr.mxu0 0.0
        %3042 = vmatpush1.msra.mxu0 0.0
        %3043 = vmatprep.subr.mxu0 0.0
        %3044 = vmatpush1.msra.mxu0 0.0
        %3045 = vmatprep.subr.mxu0 0.0
        %3046 = vmatpush1.msra.mxu0 0.0
        %3047 = vmatprep.subr.mxu0 0.0
        %3048 = vmatpush1.msra.mxu0 0.0
        %3049 = vmatprep.subr.mxu0 0.0
        %3050 = vmatpush1.msra.mxu0 0.0
        %3051 = vmatprep.subr.mxu0 0.0
        %3052 = vmatpush1.msra.mxu0 0.0
        %3053 = vmatprep.subr.mxu0 0.0
        %3054 = vmatpush1.msra.mxu0 0.0
        %3055 = vmatprep.subr.mxu0 0.0
        %3056 = vmatpush1.msra.mxu0 0.0
        %3057 = vmatprep.subr.mxu0 0.0
        %3058 = vmatpush1.msra.mxu0 0.0
        %3059 = vmatprep.subr.mxu0 0.0
        %3060 = vmatpush1.msra.mxu0 0.0
        %3061 = vmatprep.subr.mxu0 0.0
        %3062 = vmatpush1.msra.mxu0 0.0
        %3063 = vmatprep.subr.mxu0 0.0
        %3064 = vmatpush1.msra.mxu0 0.0
        %3065 = vmatprep.subr.mxu0 0.0
        %3066 = vmatpush1.msra.mxu0 0.0
        %3067 = vmatprep.subr.mxu0 0.0
        %3068 = vmatpush1.msra.mxu0 %v3032
        %3069 = vmatprep.subr.mxu0 0.0
        %3070 = vmatpush2.msra.mxu0 0.0
        %3071 = vmatprep.subr.mxu0 0.0
        %3072 = vmatpush2.msra.mxu0 0.0
        %3073 = vmatprep.subr.mxu0 0.0
        %3074 = vmatpush2.msra.mxu0 0.0
        %3075 = vmatprep.subr.mxu0 0.0
        %3076 = vmatpush2.msra.mxu0 0.0
        %3077 = vmatprep.subr.mxu0 0.0
        %3078 = vmatpush2.msra.mxu0 0.0
        %3079 = vmatprep.subr.mxu0 0.0
        %3080 = vmatpush2.msra.mxu0 0.0
        %3081 = vmatprep.subr.mxu0 0.0
        %3082 = vmatpush2.msra.mxu0 0.0
        %3083 = vmatprep.subr.mxu0 0.0
        %3084 = vmatpush2.msra.mxu0 0.0
        %3085 = vmatprep.subr.mxu0 0.0
        %3086 = vmatpush2.msra.mxu0 0.0
        %3087 = vmatprep.subr.mxu0 0.0
        %3088 = vmatpush2.msra.mxu0 0.0
        %3089 = vmatprep.subr.mxu0 0.0
        %3090 = vmatpush2.msra.mxu0 0.0
        %3091 = vmatprep.subr.mxu0 0.0
        %3092 = vmatpush2.msra.mxu0 0.0
        %3093 = vmatprep.subr.mxu0 0.0
        %3094 = vmatpush2.msra.mxu0 0.0
        %3095 = vmatprep.subr.mxu0 0.0
        %3096 = vmatpush2.msra.mxu0 0.0
        %3097 = vmatprep.subr.mxu0 0.0
        %3098 = vmatpush2.msra.mxu0 0.0
        %3099 = vmatprep.subr.mxu0 0.0
        %3100 = vmatpush2.msra.mxu0 0.0
        %3101 = vmatprep.mubr.f32.mxu0 0.0
        %3102 = vmatmul.mubr.f32.gmra.mxu0 %v3035
        %v3103 = vpop.f32.mrf.mxu0
        %v3104 = vadd.f32 0.0, %v3103
        %v3105 = vpop.f32.mrf.mxu0
        %3106 = vdwg.mxu0
        %v3107 = vld [vmem:[%s41] sm:$0xff]
        %3108 = vrot.lane.b32.xlu0 %v2939, 120
        %v3109 = vpop.permute.xlu0 %3108
        %3110 = vrot.lane.b32.xlu0 %v2939, 88
        %v3111 = vpop.permute.xlu0 %3110
        %v3112 = vsel %vm1627, %v3109, 0
        %v3114 = vsel %vm1627, %v3111, 0
        %3116 = vmatprep.subr.mxu0 0.0
        %3117 = vmatpush1.xpose.msra.mxu0 0.0
        %3118 = vmatprep.subr.mxu0 0.0
        %3119 = vmatpush1.xpose.msra.mxu0 0.0
        %3120 = vmatprep.subr.mxu0 0.0
        %3121 = vmatpush1.xpose.msra.mxu0 0.0
        %3122 = vmatprep.subr.mxu0 0.0
        %3123 = vmatpush1.xpose.msra.mxu0 0.0
        %3124 = vmatprep.subr.mxu0 0.0
        %3125 = vmatpush1.xpose.msra.mxu0 0.0
        %3126 = vmatprep.subr.mxu0 0.0
        %3127 = vmatpush1.xpose.msra.mxu0 0.0
        %3128 = vmatprep.subr.mxu0 0.0
        %3129 = vmatpush1.xpose.msra.mxu0 0.0
        %3130 = vmatprep.subr.mxu0 0.0
        %3131 = vmatpush1.xpose.msra.mxu0 0.0
        %3132 = vmatprep.subr.mxu0 0.0
        %3133 = vmatpush1.xpose.msra.mxu0 0.0
        %3134 = vmatprep.subr.mxu0 0.0
        %3135 = vmatpush1.xpose.msra.mxu0 0.0
        %3136 = vmatprep.subr.mxu0 0.0
        %3137 = vmatpush1.xpose.msra.mxu0 0.0
        %3138 = vmatprep.subr.mxu0 0.0
        %3139 = vmatpush1.xpose.msra.mxu0 0.0
        %3140 = vmatprep.subr.mxu0 0.0
        %3141 = vmatpush1.xpose.msra.mxu0 0.0
        %3142 = vmatprep.subr.mxu0 0.0
        %3143 = vmatpush1.xpose.msra.mxu0 0.0
        %3144 = vmatprep.subr.mxu0 0.0
        %3145 = vmatpush1.xpose.msra.mxu0 0.0
        %3146 = vmatprep.subr.mxu0 0.0
        %3147 = vmatpush1.xpose.msra.mxu0 %v3114
        %3148 = vmatprep.subr.mxu0 0.0
        %3149 = vmatpush2.xpose.msra.mxu0 0.0
        %3150 = vmatprep.subr.mxu0 0.0
        %3151 = vmatpush2.xpose.msra.mxu0 0.0
        %3152 = vmatprep.subr.mxu0 0.0
        %3153 = vmatpush2.xpose.msra.mxu0 0.0
        %3154 = vmatprep.subr.mxu0 0.0
        %3155 = vmatpush2.xpose.msra.mxu0 0.0
        %3156 = vmatprep.subr.mxu0 0.0
        %3157 = vmatpush2.xpose.msra.mxu0 0.0
        %3158 = vmatprep.subr.mxu0 0.0
        %3159 = vmatpush2.xpose.msra.mxu0 0.0
        %3160 = vmatprep.subr.mxu0 0.0
        %3161 = vmatpush2.xpose.msra.mxu0 0.0
        %3162 = vmatprep.subr.mxu0 0.0
        %3163 = vmatpush2.xpose.msra.mxu0 0.0
        %3164 = vmatprep.subr.mxu0 0.0
        %3165 = vmatpush2.xpose.msra.mxu0 0.0
        %3166 = vmatprep.subr.mxu0 0.0
        %3167 = vmatpush2.xpose.msra.mxu0 0.0
        %3168 = vmatprep.subr.mxu0 0.0
        %3169 = vmatpush2.xpose.msra.mxu0 0.0
        %3170 = vmatprep.subr.mxu0 0.0
        %3171 = vmatpush2.xpose.msra.mxu0 0.0
        %3172 = vmatprep.subr.mxu0 0.0
        %3173 = vmatpush2.xpose.msra.mxu0 0.0
        %3174 = vmatprep.subr.mxu0 0.0
        %3175 = vmatpush2.xpose.msra.mxu0 0.0
        %3176 = vmatprep.subr.mxu0 0.0
        %3177 = vmatpush2.xpose.msra.mxu0 0.0
        %3178 = vmatprep.subr.mxu0 0.0
        %3179 = vmatpush2.xpose.msra.mxu0 0.0
        %3180 = vmatprep.mubr.f32.mxu0 0.0
        %3181 = vmatmul.mubr.f32.gmra.mxu0 %v3112
        %v3182 = vpop.f32.mrf.mxu0
        %v3183 = vadd.f32 0.0, %v3182
        %v3184 = vpop.f32.mrf.mxu0
        %3185 = vdwg.mxu0
        %v3186 = vmul.f32 %v3183, 0.35355338
        %v3187 = vsel %vm1627, %v3186, -inf
        %3188 = vmax.xlane.f32.xlu0 %v3187
        %v3189 = vpop.xlane.xlu0 %3188
        %v3190 = vsub.f32 %v3186, %v3189
        %v3191 = vmul.f32 %v3190, 1.442695
        %v3192 = vpow.pop %v3191
        %v3193 = vsel %vm1627, %v3192, 0.0
        %3194 = vadd.xlane.f32.xlu0 %v3193
        %v3195 = vpop.xlane.xlu0 %3194
        %v3196 = vrcp.pop %v3195
        %v3197 = vmul.f32 %v3192, %v3196
        %3198 = vrot.lane.b32.xlu0 %v2939, 56
        %v3199 = vpop.permute.xlu0 %3198
        %v3202 = vsel %vm1627, %v3197, 0
        %3204 = vmatprep.subr.mxu0 0.0
        %3205 = vmatpush1.msra.mxu0 0.0
        %3206 = vmatprep.subr.mxu0 0.0
        %3207 = vmatpush1.msra.mxu0 0.0
        %3208 = vmatprep.subr.mxu0 0.0
        %3209 = vmatpush1.msra.mxu0 0.0
        %3210 = vmatprep.subr.mxu0 0.0
        %3211 = vmatpush1.msra.mxu0 0.0
        %3212 = vmatprep.subr.mxu0 0.0
        %3213 = vmatpush1.msra.mxu0 0.0
        %3214 = vmatprep.subr.mxu0 0.0
        %3215 = vmatpush1.msra.mxu0 0.0
        %3216 = vmatprep.subr.mxu0 0.0
        %3217 = vmatpush1.msra.mxu0 0.0
        %3218 = vmatprep.subr.mxu0 0.0
        %3219 = vmatpush1.msra.mxu0 0.0
        %3220 = vmatprep.subr.mxu0 0.0
        %3221 = vmatpush1.msra.mxu0 0.0
        %3222 = vmatprep.subr.mxu0 0.0
        %3223 = vmatpush1.msra.mxu0 0.0
        %3224 = vmatprep.subr.mxu0 0.0
        %3225 = vmatpush1.msra.mxu0 0.0
        %3226 = vmatprep.subr.mxu0 0.0
        %3227 = vmatpush1.msra.mxu0 0.0
        %3228 = vmatprep.subr.mxu0 0.0
        %3229 = vmatpush1.msra.mxu0 0.0
        %3230 = vmatprep.subr.mxu0 0.0
        %3231 = vmatpush1.msra.mxu0 0.0
        %3232 = vmatprep.subr.mxu0 0.0
        %3233 = vmatpush1.msra.mxu0 0.0
        %3234 = vmatprep.subr.mxu0 0.0
        %3235 = vmatpush1.msra.mxu0 %v3199
        %3236 = vmatprep.subr.mxu0 0.0
        %3237 = vmatpush2.msra.mxu0 0.0
        %3238 = vmatprep.subr.mxu0 0.0
        %3239 = vmatpush2.msra.mxu0 0.0
        %3240 = vmatprep.subr.mxu0 0.0
        %3241 = vmatpush2.msra.mxu0 0.0
        %3242 = vmatprep.subr.mxu0 0.0
        %3243 = vmatpush2.msra.mxu0 0.0
        %3244 = vmatprep.subr.mxu0 0.0
        %3245 = vmatpush2.msra.mxu0 0.0
        %3246 = vmatprep.subr.mxu0 0.0
        %3247 = vmatpush2.msra.mxu0 0.0
        %3248 = vmatprep.subr.mxu0 0.0
        %3249 = vmatpush2.msra.mxu0 0.0
        %3250 = vmatprep.subr.mxu0 0.0
        %3251 = vmatpush2.msra.mxu0 0.0
        %3252 = vmatprep.subr.mxu0 0.0
        %3253 = vmatpush2.msra.mxu0 0.0
        %3254 = vmatprep.subr.mxu0 0.0
        %3255 = vmatpush2.msra.mxu0 0.0
        %3256 = vmatprep.subr.mxu0 0.0
        %3257 = vmatpush2.msra.mxu0 0.0
        %3258 = vmatprep.subr.mxu0 0.0
        %3259 = vmatpush2.msra.mxu0 0.0
        %3260 = vmatprep.subr.mxu0 0.0
        %3261 = vmatpush2.msra.mxu0 0.0
        %3262 = vmatprep.subr.mxu0 0.0
        %3263 = vmatpush2.msra.mxu0 0.0
        %3264 = vmatprep.subr.mxu0 0.0
        %3265 = vmatpush2.msra.mxu0 0.0
        %3266 = vmatprep.subr.mxu0 0.0
        %3267 = vmatpush2.msra.mxu0 0.0
        %3268 = vmatprep.mubr.f32.mxu0 0.0
        %3269 = vmatmul.mubr.f32.gmra.mxu0 %v3202
        %v3270 = vpop.f32.mrf.mxu0
        %v3271 = vadd.f32 0.0, %v3270
        %v3272 = vpop.f32.mrf.mxu0
        %3273 = vdwg.mxu0
        %v3274 = vld [vmem:[%s41 + $0x8] sm:$0xff]
        %v3276 = vsel %vm1627, %v3271, 0
        %3278 = vmatprep.subr.mxu0 0.0
        %3279 = vmatpush1.msra.mxu0 0.0
        %3280 = vmatprep.subr.mxu0 0.0
        %3281 = vmatpush1.msra.mxu0 0.0
        %3282 = vmatprep.subr.mxu0 0.0
        %3283 = vmatpush1.msra.mxu0 0.0
        %3284 = vmatprep.subr.mxu0 0.0
        %3285 = vmatpush1.msra.mxu0 0.0
        %3286 = vmatprep.subr.mxu0 0.0
        %3287 = vmatpush1.msra.mxu0 0.0
        %3288 = vmatprep.subr.mxu0 0.0
        %3289 = vmatpush1.msra.mxu0 0.0
        %3290 = vmatprep.subr.mxu0 0.0
        %3291 = vmatpush1.msra.mxu0 0.0
        %3292 = vmatprep.subr.mxu0 0.0
        %3293 = vmatpush1.msra.mxu0 0.0
        %3294 = vmatprep.subr.mxu0 0.0
        %3295 = vmatpush1.msra.mxu0 0.0
        %3296 = vmatprep.subr.mxu0 0.0
        %3297 = vmatpush1.msra.mxu0 0.0
        %3298 = vmatprep.subr.mxu0 0.0
        %3299 = vmatpush1.msra.mxu0 0.0
        %3300 = vmatprep.subr.mxu0 0.0
        %3301 = vmatpush1.msra.mxu0 0.0
        %3302 = vmatprep.subr.mxu0 0.0
        %3303 = vmatpush1.msra.mxu0 0.0
        %3304 = vmatprep.subr.mxu0 0.0
        %3305 = vmatpush1.msra.mxu0 0.0
        %3306 = vmatprep.subr.mxu0 0.0
        %3307 = vmatpush1.msra.mxu0 0.0
        %3308 = vmatprep.subr.mxu0 0.0
        %3309 = vmatpush1.msra.mxu0 %v3274
        %3310 = vmatprep.subr.mxu0 0.0
        %3311 = vmatpush2.msra.mxu0 0.0
        %3312 = vmatprep.subr.mxu0 0.0
        %3313 = vmatpush2.msra.mxu0 0.0
        %3314 = vmatprep.subr.mxu0 0.0
        %3315 = vmatpush2.msra.mxu0 0.0
        %3316 = vmatprep.subr.mxu0 0.0
        %3317 = vmatpush2.msra.mxu0 0.0
        %3318 = vmatprep.subr.mxu0 0.0
        %3319 = vmatpush2.msra.mxu0 0.0
        %3320 = vmatprep.subr.mxu0 0.0
        %3321 = vmatpush2.msra.mxu0 0.0
        %3322 = vmatprep.subr.mxu0 0.0
        %3323 = vmatpush2.msra.mxu0 0.0
        %3324 = vmatprep.subr.mxu0 0.0
        %3325 = vmatpush2.msra.mxu0 0.0
        %3326 = vmatprep.subr.mxu0 0.0
        %3327 = vmatpush2.msra.mxu0 0.0
        %3328 = vmatprep.subr.mxu0 0.0
        %3329 = vmatpush2.msra.mxu0 0.0
        %3330 = vmatprep.subr.mxu0 0.0
        %3331 = vmatpush2.msra.mxu0 0.0
        %3332 = vmatprep.subr.mxu0 0.0
        %3333 = vmatpush2.msra.mxu0 0.0
        %3334 = vmatprep.subr.mxu0 0.0
        %3335 = vmatpush2.msra.mxu0 0.0
        %3336 = vmatprep.subr.mxu0 0.0
        %3337 = vmatpush2.msra.mxu0 0.0
        %3338 = vmatprep.subr.mxu0 0.0
        %3339 = vmatpush2.msra.mxu0 0.0
        %3340 = vmatprep.subr.mxu0 0.0
        %3341 = vmatpush2.msra.mxu0 0.0
        %3342 = vmatprep.mubr.f32.mxu0 0.0
        %3343 = vmatmul.mubr.f32.gmra.mxu0 %v3276
        %v3344 = vpop.f32.mrf.mxu0
        %v3345 = vadd.f32 0.0, %v3344
        %v3346 = vpop.f32.mrf.mxu0
        %3347 = vdwg.mxu0
        %v3349 = vsel %vm1627, %v3104, 0
        %3351 = vmatprep.subr.mxu0 0.0
        %3352 = vmatpush1.msra.mxu0 0.0
        %3353 = vmatprep.subr.mxu0 0.0
        %3354 = vmatpush1.msra.mxu0 0.0
        %3355 = vmatprep.subr.mxu0 0.0
        %3356 = vmatpush1.msra.mxu0 0.0
        %3357 = vmatprep.subr.mxu0 0.0
        %3358 = vmatpush1.msra.mxu0 0.0
        %3359 = vmatprep.subr.mxu0 0.0
        %3360 = vmatpush1.msra.mxu0 0.0
        %3361 = vmatprep.subr.mxu0 0.0
        %3362 = vmatpush1.msra.mxu0 0.0
        %3363 = vmatprep.subr.mxu0 0.0
        %3364 = vmatpush1.msra.mxu0 0.0
        %3365 = vmatprep.subr.mxu0 0.0
        %3366 = vmatpush1.msra.mxu0 0.0
        %3367 = vmatprep.subr.mxu0 0.0
        %3368 = vmatpush1.msra.mxu0 0.0
        %3369 = vmatprep.subr.mxu0 0.0
        %3370 = vmatpush1.msra.mxu0 0.0
        %3371 = vmatprep.subr.mxu0 0.0
        %3372 = vmatpush1.msra.mxu0 0.0
        %3373 = vmatprep.subr.mxu0 0.0
        %3374 = vmatpush1.msra.mxu0 0.0
        %3375 = vmatprep.subr.mxu0 0.0
        %3376 = vmatpush1.msra.mxu0 0.0
        %3377 = vmatprep.subr.mxu0 0.0
        %3378 = vmatpush1.msra.mxu0 0.0
        %3379 = vmatprep.subr.mxu0 0.0
        %3380 = vmatpush1.msra.mxu0 0.0
        %3381 = vmatprep.subr.mxu0 0.0
        %3382 = vmatpush1.msra.mxu0 %v3107
        %3383 = vmatprep.subr.mxu0 0.0
        %3384 = vmatpush2.msra.mxu0 0.0
        %3385 = vmatprep.subr.mxu0 0.0
        %3386 = vmatpush2.msra.mxu0 0.0
        %3387 = vmatprep.subr.mxu0 0.0
        %3388 = vmatpush2.msra.mxu0 0.0
        %3389 = vmatprep.subr.mxu0 0.0
        %3390 = vmatpush2.msra.mxu0 0.0
        %3391 = vmatprep.subr.mxu0 0.0
        %3392 = vmatpush2.msra.mxu0 0.0
        %3393 = vmatprep.subr.mxu0 0.0
        %3394 = vmatpush2.msra.mxu0 0.0
        %3395 = vmatprep.subr.mxu0 0.0
        %3396 = vmatpush2.msra.mxu0 0.0
        %3397 = vmatprep.subr.mxu0 0.0
        %3398 = vmatpush2.msra.mxu0 0.0
        %3399 = vmatprep.subr.mxu0 0.0
        %3400 = vmatpush2.msra.mxu0 0.0
        %3401 = vmatprep.subr.mxu0 0.0
        %3402 = vmatpush2.msra.mxu0 0.0
        %3403 = vmatprep.subr.mxu0 0.0
        %3404 = vmatpush2.msra.mxu0 0.0
        %3405 = vmatprep.subr.mxu0 0.0
        %3406 = vmatpush2.msra.mxu0 0.0
        %3407 = vmatprep.subr.mxu0 0.0
        %3408 = vmatpush2.msra.mxu0 0.0
        %3409 = vmatprep.subr.mxu0 0.0
        %3410 = vmatpush2.msra.mxu0 0.0
        %3411 = vmatprep.subr.mxu0 0.0
        %3412 = vmatpush2.msra.mxu0 0.0
        %3413 = vmatprep.subr.mxu0 0.0
        %3414 = vmatpush2.msra.mxu0 0.0
        %3415 = vmatprep.mubr.f32.mxu0 0.0
        %3416 = vmatmul.mubr.f32.gmra.mxu0 %v3349
        %v3417 = vpop.f32.mrf.mxu0
        %v3418 = vadd.f32 %v3345, %v3417
        %v3419 = vpop.f32.mrf.mxu0
        %3420 = vdwg.mxu0
        %3421 = vrot.lane.b32.xlu0 %v2939, 112
        %v3422 = vpop.permute.xlu0 %3421
        %3423 = vrot.lane.b32.xlu0 %v2939, 80
        %v3424 = vpop.permute.xlu0 %3423
        %v3425 = vsel %vm1627, %v3422, 0
        %v3427 = vsel %vm1627, %v3424, 0
        %3429 = vmatprep.subr.mxu0 0.0
        %3430 = vmatpush1.xpose.msra.mxu0 0.0
        %3431 = vmatprep.subr.mxu0 0.0
        %3432 = vmatpush1.xpose.msra.mxu0 0.0
        %3433 = vmatprep.subr.mxu0 0.0
        %3434 = vmatpush1.xpose.msra.mxu0 0.0
        %3435 = vmatprep.subr.mxu0 0.0
        %3436 = vmatpush1.xpose.msra.mxu0 0.0
        %3437 = vmatprep.subr.mxu0 0.0
        %3438 = vmatpush1.xpose.msra.mxu0 0.0
        %3439 = vmatprep.subr.mxu0 0.0
        %3440 = vmatpush1.xpose.msra.mxu0 0.0
        %3441 = vmatprep.subr.mxu0 0.0
        %3442 = vmatpush1.xpose.msra.mxu0 0.0
        %3443 = vmatprep.subr.mxu0 0.0
        %3444 = vmatpush1.xpose.msra.mxu0 0.0
        %3445 = vmatprep.subr.mxu0 0.0
        %3446 = vmatpush1.xpose.msra.mxu0 0.0
        %3447 = vmatprep.subr.mxu0 0.0
        %3448 = vmatpush1.xpose.msra.mxu0 0.0
        %3449 = vmatprep.subr.mxu0 0.0
        %3450 = vmatpush1.xpose.msra.mxu0 0.0
        %3451 = vmatprep.subr.mxu0 0.0
        %3452 = vmatpush1.xpose.msra.mxu0 0.0
        %3453 = vmatprep.subr.mxu0 0.0
        %3454 = vmatpush1.xpose.msra.mxu0 0.0
        %3455 = vmatprep.subr.mxu0 0.0
        %3456 = vmatpush1.xpose.msra.mxu0 0.0
        %3457 = vmatprep.subr.mxu0 0.0
        %3458 = vmatpush1.xpose.msra.mxu0 0.0
        %3459 = vmatprep.subr.mxu0 0.0
        %3460 = vmatpush1.xpose.msra.mxu0 %v3427
        %3461 = vmatprep.subr.mxu0 0.0
        %3462 = vmatpush2.xpose.msra.mxu0 0.0
        %3463 = vmatprep.subr.mxu0 0.0
        %3464 = vmatpush2.xpose.msra.mxu0 0.0
        %3465 = vmatprep.subr.mxu0 0.0
        %3466 = vmatpush2.xpose.msra.mxu0 0.0
        %3467 = vmatprep.subr.mxu0 0.0
        %3468 = vmatpush2.xpose.msra.mxu0 0.0
        %3469 = vmatprep.subr.mxu0 0.0
        %3470 = vmatpush2.xpose.msra.mxu0 0.0
        %3471 = vmatprep.subr.mxu0 0.0
        %3472 = vmatpush2.xpose.msra.mxu0 0.0
        %3473 = vmatprep.subr.mxu0 0.0
        %3474 = vmatpush2.xpose.msra.mxu0 0.0
        %3475 = vmatprep.subr.mxu0 0.0
        %3476 = vmatpush2.xpose.msra.mxu0 0.0
        %3477 = vmatprep.subr.mxu0 0.0
        %3478 = vmatpush2.xpose.msra.mxu0 0.0
        %3479 = vmatprep.subr.mxu0 0.0
        %3480 = vmatpush2.xpose.msra.mxu0 0.0
        %3481 = vmatprep.subr.mxu0 0.0
        %3482 = vmatpush2.xpose.msra.mxu0 0.0
        %3483 = vmatprep.subr.mxu0 0.0
        %3484 = vmatpush2.xpose.msra.mxu0 0.0
        %3485 = vmatprep.subr.mxu0 0.0
        %3486 = vmatpush2.xpose.msra.mxu0 0.0
        %3487 = vmatprep.subr.mxu0 0.0
        %3488 = vmatpush2.xpose.msra.mxu0 0.0
        %3489 = vmatprep.subr.mxu0 0.0
        %3490 = vmatpush2.xpose.msra.mxu0 0.0
        %3491 = vmatprep.subr.mxu0 0.0
        %3492 = vmatpush2.xpose.msra.mxu0 0.0
        %3493 = vmatprep.mubr.f32.mxu0 0.0
        %3494 = vmatmul.mubr.f32.gmra.mxu0 %v3425
        %v3495 = vpop.f32.mrf.mxu0
        %v3496 = vadd.f32 0.0, %v3495
        %v3497 = vpop.f32.mrf.mxu0
        %3498 = vdwg.mxu0
        %v3499 = vmul.f32 %v3496, 0.35355338
        %v3500 = vsel %vm1627, %v3499, -inf
        %3501 = vmax.xlane.f32.xlu0 %v3500
        %v3502 = vpop.xlane.xlu0 %3501
        %v3503 = vsub.f32 %v3499, %v3502
        %v3504 = vmul.f32 %v3503, 1.442695
        %v3505 = vpow.pop %v3504
        %v3506 = vsel %vm1627, %v3505, 0.0
        %3507 = vadd.xlane.f32.xlu0 %v3506
        %v3508 = vpop.xlane.xlu0 %3507
        %v3509 = vrcp.pop %v3508
        %v3510 = vmul.f32 %v3505, %v3509
        %3511 = vrot.lane.b32.xlu0 %v2939, 48
        %v3512 = vpop.permute.xlu0 %3511
        %v3515 = vsel %vm1627, %v3510, 0
        %3517 = vmatprep.subr.mxu0 0.0
        %3518 = vmatpush1.msra.mxu0 0.0
        %3519 = vmatprep.subr.mxu0 0.0
        %3520 = vmatpush1.msra.mxu0 0.0
        %3521 = vmatprep.subr.mxu0 0.0
        %3522 = vmatpush1.msra.mxu0 0.0
        %3523 = vmatprep.subr.mxu0 0.0
        %3524 = vmatpush1.msra.mxu0 0.0
        %3525 = vmatprep.subr.mxu0 0.0
        %3526 = vmatpush1.msra.mxu0 0.0
        %3527 = vmatprep.subr.mxu0 0.0
        %3528 = vmatpush1.msra.mxu0 0.0
        %3529 = vmatprep.subr.mxu0 0.0
        %3530 = vmatpush1.msra.mxu0 0.0
        %3531 = vmatprep.subr.mxu0 0.0
        %3532 = vmatpush1.msra.mxu0 0.0
        %3533 = vmatprep.subr.mxu0 0.0
        %3534 = vmatpush1.msra.mxu0 0.0
        %3535 = vmatprep.subr.mxu0 0.0
        %3536 = vmatpush1.msra.mxu0 0.0
        %3537 = vmatprep.subr.mxu0 0.0
        %3538 = vmatpush1.msra.mxu0 0.0
        %3539 = vmatprep.subr.mxu0 0.0
        %3540 = vmatpush1.msra.mxu0 0.0
        %3541 = vmatprep.subr.mxu0 0.0
        %3542 = vmatpush1.msra.mxu0 0.0
        %3543 = vmatprep.subr.mxu0 0.0
        %3544 = vmatpush1.msra.mxu0 0.0
        %3545 = vmatprep.subr.mxu0 0.0
        %3546 = vmatpush1.msra.mxu0 0.0
        %3547 = vmatprep.subr.mxu0 0.0
        %3548 = vmatpush1.msra.mxu0 %v3512
        %3549 = vmatprep.subr.mxu0 0.0
        %3550 = vmatpush2.msra.mxu0 0.0
        %3551 = vmatprep.subr.mxu0 0.0
        %3552 = vmatpush2.msra.mxu0 0.0
        %3553 = vmatprep.subr.mxu0 0.0
        %3554 = vmatpush2.msra.mxu0 0.0
        %3555 = vmatprep.subr.mxu0 0.0
        %3556 = vmatpush2.msra.mxu0 0.0
        %3557 = vmatprep.subr.mxu0 0.0
        %3558 = vmatpush2.msra.mxu0 0.0
        %3559 = vmatprep.subr.mxu0 0.0
        %3560 = vmatpush2.msra.mxu0 0.0
        %3561 = vmatprep.subr.mxu0 0.0
        %3562 = vmatpush2.msra.mxu0 0.0
        %3563 = vmatprep.subr.mxu0 0.0
        %3564 = vmatpush2.msra.mxu0 0.0
        %3565 = vmatprep.subr.mxu0 0.0
        %3566 = vmatpush2.msra.mxu0 0.0
        %3567 = vmatprep.subr.mxu0 0.0
        %3568 = vmatpush2.msra.mxu0 0.0
        %3569 = vmatprep.subr.mxu0 0.0
        %3570 = vmatpush2.msra.mxu0 0.0
        %3571 = vmatprep.subr.mxu0 0.0
        %3572 = vmatpush2.msra.mxu0 0.0
        %3573 = vmatprep.subr.mxu0 0.0
        %3574 = vmatpush2.msra.mxu0 0.0
        %3575 = vmatprep.subr.mxu0 0.0
        %3576 = vmatpush2.msra.mxu0 0.0
        %3577 = vmatprep.subr.mxu0 0.0
        %3578 = vmatpush2.msra.mxu0 0.0
        %3579 = vmatprep.subr.mxu0 0.0
        %3580 = vmatpush2.msra.mxu0 0.0
        %3581 = vmatprep.mubr.f32.mxu0 0.0
        %3582 = vmatmul.mubr.f32.gmra.mxu0 %v3515
        %v3583 = vpop.f32.mrf.mxu0
        %v3584 = vadd.f32 0.0, %v3583
        %v3585 = vpop.f32.mrf.mxu0
        %3586 = vdwg.mxu0
        %v3587 = vld [vmem:[%s41 + $0x10] sm:$0xff]
        %v3589 = vsel %vm1627, %v3584, 0
        %3591 = vmatprep.subr.mxu0 0.0
        %3592 = vmatpush1.msra.mxu0 0.0
        %3593 = vmatprep.subr.mxu0 0.0
        %3594 = vmatpush1.msra.mxu0 0.0
        %3595 = vmatprep.subr.mxu0 0.0
        %3596 = vmatpush1.msra.mxu0 0.0
        %3597 = vmatprep.subr.mxu0 0.0
        %3598 = vmatpush1.msra.mxu0 0.0
        %3599 = vmatprep.subr.mxu0 0.0
        %3600 = vmatpush1.msra.mxu0 0.0
        %3601 = vmatprep.subr.mxu0 0.0
        %3602 = vmatpush1.msra.mxu0 0.0
        %3603 = vmatprep.subr.mxu0 0.0
        %3604 = vmatpush1.msra.mxu0 0.0
        %3605 = vmatprep.subr.mxu0 0.0
        %3606 = vmatpush1.msra.mxu0 0.0
        %3607 = vmatprep.subr.mxu0 0.0
        %3608 = vmatpush1.msra.mxu0 0.0
        %3609 = vmatprep.subr.mxu0 0.0
        %3610 = vmatpush1.msra.mxu0 0.0
        %3611 = vmatprep.subr.mxu0 0.0
        %3612 = vmatpush1.msra.mxu0 0.0
        %3613 = vmatprep.subr.mxu0 0.0
        %3614 = vmatpush1.msra.mxu0 0.0
        %3615 = vmatprep.subr.mxu0 0.0
        %3616 = vmatpush1.msra.mxu0 0.0
        %3617 = vmatprep.subr.mxu0 0.0
        %3618 = vmatpush1.msra.mxu0 0.0
        %3619 = vmatprep.subr.mxu0 0.0
        %3620 = vmatpush1.msra.mxu0 0.0
        %3621 = vmatprep.subr.mxu0 0.0
        %3622 = vmatpush1.msra.mxu0 %v3587
        %3623 = vmatprep.subr.mxu0 0.0
        %3624 = vmatpush2.msra.mxu0 0.0
        %3625 = vmatprep.subr.mxu0 0.0
        %3626 = vmatpush2.msra.mxu0 0.0
        %3627 = vmatprep.subr.mxu0 0.0
        %3628 = vmatpush2.msra.mxu0 0.0
        %3629 = vmatprep.subr.mxu0 0.0
        %3630 = vmatpush2.msra.mxu0 0.0
        %3631 = vmatprep.subr.mxu0 0.0
        %3632 = vmatpush2.msra.mxu0 0.0
        %3633 = vmatprep.subr.mxu0 0.0
        %3634 = vmatpush2.msra.mxu0 0.0
        %3635 = vmatprep.subr.mxu0 0.0
        %3636 = vmatpush2.msra.mxu0 0.0
        %3637 = vmatprep.subr.mxu0 0.0
        %3638 = vmatpush2.msra.mxu0 0.0
        %3639 = vmatprep.subr.mxu0 0.0
        %3640 = vmatpush2.msra.mxu0 0.0
        %3641 = vmatprep.subr.mxu0 0.0
        %3642 = vmatpush2.msra.mxu0 0.0
        %3643 = vmatprep.subr.mxu0 0.0
        %3644 = vmatpush2.msra.mxu0 0.0
        %3645 = vmatprep.subr.mxu0 0.0
        %3646 = vmatpush2.msra.mxu0 0.0
        %3647 = vmatprep.subr.mxu0 0.0
        %3648 = vmatpush2.msra.mxu0 0.0
        %3649 = vmatprep.subr.mxu0 0.0
        %3650 = vmatpush2.msra.mxu0 0.0
        %3651 = vmatprep.subr.mxu0 0.0
        %3652 = vmatpush2.msra.mxu0 0.0
        %3653 = vmatprep.subr.mxu0 0.0
        %3654 = vmatpush2.msra.mxu0 0.0
        %3655 = vmatprep.mubr.f32.mxu0 0.0
        %3656 = vmatmul.mubr.f32.gmra.mxu0 %v3589
        %v3657 = vpop.f32.mrf.mxu0
        %v3658 = vadd.f32 0.0, %v3657
        %v3659 = vpop.f32.mrf.mxu0
        %3660 = vdwg.mxu0
        %v3661 = vadd.f32 %v3418, %v3658
        %3662 = vrot.lane.b32.xlu0 %v2939, 104
        %v3663 = vpop.permute.xlu0 %3662
        %3664 = vrot.lane.b32.xlu0 %v2939, 72
        %v3665 = vpop.permute.xlu0 %3664
        %v3666 = vsel %vm1627, %v3663, 0
        %v3668 = vsel %vm1627, %v3665, 0
        %3670 = vmatprep.subr.mxu0 0.0
        %3671 = vmatpush1.xpose.msra.mxu0 0.0
        %3672 = vmatprep.subr.mxu0 0.0
        %3673 = vmatpush1.xpose.msra.mxu0 0.0
        %3674 = vmatprep.subr.mxu0 0.0
        %3675 = vmatpush1.xpose.msra.mxu0 0.0
        %3676 = vmatprep.subr.mxu0 0.0
        %3677 = vmatpush1.xpose.msra.mxu0 0.0
        %3678 = vmatprep.subr.mxu0 0.0
        %3679 = vmatpush1.xpose.msra.mxu0 0.0
        %3680 = vmatprep.subr.mxu0 0.0
        %3681 = vmatpush1.xpose.msra.mxu0 0.0
        %3682 = vmatprep.subr.mxu0 0.0
        %3683 = vmatpush1.xpose.msra.mxu0 0.0
        %3684 = vmatprep.subr.mxu0 0.0
        %3685 = vmatpush1.xpose.msra.mxu0 0.0
        %3686 = vmatprep.subr.mxu0 0.0
        %3687 = vmatpush1.xpose.msra.mxu0 0.0
        %3688 = vmatprep.subr.mxu0 0.0
        %3689 = vmatpush1.xpose.msra.mxu0 0.0
        %3690 = vmatprep.subr.mxu0 0.0
        %3691 = vmatpush1.xpose.msra.mxu0 0.0
        %3692 = vmatprep.subr.mxu0 0.0
        %3693 = vmatpush1.xpose.msra.mxu0 0.0
        %3694 = vmatprep.subr.mxu0 0.0
        %3695 = vmatpush1.xpose.msra.mxu0 0.0
        %3696 = vmatprep.subr.mxu0 0.0
        %3697 = vmatpush1.xpose.msra.mxu0 0.0
        %3698 = vmatprep.subr.mxu0 0.0
        %3699 = vmatpush1.xpose.msra.mxu0 0.0
        %3700 = vmatprep.subr.mxu0 0.0
        %3701 = vmatpush1.xpose.msra.mxu0 %v3668
        %3702 = vmatprep.subr.mxu0 0.0
        %3703 = vmatpush2.xpose.msra.mxu0 0.0
        %3704 = vmatprep.subr.mxu0 0.0
        %3705 = vmatpush2.xpose.msra.mxu0 0.0
        %3706 = vmatprep.subr.mxu0 0.0
        %3707 = vmatpush2.xpose.msra.mxu0 0.0
        %3708 = vmatprep.subr.mxu0 0.0
        %3709 = vmatpush2.xpose.msra.mxu0 0.0
        %3710 = vmatprep.subr.mxu0 0.0
        %3711 = vmatpush2.xpose.msra.mxu0 0.0
        %3712 = vmatprep.subr.mxu0 0.0
        %3713 = vmatpush2.xpose.msra.mxu0 0.0
        %3714 = vmatprep.subr.mxu0 0.0
        %3715 = vmatpush2.xpose.msra.mxu0 0.0
        %3716 = vmatprep.subr.mxu0 0.0
        %3717 = vmatpush2.xpose.msra.mxu0 0.0
        %3718 = vmatprep.subr.mxu0 0.0
        %3719 = vmatpush2.xpose.msra.mxu0 0.0
        %3720 = vmatprep.subr.mxu0 0.0
        %3721 = vmatpush2.xpose.msra.mxu0 0.0
        %3722 = vmatprep.subr.mxu0 0.0
        %3723 = vmatpush2.xpose.msra.mxu0 0.0
        %3724 = vmatprep.subr.mxu0 0.0
        %3725 = vmatpush2.xpose.msra.mxu0 0.0
        %3726 = vmatprep.subr.mxu0 0.0
        %3727 = vmatpush2.xpose.msra.mxu0 0.0
        %3728 = vmatprep.subr.mxu0 0.0
        %3729 = vmatpush2.xpose.msra.mxu0 0.0
        %3730 = vmatprep.subr.mxu0 0.0
        %3731 = vmatpush2.xpose.msra.mxu0 0.0
        %3732 = vmatprep.subr.mxu0 0.0
        %3733 = vmatpush2.xpose.msra.mxu0 0.0
        %3734 = vmatprep.mubr.f32.mxu0 0.0
        %3735 = vmatmul.mubr.f32.gmra.mxu0 %v3666
        %v3736 = vpop.f32.mrf.mxu0
        %v3737 = vadd.f32 0.0, %v3736
        %v3738 = vpop.f32.mrf.mxu0
        %3739 = vdwg.mxu0
        %v3740 = vmul.f32 %v3737, 0.35355338
        %v3741 = vsel %vm1627, %v3740, -inf
        %3742 = vmax.xlane.f32.xlu0 %v3741
        %v3743 = vpop.xlane.xlu0 %3742
        %v3744 = vsub.f32 %v3740, %v3743
        %v3745 = vmul.f32 %v3744, 1.442695
        %v3746 = vpow.pop %v3745
        %v3747 = vsel %vm1627, %v3746, 0.0
        %3748 = vadd.xlane.f32.xlu0 %v3747
        %v3749 = vpop.xlane.xlu0 %3748
        %v3750 = vrcp.pop %v3749
        %v3751 = vmul.f32 %v3746, %v3750
        %3752 = vrot.lane.b32.xlu0 %v2939, 40
        %v3753 = vpop.permute.xlu0 %3752
        %v3756 = vsel %vm1627, %v3751, 0
        %3758 = vmatprep.subr.mxu0 0.0
        %3759 = vmatpush1.msra.mxu0 0.0
        %3760 = vmatprep.subr.mxu0 0.0
        %3761 = vmatpush1.msra.mxu0 0.0
        %3762 = vmatprep.subr.mxu0 0.0
        %3763 = vmatpush1.msra.mxu0 0.0
        %3764 = vmatprep.subr.mxu0 0.0
        %3765 = vmatpush1.msra.mxu0 0.0
        %3766 = vmatprep.subr.mxu0 0.0
        %3767 = vmatpush1.msra.mxu0 0.0
        %3768 = vmatprep.subr.mxu0 0.0
        %3769 = vmatpush1.msra.mxu0 0.0
        %3770 = vmatprep.subr.mxu0 0.0
        %3771 = vmatpush1.msra.mxu0 0.0
        %3772 = vmatprep.subr.mxu0 0.0
        %3773 = vmatpush1.msra.mxu0 0.0
        %3774 = vmatprep.subr.mxu0 0.0
        %3775 = vmatpush1.msra.mxu0 0.0
        %3776 = vmatprep.subr.mxu0 0.0
        %3777 = vmatpush1.msra.mxu0 0.0
        %3778 = vmatprep.subr.mxu0 0.0
        %3779 = vmatpush1.msra.mxu0 0.0
        %3780 = vmatprep.subr.mxu0 0.0
        %3781 = vmatpush1.msra.mxu0 0.0
        %3782 = vmatprep.subr.mxu0 0.0
        %3783 = vmatpush1.msra.mxu0 0.0
        %3784 = vmatprep.subr.mxu0 0.0
        %3785 = vmatpush1.msra.mxu0 0.0
        %3786 = vmatprep.subr.mxu0 0.0
        %3787 = vmatpush1.msra.mxu0 0.0
        %3788 = vmatprep.subr.mxu0 0.0
        %3789 = vmatpush1.msra.mxu0 %v3753
        %3790 = vmatprep.subr.mxu0 0.0
        %3791 = vmatpush2.msra.mxu0 0.0
        %3792 = vmatprep.subr.mxu0 0.0
        %3793 = vmatpush2.msra.mxu0 0.0
        %3794 = vmatprep.subr.mxu0 0.0
        %3795 = vmatpush2.msra.mxu0 0.0
        %3796 = vmatprep.subr.mxu0 0.0
        %3797 = vmatpush2.msra.mxu0 0.0
        %3798 = vmatprep.subr.mxu0 0.0
        %3799 = vmatpush2.msra.mxu0 0.0
        %3800 = vmatprep.subr.mxu0 0.0
        %3801 = vmatpush2.msra.mxu0 0.0
        %3802 = vmatprep.subr.mxu0 0.0
        %3803 = vmatpush2.msra.mxu0 0.0
        %3804 = vmatprep.subr.mxu0 0.0
        %3805 = vmatpush2.msra.mxu0 0.0
        %3806 = vmatprep.subr.mxu0 0.0
        %3807 = vmatpush2.msra.mxu0 0.0
        %3808 = vmatprep.subr.mxu0 0.0
        %3809 = vmatpush2.msra.mxu0 0.0
        %3810 = vmatprep.subr.mxu0 0.0
        %3811 = vmatpush2.msra.mxu0 0.0
        %3812 = vmatprep.subr.mxu0 0.0
        %3813 = vmatpush2.msra.mxu0 0.0
        %3814 = vmatprep.subr.mxu0 0.0
        %3815 = vmatpush2.msra.mxu0 0.0
        %3816 = vmatprep.subr.mxu0 0.0
        %3817 = vmatpush2.msra.mxu0 0.0
        %3818 = vmatprep.subr.mxu0 0.0
        %3819 = vmatpush2.msra.mxu0 0.0
        %3820 = vmatprep.subr.mxu0 0.0
        %3821 = vmatpush2.msra.mxu0 0.0
        %3822 = vmatprep.mubr.f32.mxu0 0.0
        %3823 = vmatmul.mubr.f32.gmra.mxu0 %v3756
        %v3824 = vpop.f32.mrf.mxu0
        %v3825 = vadd.f32 0.0, %v3824
        %v3826 = vpop.f32.mrf.mxu0
        %3827 = vdwg.mxu0
        %v3828 = vld [vmem:[%s41 + $0x18] sm:$0xff]
        %v3830 = vsel %vm1627, %v3825, 0
        %3832 = vmatprep.subr.mxu0 0.0
        %3833 = vmatpush1.msra.mxu0 0.0
        %3834 = vmatprep.subr.mxu0 0.0
        %3835 = vmatpush1.msra.mxu0 0.0
        %3836 = vmatprep.subr.mxu0 0.0
        %3837 = vmatpush1.msra.mxu0 0.0
        %3838 = vmatprep.subr.mxu0 0.0
        %3839 = vmatpush1.msra.mxu0 0.0
        %3840 = vmatprep.subr.mxu0 0.0
        %3841 = vmatpush1.msra.mxu0 0.0
        %3842 = vmatprep.subr.mxu0 0.0
        %3843 = vmatpush1.msra.mxu0 0.0
        %3844 = vmatprep.subr.mxu0 0.0
        %3845 = vmatpush1.msra.mxu0 0.0
        %3846 = vmatprep.subr.mxu0 0.0
        %3847 = vmatpush1.msra.mxu0 0.0
        %3848 = vmatprep.subr.mxu0 0.0
        %3849 = vmatpush1.msra.mxu0 0.0
        %3850 = vmatprep.subr.mxu0 0.0
        %3851 = vmatpush1.msra.mxu0 0.0
        %3852 = vmatprep.subr.mxu0 0.0
        %3853 = vmatpush1.msra.mxu0 0.0
        %3854 = vmatprep.subr.mxu0 0.0
        %3855 = vmatpush1.msra.mxu0 0.0
        %3856 = vmatprep.subr.mxu0 0.0
        %3857 = vmatpush1.msra.mxu0 0.0
        %3858 = vmatprep.subr.mxu0 0.0
        %3859 = vmatpush1.msra.mxu0 0.0
        %3860 = vmatprep.subr.mxu0 0.0
        %3861 = vmatpush1.msra.mxu0 0.0
        %3862 = vmatprep.subr.mxu0 0.0
        %3863 = vmatpush1.msra.mxu0 %v3828
        %3864 = vmatprep.subr.mxu0 0.0
        %3865 = vmatpush2.msra.mxu0 0.0
        %3866 = vmatprep.subr.mxu0 0.0
        %3867 = vmatpush2.msra.mxu0 0.0
        %3868 = vmatprep.subr.mxu0 0.0
        %3869 = vmatpush2.msra.mxu0 0.0
        %3870 = vmatprep.subr.mxu0 0.0
        %3871 = vmatpush2.msra.mxu0 0.0
        %3872 = vmatprep.subr.mxu0 0.0
        %3873 = vmatpush2.msra.mxu0 0.0
        %3874 = vmatprep.subr.mxu0 0.0
        %3875 = vmatpush2.msra.mxu0 0.0
        %3876 = vmatprep.subr.mxu0 0.0
        %3877 = vmatpush2.msra.mxu0 0.0
        %3878 = vmatprep.subr.mxu0 0.0
        %3879 = vmatpush2.msra.mxu0 0.0
        %3880 = vmatprep.subr.mxu0 0.0
        %3881 = vmatpush2.msra.mxu0 0.0
        %3882 = vmatprep.subr.mxu0 0.0
        %3883 = vmatpush2.msra.mxu0 0.0
        %3884 = vmatprep.subr.mxu0 0.0
        %3885 = vmatpush2.msra.mxu0 0.0
        %3886 = vmatprep.subr.mxu0 0.0
        %3887 = vmatpush2.msra.mxu0 0.0
        %3888 = vmatprep.subr.mxu0 0.0
        %3889 = vmatpush2.msra.mxu0 0.0
        %3890 = vmatprep.subr.mxu0 0.0
        %3891 = vmatpush2.msra.mxu0 0.0
        %3892 = vmatprep.subr.mxu0 0.0
        %3893 = vmatpush2.msra.mxu0 0.0
        %3894 = vmatprep.subr.mxu0 0.0
        %3895 = vmatpush2.msra.mxu0 0.0
        %3896 = vmatprep.mubr.f32.mxu0 0.0
        %3897 = vmatmul.mubr.f32.gmra.mxu0 %v3830
        %v3898 = vpop.f32.mrf.mxu0
        %v3899 = vadd.f32 0.0, %v3898
        %v3900 = vpop.f32.mrf.mxu0
        %3901 = vdwg.mxu0
        %v3902 = vadd.f32 %v3661, %v3899
        %v3903 = vld [vmem:[%s43] sm:$0x1]
        %v3905 = vlaneseq
        %v3906 = vshrl.u32 %v3905, 7
        %v3907 = vsub.s32 0, %v3906
        %v3908 = vrot.slane %v3903, %v3907
        %v3910 = vadd.f32 %v3902, %v3908
        %v3911 = vadd.f32 %v1540, %v3910
        %v3912 = vsel %vm1469, %v3911, 0.0
        %3913 = vadd.xlane.f32.xlu0 %v3912
        %v3914 = vpop.xlane.xlu0 %3913
        %v3915 = vmul.f32 %v3914, %v2598
        %v3916 = vsub.f32 %v3911, %v3915
        %v3917 = vmul.f32 %v3916, %v3916
        %v3918 = vsel %vm1469, %v3917, 0.0
        %3919 = vadd.xlane.f32.xlu0 %v3918
        %v3920 = vpop.xlane.xlu0 %3919
        %v3921 = vmul.f32 %v3920, %v2598
        %v3922 = vadd.f32 %v3921, 1e-05
        %v3923 = vrsqrt.pop %v3922
        %v3924 = vmul.f32 %v3916, %v3923
        %v3925 = vld [vmem:[%s45] sm:$0x1]
        %v3927 = vlaneseq
        %v3928 = vshrl.u32 %v3927, 7
        %v3929 = vsub.s32 0, %v3928
        %v3930 = vrot.slane %v3925, %v3929
        %v3932 = vmul.f32 %v3924, %v3930
        %v3933 = vld [vmem:[%s47] sm:$0x1]
        %v3935 = vlaneseq
        %v3936 = vshrl.u32 %v3935, 7
        %v3937 = vsub.s32 0, %v3936
        %v3938 = vrot.slane %v3933, %v3937
        %v3940 = vadd.f32 %v3932, %v3938
        %v3941 = vld [vmem:[%s49] sm:$0xff]
        %v3942 = vld [vmem:[%s49 + $0x8] sm:$0xff]
        %v3943 = vld [vmem:[%s49 + $0x10] sm:$0xff]
        %v3944 = vld [vmem:[%s49 + $0x18] sm:$0xff]
        %v3945 = vld [vmem:[%s51] sm:$0x1]
        %v3947 = vlaneseq
        %v3948 = vshrl.u32 %v3947, 7
        %v3949 = vsub.s32 0, %v3948
        %v3950 = vrot.slane %v3945, %v3949
        %v3953 = vsel %vm1469, %v3940, 0
        %3955 = vmatprep.subr.mxu0 0.0
        %3956 = vmatpush1.msra.mxu0 0.0
        %3957 = vmatprep.subr.mxu0 0.0
        %3958 = vmatpush1.msra.mxu0 0.0
        %3959 = vmatprep.subr.mxu0 0.0
        %3960 = vmatpush1.msra.mxu0 0.0
        %3961 = vmatprep.subr.mxu0 0.0
        %3962 = vmatpush1.msra.mxu0 0.0
        %3963 = vmatprep.subr.mxu0 0.0
        %3964 = vmatpush1.msra.mxu0 0.0
        %3965 = vmatprep.subr.mxu0 0.0
        %3966 = vmatpush1.msra.mxu0 0.0
        %3967 = vmatprep.subr.mxu0 0.0
        %3968 = vmatpush1.msra.mxu0 0.0
        %3969 = vmatprep.subr.mxu0 0.0
        %3970 = vmatpush1.msra.mxu0 0.0
        %3971 = vmatprep.subr.mxu0 0.0
        %3972 = vmatpush1.msra.mxu0 0.0
        %3973 = vmatprep.subr.mxu0 0.0
        %3974 = vmatpush1.msra.mxu0 0.0
        %3975 = vmatprep.subr.mxu0 0.0
        %3976 = vmatpush1.msra.mxu0 0.0
        %3977 = vmatprep.subr.mxu0 0.0
        %3978 = vmatpush1.msra.mxu0 0.0
        %3979 = vmatprep.subr.mxu0 0.0
        %3980 = vmatpush1.msra.mxu0 %v3944
        %3981 = vmatprep.subr.mxu0 0.0
        %3982 = vmatpush1.msra.mxu0 %v3943
        %3983 = vmatprep.subr.mxu0 0.0
        %3984 = vmatpush1.msra.mxu0 %v3942
        %3985 = vmatprep.subr.mxu0 0.0
        %3986 = vmatpush1.msra.mxu0 %v3941
        %3987 = vmatprep.subr.mxu0 0.0
        %3988 = vmatpush2.msra.mxu0 0.0
        %3989 = vmatprep.subr.mxu0 0.0
        %3990 = vmatpush2.msra.mxu0 0.0
        %3991 = vmatprep.subr.mxu0 0.0
        %3992 = vmatpush2.msra.mxu0 0.0
        %3993 = vmatprep.subr.mxu0 0.0
        %3994 = vmatpush2.msra.mxu0 0.0
        %3995 = vmatprep.subr.mxu0 0.0
        %3996 = vmatpush2.msra.mxu0 0.0
        %3997 = vmatprep.subr.mxu0 0.0
        %3998 = vmatpush2.msra.mxu0 0.0
        %3999 = vmatprep.subr.mxu0 0.0
        %4000 = vmatpush2.msra.mxu0 0.0
        %4001 = vmatprep.subr.mxu0 0.0
        %4002 = vmatpush2.msra.mxu0 0.0
        %4003 = vmatprep.subr.mxu0 0.0
        %4004 = vmatpush2.msra.mxu0 0.0
        %4005 = vmatprep.subr.mxu0 0.0
        %4006 = vmatpush2.msra.mxu0 0.0
        %4007 = vmatprep.subr.mxu0 0.0
        %4008 = vmatpush2.msra.mxu0 0.0
        %4009 = vmatprep.subr.mxu0 0.0
        %4010 = vmatpush2.msra.mxu0 0.0
        %4011 = vmatprep.subr.mxu0 0.0
        %4012 = vmatpush2.msra.mxu0 0.0
        %4013 = vmatprep.subr.mxu0 0.0
        %4014 = vmatpush2.msra.mxu0 0.0
        %4015 = vmatprep.subr.mxu0 0.0
        %4016 = vmatpush2.msra.mxu0 0.0
        %4017 = vmatprep.subr.mxu0 0.0
        %4018 = vmatpush2.msra.mxu0 0.0
        %4019 = vmatprep.mubr.f32.mxu0 0.0
        %4020 = vmatmul.mubr.f32.gmra.mxu0 %v3953
        %v4021 = vpop.f32.mrf.mxu0
        %v4022 = vadd.f32 %v3950, %v4021
        %v4023 = vpop.f32.mrf.mxu0
        %4024 = vdwg.mxu0
        %4029 = vrot.lane.b32.xlu0 %v3941, 96
        %v4030 = vpop.permute.xlu0 %4029
        %4031 = vrot.lane.b32.xlu0 %v3942, 96
        %v4032 = vpop.permute.xlu0 %4031
        %4033 = vrot.lane.b32.xlu0 %v3943, 96
        %v4034 = vpop.permute.xlu0 %4033
        %4035 = vrot.lane.b32.xlu0 %v3944, 96
        %v4036 = vpop.permute.xlu0 %4035
        %4041 = vrot.lane.b32.xlu0 %v3950, 96
        %v4042 = vpop.permute.xlu0 %4041
        %v4045 = vsel %vm1469, %v2857, 0
        %4047 = vmatprep.subr.mxu0 0.0
        %4048 = vmatpush1.msra.mxu0 0.0
        %4049 = vmatprep.subr.mxu0 0.0
        %4050 = vmatpush1.msra.mxu0 0.0
        %4051 = vmatprep.subr.mxu0 0.0
        %4052 = vmatpush1.msra.mxu0 0.0
        %4053 = vmatprep.subr.mxu0 0.0
        %4054 = vmatpush1.msra.mxu0 0.0
        %4055 = vmatprep.subr.mxu0 0.0
        %4056 = vmatpush1.msra.mxu0 0.0
        %4057 = vmatprep.subr.mxu0 0.0
        %4058 = vmatpush1.msra.mxu0 0.0
        %4059 = vmatprep.subr.mxu0 0.0
        %4060 = vmatpush1.msra.mxu0 0.0
        %4061 = vmatprep.subr.mxu0 0.0
        %4062 = vmatpush1.msra.mxu0 0.0
        %4063 = vmatprep.subr.mxu0 0.0
        %4064 = vmatpush1.msra.mxu0 0.0
        %4065 = vmatprep.subr.mxu0 0.0
        %4066 = vmatpush1.msra.mxu0 0.0
        %4067 = vmatprep.subr.mxu0 0.0
        %4068 = vmatpush1.msra.mxu0 0.0
        %4069 = vmatprep.subr.mxu0 0.0
        %4070 = vmatpush1.msra.mxu0 0.0
        %4071 = vmatprep.subr.mxu0 0.0
        %4072 = vmatpush1.msra.mxu0 %v4036
        %4073 = vmatprep.subr.mxu0 0.0
        %4074 = vmatpush1.msra.mxu0 %v4034
        %4075 = vmatprep.subr.mxu0 0.0
        %4076 = vmatpush1.msra.mxu0 %v4032
        %4077 = vmatprep.subr.mxu0 0.0
        %4078 = vmatpush1.msra.mxu0 %v4030
        %4079 = vmatprep.subr.mxu0 0.0
        %4080 = vmatpush2.msra.mxu0 0.0
        %4081 = vmatprep.subr.mxu0 0.0
        %4082 = vmatpush2.msra.mxu0 0.0
        %4083 = vmatprep.subr.mxu0 0.0
        %4084 = vmatpush2.msra.mxu0 0.0
        %4085 = vmatprep.subr.mxu0 0.0
        %4086 = vmatpush2.msra.mxu0 0.0
        %4087 = vmatprep.subr.mxu0 0.0
        %4088 = vmatpush2.msra.mxu0 0.0
        %4089 = vmatprep.subr.mxu0 0.0
        %4090 = vmatpush2.msra.mxu0 0.0
        %4091 = vmatprep.subr.mxu0 0.0
        %4092 = vmatpush2.msra.mxu0 0.0
        %4093 = vmatprep.subr.mxu0 0.0
        %4094 = vmatpush2.msra.mxu0 0.0
        %4095 = vmatprep.subr.mxu0 0.0
        %4096 = vmatpush2.msra.mxu0 0.0
        %4097 = vmatprep.subr.mxu0 0.0
        %4098 = vmatpush2.msra.mxu0 0.0
        %4099 = vmatprep.subr.mxu0 0.0
        %4100 = vmatpush2.msra.mxu0 0.0
        %4101 = vmatprep.subr.mxu0 0.0
        %4102 = vmatpush2.msra.mxu0 0.0
        %4103 = vmatprep.subr.mxu0 0.0
        %4104 = vmatpush2.msra.mxu0 0.0
        %4105 = vmatprep.subr.mxu0 0.0
        %4106 = vmatpush2.msra.mxu0 0.0
        %4107 = vmatprep.subr.mxu0 0.0
        %4108 = vmatpush2.msra.mxu0 0.0
        %4109 = vmatprep.subr.mxu0 0.0
        %4110 = vmatpush2.msra.mxu0 0.0
        %4111 = vmatprep.mubr.f32.mxu0 0.0
        %4112 = vmatmul.mubr.f32.gmra.mxu0 %v4045
        %v4113 = vpop.f32.mrf.mxu0
        %v4114 = vadd.f32 %v4042, %v4113
        %v4115 = vpop.f32.mrf.mxu0
        %4116 = vdwg.mxu0
        %v4118 = vsel %vm1627, %v4022, 0
        %v4121 = vsel %vm1627, %v4114, 0
        %4123 = vmatprep.subr.mxu0 0.0
        %4124 = vmatpush1.xpose.msra.mxu0 0.0
        %4125 = vmatprep.subr.mxu0 0.0
        %4126 = vmatpush1.xpose.msra.mxu0 0.0
        %4127 = vmatprep.subr.mxu0 0.0
        %4128 = vmatpush1.xpose.msra.mxu0 0.0
        %4129 = vmatprep.subr.mxu0 0.0
        %4130 = vmatpush1.xpose.msra.mxu0 0.0
        %4131 = vmatprep.subr.mxu0 0.0
        %4132 = vmatpush1.xpose.msra.mxu0 0.0
        %4133 = vmatprep.subr.mxu0 0.0
        %4134 = vmatpush1.xpose.msra.mxu0 0.0
        %4135 = vmatprep.subr.mxu0 0.0
        %4136 = vmatpush1.xpose.msra.mxu0 0.0
        %4137 = vmatprep.subr.mxu0 0.0
        %4138 = vmatpush1.xpose.msra.mxu0 0.0
        %4139 = vmatprep.subr.mxu0 0.0
        %4140 = vmatpush1.xpose.msra.mxu0 0.0
        %4141 = vmatprep.subr.mxu0 0.0
        %4142 = vmatpush1.xpose.msra.mxu0 0.0
        %4143 = vmatprep.subr.mxu0 0.0
        %4144 = vmatpush1.xpose.msra.mxu0 0.0
        %4145 = vmatprep.subr.mxu0 0.0
        %4146 = vmatpush1.xpose.msra.mxu0 0.0
        %4147 = vmatprep.subr.mxu0 0.0
        %4148 = vmatpush1.xpose.msra.mxu0 0.0
        %4149 = vmatprep.subr.mxu0 0.0
        %4150 = vmatpush1.xpose.msra.mxu0 0.0
        %4151 = vmatprep.subr.mxu0 0.0
        %4152 = vmatpush1.xpose.msra.mxu0 0.0
        %4153 = vmatprep.subr.mxu0 0.0
        %4154 = vmatpush1.xpose.msra.mxu0 %v4121
        %4155 = vmatprep.subr.mxu0 0.0
        %4156 = vmatpush2.xpose.msra.mxu0 0.0
        %4157 = vmatprep.subr.mxu0 0.0
        %4158 = vmatpush2.xpose.msra.mxu0 0.0
        %4159 = vmatprep.subr.mxu0 0.0
        %4160 = vmatpush2.xpose.msra.mxu0 0.0
        %4161 = vmatprep.subr.mxu0 0.0
        %4162 = vmatpush2.xpose.msra.mxu0 0.0
        %4163 = vmatprep.subr.mxu0 0.0
        %4164 = vmatpush2.xpose.msra.mxu0 0.0
        %4165 = vmatprep.subr.mxu0 0.0
        %4166 = vmatpush2.xpose.msra.mxu0 0.0
        %4167 = vmatprep.subr.mxu0 0.0
        %4168 = vmatpush2.xpose.msra.mxu0 0.0
        %4169 = vmatprep.subr.mxu0 0.0
        %4170 = vmatpush2.xpose.msra.mxu0 0.0
        %4171 = vmatprep.subr.mxu0 0.0
        %4172 = vmatpush2.xpose.msra.mxu0 0.0
        %4173 = vmatprep.subr.mxu0 0.0
        %4174 = vmatpush2.xpose.msra.mxu0 0.0
        %4175 = vmatprep.subr.mxu0 0.0
        %4176 = vmatpush2.xpose.msra.mxu0 0.0
        %4177 = vmatprep.subr.mxu0 0.0
        %4178 = vmatpush2.xpose.msra.mxu0 0.0
        %4179 = vmatprep.subr.mxu0 0.0
        %4180 = vmatpush2.xpose.msra.mxu0 0.0
        %4181 = vmatprep.subr.mxu0 0.0
        %4182 = vmatpush2.xpose.msra.mxu0 0.0
        %4183 = vmatprep.subr.mxu0 0.0
        %4184 = vmatpush2.xpose.msra.mxu0 0.0
        %4185 = vmatprep.subr.mxu0 0.0
        %4186 = vmatpush2.xpose.msra.mxu0 0.0
        %4187 = vmatprep.mubr.f32.mxu0 0.0
        %4188 = vmatmul.mubr.f32.gmra.mxu0 %v4118
        %v4189 = vpop.f32.mrf.mxu0
        %v4190 = vadd.f32 0.0, %v4189
        %v4191 = vpop.f32.mrf.mxu0
        %4192 = vdwg.mxu0
        %v4193 = vmul.f32 %v4190, 0.35355338
        %v4194 = vsel %vm1627, %v4193, -inf
        %4195 = vmax.xlane.f32.xlu0 %v4194
        %v4196 = vpop.xlane.xlu0 %4195
        %v4197 = vsub.f32 %v4193, %v4196
        %v4198 = vmul.f32 %v4197, 1.442695
        %v4199 = vpow.pop %v4198
        %v4200 = vsel %vm1627, %v4199, 0.0
        %4201 = vadd.xlane.f32.xlu0 %v4200
        %v4202 = vpop.xlane.xlu0 %4201
        %v4203 = vrcp.pop %v4202
        %v4204 = vmul.f32 %v4199, %v4203
        %4205 = vrot.lane.b32.xlu0 %v4114, 96
        %v4206 = vpop.permute.xlu0 %4205
        %v4209 = vsel %vm1627, %v4204, 0
        %4211 = vmatprep.subr.mxu0 0.0
        %4212 = vmatpush1.msra.mxu0 0.0
        %4213 = vmatprep.subr.mxu0 0.0
        %4214 = vmatpush1.msra.mxu0 0.0
        %4215 = vmatprep.subr.mxu0 0.0
        %4216 = vmatpush1.msra.mxu0 0.0
        %4217 = vmatprep.subr.mxu0 0.0
        %4218 = vmatpush1.msra.mxu0 0.0
        %4219 = vmatprep.subr.mxu0 0.0
        %4220 = vmatpush1.msra.mxu0 0.0
        %4221 = vmatprep.subr.mxu0 0.0
        %4222 = vmatpush1.msra.mxu0 0.0
        %4223 = vmatprep.subr.mxu0 0.0
        %4224 = vmatpush1.msra.mxu0 0.0
        %4225 = vmatprep.subr.mxu0 0.0
        %4226 = vmatpush1.msra.mxu0 0.0
        %4227 = vmatprep.subr.mxu0 0.0
        %4228 = vmatpush1.msra.mxu0 0.0
        %4229 = vmatprep.subr.mxu0 0.0
        %4230 = vmatpush1.msra.mxu0 0.0
        %4231 = vmatprep.subr.mxu0 0.0
        %4232 = vmatpush1.msra.mxu0 0.0
        %4233 = vmatprep.subr.mxu0 0.0
        %4234 = vmatpush1.msra.mxu0 0.0
        %4235 = vmatprep.subr.mxu0 0.0
        %4236 = vmatpush1.msra.mxu0 0.0
        %4237 = vmatprep.subr.mxu0 0.0
        %4238 = vmatpush1.msra.mxu0 0.0
        %4239 = vmatprep.subr.mxu0 0.0
        %4240 = vmatpush1.msra.mxu0 0.0
        %4241 = vmatprep.subr.mxu0 0.0
        %4242 = vmatpush1.msra.mxu0 %v4206
        %4243 = vmatprep.subr.mxu0 0.0
        %4244 = vmatpush2.msra.mxu0 0.0
        %4245 = vmatprep.subr.mxu0 0.0
        %4246 = vmatpush2.msra.mxu0 0.0
        %4247 = vmatprep.subr.mxu0 0.0
        %4248 = vmatpush2.msra.mxu0 0.0
        %4249 = vmatprep.subr.mxu0 0.0
        %4250 = vmatpush2.msra.mxu0 0.0
        %4251 = vmatprep.subr.mxu0 0.0
        %4252 = vmatpush2.msra.mxu0 0.0
        %4253 = vmatprep.subr.mxu0 0.0
        %4254 = vmatpush2.msra.mxu0 0.0
        %4255 = vmatprep.subr.mxu0 0.0
        %4256 = vmatpush2.msra.mxu0 0.0
        %4257 = vmatprep.subr.mxu0 0.0
        %4258 = vmatpush2.msra.mxu0 0.0
        %4259 = vmatprep.subr.mxu0 0.0
        %4260 = vmatpush2.msra.mxu0 0.0
        %4261 = vmatprep.subr.mxu0 0.0
        %4262 = vmatpush2.msra.mxu0 0.0
        %4263 = vmatprep.subr.mxu0 0.0
        %4264 = vmatpush2.msra.mxu0 0.0
        %4265 = vmatprep.subr.mxu0 0.0
        %4266 = vmatpush2.msra.mxu0 0.0
        %4267 = vmatprep.subr.mxu0 0.0
        %4268 = vmatpush2.msra.mxu0 0.0
        %4269 = vmatprep.subr.mxu0 0.0
        %4270 = vmatpush2.msra.mxu0 0.0
        %4271 = vmatprep.subr.mxu0 0.0
        %4272 = vmatpush2.msra.mxu0 0.0
        %4273 = vmatprep.subr.mxu0 0.0
        %4274 = vmatpush2.msra.mxu0 0.0
        %4275 = vmatprep.mubr.f32.mxu0 0.0
        %4276 = vmatmul.mubr.f32.gmra.mxu0 %v4209
        %v4277 = vpop.f32.mrf.mxu0
        %v4278 = vadd.f32 0.0, %v4277
        %v4279 = vpop.f32.mrf.mxu0
        %4280 = vdwg.mxu0
        %v4281 = vld [vmem:[%s53] sm:$0xff]
        %4282 = vrot.lane.b32.xlu0 %v4022, 120
        %v4283 = vpop.permute.xlu0 %4282
        %4284 = vrot.lane.b32.xlu0 %v4114, 120
        %v4285 = vpop.permute.xlu0 %4284
        %v4286 = vsel %vm1627, %v4283, 0
        %v4288 = vsel %vm1627, %v4285, 0
        %4290 = vmatprep.subr.mxu0 0.0
        %4291 = vmatpush1.xpose.msra.mxu0 0.0
        %4292 = vmatprep.subr.mxu0 0.0
        %4293 = vmatpush1.xpose.msra.mxu0 0.0
        %4294 = vmatprep.subr.mxu0 0.0
        %4295 = vmatpush1.xpose.msra.mxu0 0.0
        %4296 = vmatprep.subr.mxu0 0.0
        %4297 = vmatpush1.xpose.msra.mxu0 0.0
        %4298 = vmatprep.subr.mxu0 0.0
        %4299 = vmatpush1.xpose.msra.mxu0 0.0
        %4300 = vmatprep.subr.mxu0 0.0
        %4301 = vmatpush1.xpose.msra.mxu0 0.0
        %4302 = vmatprep.subr.mxu0 0.0
        %4303 = vmatpush1.xpose.msra.mxu0 0.0
        %4304 = vmatprep.subr.mxu0 0.0
        %4305 = vmatpush1.xpose.msra.mxu0 0.0
        %4306 = vmatprep.subr.mxu0 0.0
        %4307 = vmatpush1.xpose.msra.mxu0 0.0
        %4308 = vmatprep.subr.mxu0 0.0
        %4309 = vmatpush1.xpose.msra.mxu0 0.0
        %4310 = vmatprep.subr.mxu0 0.0
        %4311 = vmatpush1.xpose.msra.mxu0 0.0
        %4312 = vmatprep.subr.mxu0 0.0
        %4313 = vmatpush1.xpose.msra.mxu0 0.0
        %4314 = vmatprep.subr.mxu0 0.0
        %4315 = vmatpush1.xpose.msra.mxu0 0.0
        %4316 = vmatprep.subr.mxu0 0.0
        %4317 = vmatpush1.xpose.msra.mxu0 0.0
        %4318 = vmatprep.subr.mxu0 0.0
        %4319 = vmatpush1.xpose.msra.mxu0 0.0
        %4320 = vmatprep.subr.mxu0 0.0
        %4321 = vmatpush1.xpose.msra.mxu0 %v4288
        %4322 = vmatprep.subr.mxu0 0.0
        %4323 = vmatpush2.xpose.msra.mxu0 0.0
        %4324 = vmatprep.subr.mxu0 0.0
        %4325 = vmatpush2.xpose.msra.mxu0 0.0
        %4326 = vmatprep.subr.mxu0 0.0
        %4327 = vmatpush2.xpose.msra.mxu0 0.0
        %4328 = vmatprep.subr.mxu0 0.0
        %4329 = vmatpush2.xpose.msra.mxu0 0.0
        %4330 = vmatprep.subr.mxu0 0.0
        %4331 = vmatpush2.xpose.msra.mxu0 0.0
        %4332 = vmatprep.subr.mxu0 0.0
        %4333 = vmatpush2.xpose.msra.mxu0 0.0
        %4334 = vmatprep.subr.mxu0 0.0
        %4335 = vmatpush2.xpose.msra.mxu0 0.0
        %4336 = vmatprep.subr.mxu0 0.0
        %4337 = vmatpush2.xpose.msra.mxu0 0.0
        %4338 = vmatprep.subr.mxu0 0.0
        %4339 = vmatpush2.xpose.msra.mxu0 0.0
        %4340 = vmatprep.subr.mxu0 0.0
        %4341 = vmatpush2.xpose.msra.mxu0 0.0
        %4342 = vmatprep.subr.mxu0 0.0
        %4343 = vmatpush2.xpose.msra.mxu0 0.0
        %4344 = vmatprep.subr.mxu0 0.0
        %4345 = vmatpush2.xpose.msra.mxu0 0.0
        %4346 = vmatprep.subr.mxu0 0.0
        %4347 = vmatpush2.xpose.msra.mxu0 0.0
        %4348 = vmatprep.subr.mxu0 0.0
        %4349 = vmatpush2.xpose.msra.mxu0 0.0
        %4350 = vmatprep.subr.mxu0 0.0
        %4351 = vmatpush2.xpose.msra.mxu0 0.0
        %4352 = vmatprep.subr.mxu0 0.0
        %4353 = vmatpush2.xpose.msra.mxu0 0.0
        %4354 = vmatprep.mubr.f32.mxu0 0.0
        %4355 = vmatmul.mubr.f32.gmra.mxu0 %v4286
        %v4356 = vpop.f32.mrf.mxu0
        %v4357 = vadd.f32 0.0, %v4356
        %v4358 = vpop.f32.mrf.mxu0
        %4359 = vdwg.mxu0
        %v4360 = vmul.f32 %v4357, 0.35355338
        %v4361 = vsel %vm1627, %v4360, -inf
        %4362 = vmax.xlane.f32.xlu0 %v4361
        %v4363 = vpop.xlane.xlu0 %4362
        %v4364 = vsub.f32 %v4360, %v4363
        %v4365 = vmul.f32 %v4364, 1.442695
        %v4366 = vpow.pop %v4365
        %v4367 = vsel %vm1627, %v4366, 0.0
        %4368 = vadd.xlane.f32.xlu0 %v4367
        %v4369 = vpop.xlane.xlu0 %4368
        %v4370 = vrcp.pop %v4369
        %v4371 = vmul.f32 %v4366, %v4370
        %4372 = vrot.lane.b32.xlu0 %v4114, 88
        %v4373 = vpop.permute.xlu0 %4372
        %v4376 = vsel %vm1627, %v4371, 0
        %4378 = vmatprep.subr.mxu0 0.0
        %4379 = vmatpush1.msra.mxu0 0.0
        %4380 = vmatprep.subr.mxu0 0.0
        %4381 = vmatpush1.msra.mxu0 0.0
        %4382 = vmatprep.subr.mxu0 0.0
        %4383 = vmatpush1.msra.mxu0 0.0
        %4384 = vmatprep.subr.mxu0 0.0
        %4385 = vmatpush1.msra.mxu0 0.0
        %4386 = vmatprep.subr.mxu0 0.0
        %4387 = vmatpush1.msra.mxu0 0.0
        %4388 = vmatprep.subr.mxu0 0.0
        %4389 = vmatpush1.msra.mxu0 0.0
        %4390 = vmatprep.subr.mxu0 0.0
        %4391 = vmatpush1.msra.mxu0 0.0
        %4392 = vmatprep.subr.mxu0 0.0
        %4393 = vmatpush1.msra.mxu0 0.0
        %4394 = vmatprep.subr.mxu0 0.0
        %4395 = vmatpush1.msra.mxu0 0.0
        %4396 = vmatprep.subr.mxu0 0.0
        %4397 = vmatpush1.msra.mxu0 0.0
        %4398 = vmatprep.subr.mxu0 0.0
        %4399 = vmatpush1.msra.mxu0 0.0
        %4400 = vmatprep.subr.mxu0 0.0
        %4401 = vmatpush1.msra.mxu0 0.0
        %4402 = vmatprep.subr.mxu0 0.0
        %4403 = vmatpush1.msra.mxu0 0.0
        %4404 = vmatprep.subr.mxu0 0.0
        %4405 = vmatpush1.msra.mxu0 0.0
        %4406 = vmatprep.subr.mxu0 0.0
        %4407 = vmatpush1.msra.mxu0 0.0
        %4408 = vmatprep.subr.mxu0 0.0
        %4409 = vmatpush1.msra.mxu0 %v4373
        %4410 = vmatprep.subr.mxu0 0.0
        %4411 = vmatpush2.msra.mxu0 0.0
        %4412 = vmatprep.subr.mxu0 0.0
        %4413 = vmatpush2.msra.mxu0 0.0
        %4414 = vmatprep.subr.mxu0 0.0
        %4415 = vmatpush2.msra.mxu0 0.0
        %4416 = vmatprep.subr.mxu0 0.0
        %4417 = vmatpush2.msra.mxu0 0.0
        %4418 = vmatprep.subr.mxu0 0.0
        %4419 = vmatpush2.msra.mxu0 0.0
        %4420 = vmatprep.subr.mxu0 0.0
        %4421 = vmatpush2.msra.mxu0 0.0
        %4422 = vmatprep.subr.mxu0 0.0
        %4423 = vmatpush2.msra.mxu0 0.0
        %4424 = vmatprep.subr.mxu0 0.0
        %4425 = vmatpush2.msra.mxu0 0.0
        %4426 = vmatprep.subr.mxu0 0.0
        %4427 = vmatpush2.msra.mxu0 0.0
        %4428 = vmatprep.subr.mxu0 0.0
        %4429 = vmatpush2.msra.mxu0 0.0
        %4430 = vmatprep.subr.mxu0 0.0
        %4431 = vmatpush2.msra.mxu0 0.0
        %4432 = vmatprep.subr.mxu0 0.0
        %4433 = vmatpush2.msra.mxu0 0.0
        %4434 = vmatprep.subr.mxu0 0.0
        %4435 = vmatpush2.msra.mxu0 0.0
        %4436 = vmatprep.subr.mxu0 0.0
        %4437 = vmatpush2.msra.mxu0 0.0
        %4438 = vmatprep.subr.mxu0 0.0
        %4439 = vmatpush2.msra.mxu0 0.0
        %4440 = vmatprep.subr.mxu0 0.0
        %4441 = vmatpush2.msra.mxu0 0.0
        %4442 = vmatprep.mubr.f32.mxu0 0.0
        %4443 = vmatmul.mubr.f32.gmra.mxu0 %v4376
        %v4444 = vpop.f32.mrf.mxu0
        %v4445 = vadd.f32 0.0, %v4444
        %v4446 = vpop.f32.mrf.mxu0
        %4447 = vdwg.mxu0
        %v4448 = vld [vmem:[%s53 + $0x8] sm:$0xff]
        %v4450 = vsel %vm1627, %v4445, 0
        %4452 = vmatprep.subr.mxu0 0.0
        %4453 = vmatpush1.msra.mxu0 0.0
        %4454 = vmatprep.subr.mxu0 0.0
        %4455 = vmatpush1.msra.mxu0 0.0
        %4456 = vmatprep.subr.mxu0 0.0
        %4457 = vmatpush1.msra.mxu0 0.0
        %4458 = vmatprep.subr.mxu0 0.0
        %4459 = vmatpush1.msra.mxu0 0.0
        %4460 = vmatprep.subr.mxu0 0.0
        %4461 = vmatpush1.msra.mxu0 0.0
        %4462 = vmatprep.subr.mxu0 0.0
        %4463 = vmatpush1.msra.mxu0 0.0
        %4464 = vmatprep.subr.mxu0 0.0
        %4465 = vmatpush1.msra.mxu0 0.0
        %4466 = vmatprep.subr.mxu0 0.0
        %4467 = vmatpush1.msra.mxu0 0.0
        %4468 = vmatprep.subr.mxu0 0.0
        %4469 = vmatpush1.msra.mxu0 0.0
        %4470 = vmatprep.subr.mxu0 0.0
        %4471 = vmatpush1.msra.mxu0 0.0
        %4472 = vmatprep.subr.mxu0 0.0
        %4473 = vmatpush1.msra.mxu0 0.0
        %4474 = vmatprep.subr.mxu0 0.0
        %4475 = vmatpush1.msra.mxu0 0.0
        %4476 = vmatprep.subr.mxu0 0.0
        %4477 = vmatpush1.msra.mxu0 0.0
        %4478 = vmatprep.subr.mxu0 0.0
        %4479 = vmatpush1.msra.mxu0 0.0
        %4480 = vmatprep.subr.mxu0 0.0
        %4481 = vmatpush1.msra.mxu0 0.0
        %4482 = vmatprep.subr.mxu0 0.0
        %4483 = vmatpush1.msra.mxu0 %v4448
        %4484 = vmatprep.subr.mxu0 0.0
        %4485 = vmatpush2.msra.mxu0 0.0
        %4486 = vmatprep.subr.mxu0 0.0
        %4487 = vmatpush2.msra.mxu0 0.0
        %4488 = vmatprep.subr.mxu0 0.0
        %4489 = vmatpush2.msra.mxu0 0.0
        %4490 = vmatprep.subr.mxu0 0.0
        %4491 = vmatpush2.msra.mxu0 0.0
        %4492 = vmatprep.subr.mxu0 0.0
        %4493 = vmatpush2.msra.mxu0 0.0
        %4494 = vmatprep.subr.mxu0 0.0
        %4495 = vmatpush2.msra.mxu0 0.0
        %4496 = vmatprep.subr.mxu0 0.0
        %4497 = vmatpush2.msra.mxu0 0.0
        %4498 = vmatprep.subr.mxu0 0.0
        %4499 = vmatpush2.msra.mxu0 0.0
        %4500 = vmatprep.subr.mxu0 0.0
        %4501 = vmatpush2.msra.mxu0 0.0
        %4502 = vmatprep.subr.mxu0 0.0
        %4503 = vmatpush2.msra.mxu0 0.0
        %4504 = vmatprep.subr.mxu0 0.0
        %4505 = vmatpush2.msra.mxu0 0.0
        %4506 = vmatprep.subr.mxu0 0.0
        %4507 = vmatpush2.msra.mxu0 0.0
        %4508 = vmatprep.subr.mxu0 0.0
        %4509 = vmatpush2.msra.mxu0 0.0
        %4510 = vmatprep.subr.mxu0 0.0
        %4511 = vmatpush2.msra.mxu0 0.0
        %4512 = vmatprep.subr.mxu0 0.0
        %4513 = vmatpush2.msra.mxu0 0.0
        %4514 = vmatprep.subr.mxu0 0.0
        %4515 = vmatpush2.msra.mxu0 0.0
        %4516 = vmatprep.mubr.f32.mxu0 0.0
        %4517 = vmatmul.mubr.f32.gmra.mxu0 %v4450
        %v4518 = vpop.f32.mrf.mxu0
        %v4519 = vadd.f32 0.0, %v4518
        %v4520 = vpop.f32.mrf.mxu0
        %4521 = vdwg.mxu0
        %v4523 = vsel %vm1627, %v4278, 0
        %4525 = vmatprep.subr.mxu0 0.0
        %4526 = vmatpush1.msra.mxu0 0.0
        %4527 = vmatprep.subr.mxu0 0.0
        %4528 = vmatpush1.msra.mxu0 0.0
        %4529 = vmatprep.subr.mxu0 0.0
        %4530 = vmatpush1.msra.mxu0 0.0
        %4531 = vmatprep.subr.mxu0 0.0
        %4532 = vmatpush1.msra.mxu0 0.0
        %4533 = vmatprep.subr.mxu0 0.0
        %4534 = vmatpush1.msra.mxu0 0.0
        %4535 = vmatprep.subr.mxu0 0.0
        %4536 = vmatpush1.msra.mxu0 0.0
        %4537 = vmatprep.subr.mxu0 0.0
        %4538 = vmatpush1.msra.mxu0 0.0
        %4539 = vmatprep.subr.mxu0 0.0
        %4540 = vmatpush1.msra.mxu0 0.0
        %4541 = vmatprep.subr.mxu0 0.0
        %4542 = vmatpush1.msra.mxu0 0.0
        %4543 = vmatprep.subr.mxu0 0.0
        %4544 = vmatpush1.msra.mxu0 0.0
        %4545 = vmatprep.subr.mxu0 0.0
        %4546 = vmatpush1.msra.mxu0 0.0
        %4547 = vmatprep.subr.mxu0 0.0
        %4548 = vmatpush1.msra.mxu0 0.0
        %4549 = vmatprep.subr.mxu0 0.0
        %4550 = vmatpush1.msra.mxu0 0.0
        %4551 = vmatprep.subr.mxu0 0.0
        %4552 = vmatpush1.msra.mxu0 0.0
        %4553 = vmatprep.subr.mxu0 0.0
        %4554 = vmatpush1.msra.mxu0 0.0
        %4555 = vmatprep.subr.mxu0 0.0
        %4556 = vmatpush1.msra.mxu0 %v4281
        %4557 = vmatprep.subr.mxu0 0.0
        %4558 = vmatpush2.msra.mxu0 0.0
        %4559 = vmatprep.subr.mxu0 0.0
        %4560 = vmatpush2.msra.mxu0 0.0
        %4561 = vmatprep.subr.mxu0 0.0
        %4562 = vmatpush2.msra.mxu0 0.0
        %4563 = vmatprep.subr.mxu0 0.0
        %4564 = vmatpush2.msra.mxu0 0.0
        %4565 = vmatprep.subr.mxu0 0.0
        %4566 = vmatpush2.msra.mxu0 0.0
        %4567 = vmatprep.subr.mxu0 0.0
        %4568 = vmatpush2.msra.mxu0 0.0
        %4569 = vmatprep.subr.mxu0 0.0
        %4570 = vmatpush2.msra.mxu0 0.0
        %4571 = vmatprep.subr.mxu0 0.0
        %4572 = vmatpush2.msra.mxu0 0.0
        %4573 = vmatprep.subr.mxu0 0.0
        %4574 = vmatpush2.msra.mxu0 0.0
        %4575 = vmatprep.subr.mxu0 0.0
        %4576 = vmatpush2.msra.mxu0 0.0
        %4577 = vmatprep.subr.mxu0 0.0
        %4578 = vmatpush2.msra.mxu0 0.0
        %4579 = vmatprep.subr.mxu0 0.0
        %4580 = vmatpush2.msra.mxu0 0.0
        %4581 = vmatprep.subr.mxu0 0.0
        %4582 = vmatpush2.msra.mxu0 0.0
        %4583 = vmatprep.subr.mxu0 0.0
        %4584 = vmatpush2.msra.mxu0 0.0
        %4585 = vmatprep.subr.mxu0 0.0
        %4586 = vmatpush2.msra.mxu0 0.0
        %4587 = vmatprep.subr.mxu0 0.0
        %4588 = vmatpush2.msra.mxu0 0.0
        %4589 = vmatprep.mubr.f32.mxu0 0.0
        %4590 = vmatmul.mubr.f32.gmra.mxu0 %v4523
        %v4591 = vpop.f32.mrf.mxu0
        %v4592 = vadd.f32 %v4519, %v4591
        %v4593 = vpop.f32.mrf.mxu0
        %4594 = vdwg.mxu0
        %4595 = vrot.lane.b32.xlu0 %v4022, 112
        %v4596 = vpop.permute.xlu0 %4595
        %4597 = vrot.lane.b32.xlu0 %v4114, 112
        %v4598 = vpop.permute.xlu0 %4597
        %v4599 = vsel %vm1627, %v4596, 0
        %v4601 = vsel %vm1627, %v4598, 0
        %4603 = vmatprep.subr.mxu0 0.0
        %4604 = vmatpush1.xpose.msra.mxu0 0.0
        %4605 = vmatprep.subr.mxu0 0.0
        %4606 = vmatpush1.xpose.msra.mxu0 0.0
        %4607 = vmatprep.subr.mxu0 0.0
        %4608 = vmatpush1.xpose.msra.mxu0 0.0
        %4609 = vmatprep.subr.mxu0 0.0
        %4610 = vmatpush1.xpose.msra.mxu0 0.0
        %4611 = vmatprep.subr.mxu0 0.0
        %4612 = vmatpush1.xpose.msra.mxu0 0.0
        %4613 = vmatprep.subr.mxu0 0.0
        %4614 = vmatpush1.xpose.msra.mxu0 0.0
        %4615 = vmatprep.subr.mxu0 0.0
        %4616 = vmatpush1.xpose.msra.mxu0 0.0
        %4617 = vmatprep.subr.mxu0 0.0
        %4618 = vmatpush1.xpose.msra.mxu0 0.0
        %4619 = vmatprep.subr.mxu0 0.0
        %4620 = vmatpush1.xpose.msra.mxu0 0.0
        %4621 = vmatprep.subr.mxu0 0.0
        %4622 = vmatpush1.xpose.msra.mxu0 0.0
        %4623 = vmatprep.subr.mxu0 0.0
        %4624 = vmatpush1.xpose.msra.mxu0 0.0
        %4625 = vmatprep.subr.mxu0 0.0
        %4626 = vmatpush1.xpose.msra.mxu0 0.0
        %4627 = vmatprep.subr.mxu0 0.0
        %4628 = vmatpush1.xpose.msra.mxu0 0.0
        %4629 = vmatprep.subr.mxu0 0.0
        %4630 = vmatpush1.xpose.msra.mxu0 0.0
        %4631 = vmatprep.subr.mxu0 0.0
        %4632 = vmatpush1.xpose.msra.mxu0 0.0
        %4633 = vmatprep.subr.mxu0 0.0
        %4634 = vmatpush1.xpose.msra.mxu0 %v4601
        %4635 = vmatprep.subr.mxu0 0.0
        %4636 = vmatpush2.xpose.msra.mxu0 0.0
        %4637 = vmatprep.subr.mxu0 0.0
        %4638 = vmatpush2.xpose.msra.mxu0 0.0
        %4639 = vmatprep.subr.mxu0 0.0
        %4640 = vmatpush2.xpose.msra.mxu0 0.0
        %4641 = vmatprep.subr.mxu0 0.0
        %4642 = vmatpush2.xpose.msra.mxu0 0.0
        %4643 = vmatprep.subr.mxu0 0.0
        %4644 = vmatpush2.xpose.msra.mxu0 0.0
        %4645 = vmatprep.subr.mxu0 0.0
        %4646 = vmatpush2.xpose.msra.mxu0 0.0
        %4647 = vmatprep.subr.mxu0 0.0
        %4648 = vmatpush2.xpose.msra.mxu0 0.0
        %4649 = vmatprep.subr.mxu0 0.0
        %4650 = vmatpush2.xpose.msra.mxu0 0.0
        %4651 = vmatprep.subr.mxu0 0.0
        %4652 = vmatpush2.xpose.msra.mxu0 0.0
        %4653 = vmatprep.subr.mxu0 0.0
        %4654 = vmatpush2.xpose.msra.mxu0 0.0
        %4655 = vmatprep.subr.mxu0 0.0
        %4656 = vmatpush2.xpose.msra.mxu0 0.0
        %4657 = vmatprep.subr.mxu0 0.0
        %4658 = vmatpush2.xpose.msra.mxu0 0.0
        %4659 = vmatprep.subr.mxu0 0.0
        %4660 = vmatpush2.xpose.msra.mxu0 0.0
        %4661 = vmatprep.subr.mxu0 0.0
        %4662 = vmatpush2.xpose.msra.mxu0 0.0
        %4663 = vmatprep.subr.mxu0 0.0
        %4664 = vmatpush2.xpose.msra.mxu0 0.0
        %4665 = vmatprep.subr.mxu0 0.0
        %4666 = vmatpush2.xpose.msra.mxu0 0.0
        %4667 = vmatprep.mubr.f32.mxu0 0.0
        %4668 = vmatmul.mubr.f32.gmra.mxu0 %v4599
        %v4669 = vpop.f32.mrf.mxu0
        %v4670 = vadd.f32 0.0, %v4669
        %v4671 = vpop.f32.mrf.mxu0
        %4672 = vdwg.mxu0
        %v4673 = vmul.f32 %v4670, 0.35355338
        %v4674 = vsel %vm1627, %v4673, -inf
        %4675 = vmax.xlane.f32.xlu0 %v4674
        %v4676 = vpop.xlane.xlu0 %4675
        %v4677 = vsub.f32 %v4673, %v4676
        %v4678 = vmul.f32 %v4677, 1.442695
        %v4679 = vpow.pop %v4678
        %v4680 = vsel %vm1627, %v4679, 0.0
        %4681 = vadd.xlane.f32.xlu0 %v4680
        %v4682 = vpop.xlane.xlu0 %4681
        %v4683 = vrcp.pop %v4682
        %v4684 = vmul.f32 %v4679, %v4683
        %4685 = vrot.lane.b32.xlu0 %v4114, 80
        %v4686 = vpop.permute.xlu0 %4685
        %v4689 = vsel %vm1627, %v4684, 0
        %4691 = vmatprep.subr.mxu0 0.0
        %4692 = vmatpush1.msra.mxu0 0.0
        %4693 = vmatprep.subr.mxu0 0.0
        %4694 = vmatpush1.msra.mxu0 0.0
        %4695 = vmatprep.subr.mxu0 0.0
        %4696 = vmatpush1.msra.mxu0 0.0
        %4697 = vmatprep.subr.mxu0 0.0
        %4698 = vmatpush1.msra.mxu0 0.0
        %4699 = vmatprep.subr.mxu0 0.0
        %4700 = vmatpush1.msra.mxu0 0.0
        %4701 = vmatprep.subr.mxu0 0.0
        %4702 = vmatpush1.msra.mxu0 0.0
        %4703 = vmatprep.subr.mxu0 0.0
        %4704 = vmatpush1.msra.mxu0 0.0
        %4705 = vmatprep.subr.mxu0 0.0
        %4706 = vmatpush1.msra.mxu0 0.0
        %4707 = vmatprep.subr.mxu0 0.0
        %4708 = vmatpush1.msra.mxu0 0.0
        %4709 = vmatprep.subr.mxu0 0.0
        %4710 = vmatpush1.msra.mxu0 0.0
        %4711 = vmatprep.subr.mxu0 0.0
        %4712 = vmatpush1.msra.mxu0 0.0
        %4713 = vmatprep.subr.mxu0 0.0
        %4714 = vmatpush1.msra.mxu0 0.0
        %4715 = vmatprep.subr.mxu0 0.0
        %4716 = vmatpush1.msra.mxu0 0.0
        %4717 = vmatprep.subr.mxu0 0.0
        %4718 = vmatpush1.msra.mxu0 0.0
        %4719 = vmatprep.subr.mxu0 0.0
        %4720 = vmatpush1.msra.mxu0 0.0
        %4721 = vmatprep.subr.mxu0 0.0
        %4722 = vmatpush1.msra.mxu0 %v4686
        %4723 = vmatprep.subr.mxu0 0.0
        %4724 = vmatpush2.msra.mxu0 0.0
        %4725 = vmatprep.subr.mxu0 0.0
        %4726 = vmatpush2.msra.mxu0 0.0
        %4727 = vmatprep.subr.mxu0 0.0
        %4728 = vmatpush2.msra.mxu0 0.0
        %4729 = vmatprep.subr.mxu0 0.0
        %4730 = vmatpush2.msra.mxu0 0.0
        %4731 = vmatprep.subr.mxu0 0.0
        %4732 = vmatpush2.msra.mxu0 0.0
        %4733 = vmatprep.subr.mxu0 0.0
        %4734 = vmatpush2.msra.mxu0 0.0
        %4735 = vmatprep.subr.mxu0 0.0
        %4736 = vmatpush2.msra.mxu0 0.0
        %4737 = vmatprep.subr.mxu0 0.0
        %4738 = vmatpush2.msra.mxu0 0.0
        %4739 = vmatprep.subr.mxu0 0.0
        %4740 = vmatpush2.msra.mxu0 0.0
        %4741 = vmatprep.subr.mxu0 0.0
        %4742 = vmatpush2.msra.mxu0 0.0
        %4743 = vmatprep.subr.mxu0 0.0
        %4744 = vmatpush2.msra.mxu0 0.0
        %4745 = vmatprep.subr.mxu0 0.0
        %4746 = vmatpush2.msra.mxu0 0.0
        %4747 = vmatprep.subr.mxu0 0.0
        %4748 = vmatpush2.msra.mxu0 0.0
        %4749 = vmatprep.subr.mxu0 0.0
        %4750 = vmatpush2.msra.mxu0 0.0
        %4751 = vmatprep.subr.mxu0 0.0
        %4752 = vmatpush2.msra.mxu0 0.0
        %4753 = vmatprep.subr.mxu0 0.0
        %4754 = vmatpush2.msra.mxu0 0.0
        %4755 = vmatprep.mubr.f32.mxu0 0.0
        %4756 = vmatmul.mubr.f32.gmra.mxu0 %v4689
        %v4757 = vpop.f32.mrf.mxu0
        %v4758 = vadd.f32 0.0, %v4757
        %v4759 = vpop.f32.mrf.mxu0
        %4760 = vdwg.mxu0
        %v4761 = vld [vmem:[%s53 + $0x10] sm:$0xff]
        %v4763 = vsel %vm1627, %v4758, 0
        %4765 = vmatprep.subr.mxu0 0.0
        %4766 = vmatpush1.msra.mxu0 0.0
        %4767 = vmatprep.subr.mxu0 0.0
        %4768 = vmatpush1.msra.mxu0 0.0
        %4769 = vmatprep.subr.mxu0 0.0
        %4770 = vmatpush1.msra.mxu0 0.0
        %4771 = vmatprep.subr.mxu0 0.0
        %4772 = vmatpush1.msra.mxu0 0.0
        %4773 = vmatprep.subr.mxu0 0.0
        %4774 = vmatpush1.msra.mxu0 0.0
        %4775 = vmatprep.subr.mxu0 0.0
        %4776 = vmatpush1.msra.mxu0 0.0
        %4777 = vmatprep.subr.mxu0 0.0
        %4778 = vmatpush1.msra.mxu0 0.0
        %4779 = vmatprep.subr.mxu0 0.0
        %4780 = vmatpush1.msra.mxu0 0.0
        %4781 = vmatprep.subr.mxu0 0.0
        %4782 = vmatpush1.msra.mxu0 0.0
        %4783 = vmatprep.subr.mxu0 0.0
        %4784 = vmatpush1.msra.mxu0 0.0
        %4785 = vmatprep.subr.mxu0 0.0
        %4786 = vmatpush1.msra.mxu0 0.0
        %4787 = vmatprep.subr.mxu0 0.0
        %4788 = vmatpush1.msra.mxu0 0.0
        %4789 = vmatprep.subr.mxu0 0.0
        %4790 = vmatpush1.msra.mxu0 0.0
        %4791 = vmatprep.subr.mxu0 0.0
        %4792 = vmatpush1.msra.mxu0 0.0
        %4793 = vmatprep.subr.mxu0 0.0
        %4794 = vmatpush1.msra.mxu0 0.0
        %4795 = vmatprep.subr.mxu0 0.0
        %4796 = vmatpush1.msra.mxu0 %v4761
        %4797 = vmatprep.subr.mxu0 0.0
        %4798 = vmatpush2.msra.mxu0 0.0
        %4799 = vmatprep.subr.mxu0 0.0
        %4800 = vmatpush2.msra.mxu0 0.0
        %4801 = vmatprep.subr.mxu0 0.0
        %4802 = vmatpush2.msra.mxu0 0.0
        %4803 = vmatprep.subr.mxu0 0.0
        %4804 = vmatpush2.msra.mxu0 0.0
        %4805 = vmatprep.subr.mxu0 0.0
        %4806 = vmatpush2.msra.mxu0 0.0
        %4807 = vmatprep.subr.mxu0 0.0
        %4808 = vmatpush2.msra.mxu0 0.0
        %4809 = vmatprep.subr.mxu0 0.0
        %4810 = vmatpush2.msra.mxu0 0.0
        %4811 = vmatprep.subr.mxu0 0.0
        %4812 = vmatpush2.msra.mxu0 0.0
        %4813 = vmatprep.subr.mxu0 0.0
        %4814 = vmatpush2.msra.mxu0 0.0
        %4815 = vmatprep.subr.mxu0 0.0
        %4816 = vmatpush2.msra.mxu0 0.0
        %4817 = vmatprep.subr.mxu0 0.0
        %4818 = vmatpush2.msra.mxu0 0.0
        %4819 = vmatprep.subr.mxu0 0.0
        %4820 = vmatpush2.msra.mxu0 0.0
        %4821 = vmatprep.subr.mxu0 0.0
        %4822 = vmatpush2.msra.mxu0 0.0
        %4823 = vmatprep.subr.mxu0 0.0
        %4824 = vmatpush2.msra.mxu0 0.0
        %4825 = vmatprep.subr.mxu0 0.0
        %4826 = vmatpush2.msra.mxu0 0.0
        %4827 = vmatprep.subr.mxu0 0.0
        %4828 = vmatpush2.msra.mxu0 0.0
        %4829 = vmatprep.mubr.f32.mxu0 0.0
        %4830 = vmatmul.mubr.f32.gmra.mxu0 %v4763
        %v4831 = vpop.f32.mrf.mxu0
        %v4832 = vadd.f32 0.0, %v4831
        %v4833 = vpop.f32.mrf.mxu0
        %4834 = vdwg.mxu0
        %v4835 = vadd.f32 %v4592, %v4832
        %4836 = vrot.lane.b32.xlu0 %v4022, 104
        %v4837 = vpop.permute.xlu0 %4836
        %4838 = vrot.lane.b32.xlu0 %v4114, 104
        %v4839 = vpop.permute.xlu0 %4838
        %v4840 = vsel %vm1627, %v4837, 0
        %v4842 = vsel %vm1627, %v4839, 0
        %4844 = vmatprep.subr.mxu0 0.0
        %4845 = vmatpush1.xpose.msra.mxu0 0.0
        %4846 = vmatprep.subr.mxu0 0.0
        %4847 = vmatpush1.xpose.msra.mxu0 0.0
        %4848 = vmatprep.subr.mxu0 0.0
        %4849 = vmatpush1.xpose.msra.mxu0 0.0
        %4850 = vmatprep.subr.mxu0 0.0
        %4851 = vmatpush1.xpose.msra.mxu0 0.0
        %4852 = vmatprep.subr.mxu0 0.0
        %4853 = vmatpush1.xpose.msra.mxu0 0.0
        %4854 = vmatprep.subr.mxu0 0.0
        %4855 = vmatpush1.xpose.msra.mxu0 0.0
        %4856 = vmatprep.subr.mxu0 0.0
        %4857 = vmatpush1.xpose.msra.mxu0 0.0
        %4858 = vmatprep.subr.mxu0 0.0
        %4859 = vmatpush1.xpose.msra.mxu0 0.0
        %4860 = vmatprep.subr.mxu0 0.0
        %4861 = vmatpush1.xpose.msra.mxu0 0.0
        %4862 = vmatprep.subr.mxu0 0.0
        %4863 = vmatpush1.xpose.msra.mxu0 0.0
        %4864 = vmatprep.subr.mxu0 0.0
        %4865 = vmatpush1.xpose.msra.mxu0 0.0
        %4866 = vmatprep.subr.mxu0 0.0
        %4867 = vmatpush1.xpose.msra.mxu0 0.0
        %4868 = vmatprep.subr.mxu0 0.0
        %4869 = vmatpush1.xpose.msra.mxu0 0.0
        %4870 = vmatprep.subr.mxu0 0.0
        %4871 = vmatpush1.xpose.msra.mxu0 0.0
        %4872 = vmatprep.subr.mxu0 0.0
        %4873 = vmatpush1.xpose.msra.mxu0 0.0
        %4874 = vmatprep.subr.mxu0 0.0
        %4875 = vmatpush1.xpose.msra.mxu0 %v4842
        %4876 = vmatprep.subr.mxu0 0.0
        %4877 = vmatpush2.xpose.msra.mxu0 0.0
        %4878 = vmatprep.subr.mxu0 0.0
        %4879 = vmatpush2.xpose.msra.mxu0 0.0
        %4880 = vmatprep.subr.mxu0 0.0
        %4881 = vmatpush2.xpose.msra.mxu0 0.0
        %4882 = vmatprep.subr.mxu0 0.0
        %4883 = vmatpush2.xpose.msra.mxu0 0.0
        %4884 = vmatprep.subr.mxu0 0.0
        %4885 = vmatpush2.xpose.msra.mxu0 0.0
        %4886 = vmatprep.subr.mxu0 0.0
        %4887 = vmatpush2.xpose.msra.mxu0 0.0
        %4888 = vmatprep.subr.mxu0 0.0
        %4889 = vmatpush2.xpose.msra.mxu0 0.0
        %4890 = vmatprep.subr.mxu0 0.0
        %4891 = vmatpush2.xpose.msra.mxu0 0.0
        %4892 = vmatprep.subr.mxu0 0.0
        %4893 = vmatpush2.xpose.msra.mxu0 0.0
        %4894 = vmatprep.subr.mxu0 0.0
        %4895 = vmatpush2.xpose.msra.mxu0 0.0
        %4896 = vmatprep.subr.mxu0 0.0
        %4897 = vmatpush2.xpose.msra.mxu0 0.0
        %4898 = vmatprep.subr.mxu0 0.0
        %4899 = vmatpush2.xpose.msra.mxu0 0.0
        %4900 = vmatprep.subr.mxu0 0.0
        %4901 = vmatpush2.xpose.msra.mxu0 0.0
        %4902 = vmatprep.subr.mxu0 0.0
        %4903 = vmatpush2.xpose.msra.mxu0 0.0
        %4904 = vmatprep.subr.mxu0 0.0
        %4905 = vmatpush2.xpose.msra.mxu0 0.0
        %4906 = vmatprep.subr.mxu0 0.0
        %4907 = vmatpush2.xpose.msra.mxu0 0.0
        %4908 = vmatprep.mubr.f32.mxu0 0.0
        %4909 = vmatmul.mubr.f32.gmra.mxu0 %v4840
        %v4910 = vpop.f32.mrf.mxu0
        %v4911 = vadd.f32 0.0, %v4910
        %v4912 = vpop.f32.mrf.mxu0
        %4913 = vdwg.mxu0
        %v4914 = vmul.f32 %v4911, 0.35355338
        %v4915 = vsel %vm1627, %v4914, -inf
        %4916 = vmax.xlane.f32.xlu0 %v4915
        %v4917 = vpop.xlane.xlu0 %4916
        %v4918 = vsub.f32 %v4914, %v4917
        %v4919 = vmul.f32 %v4918, 1.442695
        %v4920 = vpow.pop %v4919
        %v4921 = vsel %vm1627, %v4920, 0.0
        %4922 = vadd.xlane.f32.xlu0 %v4921
        %v4923 = vpop.xlane.xlu0 %4922
        %v4924 = vrcp.pop %v4923
        %v4925 = vmul.f32 %v4920, %v4924
        %4926 = vrot.lane.b32.xlu0 %v4114, 72
        %v4927 = vpop.permute.xlu0 %4926
        %v4930 = vsel %vm1627, %v4925, 0
        %4932 = vmatprep.subr.mxu0 0.0
        %4933 = vmatpush1.msra.mxu0 0.0
        %4934 = vmatprep.subr.mxu0 0.0
        %4935 = vmatpush1.msra.mxu0 0.0
        %4936 = vmatprep.subr.mxu0 0.0
        %4937 = vmatpush1.msra.mxu0 0.0
        %4938 = vmatprep.subr.mxu0 0.0
        %4939 = vmatpush1.msra.mxu0 0.0
        %4940 = vmatprep.subr.mxu0 0.0
        %4941 = vmatpush1.msra.mxu0 0.0
        %4942 = vmatprep.subr.mxu0 0.0
        %4943 = vmatpush1.msra.mxu0 0.0
        %4944 = vmatprep.subr.mxu0 0.0
        %4945 = vmatpush1.msra.mxu0 0.0
        %4946 = vmatprep.subr.mxu0 0.0
        %4947 = vmatpush1.msra.mxu0 0.0
        %4948 = vmatprep.subr.mxu0 0.0
        %4949 = vmatpush1.msra.mxu0 0.0
        %4950 = vmatprep.subr.mxu0 0.0
        %4951 = vmatpush1.msra.mxu0 0.0
        %4952 = vmatprep.subr.mxu0 0.0
        %4953 = vmatpush1.msra.mxu0 0.0
        %4954 = vmatprep.subr.mxu0 0.0
        %4955 = vmatpush1.msra.mxu0 0.0
        %4956 = vmatprep.subr.mxu0 0.0
        %4957 = vmatpush1.msra.mxu0 0.0
        %4958 = vmatprep.subr.mxu0 0.0
        %4959 = vmatpush1.msra.mxu0 0.0
        %4960 = vmatprep.subr.mxu0 0.0
        %4961 = vmatpush1.msra.mxu0 0.0
        %4962 = vmatprep.subr.mxu0 0.0
        %4963 = vmatpush1.msra.mxu0 %v4927
        %4964 = vmatprep.subr.mxu0 0.0
        %4965 = vmatpush2.msra.mxu0 0.0
        %4966 = vmatprep.subr.mxu0 0.0
        %4967 = vmatpush2.msra.mxu0 0.0
        %4968 = vmatprep.subr.mxu0 0.0
        %4969 = vmatpush2.msra.mxu0 0.0
        %4970 = vmatprep.subr.mxu0 0.0
        %4971 = vmatpush2.msra.mxu0 0.0
        %4972 = vmatprep.subr.mxu0 0.0
        %4973 = vmatpush2.msra.mxu0 0.0
        %4974 = vmatprep.subr.mxu0 0.0
        %4975 = vmatpush2.msra.mxu0 0.0
        %4976 = vmatprep.subr.mxu0 0.0
        %4977 = vmatpush2.msra.mxu0 0.0
        %4978 = vmatprep.subr.mxu0 0.0
        %4979 = vmatpush2.msra.mxu0 0.0
        %4980 = vmatprep.subr.mxu0 0.0
        %4981 = vmatpush2.msra.mxu0 0.0
        %4982 = vmatprep.subr.mxu0 0.0
        %4983 = vmatpush2.msra.mxu0 0.0
        %4984 = vmatprep.subr.mxu0 0.0
        %4985 = vmatpush2.msra.mxu0 0.0
        %4986 = vmatprep.subr.mxu0 0.0
        %4987 = vmatpush2.msra.mxu0 0.0
        %4988 = vmatprep.subr.mxu0 0.0
        %4989 = vmatpush2.msra.mxu0 0.0
        %4990 = vmatprep.subr.mxu0 0.0
        %4991 = vmatpush2.msra.mxu0 0.0
        %4992 = vmatprep.subr.mxu0 0.0
        %4993 = vmatpush2.msra.mxu0 0.0
        %4994 = vmatprep.subr.mxu0 0.0
        %4995 = vmatpush2.msra.mxu0 0.0
        %4996 = vmatprep.mubr.f32.mxu0 0.0
        %4997 = vmatmul.mubr.f32.gmra.mxu0 %v4930
        %v4998 = vpop.f32.mrf.mxu0
        %v4999 = vadd.f32 0.0, %v4998
        %v5000 = vpop.f32.mrf.mxu0
        %5001 = vdwg.mxu0
        %v5002 = vld [vmem:[%s53 + $0x18] sm:$0xff]
        %v5004 = vsel %vm1627, %v4999, 0
        %5006 = vmatprep.subr.mxu0 0.0
        %5007 = vmatpush1.msra.mxu0 0.0
        %5008 = vmatprep.subr.mxu0 0.0
        %5009 = vmatpush1.msra.mxu0 0.0
        %5010 = vmatprep.subr.mxu0 0.0
        %5011 = vmatpush1.msra.mxu0 0.0
        %5012 = vmatprep.subr.mxu0 0.0
        %5013 = vmatpush1.msra.mxu0 0.0
        %5014 = vmatprep.subr.mxu0 0.0
        %5015 = vmatpush1.msra.mxu0 0.0
        %5016 = vmatprep.subr.mxu0 0.0
        %5017 = vmatpush1.msra.mxu0 0.0
        %5018 = vmatprep.subr.mxu0 0.0
        %5019 = vmatpush1.msra.mxu0 0.0
        %5020 = vmatprep.subr.mxu0 0.0
        %5021 = vmatpush1.msra.mxu0 0.0
        %5022 = vmatprep.subr.mxu0 0.0
        %5023 = vmatpush1.msra.mxu0 0.0
        %5024 = vmatprep.subr.mxu0 0.0
        %5025 = vmatpush1.msra.mxu0 0.0
        %5026 = vmatprep.subr.mxu0 0.0
        %5027 = vmatpush1.msra.mxu0 0.0
        %5028 = vmatprep.subr.mxu0 0.0
        %5029 = vmatpush1.msra.mxu0 0.0
        %5030 = vmatprep.subr.mxu0 0.0
        %5031 = vmatpush1.msra.mxu0 0.0
        %5032 = vmatprep.subr.mxu0 0.0
        %5033 = vmatpush1.msra.mxu0 0.0
        %5034 = vmatprep.subr.mxu0 0.0
        %5035 = vmatpush1.msra.mxu0 0.0
        %5036 = vmatprep.subr.mxu0 0.0
        %5037 = vmatpush1.msra.mxu0 %v5002
        %5038 = vmatprep.subr.mxu0 0.0
        %5039 = vmatpush2.msra.mxu0 0.0
        %5040 = vmatprep.subr.mxu0 0.0
        %5041 = vmatpush2.msra.mxu0 0.0
        %5042 = vmatprep.subr.mxu0 0.0
        %5043 = vmatpush2.msra.mxu0 0.0
        %5044 = vmatprep.subr.mxu0 0.0
        %5045 = vmatpush2.msra.mxu0 0.0
        %5046 = vmatprep.subr.mxu0 0.0
        %5047 = vmatpush2.msra.mxu0 0.0
        %5048 = vmatprep.subr.mxu0 0.0
        %5049 = vmatpush2.msra.mxu0 0.0
        %5050 = vmatprep.subr.mxu0 0.0
        %5051 = vmatpush2.msra.mxu0 0.0
        %5052 = vmatprep.subr.mxu0 0.0
        %5053 = vmatpush2.msra.mxu0 0.0
        %5054 = vmatprep.subr.mxu0 0.0
        %5055 = vmatpush2.msra.mxu0 0.0
        %5056 = vmatprep.subr.mxu0 0.0
        %5057 = vmatpush2.msra.mxu0 0.0
        %5058 = vmatprep.subr.mxu0 0.0
        %5059 = vmatpush2.msra.mxu0 0.0
        %5060 = vmatprep.subr.mxu0 0.0
        %5061 = vmatpush2.msra.mxu0 0.0
        %5062 = vmatprep.subr.mxu0 0.0
        %5063 = vmatpush2.msra.mxu0 0.0
        %5064 = vmatprep.subr.mxu0 0.0
        %5065 = vmatpush2.msra.mxu0 0.0
        %5066 = vmatprep.subr.mxu0 0.0
        %5067 = vmatpush2.msra.mxu0 0.0
        %5068 = vmatprep.subr.mxu0 0.0
        %5069 = vmatpush2.msra.mxu0 0.0
        %5070 = vmatprep.mubr.f32.mxu0 0.0
        %5071 = vmatmul.mubr.f32.gmra.mxu0 %v5004
        %v5072 = vpop.f32.mrf.mxu0
        %v5073 = vadd.f32 0.0, %v5072
        %v5074 = vpop.f32.mrf.mxu0
        %5075 = vdwg.mxu0
        %v5076 = vadd.f32 %v4835, %v5073
        %v5077 = vld [vmem:[%s55] sm:$0x1]
        %v5079 = vlaneseq
        %v5080 = vshrl.u32 %v5079, 7
        %v5081 = vsub.s32 0, %v5080
        %v5082 = vrot.slane %v5077, %v5081
        %v5084 = vadd.f32 %v5076, %v5082
        %v5085 = vadd.f32 %v3940, %v5084
        %v5086 = vsel %vm1469, %v5085, 0.0
        %5087 = vadd.xlane.f32.xlu0 %v5086
        %v5088 = vpop.xlane.xlu0 %5087
        %v5089 = vmul.f32 %v5088, %v2598
        %v5090 = vsub.f32 %v5085, %v5089
        %v5091 = vmul.f32 %v5090, %v5090
        %v5092 = vsel %vm1469, %v5091, 0.0
        %5093 = vadd.xlane.f32.xlu0 %v5092
        %v5094 = vpop.xlane.xlu0 %5093
        %v5095 = vmul.f32 %v5094, %v2598
        %v5096 = vadd.f32 %v5095, 1e-05
        %v5097 = vrsqrt.pop %v5096
        %v5098 = vmul.f32 %v5090, %v5097
        %v5099 = vld [vmem:[%s57] sm:$0x1]
        %v5101 = vlaneseq
        %v5102 = vshrl.u32 %v5101, 7
        %v5103 = vsub.s32 0, %v5102
        %v5104 = vrot.slane %v5099, %v5103
        %v5106 = vmul.f32 %v5098, %v5104
        %v5107 = vld [vmem:[%s59] sm:$0x1]
        %v5109 = vlaneseq
        %v5110 = vshrl.u32 %v5109, 7
        %v5111 = vsub.s32 0, %v5110
        %v5112 = vrot.slane %v5107, %v5111
        %v5114 = vadd.f32 %v5106, %v5112
        %v5115 = vld [vmem:[%s61] sm:$0xff]
        %v5116 = vld [vmem:[%s61 + $0x8] sm:$0xff]
        %v5117 = vld [vmem:[%s61 + $0x10] sm:$0xff]
        %v5118 = vld [vmem:[%s61 + $0x18] sm:$0xff]
        %v5119 = vld [vmem:[%s63] sm:$0x1]
        %v5121 = vlaneseq
        %v5122 = vshrl.u32 %v5121, 7
        %v5123 = vsub.s32 0, %v5122
        %v5124 = vrot.slane %v5119, %v5123
        %v5127 = vsel %vm1469, %v5114, 0
        %5129 = vmatprep.subr.mxu0 0.0
        %5130 = vmatpush1.msra.mxu0 0.0
        %5131 = vmatprep.subr.mxu0 0.0
        %5132 = vmatpush1.msra.mxu0 0.0
        %5133 = vmatprep.subr.mxu0 0.0
        %5134 = vmatpush1.msra.mxu0 0.0
        %5135 = vmatprep.subr.mxu0 0.0
        %5136 = vmatpush1.msra.mxu0 0.0
        %5137 = vmatprep.subr.mxu0 0.0
        %5138 = vmatpush1.msra.mxu0 0.0
        %5139 = vmatprep.subr.mxu0 0.0
        %5140 = vmatpush1.msra.mxu0 0.0
        %5141 = vmatprep.subr.mxu0 0.0
        %5142 = vmatpush1.msra.mxu0 0.0
        %5143 = vmatprep.subr.mxu0 0.0
        %5144 = vmatpush1.msra.mxu0 0.0
        %5145 = vmatprep.subr.mxu0 0.0
        %5146 = vmatpush1.msra.mxu0 0.0
        %5147 = vmatprep.subr.mxu0 0.0
        %5148 = vmatpush1.msra.mxu0 0.0
        %5149 = vmatprep.subr.mxu0 0.0
        %5150 = vmatpush1.msra.mxu0 0.0
        %5151 = vmatprep.subr.mxu0 0.0
        %5152 = vmatpush1.msra.mxu0 0.0
        %5153 = vmatprep.subr.mxu0 0.0
        %5154 = vmatpush1.msra.mxu0 %v5118
        %5155 = vmatprep.subr.mxu0 0.0
        %5156 = vmatpush1.msra.mxu0 %v5117
        %5157 = vmatprep.subr.mxu0 0.0
        %5158 = vmatpush1.msra.mxu0 %v5116
        %5159 = vmatprep.subr.mxu0 0.0
        %5160 = vmatpush1.msra.mxu0 %v5115
        %5161 = vmatprep.subr.mxu0 0.0
        %5162 = vmatpush2.msra.mxu0 0.0
        %5163 = vmatprep.subr.mxu0 0.0
        %5164 = vmatpush2.msra.mxu0 0.0
        %5165 = vmatprep.subr.mxu0 0.0
        %5166 = vmatpush2.msra.mxu0 0.0
        %5167 = vmatprep.subr.mxu0 0.0
        %5168 = vmatpush2.msra.mxu0 0.0
        %5169 = vmatprep.subr.mxu0 0.0
        %5170 = vmatpush2.msra.mxu0 0.0
        %5171 = vmatprep.subr.mxu0 0.0
        %5172 = vmatpush2.msra.mxu0 0.0
        %5173 = vmatprep.subr.mxu0 0.0
        %5174 = vmatpush2.msra.mxu0 0.0
        %5175 = vmatprep.subr.mxu0 0.0
        %5176 = vmatpush2.msra.mxu0 0.0
        %5177 = vmatprep.subr.mxu0 0.0
        %5178 = vmatpush2.msra.mxu0 0.0
        %5179 = vmatprep.subr.mxu0 0.0
        %5180 = vmatpush2.msra.mxu0 0.0
        %5181 = vmatprep.subr.mxu0 0.0
        %5182 = vmatpush2.msra.mxu0 0.0
        %5183 = vmatprep.subr.mxu0 0.0
        %5184 = vmatpush2.msra.mxu0 0.0
        %5185 = vmatprep.subr.mxu0 0.0
        %5186 = vmatpush2.msra.mxu0 0.0
        %5187 = vmatprep.subr.mxu0 0.0
        %5188 = vmatpush2.msra.mxu0 0.0
        %5189 = vmatprep.subr.mxu0 0.0
        %5190 = vmatpush2.msra.mxu0 0.0
        %5191 = vmatprep.subr.mxu0 0.0
        %5192 = vmatpush2.msra.mxu0 0.0
        %5193 = vmatprep.mubr.f32.mxu0 0.0
        %5194 = vmatmul.mubr.f32.gmra.mxu0 %v5127
        %v5195 = vpop.f32.mrf.mxu0
        %v5196 = vadd.f32 %v5124, %v5195
        %v5197 = vpop.f32.mrf.mxu0
        %5198 = vdwg.mxu0
        %v5199 = vmax.f32 %v5196, 0.0
        %v5200 = vld [vmem:[%s65] sm:$0xff]
        %v5201 = vld [vmem:[%s65 + $0x8] sm:$0xff]
        %v5202 = vld [vmem:[%s65 + $0x10] sm:$0xff]
        %v5203 = vld [vmem:[%s65 + $0x18] sm:$0xff]
        %v5204 = vld [vmem:[%s65 + $0x20] sm:$0xff]
        %v5205 = vld [vmem:[%s65 + $0x28] sm:$0xff]
        %v5206 = vld [vmem:[%s65 + $0x30] sm:$0xff]
        %v5207 = vld [vmem:[%s65 + $0x38] sm:$0xff]
        %v5208 = vld [vmem:[%s67] sm:$0x1]
        %v5210 = vlaneseq
        %v5211 = vshrl.u32 %v5210, 7
        %v5212 = vsub.s32 0, %v5211
        %v5213 = vrot.slane %v5208, %v5212
        %v5216 = vsel %vm2725, %v5199, 0
        %5218 = vmatprep.subr.mxu0 0.0
        %5219 = vmatpush1.msra.mxu0 0.0
        %5220 = vmatprep.subr.mxu0 0.0
        %5221 = vmatpush1.msra.mxu0 0.0
        %5222 = vmatprep.subr.mxu0 0.0
        %5223 = vmatpush1.msra.mxu0 0.0
        %5224 = vmatprep.subr.mxu0 0.0
        %5225 = vmatpush1.msra.mxu0 0.0
        %5226 = vmatprep.subr.mxu0 0.0
        %5227 = vmatpush1.msra.mxu0 0.0
        %5228 = vmatprep.subr.mxu0 0.0
        %5229 = vmatpush1.msra.mxu0 0.0
        %5230 = vmatprep.subr.mxu0 0.0
        %5231 = vmatpush1.msra.mxu0 0.0
        %5232 = vmatprep.subr.mxu0 0.0
        %5233 = vmatpush1.msra.mxu0 0.0
        %5234 = vmatprep.subr.mxu0 0.0
        %5235 = vmatpush1.msra.mxu0 %v5207
        %5236 = vmatprep.subr.mxu0 0.0
        %5237 = vmatpush1.msra.mxu0 %v5206
        %5238 = vmatprep.subr.mxu0 0.0
        %5239 = vmatpush1.msra.mxu0 %v5205
        %5240 = vmatprep.subr.mxu0 0.0
        %5241 = vmatpush1.msra.mxu0 %v5204
        %5242 = vmatprep.subr.mxu0 0.0
        %5243 = vmatpush1.msra.mxu0 %v5203
        %5244 = vmatprep.subr.mxu0 0.0
        %5245 = vmatpush1.msra.mxu0 %v5202
        %5246 = vmatprep.subr.mxu0 0.0
        %5247 = vmatpush1.msra.mxu0 %v5201
        %5248 = vmatprep.subr.mxu0 0.0
        %5249 = vmatpush1.msra.mxu0 %v5200
        %5250 = vmatprep.subr.mxu0 0.0
        %5251 = vmatpush2.msra.mxu0 0.0
        %5252 = vmatprep.subr.mxu0 0.0
        %5253 = vmatpush2.msra.mxu0 0.0
        %5254 = vmatprep.subr.mxu0 0.0
        %5255 = vmatpush2.msra.mxu0 0.0
        %5256 = vmatprep.subr.mxu0 0.0
        %5257 = vmatpush2.msra.mxu0 0.0
        %5258 = vmatprep.subr.mxu0 0.0
        %5259 = vmatpush2.msra.mxu0 0.0
        %5260 = vmatprep.subr.mxu0 0.0
        %5261 = vmatpush2.msra.mxu0 0.0
        %5262 = vmatprep.subr.mxu0 0.0
        %5263 = vmatpush2.msra.mxu0 0.0
        %5264 = vmatprep.subr.mxu0 0.0
        %5265 = vmatpush2.msra.mxu0 0.0
        %5266 = vmatprep.subr.mxu0 0.0
        %5267 = vmatpush2.msra.mxu0 0.0
        %5268 = vmatprep.subr.mxu0 0.0
        %5269 = vmatpush2.msra.mxu0 0.0
        %5270 = vmatprep.subr.mxu0 0.0
        %5271 = vmatpush2.msra.mxu0 0.0
        %5272 = vmatprep.subr.mxu0 0.0
        %5273 = vmatpush2.msra.mxu0 0.0
        %5274 = vmatprep.subr.mxu0 0.0
        %5275 = vmatpush2.msra.mxu0 0.0
        %5276 = vmatprep.subr.mxu0 0.0
        %5277 = vmatpush2.msra.mxu0 0.0
        %5278 = vmatprep.subr.mxu0 0.0
        %5279 = vmatpush2.msra.mxu0 0.0
        %5280 = vmatprep.subr.mxu0 0.0
        %5281 = vmatpush2.msra.mxu0 0.0
        %5282 = vmatprep.mubr.f32.mxu0 0.0
        %5283 = vmatmul.mubr.f32.gmra.mxu0 %v5216
        %v5284 = vpop.f32.mrf.mxu0
        %v5285 = vadd.f32 %v5213, %v5284
        %v5286 = vpop.f32.mrf.mxu0
        %5287 = vdwg.mxu0
        %v5288 = vadd.f32 %v5114, %v5285
        %v5289 = vsel %vm1469, %v5288, 0.0
        %5290 = vadd.xlane.f32.xlu0 %v5289
        %v5291 = vpop.xlane.xlu0 %5290
        %v5292 = vmul.f32 %v5291, %v2598
        %v5293 = vsub.f32 %v5288, %v5292
        %v5294 = vmul.f32 %v5293, %v5293
        %v5295 = vsel %vm1469, %v5294, 0.0
        %5296 = vadd.xlane.f32.xlu0 %v5295
        %v5297 = vpop.xlane.xlu0 %5296
        %v5298 = vmul.f32 %v5297, %v2598
        %v5299 = vadd.f32 %v5298, 1e-05
        %v5300 = vrsqrt.pop %v5299
        %v5301 = vmul.f32 %v5293, %v5300
        %v5302 = vld [vmem:[%s69] sm:$0x1]
        %v5304 = vlaneseq
        %v5305 = vshrl.u32 %v5304, 7
        %v5306 = vsub.s32 0, %v5305
        %v5307 = vrot.slane %v5302, %v5306
        %v5309 = vmul.f32 %v5301, %v5307
        %v5310 = vld [vmem:[%s71] sm:$0x1]
        %v5312 = vlaneseq
        %v5313 = vshrl.u32 %v5312, 7
        %v5314 = vsub.s32 0, %v5313
        %v5315 = vrot.slane %v5310, %v5314
        %v5317 = vadd.f32 %v5309, %v5315
        %v5318 = vsel %vm1469, %v5317, 0.0
        %5319 = vadd.xlane.f32.xlu0 %v5318
        %v5320 = vpop.xlane.xlu0 %5319
        %v5321 = vmul.f32 %v5320, %v2598
        %v5322 = vsub.f32 %v5317, %v5321
        %v5323 = vmul.f32 %v5322, %v5322
        %v5324 = vsel %vm1469, %v5323, 0.0
        %5325 = vadd.xlane.f32.xlu0 %v5324
        %v5326 = vpop.xlane.xlu0 %5325
        %v5327 = vmul.f32 %v5326, %v2598
        %v5328 = vadd.f32 %v5327, 1e-05
        %v5329 = vrsqrt.pop %v5328
        %v5330 = vmul.f32 %v5322, %v5329
        %v5331 = vld [vmem:[%s73] sm:$0x1]
        %v5333 = vlaneseq
        %v5334 = vshrl.u32 %v5333, 7
        %v5335 = vsub.s32 0, %v5334
        %v5336 = vrot.slane %v5331, %v5335
        %v5338 = vmul.f32 %v5330, %v5336
        %v5339 = vld [vmem:[%s75] sm:$0x1]
        %v5341 = vlaneseq
        %v5342 = vshrl.u32 %v5341, 7
        %v5343 = vsub.s32 0, %v5342
        %v5344 = vrot.slane %v5339, %v5343
        %v5346 = vadd.f32 %v5338, %v5344
        %5347 = vst.msk [vmem:[#allocation2] sm:$0xff] %vm1469, %v5346
        %v5348 = vld [vmem:[%s79] sm:$0x1]
        %v5349 = vld [vmem:[#allocation2] sm:$0x1]
        %v5350 = vld [vmem:[%s77] sm:$0xff]
        %v5351 = vld [vmem:[%s77 + $0x8] sm:$0xff]
        %v5352 = vld [vmem:[%s77 + $0x10] sm:$0xff]
        %v5353 = vld [vmem:[%s77 + $0x18] sm:$0xff]
        %v5355 = vsel %vm1469, %v5349, 0
        %5357 = vmatprep.subr.mxu0 0.0
        %5358 = vmatpush1.msra.mxu0 0.0
        %5359 = vmatprep.subr.mxu0 0.0
        %5360 = vmatpush1.msra.mxu0 0.0
        %5361 = vmatprep.subr.mxu0 0.0
        %5362 = vmatpush1.msra.mxu0 0.0
        %5363 = vmatprep.subr.mxu0 0.0
        %5364 = vmatpush1.msra.mxu0 0.0
        %5365 = vmatprep.subr.mxu0 0.0
        %5366 = vmatpush1.msra.mxu0 0.0
        %5367 = vmatprep.subr.mxu0 0.0
        %5368 = vmatpush1.msra.mxu0 0.0
        %5369 = vmatprep.subr.mxu0 0.0
        %5370 = vmatpush1.msra.mxu0 0.0
        %5371 = vmatprep.subr.mxu0 0.0
        %5372 = vmatpush1.msra.mxu0 0.0
        %5373 = vmatprep.subr.mxu0 0.0
        %5374 = vmatpush1.msra.mxu0 0.0
        %5375 = vmatprep.subr.mxu0 0.0
        %5376 = vmatpush1.msra.mxu0 0.0
        %5377 = vmatprep.subr.mxu0 0.0
        %5378 = vmatpush1.msra.mxu0 0.0
        %5379 = vmatprep.subr.mxu0 0.0
        %5380 = vmatpush1.msra.mxu0 0.0
        %5381 = vmatprep.subr.mxu0 0.0
        %5382 = vmatpush1.msra.mxu0 %v5353
        %5383 = vmatprep.subr.mxu0 0.0
        %5384 = vmatpush1.msra.mxu0 %v5352
        %5385 = vmatprep.subr.mxu0 0.0
        %5386 = vmatpush1.msra.mxu0 %v5351
        %5387 = vmatprep.subr.mxu0 0.0
        %5388 = vmatpush1.msra.mxu0 %v5350
        %5389 = vmatprep.subr.mxu0 0.0
        %5390 = vmatpush2.msra.mxu0 0.0
        %5391 = vmatprep.subr.mxu0 0.0
        %5392 = vmatpush2.msra.mxu0 0.0
        %5393 = vmatprep.subr.mxu0 0.0
        %5394 = vmatpush2.msra.mxu0 0.0
        %5395 = vmatprep.subr.mxu0 0.0
        %5396 = vmatpush2.msra.mxu0 0.0
        %5397 = vmatprep.subr.mxu0 0.0
        %5398 = vmatpush2.msra.mxu0 0.0
        %5399 = vmatprep.subr.mxu0 0.0
        %5400 = vmatpush2.msra.mxu0 0.0
        %5401 = vmatprep.subr.mxu0 0.0
        %5402 = vmatpush2.msra.mxu0 0.0
        %5403 = vmatprep.subr.mxu0 0.0
        %5404 = vmatpush2.msra.mxu0 0.0
        %5405 = vmatprep.subr.mxu0 0.0
        %5406 = vmatpush2.msra.mxu0 0.0
        %5407 = vmatprep.subr.mxu0 0.0
        %5408 = vmatpush2.msra.mxu0 0.0
        %5409 = vmatprep.subr.mxu0 0.0
        %5410 = vmatpush2.msra.mxu0 0.0
        %5411 = vmatprep.subr.mxu0 0.0
        %5412 = vmatpush2.msra.mxu0 0.0
        %5413 = vmatprep.subr.mxu0 0.0
        %5414 = vmatpush2.msra.mxu0 0.0
        %5415 = vmatprep.subr.mxu0 0.0
        %5416 = vmatpush2.msra.mxu0 0.0
        %5417 = vmatprep.subr.mxu0 0.0
        %5418 = vmatpush2.msra.mxu0 0.0
        %5419 = vmatprep.subr.mxu0 0.0
        %5420 = vmatpush2.msra.mxu0 0.0
        %5421 = vmatprep.mubr.f32.mxu0 0.0
        %5422 = vmatmul.mubr.f32.gmra.mxu0 %v5355
        %v5423 = vpop.f32.mrf.mxu0
        %v5424 = vadd.f32 0.0, %v5423
        %v5425 = vpop.f32.mrf.mxu0
        %5426 = vdwg.mxu0
        %v5427 = vadd.f32 %v5348, %v5424
        %v5428 = vld [vmem:[#allocation2 + $0x1] sm:$0x1]
        %s5429 = scalar_lea.vmem %s77, 32
        %v5430 = vld [vmem:[%s5429] sm:$0xff]
        %v5431 = vld [vmem:[%s5429 + $0x8] sm:$0xff]
        %v5432 = vld [vmem:[%s5429 + $0x10] sm:$0xff]
        %v5433 = vld [vmem:[%s5429 + $0x18] sm:$0xff]
        %v5435 = vsel %vm1469, %v5428, 0
        %5437 = vmatprep.subr.mxu0 0.0
        %5438 = vmatpush1.msra.mxu0 0.0
        %5439 = vmatprep.subr.mxu0 0.0
        %5440 = vmatpush1.msra.mxu0 0.0
        %5441 = vmatprep.subr.mxu0 0.0
        %5442 = vmatpush1.msra.mxu0 0.0
        %5443 = vmatprep.subr.mxu0 0.0
        %5444 = vmatpush1.msra.mxu0 0.0
        %5445 = vmatprep.subr.mxu0 0.0
        %5446 = vmatpush1.msra.mxu0 0.0
        %5447 = vmatprep.subr.mxu0 0.0
        %5448 = vmatpush1.msra.mxu0 0.0
        %5449 = vmatprep.subr.mxu0 0.0
        %5450 = vmatpush1.msra.mxu0 0.0
        %5451 = vmatprep.subr.mxu0 0.0
        %5452 = vmatpush1.msra.mxu0 0.0
        %5453 = vmatprep.subr.mxu0 0.0
        %5454 = vmatpush1.msra.mxu0 0.0
        %5455 = vmatprep.subr.mxu0 0.0
        %5456 = vmatpush1.msra.mxu0 0.0
        %5457 = vmatprep.subr.mxu0 0.0
        %5458 = vmatpush1.msra.mxu0 0.0
        %5459 = vmatprep.subr.mxu0 0.0
        %5460 = vmatpush1.msra.mxu0 0.0
        %5461 = vmatprep.subr.mxu0 0.0
        %5462 = vmatpush1.msra.mxu0 %v5433
        %5463 = vmatprep.subr.mxu0 0.0
        %5464 = vmatpush1.msra.mxu0 %v5432
        %5465 = vmatprep.subr.mxu0 0.0
        %5466 = vmatpush1.msra.mxu0 %v5431
        %5467 = vmatprep.subr.mxu0 0.0
        %5468 = vmatpush1.msra.mxu0 %v5430
        %5469 = vmatprep.subr.mxu0 0.0
        %5470 = vmatpush2.msra.mxu0 0.0
        %5471 = vmatprep.subr.mxu0 0.0
        %5472 = vmatpush2.msra.mxu0 0.0
        %5473 = vmatprep.subr.mxu0 0.0
        %5474 = vmatpush2.msra.mxu0 0.0
        %5475 = vmatprep.subr.mxu0 0.0
        %5476 = vmatpush2.msra.mxu0 0.0
        %5477 = vmatprep.subr.mxu0 0.0
        %5478 = vmatpush2.msra.mxu0 0.0
        %5479 = vmatprep.subr.mxu0 0.0
        %5480 = vmatpush2.msra.mxu0 0.0
        %5481 = vmatprep.subr.mxu0 0.0
        %5482 = vmatpush2.msra.mxu0 0.0
        %5483 = vmatprep.subr.mxu0 0.0
        %5484 = vmatpush2.msra.mxu0 0.0
        %5485 = vmatprep.subr.mxu0 0.0
        %5486 = vmatpush2.msra.mxu0 0.0
        %5487 = vmatprep.subr.mxu0 0.0
        %5488 = vmatpush2.msra.mxu0 0.0
        %5489 = vmatprep.subr.mxu0 0.0
        %5490 = vmatpush2.msra.mxu0 0.0
        %5491 = vmatprep.subr.mxu0 0.0
        %5492 = vmatpush2.msra.mxu0 0.0
        %5493 = vmatprep.subr.mxu0 0.0
        %5494 = vmatpush2.msra.mxu0 0.0
        %5495 = vmatprep.subr.mxu0 0.0
        %5496 = vmatpush2.msra.mxu0 0.0
        %5497 = vmatprep.subr.mxu0 0.0
        %5498 = vmatpush2.msra.mxu0 0.0
        %5499 = vmatprep.subr.mxu0 0.0
        %5500 = vmatpush2.msra.mxu0 0.0
        %5501 = vmatprep.mubr.f32.mxu0 0.0
        %5502 = vmatmul.mubr.f32.gmra.mxu0 %v5435
        %v5503 = vpop.f32.mrf.mxu0
        %v5504 = vadd.f32 0.0, %v5503
        %v5505 = vpop.f32.mrf.mxu0
        %5506 = vdwg.mxu0
        %v5507 = vadd.f32 %v5427, %v5504
        %v5508 = vld [vmem:[#allocation2 + $0x2] sm:$0x1]
        %s5509 = scalar_lea.vmem %s77, 64
        %v5510 = vld [vmem:[%s5509] sm:$0xff]
        %v5511 = vld [vmem:[%s5509 + $0x8] sm:$0xff]
        %v5512 = vld [vmem:[%s5509 + $0x10] sm:$0xff]
        %v5513 = vld [vmem:[%s5509 + $0x18] sm:$0xff]
        %v5515 = vsel %vm1469, %v5508, 0
        %5517 = vmatprep.subr.mxu0 0.0
        %5518 = vmatpush1.msra.mxu0 0.0
        %5519 = vmatprep.subr.mxu0 0.0
        %5520 = vmatpush1.msra.mxu0 0.0
        %5521 = vmatprep.subr.mxu0 0.0
        %5522 = vmatpush1.msra.mxu0 0.0
        %5523 = vmatprep.subr.mxu0 0.0
        %5524 = vmatpush1.msra.mxu0 0.0
        %5525 = vmatprep.subr.mxu0 0.0
        %5526 = vmatpush1.msra.mxu0 0.0
        %5527 = vmatprep.subr.mxu0 0.0
        %5528 = vmatpush1.msra.mxu0 0.0
        %5529 = vmatprep.subr.mxu0 0.0
        %5530 = vmatpush1.msra.mxu0 0.0
        %5531 = vmatprep.subr.mxu0 0.0
        %5532 = vmatpush1.msra.mxu0 0.0
        %5533 = vmatprep.subr.mxu0 0.0
        %5534 = vmatpush1.msra.mxu0 0.0
        %5535 = vmatprep.subr.mxu0 0.0
        %5536 = vmatpush1.msra.mxu0 0.0
        %5537 = vmatprep.subr.mxu0 0.0
        %5538 = vmatpush1.msra.mxu0 0.0
        %5539 = vmatprep.subr.mxu0 0.0
        %5540 = vmatpush1.msra.mxu0 0.0
        %5541 = vmatprep.subr.mxu0 0.0
        %5542 = vmatpush1.msra.mxu0 %v5513
        %5543 = vmatprep.subr.mxu0 0.0
        %5544 = vmatpush1.msra.mxu0 %v5512
        %5545 = vmatprep.subr.mxu0 0.0
        %5546 = vmatpush1.msra.mxu0 %v5511
        %5547 = vmatprep.subr.mxu0 0.0
        %5548 = vmatpush1.msra.mxu0 %v5510
        %5549 = vmatprep.subr.mxu0 0.0
        %5550 = vmatpush2.msra.mxu0 0.0
        %5551 = vmatprep.subr.mxu0 0.0
        %5552 = vmatpush2.msra.mxu0 0.0
        %5553 = vmatprep.subr.mxu0 0.0
        %5554 = vmatpush2.msra.mxu0 0.0
        %5555 = vmatprep.subr.mxu0 0.0
        %5556 = vmatpush2.msra.mxu0 0.0
        %5557 = vmatprep.subr.mxu0 0.0
        %5558 = vmatpush2.msra.mxu0 0.0
        %5559 = vmatprep.subr.mxu0 0.0
        %5560 = vmatpush2.msra.mxu0 0.0
        %5561 = vmatprep.subr.mxu0 0.0
        %5562 = vmatpush2.msra.mxu0 0.0
        %5563 = vmatprep.subr.mxu0 0.0
        %5564 = vmatpush2.msra.mxu0 0.0
        %5565 = vmatprep.subr.mxu0 0.0
        %5566 = vmatpush2.msra.mxu0 0.0
        %5567 = vmatprep.subr.mxu0 0.0
        %5568 = vmatpush2.msra.mxu0 0.0
        %5569 = vmatprep.subr.mxu0 0.0
        %5570 = vmatpush2.msra.mxu0 0.0
        %5571 = vmatprep.subr.mxu0 0.0
        %5572 = vmatpush2.msra.mxu0 0.0
        %5573 = vmatprep.subr.mxu0 0.0
        %5574 = vmatpush2.msra.mxu0 0.0
        %5575 = vmatprep.subr.mxu0 0.0
        %5576 = vmatpush2.msra.mxu0 0.0
        %5577 = vmatprep.subr.mxu0 0.0
        %5578 = vmatpush2.msra.mxu0 0.0
        %5579 = vmatprep.subr.mxu0 0.0
        %5580 = vmatpush2.msra.mxu0 0.0
        %5581 = vmatprep.mubr.f32.mxu0 0.0
        %5582 = vmatmul.mubr.f32.gmra.mxu0 %v5515
        %v5583 = vpop.f32.mrf.mxu0
        %v5584 = vadd.f32 0.0, %v5583
        %v5585 = vpop.f32.mrf.mxu0
        %5586 = vdwg.mxu0
        %v5587 = vadd.f32 %v5507, %v5584
        %v5588 = vld [vmem:[#allocation2 + $0x3] sm:$0x1]
        %s5589 = scalar_lea.vmem %s77, 96
        %v5590 = vld [vmem:[%s5589] sm:$0xff]
        %v5591 = vld [vmem:[%s5589 + $0x8] sm:$0xff]
        %v5592 = vld [vmem:[%s5589 + $0x10] sm:$0xff]
        %v5593 = vld [vmem:[%s5589 + $0x18] sm:$0xff]
        %v5595 = vsel %vm1469, %v5588, 0
        %5597 = vmatprep.subr.mxu0 0.0
        %5598 = vmatpush1.msra.mxu0 0.0
        %5599 = vmatprep.subr.mxu0 0.0
        %5600 = vmatpush1.msra.mxu0 0.0
        %5601 = vmatprep.subr.mxu0 0.0
        %5602 = vmatpush1.msra.mxu0 0.0
        %5603 = vmatprep.subr.mxu0 0.0
        %5604 = vmatpush1.msra.mxu0 0.0
        %5605 = vmatprep.subr.mxu0 0.0
        %5606 = vmatpush1.msra.mxu0 0.0
        %5607 = vmatprep.subr.mxu0 0.0
        %5608 = vmatpush1.msra.mxu0 0.0
        %5609 = vmatprep.subr.mxu0 0.0
        %5610 = vmatpush1.msra.mxu0 0.0
        %5611 = vmatprep.subr.mxu0 0.0
        %5612 = vmatpush1.msra.mxu0 0.0
        %5613 = vmatprep.subr.mxu0 0.0
        %5614 = vmatpush1.msra.mxu0 0.0
        %5615 = vmatprep.subr.mxu0 0.0
        %5616 = vmatpush1.msra.mxu0 0.0
        %5617 = vmatprep.subr.mxu0 0.0
        %5618 = vmatpush1.msra.mxu0 0.0
        %5619 = vmatprep.subr.mxu0 0.0
        %5620 = vmatpush1.msra.mxu0 0.0
        %5621 = vmatprep.subr.mxu0 0.0
        %5622 = vmatpush1.msra.mxu0 %v5593
        %5623 = vmatprep.subr.mxu0 0.0
        %5624 = vmatpush1.msra.mxu0 %v5592
        %5625 = vmatprep.subr.mxu0 0.0
        %5626 = vmatpush1.msra.mxu0 %v5591
        %5627 = vmatprep.subr.mxu0 0.0
        %5628 = vmatpush1.msra.mxu0 %v5590
        %5629 = vmatprep.subr.mxu0 0.0
        %5630 = vmatpush2.msra.mxu0 0.0
        %5631 = vmatprep.subr.mxu0 0.0
        %5632 = vmatpush2.msra.mxu0 0.0
        %5633 = vmatprep.subr.mxu0 0.0
        %5634 = vmatpush2.msra.mxu0 0.0
        %5635 = vmatprep.subr.mxu0 0.0
        %5636 = vmatpush2.msra.mxu0 0.0
        %5637 = vmatprep.subr.mxu0 0.0
        %5638 = vmatpush2.msra.mxu0 0.0
        %5639 = vmatprep.subr.mxu0 0.0
        %5640 = vmatpush2.msra.mxu0 0.0
        %5641 = vmatprep.subr.mxu0 0.0
        %5642 = vmatpush2.msra.mxu0 0.0
        %5643 = vmatprep.subr.mxu0 0.0
        %5644 = vmatpush2.msra.mxu0 0.0
        %5645 = vmatprep.subr.mxu0 0.0
        %5646 = vmatpush2.msra.mxu0 0.0
        %5647 = vmatprep.subr.mxu0 0.0
        %5648 = vmatpush2.msra.mxu0 0.0
        %5649 = vmatprep.subr.mxu0 0.0
        %5650 = vmatpush2.msra.mxu0 0.0
        %5651 = vmatprep.subr.mxu0 0.0
        %5652 = vmatpush2.msra.mxu0 0.0
        %5653 = vmatprep.subr.mxu0 0.0
        %5654 = vmatpush2.msra.mxu0 0.0
        %5655 = vmatprep.subr.mxu0 0.0
        %5656 = vmatpush2.msra.mxu0 0.0
        %5657 = vmatprep.subr.mxu0 0.0
        %5658 = vmatpush2.msra.mxu0 0.0
        %5659 = vmatprep.subr.mxu0 0.0
        %5660 = vmatpush2.msra.mxu0 0.0
        %5661 = vmatprep.mubr.f32.mxu0 0.0
        %5662 = vmatmul.mubr.f32.gmra.mxu0 %v5595
        %v5663 = vpop.f32.mrf.mxu0
        %v5664 = vadd.f32 0.0, %v5663
        %v5665 = vpop.f32.mrf.mxu0
        %5666 = vdwg.mxu0
        %v5667 = vadd.f32 %v5587, %v5664
        %v5668 = vld [vmem:[#allocation2 + $0x4] sm:$0x1]
        %s5669 = scalar_lea.vmem %s77, 128
        %v5670 = vld [vmem:[%s5669] sm:$0xff]
        %v5671 = vld [vmem:[%s5669 + $0x8] sm:$0xff]
        %v5672 = vld [vmem:[%s5669 + $0x10] sm:$0xff]
        %v5673 = vld [vmem:[%s5669 + $0x18] sm:$0xff]
        %v5675 = vsel %vm1469, %v5668, 0
        %5677 = vmatprep.subr.mxu0 0.0
        %5678 = vmatpush1.msra.mxu0 0.0
        %5679 = vmatprep.subr.mxu0 0.0
        %5680 = vmatpush1.msra.mxu0 0.0
        %5681 = vmatprep.subr.mxu0 0.0
        %5682 = vmatpush1.msra.mxu0 0.0
        %5683 = vmatprep.subr.mxu0 0.0
        %5684 = vmatpush1.msra.mxu0 0.0
        %5685 = vmatprep.subr.mxu0 0.0
        %5686 = vmatpush1.msra.mxu0 0.0
        %5687 = vmatprep.subr.mxu0 0.0
        %5688 = vmatpush1.msra.mxu0 0.0
        %5689 = vmatprep.subr.mxu0 0.0
        %5690 = vmatpush1.msra.mxu0 0.0
        %5691 = vmatprep.subr.mxu0 0.0
        %5692 = vmatpush1.msra.mxu0 0.0
        %5693 = vmatprep.subr.mxu0 0.0
        %5694 = vmatpush1.msra.mxu0 0.0
        %5695 = vmatprep.subr.mxu0 0.0
        %5696 = vmatpush1.msra.mxu0 0.0
        %5697 = vmatprep.subr.mxu0 0.0
        %5698 = vmatpush1.msra.mxu0 0.0
        %5699 = vmatprep.subr.mxu0 0.0
        %5700 = vmatpush1.msra.mxu0 0.0
        %5701 = vmatprep.subr.mxu0 0.0
        %5702 = vmatpush1.msra.mxu0 %v5673
        %5703 = vmatprep.subr.mxu0 0.0
        %5704 = vmatpush1.msra.mxu0 %v5672
        %5705 = vmatprep.subr.mxu0 0.0
        %5706 = vmatpush1.msra.mxu0 %v5671
        %5707 = vmatprep.subr.mxu0 0.0
        %5708 = vmatpush1.msra.mxu0 %v5670
        %5709 = vmatprep.subr.mxu0 0.0
        %5710 = vmatpush2.msra.mxu0 0.0
        %5711 = vmatprep.subr.mxu0 0.0
        %5712 = vmatpush2.msra.mxu0 0.0
        %5713 = vmatprep.subr.mxu0 0.0
        %5714 = vmatpush2.msra.mxu0 0.0
        %5715 = vmatprep.subr.mxu0 0.0
        %5716 = vmatpush2.msra.mxu0 0.0
        %5717 = vmatprep.subr.mxu0 0.0
        %5718 = vmatpush2.msra.mxu0 0.0
        %5719 = vmatprep.subr.mxu0 0.0
        %5720 = vmatpush2.msra.mxu0 0.0
        %5721 = vmatprep.subr.mxu0 0.0
        %5722 = vmatpush2.msra.mxu0 0.0
        %5723 = vmatprep.subr.mxu0 0.0
        %5724 = vmatpush2.msra.mxu0 0.0
        %5725 = vmatprep.subr.mxu0 0.0
        %5726 = vmatpush2.msra.mxu0 0.0
        %5727 = vmatprep.subr.mxu0 0.0
        %5728 = vmatpush2.msra.mxu0 0.0
        %5729 = vmatprep.subr.mxu0 0.0
        %5730 = vmatpush2.msra.mxu0 0.0
        %5731 = vmatprep.subr.mxu0 0.0
        %5732 = vmatpush2.msra.mxu0 0.0
        %5733 = vmatprep.subr.mxu0 0.0
        %5734 = vmatpush2.msra.mxu0 0.0
        %5735 = vmatprep.subr.mxu0 0.0
        %5736 = vmatpush2.msra.mxu0 0.0
        %5737 = vmatprep.subr.mxu0 0.0
        %5738 = vmatpush2.msra.mxu0 0.0
        %5739 = vmatprep.subr.mxu0 0.0
        %5740 = vmatpush2.msra.mxu0 0.0
        %5741 = vmatprep.mubr.f32.mxu0 0.0
        %5742 = vmatmul.mubr.f32.gmra.mxu0 %v5675
        %v5743 = vpop.f32.mrf.mxu0
        %v5744 = vadd.f32 0.0, %v5743
        %v5745 = vpop.f32.mrf.mxu0
        %5746 = vdwg.mxu0
        %v5747 = vadd.f32 %v5667, %v5744
        %v5748 = vld [vmem:[#allocation2 + $0x5] sm:$0x1]
        %s5749 = scalar_lea.vmem %s77, 160
        %v5750 = vld [vmem:[%s5749] sm:$0xff]
        %v5751 = vld [vmem:[%s5749 + $0x8] sm:$0xff]
        %v5752 = vld [vmem:[%s5749 + $0x10] sm:$0xff]
        %v5753 = vld [vmem:[%s5749 + $0x18] sm:$0xff]
        %v5755 = vsel %vm1469, %v5748, 0
        %5757 = vmatprep.subr.mxu0 0.0
        %5758 = vmatpush1.msra.mxu0 0.0
        %5759 = vmatprep.subr.mxu0 0.0
        %5760 = vmatpush1.msra.mxu0 0.0
        %5761 = vmatprep.subr.mxu0 0.0
        %5762 = vmatpush1.msra.mxu0 0.0
        %5763 = vmatprep.subr.mxu0 0.0
        %5764 = vmatpush1.msra.mxu0 0.0
        %5765 = vmatprep.subr.mxu0 0.0
        %5766 = vmatpush1.msra.mxu0 0.0
        %5767 = vmatprep.subr.mxu0 0.0
        %5768 = vmatpush1.msra.mxu0 0.0
        %5769 = vmatprep.subr.mxu0 0.0
        %5770 = vmatpush1.msra.mxu0 0.0
        %5771 = vmatprep.subr.mxu0 0.0
        %5772 = vmatpush1.msra.mxu0 0.0
        %5773 = vmatprep.subr.mxu0 0.0
        %5774 = vmatpush1.msra.mxu0 0.0
        %5775 = vmatprep.subr.mxu0 0.0
        %5776 = vmatpush1.msra.mxu0 0.0
        %5777 = vmatprep.subr.mxu0 0.0
        %5778 = vmatpush1.msra.mxu0 0.0
        %5779 = vmatprep.subr.mxu0 0.0
        %5780 = vmatpush1.msra.mxu0 0.0
        %5781 = vmatprep.subr.mxu0 0.0
        %5782 = vmatpush1.msra.mxu0 %v5753
        %5783 = vmatprep.subr.mxu0 0.0
        %5784 = vmatpush1.msra.mxu0 %v5752
        %5785 = vmatprep.subr.mxu0 0.0
        %5786 = vmatpush1.msra.mxu0 %v5751
        %5787 = vmatprep.subr.mxu0 0.0
        %5788 = vmatpush1.msra.mxu0 %v5750
        %5789 = vmatprep.subr.mxu0 0.0
        %5790 = vmatpush2.msra.mxu0 0.0
        %5791 = vmatprep.subr.mxu0 0.0
        %5792 = vmatpush2.msra.mxu0 0.0
        %5793 = vmatprep.subr.mxu0 0.0
        %5794 = vmatpush2.msra.mxu0 0.0
        %5795 = vmatprep.subr.mxu0 0.0
        %5796 = vmatpush2.msra.mxu0 0.0
        %5797 = vmatprep.subr.mxu0 0.0
        %5798 = vmatpush2.msra.mxu0 0.0
        %5799 = vmatprep.subr.mxu0 0.0
        %5800 = vmatpush2.msra.mxu0 0.0
        %5801 = vmatprep.subr.mxu0 0.0
        %5802 = vmatpush2.msra.mxu0 0.0
        %5803 = vmatprep.subr.mxu0 0.0
        %5804 = vmatpush2.msra.mxu0 0.0
        %5805 = vmatprep.subr.mxu0 0.0
        %5806 = vmatpush2.msra.mxu0 0.0
        %5807 = vmatprep.subr.mxu0 0.0
        %5808 = vmatpush2.msra.mxu0 0.0
        %5809 = vmatprep.subr.mxu0 0.0
        %5810 = vmatpush2.msra.mxu0 0.0
        %5811 = vmatprep.subr.mxu0 0.0
        %5812 = vmatpush2.msra.mxu0 0.0
        %5813 = vmatprep.subr.mxu0 0.0
        %5814 = vmatpush2.msra.mxu0 0.0
        %5815 = vmatprep.subr.mxu0 0.0
        %5816 = vmatpush2.msra.mxu0 0.0
        %5817 = vmatprep.subr.mxu0 0.0
        %5818 = vmatpush2.msra.mxu0 0.0
        %5819 = vmatprep.subr.mxu0 0.0
        %5820 = vmatpush2.msra.mxu0 0.0
        %5821 = vmatprep.mubr.f32.mxu0 0.0
        %5822 = vmatmul.mubr.f32.gmra.mxu0 %v5755
        %v5823 = vpop.f32.mrf.mxu0
        %v5824 = vadd.f32 0.0, %v5823
        %v5825 = vpop.f32.mrf.mxu0
        %5826 = vdwg.mxu0
        %v5827 = vadd.f32 %v5747, %v5824
        %v5828 = vld [vmem:[#allocation2 + $0x6] sm:$0x1]
        %s5829 = scalar_lea.vmem %s77, 192
        %v5830 = vld [vmem:[%s5829] sm:$0xff]
        %v5831 = vld [vmem:[%s5829 + $0x8] sm:$0xff]
        %v5832 = vld [vmem:[%s5829 + $0x10] sm:$0xff]
        %v5833 = vld [vmem:[%s5829 + $0x18] sm:$0xff]
        %v5835 = vsel %vm1469, %v5828, 0
        %5837 = vmatprep.subr.mxu0 0.0
        %5838 = vmatpush1.msra.mxu0 0.0
        %5839 = vmatprep.subr.mxu0 0.0
        %5840 = vmatpush1.msra.mxu0 0.0
        %5841 = vmatprep.subr.mxu0 0.0
        %5842 = vmatpush1.msra.mxu0 0.0
        %5843 = vmatprep.subr.mxu0 0.0
        %5844 = vmatpush1.msra.mxu0 0.0
        %5845 = vmatprep.subr.mxu0 0.0
        %5846 = vmatpush1.msra.mxu0 0.0
        %5847 = vmatprep.subr.mxu0 0.0
        %5848 = vmatpush1.msra.mxu0 0.0
        %5849 = vmatprep.subr.mxu0 0.0
        %5850 = vmatpush1.msra.mxu0 0.0
        %5851 = vmatprep.subr.mxu0 0.0
        %5852 = vmatpush1.msra.mxu0 0.0
        %5853 = vmatprep.subr.mxu0 0.0
        %5854 = vmatpush1.msra.mxu0 0.0
        %5855 = vmatprep.subr.mxu0 0.0
        %5856 = vmatpush1.msra.mxu0 0.0
        %5857 = vmatprep.subr.mxu0 0.0
        %5858 = vmatpush1.msra.mxu0 0.0
        %5859 = vmatprep.subr.mxu0 0.0
        %5860 = vmatpush1.msra.mxu0 0.0
        %5861 = vmatprep.subr.mxu0 0.0
        %5862 = vmatpush1.msra.mxu0 %v5833
        %5863 = vmatprep.subr.mxu0 0.0
        %5864 = vmatpush1.msra.mxu0 %v5832
        %5865 = vmatprep.subr.mxu0 0.0
        %5866 = vmatpush1.msra.mxu0 %v5831
        %5867 = vmatprep.subr.mxu0 0.0
        %5868 = vmatpush1.msra.mxu0 %v5830
        %5869 = vmatprep.subr.mxu0 0.0
        %5870 = vmatpush2.msra.mxu0 0.0
        %5871 = vmatprep.subr.mxu0 0.0
        %5872 = vmatpush2.msra.mxu0 0.0
        %5873 = vmatprep.subr.mxu0 0.0
        %5874 = vmatpush2.msra.mxu0 0.0
        %5875 = vmatprep.subr.mxu0 0.0
        %5876 = vmatpush2.msra.mxu0 0.0
        %5877 = vmatprep.subr.mxu0 0.0
        %5878 = vmatpush2.msra.mxu0 0.0
        %5879 = vmatprep.subr.mxu0 0.0
        %5880 = vmatpush2.msra.mxu0 0.0
        %5881 = vmatprep.subr.mxu0 0.0
        %5882 = vmatpush2.msra.mxu0 0.0
        %5883 = vmatprep.subr.mxu0 0.0
        %5884 = vmatpush2.msra.mxu0 0.0
        %5885 = vmatprep.subr.mxu0 0.0
        %5886 = vmatpush2.msra.mxu0 0.0
        %5887 = vmatprep.subr.mxu0 0.0
        %5888 = vmatpush2.msra.mxu0 0.0
        %5889 = vmatprep.subr.mxu0 0.0
        %5890 = vmatpush2.msra.mxu0 0.0
        %5891 = vmatprep.subr.mxu0 0.0
        %5892 = vmatpush2.msra.mxu0 0.0
        %5893 = vmatprep.subr.mxu0 0.0
        %5894 = vmatpush2.msra.mxu0 0.0
        %5895 = vmatprep.subr.mxu0 0.0
        %5896 = vmatpush2.msra.mxu0 0.0
        %5897 = vmatprep.subr.mxu0 0.0
        %5898 = vmatpush2.msra.mxu0 0.0
        %5899 = vmatprep.subr.mxu0 0.0
        %5900 = vmatpush2.msra.mxu0 0.0
        %5901 = vmatprep.mubr.f32.mxu0 0.0
        %5902 = vmatmul.mubr.f32.gmra.mxu0 %v5835
        %v5903 = vpop.f32.mrf.mxu0
        %v5904 = vadd.f32 0.0, %v5903
        %v5905 = vpop.f32.mrf.mxu0
        %5906 = vdwg.mxu0
        %v5907 = vadd.f32 %v5827, %v5904
        %v5908 = vld [vmem:[#allocation2 + $0x7] sm:$0x1]
        %s5909 = scalar_lea.vmem %s77, 224
        %v5910 = vld [vmem:[%s5909] sm:$0xff]
        %v5911 = vld [vmem:[%s5909 + $0x8] sm:$0xff]
        %v5912 = vld [vmem:[%s5909 + $0x10] sm:$0xff]
        %v5913 = vld [vmem:[%s5909 + $0x18] sm:$0xff]
        %v5915 = vsel %vm1469, %v5908, 0
        %5917 = vmatprep.subr.mxu0 0.0
        %5918 = vmatpush1.msra.mxu0 0.0
        %5919 = vmatprep.subr.mxu0 0.0
        %5920 = vmatpush1.msra.mxu0 0.0
        %5921 = vmatprep.subr.mxu0 0.0
        %5922 = vmatpush1.msra.mxu0 0.0
        %5923 = vmatprep.subr.mxu0 0.0
        %5924 = vmatpush1.msra.mxu0 0.0
        %5925 = vmatprep.subr.mxu0 0.0
        %5926 = vmatpush1.msra.mxu0 0.0
        %5927 = vmatprep.subr.mxu0 0.0
        %5928 = vmatpush1.msra.mxu0 0.0
        %5929 = vmatprep.subr.mxu0 0.0
        %5930 = vmatpush1.msra.mxu0 0.0
        %5931 = vmatprep.subr.mxu0 0.0
        %5932 = vmatpush1.msra.mxu0 0.0
        %5933 = vmatprep.subr.mxu0 0.0
        %5934 = vmatpush1.msra.mxu0 0.0
        %5935 = vmatprep.subr.mxu0 0.0
        %5936 = vmatpush1.msra.mxu0 0.0
        %5937 = vmatprep.subr.mxu0 0.0
        %5938 = vmatpush1.msra.mxu0 0.0
        %5939 = vmatprep.subr.mxu0 0.0
        %5940 = vmatpush1.msra.mxu0 0.0
        %5941 = vmatprep.subr.mxu0 0.0
        %5942 = vmatpush1.msra.mxu0 %v5913
        %5943 = vmatprep.subr.mxu0 0.0
        %5944 = vmatpush1.msra.mxu0 %v5912
        %5945 = vmatprep.subr.mxu0 0.0
        %5946 = vmatpush1.msra.mxu0 %v5911
        %5947 = vmatprep.subr.mxu0 0.0
        %5948 = vmatpush1.msra.mxu0 %v5910
        %5949 = vmatprep.subr.mxu0 0.0
        %5950 = vmatpush2.msra.mxu0 0.0
        %5951 = vmatprep.subr.mxu0 0.0
        %5952 = vmatpush2.msra.mxu0 0.0
        %5953 = vmatprep.subr.mxu0 0.0
        %5954 = vmatpush2.msra.mxu0 0.0
        %5955 = vmatprep.subr.mxu0 0.0
        %5956 = vmatpush2.msra.mxu0 0.0
        %5957 = vmatprep.subr.mxu0 0.0
        %5958 = vmatpush2.msra.mxu0 0.0
        %5959 = vmatprep.subr.mxu0 0.0
        %5960 = vmatpush2.msra.mxu0 0.0
        %5961 = vmatprep.subr.mxu0 0.0
        %5962 = vmatpush2.msra.mxu0 0.0
        %5963 = vmatprep.subr.mxu0 0.0
        %5964 = vmatpush2.msra.mxu0 0.0
        %5965 = vmatprep.subr.mxu0 0.0
        %5966 = vmatpush2.msra.mxu0 0.0
        %5967 = vmatprep.subr.mxu0 0.0
        %5968 = vmatpush2.msra.mxu0 0.0
        %5969 = vmatprep.subr.mxu0 0.0
        %5970 = vmatpush2.msra.mxu0 0.0
        %5971 = vmatprep.subr.mxu0 0.0
        %5972 = vmatpush2.msra.mxu0 0.0
        %5973 = vmatprep.subr.mxu0 0.0
        %5974 = vmatpush2.msra.mxu0 0.0
        %5975 = vmatprep.subr.mxu0 0.0
        %5976 = vmatpush2.msra.mxu0 0.0
        %5977 = vmatprep.subr.mxu0 0.0
        %5978 = vmatpush2.msra.mxu0 0.0
        %5979 = vmatprep.subr.mxu0 0.0
        %5980 = vmatpush2.msra.mxu0 0.0
        %5981 = vmatprep.mubr.f32.mxu0 0.0
        %5982 = vmatmul.mubr.f32.gmra.mxu0 %v5915
        %v5983 = vpop.f32.mrf.mxu0
        %v5984 = vadd.f32 0.0, %v5983
        %v5985 = vpop.f32.mrf.mxu0
        %5986 = vdwg.mxu0
        %v5987 = vadd.f32 %v5907, %v5984
        %vm5988 = vcmask 32768
        %5989 = vst.msk [vmem:[%s1202] sm:$0x1] %vm5988, %v5987
        %s5990 = sand.u32 %s948, 1
        %s5991 = scalar_lea.sflag [#allocation4], %s5990
        %s5992 = sand.u32 %s948, 1
        %s5993 = scalar_lea.vmem [#allocation3], %s5992
        // Predicated region
        $region181: #{ctn_forward.1} parent=179 // pred_check
          %p5994 = pneg %p958
        $region182: #{ctn_forward.1} parent=179 // pred_check_branch
          %5996 = sbr.rel (%p5994) target = $region184
        $region183: #{ctn_forward.1} parent=179 // pred_region
          %s5998 = ssub.s32 16, 16
          %5999 = vsyncadd %s5991, %s5998
          %s6000 = smul.addr %s95, 16
          %s6001 = scalar_lea.hbm %s81, %s6000
          %s6003 = sshll.u32 %s5993, 4
          %s6004 = int_to_ptr.vmem [resolvable:$true] %s6003
          %6006 = dma.vmem_to_hbm [thread:$0]  %s6004, 16, %s6001, %s5991
        $region184: #{ctn_forward.1} parent=179 // pred_fallthru
          _
      $region180: #{ctn_forward.1} parent=5 // pred_fallthru
        _
      %p6007 = scmp.le.s32.totalorder 2, %s90
      // Predicated region
      $region185: #{ctn_forward.1} parent=5 // pred_check
        %p6008 = pneg %p6007
      $region186: #{ctn_forward.1} parent=5 // pred_check_branch
        %6010 = sbr.rel (%p6008) target = $region188
      $region187: #{ctn_forward.1} parent=5 // pred_region
        %s6011 = ssub.s32 %s90, 2
        // Predicated region
        $region189: #{ctn_forward.1} parent=187 // pred_check
          %p6012 = pneg %p964
        $region190: #{ctn_forward.1} parent=187 // pred_check_branch
          %6014 = sbr.rel (%p6012) target = $region192
        $region191: #{ctn_forward.1} parent=187 // pred_region
          %s6015 = sand.u32 %s949, 1
          %s6016 = scalar_lea.sflag [#allocation4], %s6015
          %s6017 = sand.u32 %s949, 1
          %s6018 = scalar_lea.vmem [#allocation3], %s6017
          %6019 = dma.done %s6016, 16
        $region192: #{ctn_forward.1} parent=187 // pred_fallthru
          _
      $region188: #{ctn_forward.1} parent=5 // pred_fallthru
        _
    $region6: #{ctn_forward.1} parent=1 // loop_footer
      %s94 = sadd.s32 1, %s90
    $region7: #{ctn_forward.1} parent=1 // loop_footer_branch
      %89 = sbr.rel target = $region3
    $region8: #{ctn_forward.1} parent=1 // loop_exit
      _
    %6020 = vsyncpa [#allocation4], 1
    %s6021 = scalar_lea.sflag [#allocation4], 1
    %6022 = vsyncpa %s6021, 1

</llo_original>
